<compile_context>
chip_gen: v6e
topology: v6e:2x2x1
jax: 0.10.0
libtpu: 0.0.40
codegen_flags: <defaults>
</compile_context>

<pallas_src>
import math

import jax
import jax.numpy as jnp
from jax import lax
from jax.experimental import pallas as pl
from jax.experimental.pallas import tpu as pltpu


# ----------------------------- in-kernel helpers -----------------------------

def _layernorm(x, g, b, eps=1e-5):
    mu = jnp.mean(x, axis=-1, keepdims=True)
    xc = x - mu
    var = jnp.mean(xc * xc, axis=-1, keepdims=True)
    return xc * lax.rsqrt(var + eps) * g + b


# --------------------------------- kernel ------------------------------------

def text_encoder_kernel(
    phone_ref, pitch_emb_ref, mask_col_ref, mask_row_ref,
    emb_w_ref, emb_b_ref,
    wq_ref, bq_ref, wk_ref, bk_ref, wv_ref, bv_ref, wo_ref, bo_ref,
    rk_ref, rv_ref,
    g1_ref, be1_ref,
    w1_ref, cb1_ref, w2_ref, cb2_ref,
    g2_ref, be2_ref,
    projw_ref, projb_ref,
    stats_ref,
    xp1_ref, xp2_ref,
    *, n_layers, n_heads, hidden, filter_channels, kernel_size, rel_span,
):
    f32 = jnp.float32
    bf16 = jnp.bfloat16
    T = phone_ref.shape[1]
    H = hidden
    kc = H // n_heads
    K = kernel_size
    pad_l = (K - 1) // 2
    scale = 1.0 / math.sqrt(kc)
    R = 2 * rel_span + 1

    # zero the conv halo scratch once per grid step (interiors are rewritten)
    xp1_ref[...] = jnp.zeros(xp1_ref.shape, xp1_ref.dtype)
    xp2_ref[...] = jnp.zeros(xp2_ref.shape, xp2_ref.dtype)

    mask_c = mask_col_ref[0]                        # (T, 1) f32
    mask_r = mask_row_ref[0]                        # (1, T) f32
    attn_bias = (mask_c * mask_r - 1.0) * 1e4       # 0 valid / -1e4 masked

    row_ids = lax.broadcasted_iota(jnp.int32, (T, T), 0)
    col_ids = lax.broadcasted_iota(jnp.int32, (T, T), 1)
    rel_pos = col_ids - row_ids                     # j - i

    def mm(a, b, contract=(1, 1)):
        return lax.dot_general(
            a, b, (((contract[0],), (contract[1],)), ((), ())),
            preferred_element_type=f32)

    # ---- pre-net: emb_phone (+ emb_pitch), * sqrt(H), LeakyReLU(0.1), mask ----
    x = mm(phone_ref[0].astype(bf16), emb_w_ref[...]) + emb_b_ref[...]
    x = x + pitch_emb_ref[0]
    x = x * math.sqrt(H)
    x = jnp.where(x >= 0.0, x, 0.1 * x)
    x = x * mask_c

    def conv1d_same(xp_ref, inp_f32, w_ref, l, bias):
        # inp_f32: (T, Ci) f32 ; w_ref[l, tap]: (Co, Ci) bf16 ; bias: (1, Co)
        xp_ref[pad_l:pad_l + T, :] = inp_f32          # interior; halo stays 0
        acc = None
        for tap in range(K):
            z = mm(xp_ref[tap:tap + T, :].astype(bf16), w_ref[l, tap])
            acc = z if acc is None else acc + z
        return acc + bias

    for l in range(n_layers):
        # -------- relative-position multi-head self-attention (heads_share) --------
        xb = x.astype(bf16)
        rk_l = rk_ref[l]                            # (R, kc) bf16
        rv_l = rv_ref[l]                            # (R, kc) bf16
        y = None
        for h in range(n_heads):
            q = mm(xb, wq_ref[l, h]) + bq_ref[l, h]       # (T, kc) f32
            k = mm(xb, wk_ref[l, h]) + bk_ref[l, h]
            v = mm(xb, wv_ref[l, h]) + bv_ref[l, h]
            qs = (q * scale).astype(bf16)
            scores = mm(qs, k.astype(bf16)) + attn_bias   # (T, T) f32
            # relative key logits on the MXU, scattered onto diagonals
            rel_logits = mm(qs, rk_l)                     # (T, R) f32
            for r in range(R):
                d = r - rel_span
                scores = scores + jnp.where(
                    rel_pos == d, rel_logits[:, r:r + 1], 0.0)
            scores = scores - jnp.max(scores, axis=-1, keepdims=True)
            e = jnp.exp(scores)
            p = e * pl.reciprocal(jnp.sum(e, axis=-1, keepdims=True), approx=True)
            out_h = mm(p.astype(bf16), v.astype(bf16), contract=(1, 0))   # (T, kc)
            # absolute -> relative band extraction, then (T,R)x(R,kc) on the MXU
            p_band = jnp.concatenate(
                [jnp.sum(jnp.where(rel_pos == (r - rel_span), p, 0.0),
                         axis=-1, keepdims=True) for r in range(R)], axis=-1)
            out_h = out_h + mm(p_band.astype(bf16), rv_l, contract=(1, 0))
            contrib = mm(out_h.astype(bf16), wo_ref[l, h])                # (T, H)
            y = contrib if y is None else y + contrib
        y = y + bo_ref[l]
        x = _layernorm(x + y, g1_ref[l], be1_ref[l])

        # ---------------- FFN: conv1d(K) -> ReLU -> conv1d(K) ----------------
        h1 = conv1d_same(xp1_ref, x * mask_c, w1_ref, l, cb1_ref[l])      # (T, F)
        h1 = jnp.maximum(h1, 0.0)
        h2 = conv1d_same(xp2_ref, h1 * mask_c, w2_ref, l, cb2_ref[l])     # (T, H)
        x = _layernorm(x + h2 * mask_c, g2_ref[l], be2_ref[l])

    # ---- final 1x1 proj, lane-dense padded output ----
    x = x * mask_c
    stats = mm(x.astype(bf16), projw_ref[...]) + projb_ref[...]
    stats = stats * mask_c
    stats_ref[0] = stats.astype(stats_ref.dtype)


# --------------------------------- wrapper ------------------------------------

def _full_spec(shape):
    n = len(shape)
    return pl.BlockSpec(tuple(shape), lambda b, n=n: (0,) * n)


def _batched_spec(shape):
    n = len(shape)
    return pl.BlockSpec((1,) + tuple(shape[1:]),
                        lambda b, n=n: (b,) + (0,) * (n - 1))


def text_encoder_forward(params, cfg, phone, pitch, lengths, skip_head=None):
    B, T, _ = phone.shape
    H = cfg["hidden_channels"]
    F_ = cfg["filter_channels"]
    L = cfg["n_layers"]
    nh = cfg["n_heads"]
    kc = H // nh
    K = cfg["kernel_size"]
    out_ch = cfg["out_channels"]
    W = cfg["window_size"]
    assert H % nh == 0
    assert K % 2 == 1, "SAME-padding FFN assumes odd kernel_size (matches RVC)"

    bf16, f32 = jnp.bfloat16, jnp.float32
    Dmax = min(W, T - 1)                 # effective relative window
    R = 2 * Dmax + 1
    OUTP = ((2 * out_ch + 127) // 128) * 128   # lane-dense padded output width

    # ------------------ plain-JAX glue ------------------
    if pitch is None:
        pitch_emb = jnp.zeros((B, T, H), f32)
    else:
        pitch_emb = jnp.take(params["emb_pitch"], pitch, axis=0)       # (B, T, H)
    mask = (jnp.arange(T)[None, :] < lengths[:, None]).astype(f32)
    mask_col = mask[:, :, None]                                        # (B, T, 1)
    mask_row = mask[:, None, :]                                        # (B, 1, T)

    # only the usable band of the shared relative embeddings, bf16
    rk = params["emb_rel_k"][:, W - Dmax:W + Dmax + 1, :].astype(bf16)  # (L, R, kc)
    rv = params["emb_rel_v"][:, W - Dmax:W + Dmax + 1, :].astype(bf16)

    # per-head weight layout so the kernel never slices activation lanes
    wq = params["wq"].reshape(L, nh, kc, H).astype(bf16)
    wk = params["wk"].reshape(L, nh, kc, H).astype(bf16)
    wv = params["wv"].reshape(L, nh, kc, H).astype(bf16)
    bq = params["bq"].reshape(L, nh, 1, kc)
    bk = params["bk"].reshape(L, nh, 1, kc)
    bv = params["bv"].reshape(L, nh, 1, kc)
    wo = jnp.transpose(params["wo"].reshape(L, H, nh, kc), (0, 2, 1, 3)).astype(bf16)

    projw = jnp.zeros((OUTP, H), f32).at[:2 * out_ch].set(params["proj_w"]).astype(bf16)
    projb = jnp.zeros((1, OUTP), f32).at[:, :2 * out_ch].set(params["proj_b"])

    inputs = [
        phone, pitch_emb, mask_col, mask_row,
        params["emb_w"].astype(bf16), params["emb_b"],
        wq, bq, wk, bk, wv, bv, wo, params["bo"],
        rk, rv,
        params["g1"], params["be1"],
        params["w1"].astype(bf16), params["cb1"],
        params["w2"].astype(bf16), params["cb2"],
        params["g2"], params["be2"],
        projw, projb,
    ]
    in_specs = [_batched_spec(inputs[0].shape),
                _batched_spec(inputs[1].shape),
                _batched_spec(inputs[2].shape),
                _batched_spec(inputs[3].shape)] + \
               [_full_spec(a.shape) for a in inputs[4:]]

    kernel = lambda *refs: text_encoder_kernel(
        *refs, n_layers=L, n_heads=nh, hidden=H,
        filter_channels=F_, kernel_size=K, rel_span=Dmax)

    stats = pl.pallas_call(
        kernel,
        out_shape=jax.ShapeDtypeStruct((B, T, OUTP), jnp.float32),
        grid_spec=pltpu.PrefetchScalarGridSpec(
            num_scalar_prefetch=0,
            grid=(B,),
            in_specs=in_specs,
            out_specs=_batched_spec((B, T, OUTP)),
            scratch_shapes=[pltpu.VMEM((T + K - 1, H), jnp.float32),
                            pltpu.VMEM((T + K - 1, F_), jnp.float32)],
        ),
        compiler_params=pltpu.CompilerParams(
            dimension_semantics=("parallel",),
            vmem_limit_bytes=32 * 1024 * 1024),
    )(*inputs)                                                     # (B, T, OUTP)

    stats = stats[:, :, :2 * out_ch]                               # drop lane pad
    x_mask = mask_row                                              # (B, 1, T)
    if skip_head is not None:
        head = int(skip_head)
        stats = stats[:, head:, :]
        x_mask = x_mask[:, :, head:]

    stats_t = jnp.transpose(stats, (0, 2, 1))                      # (B, 2*out, T')
    m = stats_t[:, :out_ch, :]
    logs = stats_t[:, out_ch:, :]
    return m, logs, x_mask


# ------------------------------ parameter init --------------------------------

def init_params(key, cfg):
    H = cfg["hidden_channels"]
    Cin = cfg["in_channels"]
    F_ = cfg["filter_channels"]
    L = cfg["n_layers"]
    nh = cfg["n_heads"]
    kc = H // nh
    K = cfg["kernel_size"]
    out_ch = cfg["out_channels"]
    W = cfg["window_size"]

    keys = iter(jax.random.split(key, 64))
    nrm = lambda shape, s: jax.random.normal(next(keys), shape, jnp.float32) * s

    p = {
        "emb_w": nrm((H, Cin), 1.0 / math.sqrt(Cin)),
        "emb_b": nrm((1, H), 0.01),
        "wq": nrm((L, H, H), 0.05), "bq": nrm((L, 1, H), 0.01),
        "wk": nrm((L, H, H), 0.05), "bk": nrm((L, 1, H), 0.01),
        "wv": nrm((L, H, H), 0.05), "bv": nrm((L, 1, H), 0.01),
        "wo": nrm((L, H, H), 0.05), "bo": nrm((L, 1, H), 0.01),
        "emb_rel_k": nrm((L, 2 * W + 1, kc), kc ** -0.5),
        "emb_rel_v": nrm((L, 2 * W + 1, kc), kc ** -0.5),
        "g1": jnp.ones((L, 1, H), jnp.float32),
        "be1": jnp.zeros((L, 1, H), jnp.float32),
        # conv taps stacked on axis 1: w1[l, tap] == torch conv_1.weight[:, :, tap]
        "w1": nrm((L, K, F_, H), 0.05), "cb1": nrm((L, 1, F_), 0.01),
        "w2": nrm((L, K, H, F_), 0.05), "cb2": nrm((L, 1, H), 0.01),
        "g2": jnp.ones((L, 1, H), jnp.float32),
        "be2": jnp.zeros((L, 1, H), jnp.float32),
        "proj_w": nrm((2 * out_ch, H), 0.05),
        "proj_b": nrm((1, 2 * out_ch), 0.01),
    }
    if cfg.get("f0", True):
        p["emb_pitch"] = nrm((256, H), 1.0)            # nn.Embedding ~ N(0,1)
    return p


# ----------------------------------- main --------------------------------------

if __name__ == "__main__":
    cfg = dict(
        in_channels=16,
        out_channels=8,
        hidden_channels=32,
        filter_channels=64,
        n_heads=2,
        n_layers=2,
        kernel_size=3,
        p_dropout=0.0,          # TODO(synk): dropout is identity (inference/eval)
        window_size=10,
        f0=False,               # SynthesizerTrnMs256NSFsid_nono: enc_p has f0=False
    )
    B, T = 2, 8

    key = jax.random.PRNGKey(0)
    kp, kphone = jax.random.split(key, 2)
    params = init_params(kp, cfg)

    phone = jax.random.normal(kphone, (B, T, cfg["in_channels"]), jnp.float32)
    lengths = jnp.array([T, 5], jnp.int32)

    m, logs, x_mask = text_encoder_forward(params, cfg, phone, None, lengths,
                                           skip_head=None)
    jax.block_until_ready((m, logs, x_mask))

    assert m.shape == (B, cfg["out_channels"], T)
    assert logs.shape == (B, cfg["out_channels"], T)
    assert x_mask.shape == (B, 1, T)
    assert bool(jnp.all(jnp.isfinite(m))) and bool(jnp.all(jnp.isfinite(logs)))
    print("KERNEL_OK")
</pallas_src>

<mosaic_0001>
module attributes {stable_mosaic.version = 11 : i64} {
  func.func @_lambda_(%arg0: i32, %arg1: memref<1x8x16xf32, #tpu.memory_space<vmem>>, %arg2: memref<1x8x32xf32, #tpu.memory_space<vmem>>, %arg3: memref<1x8x1xf32, #tpu.memory_space<vmem>>, %arg4: memref<1x1x8xf32, #tpu.memory_space<vmem>>, %arg5: memref<32x16xbf16, #tpu.memory_space<vmem>>, %arg6: memref<1x32xf32, #tpu.memory_space<vmem>>, %arg7: memref<2x2x16x32xbf16, #tpu.memory_space<vmem>>, %arg8: memref<2x2x1x16xf32, #tpu.memory_space<vmem>>, %arg9: memref<2x2x16x32xbf16, #tpu.memory_space<vmem>>, %arg10: memref<2x2x1x16xf32, #tpu.memory_space<vmem>>, %arg11: memref<2x2x16x32xbf16, #tpu.memory_space<vmem>>, %arg12: memref<2x2x1x16xf32, #tpu.memory_space<vmem>>, %arg13: memref<2x2x32x16xbf16, #tpu.memory_space<vmem>>, %arg14: memref<2x1x32xf32, #tpu.memory_space<vmem>>, %arg15: memref<2x15x16xbf16, #tpu.memory_space<vmem>>, %arg16: memref<2x15x16xbf16, #tpu.memory_space<vmem>>, %arg17: memref<2x1x32xf32, #tpu.memory_space<vmem>>, %arg18: memref<2x1x32xf32, #tpu.memory_space<vmem>>, %arg19: memref<2x3x64x32xbf16, #tpu.memory_space<vmem>>, %arg20: memref<2x1x64xf32, #tpu.memory_space<vmem>>, %arg21: memref<2x3x32x64xbf16, #tpu.memory_space<vmem>>, %arg22: memref<2x1x32xf32, #tpu.memory_space<vmem>>, %arg23: memref<2x1x32xf32, #tpu.memory_space<vmem>>, %arg24: memref<2x1x32xf32, #tpu.memory_space<vmem>>, %arg25: memref<128x32xbf16, #tpu.memory_space<vmem>>, %arg26: memref<1x128xf32, #tpu.memory_space<vmem>>, %arg27: memref<1x8x128xf32, #tpu.memory_space<vmem>>, %arg28: memref<10x32xf32, #tpu.memory_space<vmem>>, %arg29: memref<10x64xf32, #tpu.memory_space<vmem>>) attributes {dimension_semantics = [#tpu.dimension_semantics<parallel>], iteration_bounds = array<i64: 2>, scalar_prefetch = 0 : i64, scratch_operands = 2 : i64, tpu.core_type = #tpu.core_type<tc>, window_params = [{transform_indices = @transform_0, window_bounds = array<i64: 1, 8, 16>}, {transform_indices = @transform_1, window_bounds = array<i64: 1, 8, 32>}, {transform_indices = @transform_2, window_bounds = array<i64: 1, 8, 1>}, {transform_indices = @transform_3, window_bounds = array<i64: 1, 1, 8>}, {pipeline_mode = #tpu.pipeline_mode<synchronous>, transform_indices = @transform_4, window_bounds = array<i64: 32, 16>}, {pipeline_mode = #tpu.pipeline_mode<synchronous>, transform_indices = @transform_5, window_bounds = array<i64: 1, 32>}, {pipeline_mode = #tpu.pipeline_mode<synchronous>, transform_indices = @transform_6, window_bounds = array<i64: 2, 2, 16, 32>}, {pipeline_mode = #tpu.pipeline_mode<synchronous>, transform_indices = @transform_7, window_bounds = array<i64: 2, 2, 1, 16>}, {pipeline_mode = #tpu.pipeline_mode<synchronous>, transform_indices = @transform_8, window_bounds = array<i64: 2, 2, 16, 32>}, {pipeline_mode = #tpu.pipeline_mode<synchronous>, transform_indices = @transform_9, window_bounds = array<i64: 2, 2, 1, 16>}, {pipeline_mode = #tpu.pipeline_mode<synchronous>, transform_indices = @transform_10, window_bounds = array<i64: 2, 2, 16, 32>}, {pipeline_mode = #tpu.pipeline_mode<synchronous>, transform_indices = @transform_11, window_bounds = array<i64: 2, 2, 1, 16>}, {pipeline_mode = #tpu.pipeline_mode<synchronous>, transform_indices = @transform_12, window_bounds = array<i64: 2, 2, 32, 16>}, {pipeline_mode = #tpu.pipeline_mode<synchronous>, transform_indices = @transform_13, window_bounds = array<i64: 2, 1, 32>}, {pipeline_mode = #tpu.pipeline_mode<synchronous>, transform_indices = @transform_14, window_bounds = array<i64: 2, 15, 16>}, {pipeline_mode = #tpu.pipeline_mode<synchronous>, transform_indices = @transform_15, window_bounds = array<i64: 2, 15, 16>}, {pipeline_mode = #tpu.pipeline_mode<synchronous>, transform_indices = @transform_16, window_bounds = array<i64: 2, 1, 32>}, {pipeline_mode = #tpu.pipeline_mode<synchronous>, transform_indices = @transform_17, window_bounds = array<i64: 2, 1, 32>}, {pipeline_mode = #tpu.pipeline_mode<synchronous>, transform_indices = @transform_18, window_bounds = array<i64: 2, 3, 64, 32>}, {pipeline_mode = #tpu.pipeline_mode<synchronous>, transform_indices = @transform_19, window_bounds = array<i64: 2, 1, 64>}, {pipeline_mode = #tpu.pipeline_mode<synchronous>, transform_indices = @transform_20, window_bounds = array<i64: 2, 3, 32, 64>}, {pipeline_mode = #tpu.pipeline_mode<synchronous>, transform_indices = @transform_21, window_bounds = array<i64: 2, 1, 32>}, {pipeline_mode = #tpu.pipeline_mode<synchronous>, transform_indices = @transform_22, window_bounds = array<i64: 2, 1, 32>}, {pipeline_mode = #tpu.pipeline_mode<synchronous>, transform_indices = @transform_23, window_bounds = array<i64: 2, 1, 32>}, {pipeline_mode = #tpu.pipeline_mode<synchronous>, transform_indices = @transform_24, window_bounds = array<i64: 128, 32>}, {pipeline_mode = #tpu.pipeline_mode<synchronous>, transform_indices = @transform_25, window_bounds = array<i64: 1, 128>}, {transform_indices = @transform_26, window_bounds = array<i64: 1, 8, 128>}]} {
    %cst = arith.constant 0.000000e+00 : f32
    %0 = vector.broadcast %cst : f32 to vector<10x32xf32>
    %c0 = arith.constant 0 : index
    %c0_0 = arith.constant 0 : index
    %1 = vector.load %arg28[%c0, %c0_0] : memref<10x32xf32, #tpu.memory_space<vmem>>, vector<10x32xf32>
    tpu.vector_store %arg28[%c0, %c0_0], %0 {strides = array<i32>} : memref<10x32xf32, #tpu.memory_space<vmem>>, vector<10x32xf32>,
    %cst_1 = arith.constant 0.000000e+00 : f32
    %2 = vector.broadcast %cst_1 : f32 to vector<10x64xf32>
    %c0_2 = arith.constant 0 : index
    %c0_3 = arith.constant 0 : index
    %3 = vector.load %arg29[%c0_2, %c0_3] : memref<10x64xf32, #tpu.memory_space<vmem>>, vector<10x64xf32>
    tpu.vector_store %arg29[%c0_2, %c0_3], %2 {strides = array<i32>} : memref<10x64xf32, #tpu.memory_space<vmem>>, vector<10x64xf32>,
    %c0_4 = arith.constant 0 : index
    %c0_5 = arith.constant 0 : index
    %c0_6 = arith.constant 0 : index
    %4 = vector.load %arg3[%c0_4, %c0_5, %c0_6] : memref<1x8x1xf32, #tpu.memory_space<vmem>>, vector<1x8x1xf32>
    %5 = vector.shape_cast %4 : vector<1x8x1xf32> to vector<8x1xf32>
    %c0_7 = arith.constant 0 : index
    %c0_8 = arith.constant 0 : index
    %c0_9 = arith.constant 0 : index
    %6 = vector.load %arg4[%c0_7, %c0_8, %c0_9] : memref<1x1x8xf32, #tpu.memory_space<vmem>>, vector<1x1x8xf32>
    %7 = vector.shape_cast %6 : vector<1x1x8xf32> to vector<1x8xf32>
    %8 = vector.broadcast %5 : vector<8x1xf32> to vector<8x8xf32>
    %9 = vector.broadcast %7 : vector<1x8xf32> to vector<8x8xf32>
    %10 = arith.mulf %8, %9 : vector<8x8xf32>
    %cst_10 = arith.constant 1.000000e+00 : f32
    %11 = vector.broadcast %cst_10 : f32 to vector<8x8xf32>
    %12 = arith.subf %10, %11 : vector<8x8xf32>
    %cst_11 = arith.constant 1.000000e+04 : f32
    %13 = vector.broadcast %cst_11 : f32 to vector<8x8xf32>
    %14 = arith.mulf %12, %13 : vector<8x8xf32>
    %15 = tpu.iota {dimensions = array<i32: 0>} : vector<8x8xi32>
    %16 = tpu.iota {dimensions = array<i32: 1>} : vector<8x8xi32>
    %17 = arith.subi %16, %15 : vector<8x8xi32>
    %c0_12 = arith.constant 0 : index
    %c0_13 = arith.constant 0 : index
    %c0_14 = arith.constant 0 : index
    %18 = vector.load %arg1[%c0_12, %c0_13, %c0_14] : memref<1x8x16xf32, #tpu.memory_space<vmem>>, vector<1x8x16xf32>
    %19 = vector.shape_cast %18 : vector<1x8x16xf32> to vector<8x16xf32>
    %20 = arith.truncf %19 : vector<8x16xf32> to vector<8x16xbf16>
    %c0_15 = arith.constant 0 : index
    %c0_16 = arith.constant 0 : index
    %21 = vector.load %arg5[%c0_15, %c0_16] : memref<32x16xbf16, #tpu.memory_space<vmem>>, vector<32x16xbf16>
    %cst_17 = arith.constant dense<0.000000e+00> : vector<8x32xf32>
    %22 = tpu.matmul %20, %21, %cst_17 {dimension_numbers = #tpu.dot_dimension_numbers<[1], [1], [0], [0], [0, 0, 1, 0], [], []>} : vector<8x16xbf16>, vector<32x16xbf16>, vector<8x32xf32> -> vector<8x32xf32>
    %c0_18 = arith.constant 0 : index
    %c0_19 = arith.constant 0 : index
    %23 = vector.load %arg6[%c0_18, %c0_19] : memref<1x32xf32, #tpu.memory_space<vmem>>, vector<1x32xf32>
    %24 = vector.broadcast %23 : vector<1x32xf32> to vector<8x32xf32>
    %25 = arith.addf %22, %24 : vector<8x32xf32>
    %c0_20 = arith.constant 0 : index
    %c0_21 = arith.constant 0 : index
    %c0_22 = arith.constant 0 : index
    %26 = vector.load %arg2[%c0_20, %c0_21, %c0_22] : memref<1x8x32xf32, #tpu.memory_space<vmem>>, vector<1x8x32xf32>
    %27 = vector.shape_cast %26 : vector<1x8x32xf32> to vector<8x32xf32>
    %28 = arith.addf %25, %27 : vector<8x32xf32>
    %cst_23 = arith.constant 5.65685415 : f32
    %29 = vector.broadcast %cst_23 : f32 to vector<8x32xf32>
    %30 = arith.mulf %28, %29 : vector<8x32xf32>
    %cst_24 = arith.constant 0.000000e+00 : f32
    %31 = vector.broadcast %cst_24 : f32 to vector<8x32xf32>
    %32 = arith.cmpf oge, %30, %31 : vector<8x32xf32>
    %cst_25 = arith.constant 1.000000e-01 : f32
    %33 = vector.broadcast %cst_25 : f32 to vector<8x32xf32>
    %34 = arith.mulf %33, %30 : vector<8x32xf32>
    %35 = arith.select %32, %30, %34 : vector<8x32xi1>, vector<8x32xf32>
    %36 = vector.broadcast %5 : vector<8x1xf32> to vector<8x32xf32>
    %37 = arith.mulf %35, %36 : vector<8x32xf32>
    %38 = arith.truncf %37 : vector<8x32xf32> to vector<8x32xbf16>
    %c0_26 = arith.constant 0 : index
    %c0_27 = arith.constant 0 : index
    %c0_28 = arith.constant 0 : index
    %39 = vector.load %arg15[%c0_26, %c0_27, %c0_28] : memref<2x15x16xbf16, #tpu.memory_space<vmem>>, vector<1x15x16xbf16>
    %40 = vector.shape_cast %39 : vector<1x15x16xbf16> to vector<15x16xbf16>
    %c0_29 = arith.constant 0 : index
    %c0_30 = arith.constant 0 : index
    %c0_31 = arith.constant 0 : index
    %41 = vector.load %arg16[%c0_29, %c0_30, %c0_31] : memref<2x15x16xbf16, #tpu.memory_space<vmem>>, vector<1x15x16xbf16>
    %42 = vector.shape_cast %41 : vector<1x15x16xbf16> to vector<15x16xbf16>
    %c0_32 = arith.constant 0 : index
    %c0_33 = arith.constant 0 : index
    %c0_34 = arith.constant 0 : index
    %c0_35 = arith.constant 0 : index
    %43 = vector.load %arg7[%c0_32, %c0_33, %c0_34, %c0_35] : memref<2x2x16x32xbf16, #tpu.memory_space<vmem>>, vector<1x1x16x32xbf16>
    %44 = vector.shape_cast %43 : vector<1x1x16x32xbf16> to vector<16x32xbf16>
    %cst_36 = arith.constant dense<0.000000e+00> : vector<8x16xf32>
    %45 = tpu.matmul %38, %44, %cst_36 {dimension_numbers = #tpu.dot_dimension_numbers<[1], [1], [0], [0], [0, 0, 1, 0], [], []>} : vector<8x32xbf16>, vector<16x32xbf16>, vector<8x16xf32> -> vector<8x16xf32>
    %c0_37 = arith.constant 0 : index
    %c0_38 = arith.constant 0 : index
    %c0_39 = arith.constant 0 : index
    %c0_40 = arith.constant 0 : index
    %46 = vector.load %arg8[%c0_37, %c0_38, %c0_39, %c0_40] : memref<2x2x1x16xf32, #tpu.memory_space<vmem>>, vector<1x1x1x16xf32>
    %47 = vector.shape_cast %46 : vector<1x1x1x16xf32> to vector<1x16xf32>
    %48 = vector.broadcast %47 : vector<1x16xf32> to vector<8x16xf32>
    %49 = arith.addf %45, %48 : vector<8x16xf32>
    %c0_41 = arith.constant 0 : index
    %c0_42 = arith.constant 0 : index
    %c0_43 = arith.constant 0 : index
    %c0_44 = arith.constant 0 : index
    %50 = vector.load %arg9[%c0_41, %c0_42, %c0_43, %c0_44] : memref<2x2x16x32xbf16, #tpu.memory_space<vmem>>, vector<1x1x16x32xbf16>
    %51 = vector.shape_cast %50 : vector<1x1x16x32xbf16> to vector<16x32xbf16>
    %cst_45 = arith.constant dense<0.000000e+00> : vector<8x16xf32>
    %52 = tpu.matmul %38, %51, %cst_45 {dimension_numbers = #tpu.dot_dimension_numbers<[1], [1], [0], [0], [0, 0, 1, 0], [], []>} : vector<8x32xbf16>, vector<16x32xbf16>, vector<8x16xf32> -> vector<8x16xf32>
    %c0_46 = arith.constant 0 : index
    %c0_47 = arith.constant 0 : index
    %c0_48 = arith.constant 0 : index
    %c0_49 = arith.constant 0 : index
    %53 = vector.load %arg10[%c0_46, %c0_47, %c0_48, %c0_49] : memref<2x2x1x16xf32, #tpu.memory_space<vmem>>, vector<1x1x1x16xf32>
    %54 = vector.shape_cast %53 : vector<1x1x1x16xf32> to vector<1x16xf32>
    %55 = vector.broadcast %54 : vector<1x16xf32> to vector<8x16xf32>
    %56 = arith.addf %52, %55 : vector<8x16xf32>
    %c0_50 = arith.constant 0 : index
    %c0_51 = arith.constant 0 : index
    %c0_52 = arith.constant 0 : index
    %c0_53 = arith.constant 0 : index
    %57 = vector.load %arg11[%c0_50, %c0_51, %c0_52, %c0_53] : memref<2x2x16x32xbf16, #tpu.memory_space<vmem>>, vector<1x1x16x32xbf16>
    %58 = vector.shape_cast %57 : vector<1x1x16x32xbf16> to vector<16x32xbf16>
    %cst_54 = arith.constant dense<0.000000e+00> : vector<8x16xf32>
    %59 = tpu.matmul %38, %58, %cst_54 {dimension_numbers = #tpu.dot_dimension_numbers<[1], [1], [0], [0], [0, 0, 1, 0], [], []>} : vector<8x32xbf16>, vector<16x32xbf16>, vector<8x16xf32> -> vector<8x16xf32>
    %c0_55 = arith.constant 0 : index
    %c0_56 = arith.constant 0 : index
    %c0_57 = arith.constant 0 : index
    %c0_58 = arith.constant 0 : index
    %60 = vector.load %arg12[%c0_55, %c0_56, %c0_57, %c0_58] : memref<2x2x1x16xf32, #tpu.memory_space<vmem>>, vector<1x1x1x16xf32>
    %61 = vector.shape_cast %60 : vector<1x1x1x16xf32> to vector<1x16xf32>
    %62 = vector.broadcast %61 : vector<1x16xf32> to vector<8x16xf32>
    %63 = arith.addf %59, %62 : vector<8x16xf32>
    %cst_59 = arith.constant 2.500000e-01 : f32
    %64 = vector.broadcast %cst_59 : f32 to vector<8x16xf32>
    %65 = arith.mulf %49, %64 : vector<8x16xf32>
    %66 = arith.truncf %65 : vector<8x16xf32> to vector<8x16xbf16>
    %67 = arith.truncf %56 : vector<8x16xf32> to vector<8x16xbf16>
    %cst_60 = arith.constant dense<0.000000e+00> : vector<8x8xf32>
    %68 = tpu.matmul %66, %67, %cst_60 {dimension_numbers = #tpu.dot_dimension_numbers<[1], [1], [0], [0], [0, 0, 1, 0], [], []>} : vector<8x16xbf16>, vector<8x16xbf16>, vector<8x8xf32> -> vector<8x8xf32>
    %69 = arith.addf %68, %14 : vector<8x8xf32>
    %cst_61 = arith.constant dense<0.000000e+00> : vector<8x15xf32>
    %70 = tpu.matmul %66, %40, %cst_61 {dimension_numbers = #tpu.dot_dimension_numbers<[1], [1], [0], [0], [0, 0, 1, 0], [], []>} : vector<8x16xbf16>, vector<15x16xbf16>, vector<8x15xf32> -> vector<8x15xf32>
    %c-7_i32 = arith.constant -7 : i32
    %71 = vector.broadcast %c-7_i32 : i32 to vector<8x8xi32>
    %72 = arith.cmpi eq, %17, %71 : vector<8x8xi32>
    %73 = vector.extract_strided_slice %70 {offsets = [0, 0], sizes = [8, 1], strides = [1, 1]} : vector<8x15xf32> to vector<8x1xf32>
    %cst_62 = arith.constant 0.000000e+00 : f32
    %74 = vector.shape_cast %73 : vector<8x1xf32> to vector<8x1xf32>
    %75 = vector.broadcast %74 : vector<8x1xf32> to vector<8x8xf32>
    %76 = vector.broadcast %cst_62 : f32 to vector<8x8xf32>
    %77 = arith.select %72, %75, %76 : vector<8x8xi1>, vector<8x8xf32>
    %78 = arith.addf %69, %77 : vector<8x8xf32>
    %c-6_i32 = arith.constant -6 : i32
    %79 = vector.broadcast %c-6_i32 : i32 to vector<8x8xi32>
    %80 = arith.cmpi eq, %17, %79 : vector<8x8xi32>
    %81 = vector.extract_strided_slice %70 {offsets = [0, 1], sizes = [8, 1], strides = [1, 1]} : vector<8x15xf32> to vector<8x1xf32>
    %cst_63 = arith.constant 0.000000e+00 : f32
    %82 = vector.shape_cast %81 : vector<8x1xf32> to vector<8x1xf32>
    %83 = vector.broadcast %82 : vector<8x1xf32> to vector<8x8xf32>
    %84 = vector.broadcast %cst_63 : f32 to vector<8x8xf32>
    %85 = arith.select %80, %83, %84 : vector<8x8xi1>, vector<8x8xf32>
    %86 = arith.addf %78, %85 : vector<8x8xf32>
    %c-5_i32 = arith.constant -5 : i32
    %87 = vector.broadcast %c-5_i32 : i32 to vector<8x8xi32>
    %88 = arith.cmpi eq, %17, %87 : vector<8x8xi32>
    %89 = vector.extract_strided_slice %70 {offsets = [0, 2], sizes = [8, 1], strides = [1, 1]} : vector<8x15xf32> to vector<8x1xf32>
    %cst_64 = arith.constant 0.000000e+00 : f32
    %90 = vector.shape_cast %89 : vector<8x1xf32> to vector<8x1xf32>
    %91 = vector.broadcast %90 : vector<8x1xf32> to vector<8x8xf32>
    %92 = vector.broadcast %cst_64 : f32 to vector<8x8xf32>
    %93 = arith.select %88, %91, %92 : vector<8x8xi1>, vector<8x8xf32>
    %94 = arith.addf %86, %93 : vector<8x8xf32>
    %c-4_i32 = arith.constant -4 : i32
    %95 = vector.broadcast %c-4_i32 : i32 to vector<8x8xi32>
    %96 = arith.cmpi eq, %17, %95 : vector<8x8xi32>
    %97 = vector.extract_strided_slice %70 {offsets = [0, 3], sizes = [8, 1], strides = [1, 1]} : vector<8x15xf32> to vector<8x1xf32>
    %cst_65 = arith.constant 0.000000e+00 : f32
    %98 = vector.shape_cast %97 : vector<8x1xf32> to vector<8x1xf32>
    %99 = vector.broadcast %98 : vector<8x1xf32> to vector<8x8xf32>
    %100 = vector.broadcast %cst_65 : f32 to vector<8x8xf32>
    %101 = arith.select %96, %99, %100 : vector<8x8xi1>, vector<8x8xf32>
    %102 = arith.addf %94, %101 : vector<8x8xf32>
    %c-3_i32 = arith.constant -3 : i32
    %103 = vector.broadcast %c-3_i32 : i32 to vector<8x8xi32>
    %104 = arith.cmpi eq, %17, %103 : vector<8x8xi32>
    %105 = vector.extract_strided_slice %70 {offsets = [0, 4], sizes = [8, 1], strides = [1, 1]} : vector<8x15xf32> to vector<8x1xf32>
    %cst_66 = arith.constant 0.000000e+00 : f32
    %106 = vector.shape_cast %105 : vector<8x1xf32> to vector<8x1xf32>
    %107 = vector.broadcast %106 : vector<8x1xf32> to vector<8x8xf32>
    %108 = vector.broadcast %cst_66 : f32 to vector<8x8xf32>
    %109 = arith.select %104, %107, %108 : vector<8x8xi1>, vector<8x8xf32>
    %110 = arith.addf %102, %109 : vector<8x8xf32>
    %c-2_i32 = arith.constant -2 : i32
    %111 = vector.broadcast %c-2_i32 : i32 to vector<8x8xi32>
    %112 = arith.cmpi eq, %17, %111 : vector<8x8xi32>
    %113 = vector.extract_strided_slice %70 {offsets = [0, 5], sizes = [8, 1], strides = [1, 1]} : vector<8x15xf32> to vector<8x1xf32>
    %cst_67 = arith.constant 0.000000e+00 : f32
    %114 = vector.shape_cast %113 : vector<8x1xf32> to vector<8x1xf32>
    %115 = vector.broadcast %114 : vector<8x1xf32> to vector<8x8xf32>
    %116 = vector.broadcast %cst_67 : f32 to vector<8x8xf32>
    %117 = arith.select %112, %115, %116 : vector<8x8xi1>, vector<8x8xf32>
    %118 = arith.addf %110, %117 : vector<8x8xf32>
    %c-1_i32 = arith.constant -1 : i32
    %119 = vector.broadcast %c-1_i32 : i32 to vector<8x8xi32>
    %120 = arith.cmpi eq, %17, %119 : vector<8x8xi32>
    %121 = vector.extract_strided_slice %70 {offsets = [0, 6], sizes = [8, 1], strides = [1, 1]} : vector<8x15xf32> to vector<8x1xf32>
    %cst_68 = arith.constant 0.000000e+00 : f32
    %122 = vector.shape_cast %121 : vector<8x1xf32> to vector<8x1xf32>
    %123 = vector.broadcast %122 : vector<8x1xf32> to vector<8x8xf32>
    %124 = vector.broadcast %cst_68 : f32 to vector<8x8xf32>
    %125 = arith.select %120, %123, %124 : vector<8x8xi1>, vector<8x8xf32>
    %126 = arith.addf %118, %125 : vector<8x8xf32>
    %c0_i32 = arith.constant 0 : i32
    %127 = vector.broadcast %c0_i32 : i32 to vector<8x8xi32>
    %128 = arith.cmpi eq, %17, %127 : vector<8x8xi32>
    %129 = vector.extract_strided_slice %70 {offsets = [0, 7], sizes = [8, 1], strides = [1, 1]} : vector<8x15xf32> to vector<8x1xf32>
    %cst_69 = arith.constant 0.000000e+00 : f32
    %130 = vector.shape_cast %129 : vector<8x1xf32> to vector<8x1xf32>
    %131 = vector.broadcast %130 : vector<8x1xf32> to vector<8x8xf32>
    %132 = vector.broadcast %cst_69 : f32 to vector<8x8xf32>
    %133 = arith.select %128, %131, %132 : vector<8x8xi1>, vector<8x8xf32>
    %134 = arith.addf %126, %133 : vector<8x8xf32>
    %c1_i32 = arith.constant 1 : i32
    %135 = vector.broadcast %c1_i32 : i32 to vector<8x8xi32>
    %136 = arith.cmpi eq, %17, %135 : vector<8x8xi32>
    %137 = vector.extract_strided_slice %70 {offsets = [0, 8], sizes = [8, 1], strides = [1, 1]} : vector<8x15xf32> to vector<8x1xf32>
    %cst_70 = arith.constant 0.000000e+00 : f32
    %138 = vector.shape_cast %137 : vector<8x1xf32> to vector<8x1xf32>
    %139 = vector.broadcast %138 : vector<8x1xf32> to vector<8x8xf32>
    %140 = vector.broadcast %cst_70 : f32 to vector<8x8xf32>
    %141 = arith.select %136, %139, %140 : vector<8x8xi1>, vector<8x8xf32>
    %142 = arith.addf %134, %141 : vector<8x8xf32>
    %c2_i32 = arith.constant 2 : i32
    %143 = vector.broadcast %c2_i32 : i32 to vector<8x8xi32>
    %144 = arith.cmpi eq, %17, %143 : vector<8x8xi32>
    %145 = vector.extract_strided_slice %70 {offsets = [0, 9], sizes = [8, 1], strides = [1, 1]} : vector<8x15xf32> to vector<8x1xf32>
    %cst_71 = arith.constant 0.000000e+00 : f32
    %146 = vector.shape_cast %145 : vector<8x1xf32> to vector<8x1xf32>
    %147 = vector.broadcast %146 : vector<8x1xf32> to vector<8x8xf32>
    %148 = vector.broadcast %cst_71 : f32 to vector<8x8xf32>
    %149 = arith.select %144, %147, %148 : vector<8x8xi1>, vector<8x8xf32>
    %150 = arith.addf %142, %149 : vector<8x8xf32>
    %c3_i32 = arith.constant 3 : i32
    %151 = vector.broadcast %c3_i32 : i32 to vector<8x8xi32>
    %152 = arith.cmpi eq, %17, %151 : vector<8x8xi32>
    %153 = vector.extract_strided_slice %70 {offsets = [0, 10], sizes = [8, 1], strides = [1, 1]} : vector<8x15xf32> to vector<8x1xf32>
    %cst_72 = arith.constant 0.000000e+00 : f32
    %154 = vector.shape_cast %153 : vector<8x1xf32> to vector<8x1xf32>
    %155 = vector.broadcast %154 : vector<8x1xf32> to vector<8x8xf32>
    %156 = vector.broadcast %cst_72 : f32 to vector<8x8xf32>
    %157 = arith.select %152, %155, %156 : vector<8x8xi1>, vector<8x8xf32>
    %158 = arith.addf %150, %157 : vector<8x8xf32>
    %c4_i32 = arith.constant 4 : i32
    %159 = vector.broadcast %c4_i32 : i32 to vector<8x8xi32>
    %160 = arith.cmpi eq, %17, %159 : vector<8x8xi32>
    %161 = vector.extract_strided_slice %70 {offsets = [0, 11], sizes = [8, 1], strides = [1, 1]} : vector<8x15xf32> to vector<8x1xf32>
    %cst_73 = arith.constant 0.000000e+00 : f32
    %162 = vector.shape_cast %161 : vector<8x1xf32> to vector<8x1xf32>
    %163 = vector.broadcast %162 : vector<8x1xf32> to vector<8x8xf32>
    %164 = vector.broadcast %cst_73 : f32 to vector<8x8xf32>
    %165 = arith.select %160, %163, %164 : vector<8x8xi1>, vector<8x8xf32>
    %166 = arith.addf %158, %165 : vector<8x8xf32>
    %c5_i32 = arith.constant 5 : i32
    %167 = vector.broadcast %c5_i32 : i32 to vector<8x8xi32>
    %168 = arith.cmpi eq, %17, %167 : vector<8x8xi32>
    %169 = vector.extract_strided_slice %70 {offsets = [0, 12], sizes = [8, 1], strides = [1, 1]} : vector<8x15xf32> to vector<8x1xf32>
    %cst_74 = arith.constant 0.000000e+00 : f32
    %170 = vector.shape_cast %169 : vector<8x1xf32> to vector<8x1xf32>
    %171 = vector.broadcast %170 : vector<8x1xf32> to vector<8x8xf32>
    %172 = vector.broadcast %cst_74 : f32 to vector<8x8xf32>
    %173 = arith.select %168, %171, %172 : vector<8x8xi1>, vector<8x8xf32>
    %174 = arith.addf %166, %173 : vector<8x8xf32>
    %c6_i32 = arith.constant 6 : i32
    %175 = vector.broadcast %c6_i32 : i32 to vector<8x8xi32>
    %176 = arith.cmpi eq, %17, %175 : vector<8x8xi32>
    %177 = vector.extract_strided_slice %70 {offsets = [0, 13], sizes = [8, 1], strides = [1, 1]} : vector<8x15xf32> to vector<8x1xf32>
    %cst_75 = arith.constant 0.000000e+00 : f32
    %178 = vector.shape_cast %177 : vector<8x1xf32> to vector<8x1xf32>
    %179 = vector.broadcast %178 : vector<8x1xf32> to vector<8x8xf32>
    %180 = vector.broadcast %cst_75 : f32 to vector<8x8xf32>
    %181 = arith.select %176, %179, %180 : vector<8x8xi1>, vector<8x8xf32>
    %182 = arith.addf %174, %181 : vector<8x8xf32>
    %c7_i32 = arith.constant 7 : i32
    %183 = vector.broadcast %c7_i32 : i32 to vector<8x8xi32>
    %184 = arith.cmpi eq, %17, %183 : vector<8x8xi32>
    %185 = vector.extract_strided_slice %70 {offsets = [0, 14], sizes = [8, 1], strides = [1, 1]} : vector<8x15xf32> to vector<8x1xf32>
    %cst_76 = arith.constant 0.000000e+00 : f32
    %186 = vector.shape_cast %185 : vector<8x1xf32> to vector<8x1xf32>
    %187 = vector.broadcast %186 : vector<8x1xf32> to vector<8x8xf32>
    %188 = vector.broadcast %cst_76 : f32 to vector<8x8xf32>
    %189 = arith.select %184, %187, %188 : vector<8x8xi1>, vector<8x8xf32>
    %190 = arith.addf %182, %189 : vector<8x8xf32>
    %cst_77 = arith.constant dense<0xFF800000> : vector<8xf32>
    %191 = vector.multi_reduction <maximumf>, %190, %cst_77 [1] : vector<8x8xf32> to vector<8xf32>
    %192 = vector.shape_cast %191 : vector<8xf32> to vector<8x1xf32>
    %193 = vector.broadcast %192 : vector<8x1xf32> to vector<8x8xf32>
    %194 = arith.subf %190, %193 : vector<8x8xf32>
    %195 = math.exp %194 : vector<8x8xf32>
    %cst_78 = arith.constant dense<0.000000e+00> : vector<8xf32>
    %196 = vector.multi_reduction <add>, %195, %cst_78 [1] : vector<8x8xf32> to vector<8xf32>
    %197 = vector.shape_cast %196 : vector<8xf32> to vector<8x1xf32>
    %198 = tpu.reciprocal %197 {approx = true} : vector<8x1xf32> -> vector<8x1xf32>
    %199 = vector.broadcast %198 : vector<8x1xf32> to vector<8x8xf32>
    %200 = arith.mulf %195, %199 : vector<8x8xf32>
    %201 = arith.truncf %200 : vector<8x8xf32> to vector<8x8xbf16>
    %202 = arith.truncf %63 : vector<8x16xf32> to vector<8x16xbf16>
    %cst_79 = arith.constant dense<0.000000e+00> : vector<8x16xf32>
    %203 = tpu.matmul %201, %202, %cst_79 {dimension_numbers = #tpu.dot_dimension_numbers<[1], [0], [0], [1], [0, 0, 1, 1], [], []>} : vector<8x8xbf16>, vector<8x16xbf16>, vector<8x16xf32> -> vector<8x16xf32>
    %c-7_i32_80 = arith.constant -7 : i32
    %204 = vector.broadcast %c-7_i32_80 : i32 to vector<8x8xi32>
    %205 = arith.cmpi eq, %17, %204 : vector<8x8xi32>
    %cst_81 = arith.constant 0.000000e+00 : f32
    %206 = vector.broadcast %cst_81 : f32 to vector<8x8xf32>
    %207 = arith.select %205, %200, %206 : vector<8x8xi1>, vector<8x8xf32>
    %cst_82 = arith.constant dense<0.000000e+00> : vector<8xf32>
    %208 = vector.multi_reduction <add>, %207, %cst_82 [1] : vector<8x8xf32> to vector<8xf32>
    %209 = vector.shape_cast %208 : vector<8xf32> to vector<8x1xf32>
    %c-6_i32_83 = arith.constant -6 : i32
    %210 = vector.broadcast %c-6_i32_83 : i32 to vector<8x8xi32>
    %211 = arith.cmpi eq, %17, %210 : vector<8x8xi32>
    %cst_84 = arith.constant 0.000000e+00 : f32
    %212 = vector.broadcast %cst_84 : f32 to vector<8x8xf32>
    %213 = arith.select %211, %200, %212 : vector<8x8xi1>, vector<8x8xf32>
    %cst_85 = arith.constant dense<0.000000e+00> : vector<8xf32>
    %214 = vector.multi_reduction <add>, %213, %cst_85 [1] : vector<8x8xf32> to vector<8xf32>
    %215 = vector.shape_cast %214 : vector<8xf32> to vector<8x1xf32>
    %c-5_i32_86 = arith.constant -5 : i32
    %216 = vector.broadcast %c-5_i32_86 : i32 to vector<8x8xi32>
    %217 = arith.cmpi eq, %17, %216 : vector<8x8xi32>
    %cst_87 = arith.constant 0.000000e+00 : f32
    %218 = vector.broadcast %cst_87 : f32 to vector<8x8xf32>
    %219 = arith.select %217, %200, %218 : vector<8x8xi1>, vector<8x8xf32>
    %cst_88 = arith.constant dense<0.000000e+00> : vector<8xf32>
    %220 = vector.multi_reduction <add>, %219, %cst_88 [1] : vector<8x8xf32> to vector<8xf32>
    %221 = vector.shape_cast %220 : vector<8xf32> to vector<8x1xf32>
    %c-4_i32_89 = arith.constant -4 : i32
    %222 = vector.broadcast %c-4_i32_89 : i32 to vector<8x8xi32>
    %223 = arith.cmpi eq, %17, %222 : vector<8x8xi32>
    %cst_90 = arith.constant 0.000000e+00 : f32
    %224 = vector.broadcast %cst_90 : f32 to vector<8x8xf32>
    %225 = arith.select %223, %200, %224 : vector<8x8xi1>, vector<8x8xf32>
    %cst_91 = arith.constant dense<0.000000e+00> : vector<8xf32>
    %226 = vector.multi_reduction <add>, %225, %cst_91 [1] : vector<8x8xf32> to vector<8xf32>
    %227 = vector.shape_cast %226 : vector<8xf32> to vector<8x1xf32>
    %c-3_i32_92 = arith.constant -3 : i32
    %228 = vector.broadcast %c-3_i32_92 : i32 to vector<8x8xi32>
    %229 = arith.cmpi eq, %17, %228 : vector<8x8xi32>
    %cst_93 = arith.constant 0.000000e+00 : f32
    %230 = vector.broadcast %cst_93 : f32 to vector<8x8xf32>
    %231 = arith.select %229, %200, %230 : vector<8x8xi1>, vector<8x8xf32>
    %cst_94 = arith.constant dense<0.000000e+00> : vector<8xf32>
    %232 = vector.multi_reduction <add>, %231, %cst_94 [1] : vector<8x8xf32> to vector<8xf32>
    %233 = vector.shape_cast %232 : vector<8xf32> to vector<8x1xf32>
    %c-2_i32_95 = arith.constant -2 : i32
    %234 = vector.broadcast %c-2_i32_95 : i32 to vector<8x8xi32>
    %235 = arith.cmpi eq, %17, %234 : vector<8x8xi32>
    %cst_96 = arith.constant 0.000000e+00 : f32
    %236 = vector.broadcast %cst_96 : f32 to vector<8x8xf32>
    %237 = arith.select %235, %200, %236 : vector<8x8xi1>, vector<8x8xf32>
    %cst_97 = arith.constant dense<0.000000e+00> : vector<8xf32>
    %238 = vector.multi_reduction <add>, %237, %cst_97 [1] : vector<8x8xf32> to vector<8xf32>
    %239 = vector.shape_cast %238 : vector<8xf32> to vector<8x1xf32>
    %c-1_i32_98 = arith.constant -1 : i32
    %240 = vector.broadcast %c-1_i32_98 : i32 to vector<8x8xi32>
    %241 = arith.cmpi eq, %17, %240 : vector<8x8xi32>
    %cst_99 = arith.constant 0.000000e+00 : f32
    %242 = vector.broadcast %cst_99 : f32 to vector<8x8xf32>
    %243 = arith.select %241, %200, %242 : vector<8x8xi1>, vector<8x8xf32>
    %cst_100 = arith.constant dense<0.000000e+00> : vector<8xf32>
    %244 = vector.multi_reduction <add>, %243, %cst_100 [1] : vector<8x8xf32> to vector<8xf32>
    %245 = vector.shape_cast %244 : vector<8xf32> to vector<8x1xf32>
    %c0_i32_101 = arith.constant 0 : i32
    %246 = vector.broadcast %c0_i32_101 : i32 to vector<8x8xi32>
    %247 = arith.cmpi eq, %17, %246 : vector<8x8xi32>
    %cst_102 = arith.constant 0.000000e+00 : f32
    %248 = vector.broadcast %cst_102 : f32 to vector<8x8xf32>
    %249 = arith.select %247, %200, %248 : vector<8x8xi1>, vector<8x8xf32>
    %cst_103 = arith.constant dense<0.000000e+00> : vector<8xf32>
    %250 = vector.multi_reduction <add>, %249, %cst_103 [1] : vector<8x8xf32> to vector<8xf32>
    %251 = vector.shape_cast %250 : vector<8xf32> to vector<8x1xf32>
    %c1_i32_104 = arith.constant 1 : i32
    %252 = vector.broadcast %c1_i32_104 : i32 to vector<8x8xi32>
    %253 = arith.cmpi eq, %17, %252 : vector<8x8xi32>
    %cst_105 = arith.constant 0.000000e+00 : f32
    %254 = vector.broadcast %cst_105 : f32 to vector<8x8xf32>
    %255 = arith.select %253, %200, %254 : vector<8x8xi1>, vector<8x8xf32>
    %cst_106 = arith.constant dense<0.000000e+00> : vector<8xf32>
    %256 = vector.multi_reduction <add>, %255, %cst_106 [1] : vector<8x8xf32> to vector<8xf32>
    %257 = vector.shape_cast %256 : vector<8xf32> to vector<8x1xf32>
    %c2_i32_107 = arith.constant 2 : i32
    %258 = vector.broadcast %c2_i32_107 : i32 to vector<8x8xi32>
    %259 = arith.cmpi eq, %17, %258 : vector<8x8xi32>
    %cst_108 = arith.constant 0.000000e+00 : f32
    %260 = vector.broadcast %cst_108 : f32 to vector<8x8xf32>
    %261 = arith.select %259, %200, %260 : vector<8x8xi1>, vector<8x8xf32>
    %cst_109 = arith.constant dense<0.000000e+00> : vector<8xf32>
    %262 = vector.multi_reduction <add>, %261, %cst_109 [1] : vector<8x8xf32> to vector<8xf32>
    %263 = vector.shape_cast %262 : vector<8xf32> to vector<8x1xf32>
    %c3_i32_110 = arith.constant 3 : i32
    %264 = vector.broadcast %c3_i32_110 : i32 to vector<8x8xi32>
    %265 = arith.cmpi eq, %17, %264 : vector<8x8xi32>
    %cst_111 = arith.constant 0.000000e+00 : f32
    %266 = vector.broadcast %cst_111 : f32 to vector<8x8xf32>
    %267 = arith.select %265, %200, %266 : vector<8x8xi1>, vector<8x8xf32>
    %cst_112 = arith.constant dense<0.000000e+00> : vector<8xf32>
    %268 = vector.multi_reduction <add>, %267, %cst_112 [1] : vector<8x8xf32> to vector<8xf32>
    %269 = vector.shape_cast %268 : vector<8xf32> to vector<8x1xf32>
    %c4_i32_113 = arith.constant 4 : i32
    %270 = vector.broadcast %c4_i32_113 : i32 to vector<8x8xi32>
    %271 = arith.cmpi eq, %17, %270 : vector<8x8xi32>
    %cst_114 = arith.constant 0.000000e+00 : f32
    %272 = vector.broadcast %cst_114 : f32 to vector<8x8xf32>
    %273 = arith.select %271, %200, %272 : vector<8x8xi1>, vector<8x8xf32>
    %cst_115 = arith.constant dense<0.000000e+00> : vector<8xf32>
    %274 = vector.multi_reduction <add>, %273, %cst_115 [1] : vector<8x8xf32> to vector<8xf32>
    %275 = vector.shape_cast %274 : vector<8xf32> to vector<8x1xf32>
    %c5_i32_116 = arith.constant 5 : i32
    %276 = vector.broadcast %c5_i32_116 : i32 to vector<8x8xi32>
    %277 = arith.cmpi eq, %17, %276 : vector<8x8xi32>
    %cst_117 = arith.constant 0.000000e+00 : f32
    %278 = vector.broadcast %cst_117 : f32 to vector<8x8xf32>
    %279 = arith.select %277, %200, %278 : vector<8x8xi1>, vector<8x8xf32>
    %cst_118 = arith.constant dense<0.000000e+00> : vector<8xf32>
    %280 = vector.multi_reduction <add>, %279, %cst_118 [1] : vector<8x8xf32> to vector<8xf32>
    %281 = vector.shape_cast %280 : vector<8xf32> to vector<8x1xf32>
    %c6_i32_119 = arith.constant 6 : i32
    %282 = vector.broadcast %c6_i32_119 : i32 to vector<8x8xi32>
    %283 = arith.cmpi eq, %17, %282 : vector<8x8xi32>
    %cst_120 = arith.constant 0.000000e+00 : f32
    %284 = vector.broadcast %cst_120 : f32 to vector<8x8xf32>
    %285 = arith.select %283, %200, %284 : vector<8x8xi1>, vector<8x8xf32>
    %cst_121 = arith.constant dense<0.000000e+00> : vector<8xf32>
    %286 = vector.multi_reduction <add>, %285, %cst_121 [1] : vector<8x8xf32> to vector<8xf32>
    %287 = vector.shape_cast %286 : vector<8xf32> to vector<8x1xf32>
    %c7_i32_122 = arith.constant 7 : i32
    %288 = vector.broadcast %c7_i32_122 : i32 to vector<8x8xi32>
    %289 = arith.cmpi eq, %17, %288 : vector<8x8xi32>
    %cst_123 = arith.constant 0.000000e+00 : f32
    %290 = vector.broadcast %cst_123 : f32 to vector<8x8xf32>
    %291 = arith.select %289, %200, %290 : vector<8x8xi1>, vector<8x8xf32>
    %cst_124 = arith.constant dense<0.000000e+00> : vector<8xf32>
    %292 = vector.multi_reduction <add>, %291, %cst_124 [1] : vector<8x8xf32> to vector<8xf32>
    %293 = vector.shape_cast %292 : vector<8xf32> to vector<8x1xf32>
    %294 = tpu.concatenate %209, %215, %221, %227, %233, %239, %245, %251, %257, %263, %269, %275, %281, %287, %293 in 1 : vector<8x1xf32>, vector<8x1xf32>, vector<8x1xf32>, vector<8x1xf32>, vector<8x1xf32>, vector<8x1xf32>, vector<8x1xf32>, vector<8x1xf32>, vector<8x1xf32>, vector<8x1xf32>, vector<8x1xf32>, vector<8x1xf32>, vector<8x1xf32>, vector<8x1xf32>, vector<8x1xf32> -> vector<8x15xf32>
    %295 = arith.truncf %294 : vector<8x15xf32> to vector<8x15xbf16>
    %cst_125 = arith.constant dense<0.000000e+00> : vector<8x16xf32>
    %296 = tpu.matmul %295, %42, %cst_125 {dimension_numbers = #tpu.dot_dimension_numbers<[1], [0], [0], [1], [0, 0, 1, 1], [], []>} : vector<8x15xbf16>, vector<15x16xbf16>, vector<8x16xf32> -> vector<8x16xf32>
    %297 = arith.addf %203, %296 : vector<8x16xf32>
    %298 = arith.truncf %297 : vector<8x16xf32> to vector<8x16xbf16>
    %c0_126 = arith.constant 0 : index
    %c0_127 = arith.constant 0 : index
    %c0_128 = arith.constant 0 : index
    %c0_129 = arith.constant 0 : index
    %299 = vector.load %arg13[%c0_126, %c0_127, %c0_128, %c0_129] : memref<2x2x32x16xbf16, #tpu.memory_space<vmem>>, vector<1x1x32x16xbf16>
    %300 = vector.shape_cast %299 : vector<1x1x32x16xbf16> to vector<32x16xbf16>
    %cst_130 = arith.constant dense<0.000000e+00> : vector<8x32xf32>
    %301 = tpu.matmul %298, %300, %cst_130 {dimension_numbers = #tpu.dot_dimension_numbers<[1], [1], [0], [0], [0, 0, 1, 0], [], []>} : vector<8x16xbf16>, vector<32x16xbf16>, vector<8x32xf32> -> vector<8x32xf32>
    %c0_131 = arith.constant 0 : index
    %c1 = arith.constant 1 : index
    %c0_132 = arith.constant 0 : index
    %c0_133 = arith.constant 0 : index
    %302 = vector.load %arg7[%c0_131, %c1, %c0_132, %c0_133] : memref<2x2x16x32xbf16, #tpu.memory_space<vmem>>, vector<1x1x16x32xbf16>
    %303 = vector.shape_cast %302 : vector<1x1x16x32xbf16> to vector<16x32xbf16>
    %cst_134 = arith.constant dense<0.000000e+00> : vector<8x16xf32>
    %304 = tpu.matmul %38, %303, %cst_134 {dimension_numbers = #tpu.dot_dimension_numbers<[1], [1], [0], [0], [0, 0, 1, 0], [], []>} : vector<8x32xbf16>, vector<16x32xbf16>, vector<8x16xf32> -> vector<8x16xf32>
    %c0_135 = arith.constant 0 : index
    %c1_136 = arith.constant 1 : index
    %c0_137 = arith.constant 0 : index
    %c0_138 = arith.constant 0 : index
    %305 = vector.load %arg8[%c0_135, %c1_136, %c0_137, %c0_138] : memref<2x2x1x16xf32, #tpu.memory_space<vmem>>, vector<1x1x1x16xf32>
    %306 = vector.shape_cast %305 : vector<1x1x1x16xf32> to vector<1x16xf32>
    %307 = vector.broadcast %306 : vector<1x16xf32> to vector<8x16xf32>
    %308 = arith.addf %304, %307 : vector<8x16xf32>
    %c0_139 = arith.constant 0 : index
    %c1_140 = arith.constant 1 : index
    %c0_141 = arith.constant 0 : index
    %c0_142 = arith.constant 0 : index
    %309 = vector.load %arg9[%c0_139, %c1_140, %c0_141, %c0_142] : memref<2x2x16x32xbf16, #tpu.memory_space<vmem>>, vector<1x1x16x32xbf16>
    %310 = vector.shape_cast %309 : vector<1x1x16x32xbf16> to vector<16x32xbf16>
    %cst_143 = arith.constant dense<0.000000e+00> : vector<8x16xf32>
    %311 = tpu.matmul %38, %310, %cst_143 {dimension_numbers = #tpu.dot_dimension_numbers<[1], [1], [0], [0], [0, 0, 1, 0], [], []>} : vector<8x32xbf16>, vector<16x32xbf16>, vector<8x16xf32> -> vector<8x16xf32>
    %c0_144 = arith.constant 0 : index
    %c1_145 = arith.constant 1 : index
    %c0_146 = arith.constant 0 : index
    %c0_147 = arith.constant 0 : index
    %312 = vector.load %arg10[%c0_144, %c1_145, %c0_146, %c0_147] : memref<2x2x1x16xf32, #tpu.memory_space<vmem>>, vector<1x1x1x16xf32>
    %313 = vector.shape_cast %312 : vector<1x1x1x16xf32> to vector<1x16xf32>
    %314 = vector.broadcast %313 : vector<1x16xf32> to vector<8x16xf32>
    %315 = arith.addf %311, %314 : vector<8x16xf32>
    %c0_148 = arith.constant 0 : index
    %c1_149 = arith.constant 1 : index
    %c0_150 = arith.constant 0 : index
    %c0_151 = arith.constant 0 : index
    %316 = vector.load %arg11[%c0_148, %c1_149, %c0_150, %c0_151] : memref<2x2x16x32xbf16, #tpu.memory_space<vmem>>, vector<1x1x16x32xbf16>
    %317 = vector.shape_cast %316 : vector<1x1x16x32xbf16> to vector<16x32xbf16>
    %cst_152 = arith.constant dense<0.000000e+00> : vector<8x16xf32>
    %318 = tpu.matmul %38, %317, %cst_152 {dimension_numbers = #tpu.dot_dimension_numbers<[1], [1], [0], [0], [0, 0, 1, 0], [], []>} : vector<8x32xbf16>, vector<16x32xbf16>, vector<8x16xf32> -> vector<8x16xf32>
    %c0_153 = arith.constant 0 : index
    %c1_154 = arith.constant 1 : index
    %c0_155 = arith.constant 0 : index
    %c0_156 = arith.constant 0 : index
    %319 = vector.load %arg12[%c0_153, %c1_154, %c0_155, %c0_156] : memref<2x2x1x16xf32, #tpu.memory_space<vmem>>, vector<1x1x1x16xf32>
    %320 = vector.shape_cast %319 : vector<1x1x1x16xf32> to vector<1x16xf32>
    %321 = vector.broadcast %320 : vector<1x16xf32> to vector<8x16xf32>
    %322 = arith.addf %318, %321 : vector<8x16xf32>
    %cst_157 = arith.constant 2.500000e-01 : f32
    %323 = vector.broadcast %cst_157 : f32 to vector<8x16xf32>
    %324 = arith.mulf %308, %323 : vector<8x16xf32>
    %325 = arith.truncf %324 : vector<8x16xf32> to vector<8x16xbf16>
    %326 = arith.truncf %315 : vector<8x16xf32> to vector<8x16xbf16>
    %cst_158 = arith.constant dense<0.000000e+00> : vector<8x8xf32>
    %327 = tpu.matmul %325, %326, %cst_158 {dimension_numbers = #tpu.dot_dimension_numbers<[1], [1], [0], [0], [0, 0, 1, 0], [], []>} : vector<8x16xbf16>, vector<8x16xbf16>, vector<8x8xf32> -> vector<8x8xf32>
    %328 = arith.addf %327, %14 : vector<8x8xf32>
    %cst_159 = arith.constant dense<0.000000e+00> : vector<8x15xf32>
    %329 = tpu.matmul %325, %40, %cst_159 {dimension_numbers = #tpu.dot_dimension_numbers<[1], [1], [0], [0], [0, 0, 1, 0], [], []>} : vector<8x16xbf16>, vector<15x16xbf16>, vector<8x15xf32> -> vector<8x15xf32>
    %c-7_i32_160 = arith.constant -7 : i32
    %330 = vector.broadcast %c-7_i32_160 : i32 to vector<8x8xi32>
    %331 = arith.cmpi eq, %17, %330 : vector<8x8xi32>
    %332 = vector.extract_strided_slice %329 {offsets = [0, 0], sizes = [8, 1], strides = [1, 1]} : vector<8x15xf32> to vector<8x1xf32>
    %cst_161 = arith.constant 0.000000e+00 : f32
    %333 = vector.shape_cast %332 : vector<8x1xf32> to vector<8x1xf32>
    %334 = vector.broadcast %333 : vector<8x1xf32> to vector<8x8xf32>
    %335 = vector.broadcast %cst_161 : f32 to vector<8x8xf32>
    %336 = arith.select %331, %334, %335 : vector<8x8xi1>, vector<8x8xf32>
    %337 = arith.addf %328, %336 : vector<8x8xf32>
    %c-6_i32_162 = arith.constant -6 : i32
    %338 = vector.broadcast %c-6_i32_162 : i32 to vector<8x8xi32>
    %339 = arith.cmpi eq, %17, %338 : vector<8x8xi32>
    %340 = vector.extract_strided_slice %329 {offsets = [0, 1], sizes = [8, 1], strides = [1, 1]} : vector<8x15xf32> to vector<8x1xf32>
    %cst_163 = arith.constant 0.000000e+00 : f32
    %341 = vector.shape_cast %340 : vector<8x1xf32> to vector<8x1xf32>
    %342 = vector.broadcast %341 : vector<8x1xf32> to vector<8x8xf32>
    %343 = vector.broadcast %cst_163 : f32 to vector<8x8xf32>
    %344 = arith.select %339, %342, %343 : vector<8x8xi1>, vector<8x8xf32>
    %345 = arith.addf %337, %344 : vector<8x8xf32>
    %c-5_i32_164 = arith.constant -5 : i32
    %346 = vector.broadcast %c-5_i32_164 : i32 to vector<8x8xi32>
    %347 = arith.cmpi eq, %17, %346 : vector<8x8xi32>
    %348 = vector.extract_strided_slice %329 {offsets = [0, 2], sizes = [8, 1], strides = [1, 1]} : vector<8x15xf32> to vector<8x1xf32>
    %cst_165 = arith.constant 0.000000e+00 : f32
    %349 = vector.shape_cast %348 : vector<8x1xf32> to vector<8x1xf32>
    %350 = vector.broadcast %349 : vector<8x1xf32> to vector<8x8xf32>
    %351 = vector.broadcast %cst_165 : f32 to vector<8x8xf32>
    %352 = arith.select %347, %350, %351 : vector<8x8xi1>, vector<8x8xf32>
    %353 = arith.addf %345, %352 : vector<8x8xf32>
    %c-4_i32_166 = arith.constant -4 : i32
    %354 = vector.broadcast %c-4_i32_166 : i32 to vector<8x8xi32>
    %355 = arith.cmpi eq, %17, %354 : vector<8x8xi32>
    %356 = vector.extract_strided_slice %329 {offsets = [0, 3], sizes = [8, 1], strides = [1, 1]} : vector<8x15xf32> to vector<8x1xf32>
    %cst_167 = arith.constant 0.000000e+00 : f32
    %357 = vector.shape_cast %356 : vector<8x1xf32> to vector<8x1xf32>
    %358 = vector.broadcast %357 : vector<8x1xf32> to vector<8x8xf32>
    %359 = vector.broadcast %cst_167 : f32 to vector<8x8xf32>
    %360 = arith.select %355, %358, %359 : vector<8x8xi1>, vector<8x8xf32>
    %361 = arith.addf %353, %360 : vector<8x8xf32>
    %c-3_i32_168 = arith.constant -3 : i32
    %362 = vector.broadcast %c-3_i32_168 : i32 to vector<8x8xi32>
    %363 = arith.cmpi eq, %17, %362 : vector<8x8xi32>
    %364 = vector.extract_strided_slice %329 {offsets = [0, 4], sizes = [8, 1], strides = [1, 1]} : vector<8x15xf32> to vector<8x1xf32>
    %cst_169 = arith.constant 0.000000e+00 : f32
    %365 = vector.shape_cast %364 : vector<8x1xf32> to vector<8x1xf32>
    %366 = vector.broadcast %365 : vector<8x1xf32> to vector<8x8xf32>
    %367 = vector.broadcast %cst_169 : f32 to vector<8x8xf32>
    %368 = arith.select %363, %366, %367 : vector<8x8xi1>, vector<8x8xf32>
    %369 = arith.addf %361, %368 : vector<8x8xf32>
    %c-2_i32_170 = arith.constant -2 : i32
    %370 = vector.broadcast %c-2_i32_170 : i32 to vector<8x8xi32>
    %371 = arith.cmpi eq, %17, %370 : vector<8x8xi32>
    %372 = vector.extract_strided_slice %329 {offsets = [0, 5], sizes = [8, 1], strides = [1, 1]} : vector<8x15xf32> to vector<8x1xf32>
    %cst_171 = arith.constant 0.000000e+00 : f32
    %373 = vector.shape_cast %372 : vector<8x1xf32> to vector<8x1xf32>
    %374 = vector.broadcast %373 : vector<8x1xf32> to vector<8x8xf32>
    %375 = vector.broadcast %cst_171 : f32 to vector<8x8xf32>
    %376 = arith.select %371, %374, %375 : vector<8x8xi1>, vector<8x8xf32>
    %377 = arith.addf %369, %376 : vector<8x8xf32>
    %c-1_i32_172 = arith.constant -1 : i32
    %378 = vector.broadcast %c-1_i32_172 : i32 to vector<8x8xi32>
    %379 = arith.cmpi eq, %17, %378 : vector<8x8xi32>
    %380 = vector.extract_strided_slice %329 {offsets = [0, 6], sizes = [8, 1], strides = [1, 1]} : vector<8x15xf32> to vector<8x1xf32>
    %cst_173 = arith.constant 0.000000e+00 : f32
    %381 = vector.shape_cast %380 : vector<8x1xf32> to vector<8x1xf32>
    %382 = vector.broadcast %381 : vector<8x1xf32> to vector<8x8xf32>
    %383 = vector.broadcast %cst_173 : f32 to vector<8x8xf32>
    %384 = arith.select %379, %382, %383 : vector<8x8xi1>, vector<8x8xf32>
    %385 = arith.addf %377, %384 : vector<8x8xf32>
    %c0_i32_174 = arith.constant 0 : i32
    %386 = vector.broadcast %c0_i32_174 : i32 to vector<8x8xi32>
    %387 = arith.cmpi eq, %17, %386 : vector<8x8xi32>
    %388 = vector.extract_strided_slice %329 {offsets = [0, 7], sizes = [8, 1], strides = [1, 1]} : vector<8x15xf32> to vector<8x1xf32>
    %cst_175 = arith.constant 0.000000e+00 : f32
    %389 = vector.shape_cast %388 : vector<8x1xf32> to vector<8x1xf32>
    %390 = vector.broadcast %389 : vector<8x1xf32> to vector<8x8xf32>
    %391 = vector.broadcast %cst_175 : f32 to vector<8x8xf32>
    %392 = arith.select %387, %390, %391 : vector<8x8xi1>, vector<8x8xf32>
    %393 = arith.addf %385, %392 : vector<8x8xf32>
    %c1_i32_176 = arith.constant 1 : i32
    %394 = vector.broadcast %c1_i32_176 : i32 to vector<8x8xi32>
    %395 = arith.cmpi eq, %17, %394 : vector<8x8xi32>
    %396 = vector.extract_strided_slice %329 {offsets = [0, 8], sizes = [8, 1], strides = [1, 1]} : vector<8x15xf32> to vector<8x1xf32>
    %cst_177 = arith.constant 0.000000e+00 : f32
    %397 = vector.shape_cast %396 : vector<8x1xf32> to vector<8x1xf32>
    %398 = vector.broadcast %397 : vector<8x1xf32> to vector<8x8xf32>
    %399 = vector.broadcast %cst_177 : f32 to vector<8x8xf32>
    %400 = arith.select %395, %398, %399 : vector<8x8xi1>, vector<8x8xf32>
    %401 = arith.addf %393, %400 : vector<8x8xf32>
    %c2_i32_178 = arith.constant 2 : i32
    %402 = vector.broadcast %c2_i32_178 : i32 to vector<8x8xi32>
    %403 = arith.cmpi eq, %17, %402 : vector<8x8xi32>
    %404 = vector.extract_strided_slice %329 {offsets = [0, 9], sizes = [8, 1], strides = [1, 1]} : vector<8x15xf32> to vector<8x1xf32>
    %cst_179 = arith.constant 0.000000e+00 : f32
    %405 = vector.shape_cast %404 : vector<8x1xf32> to vector<8x1xf32>
    %406 = vector.broadcast %405 : vector<8x1xf32> to vector<8x8xf32>
    %407 = vector.broadcast %cst_179 : f32 to vector<8x8xf32>
    %408 = arith.select %403, %406, %407 : vector<8x8xi1>, vector<8x8xf32>
    %409 = arith.addf %401, %408 : vector<8x8xf32>
    %c3_i32_180 = arith.constant 3 : i32
    %410 = vector.broadcast %c3_i32_180 : i32 to vector<8x8xi32>
    %411 = arith.cmpi eq, %17, %410 : vector<8x8xi32>
    %412 = vector.extract_strided_slice %329 {offsets = [0, 10], sizes = [8, 1], strides = [1, 1]} : vector<8x15xf32> to vector<8x1xf32>
    %cst_181 = arith.constant 0.000000e+00 : f32
    %413 = vector.shape_cast %412 : vector<8x1xf32> to vector<8x1xf32>
    %414 = vector.broadcast %413 : vector<8x1xf32> to vector<8x8xf32>
    %415 = vector.broadcast %cst_181 : f32 to vector<8x8xf32>
    %416 = arith.select %411, %414, %415 : vector<8x8xi1>, vector<8x8xf32>
    %417 = arith.addf %409, %416 : vector<8x8xf32>
    %c4_i32_182 = arith.constant 4 : i32
    %418 = vector.broadcast %c4_i32_182 : i32 to vector<8x8xi32>
    %419 = arith.cmpi eq, %17, %418 : vector<8x8xi32>
    %420 = vector.extract_strided_slice %329 {offsets = [0, 11], sizes = [8, 1], strides = [1, 1]} : vector<8x15xf32> to vector<8x1xf32>
    %cst_183 = arith.constant 0.000000e+00 : f32
    %421 = vector.shape_cast %420 : vector<8x1xf32> to vector<8x1xf32>
    %422 = vector.broadcast %421 : vector<8x1xf32> to vector<8x8xf32>
    %423 = vector.broadcast %cst_183 : f32 to vector<8x8xf32>
    %424 = arith.select %419, %422, %423 : vector<8x8xi1>, vector<8x8xf32>
    %425 = arith.addf %417, %424 : vector<8x8xf32>
    %c5_i32_184 = arith.constant 5 : i32
    %426 = vector.broadcast %c5_i32_184 : i32 to vector<8x8xi32>
    %427 = arith.cmpi eq, %17, %426 : vector<8x8xi32>
    %428 = vector.extract_strided_slice %329 {offsets = [0, 12], sizes = [8, 1], strides = [1, 1]} : vector<8x15xf32> to vector<8x1xf32>
    %cst_185 = arith.constant 0.000000e+00 : f32
    %429 = vector.shape_cast %428 : vector<8x1xf32> to vector<8x1xf32>
    %430 = vector.broadcast %429 : vector<8x1xf32> to vector<8x8xf32>
    %431 = vector.broadcast %cst_185 : f32 to vector<8x8xf32>
    %432 = arith.select %427, %430, %431 : vector<8x8xi1>, vector<8x8xf32>
    %433 = arith.addf %425, %432 : vector<8x8xf32>
    %c6_i32_186 = arith.constant 6 : i32
    %434 = vector.broadcast %c6_i32_186 : i32 to vector<8x8xi32>
    %435 = arith.cmpi eq, %17, %434 : vector<8x8xi32>
    %436 = vector.extract_strided_slice %329 {offsets = [0, 13], sizes = [8, 1], strides = [1, 1]} : vector<8x15xf32> to vector<8x1xf32>
    %cst_187 = arith.constant 0.000000e+00 : f32
    %437 = vector.shape_cast %436 : vector<8x1xf32> to vector<8x1xf32>
    %438 = vector.broadcast %437 : vector<8x1xf32> to vector<8x8xf32>
    %439 = vector.broadcast %cst_187 : f32 to vector<8x8xf32>
    %440 = arith.select %435, %438, %439 : vector<8x8xi1>, vector<8x8xf32>
    %441 = arith.addf %433, %440 : vector<8x8xf32>
    %c7_i32_188 = arith.constant 7 : i32
    %442 = vector.broadcast %c7_i32_188 : i32 to vector<8x8xi32>
    %443 = arith.cmpi eq, %17, %442 : vector<8x8xi32>
    %444 = vector.extract_strided_slice %329 {offsets = [0, 14], sizes = [8, 1], strides = [1, 1]} : vector<8x15xf32> to vector<8x1xf32>
    %cst_189 = arith.constant 0.000000e+00 : f32
    %445 = vector.shape_cast %444 : vector<8x1xf32> to vector<8x1xf32>
    %446 = vector.broadcast %445 : vector<8x1xf32> to vector<8x8xf32>
    %447 = vector.broadcast %cst_189 : f32 to vector<8x8xf32>
    %448 = arith.select %443, %446, %447 : vector<8x8xi1>, vector<8x8xf32>
    %449 = arith.addf %441, %448 : vector<8x8xf32>
    %cst_190 = arith.constant dense<0xFF800000> : vector<8xf32>
    %450 = vector.multi_reduction <maximumf>, %449, %cst_190 [1] : vector<8x8xf32> to vector<8xf32>
    %451 = vector.shape_cast %450 : vector<8xf32> to vector<8x1xf32>
    %452 = vector.broadcast %451 : vector<8x1xf32> to vector<8x8xf32>
    %453 = arith.subf %449, %452 : vector<8x8xf32>
    %454 = math.exp %453 : vector<8x8xf32>
    %cst_191 = arith.constant dense<0.000000e+00> : vector<8xf32>
    %455 = vector.multi_reduction <add>, %454, %cst_191 [1] : vector<8x8xf32> to vector<8xf32>
    %456 = vector.shape_cast %455 : vector<8xf32> to vector<8x1xf32>
    %457 = tpu.reciprocal %456 {approx = true} : vector<8x1xf32> -> vector<8x1xf32>
    %458 = vector.broadcast %457 : vector<8x1xf32> to vector<8x8xf32>
    %459 = arith.mulf %454, %458 : vector<8x8xf32>
    %460 = arith.truncf %459 : vector<8x8xf32> to vector<8x8xbf16>
    %461 = arith.truncf %322 : vector<8x16xf32> to vector<8x16xbf16>
    %cst_192 = arith.constant dense<0.000000e+00> : vector<8x16xf32>
    %462 = tpu.matmul %460, %461, %cst_192 {dimension_numbers = #tpu.dot_dimension_numbers<[1], [0], [0], [1], [0, 0, 1, 1], [], []>} : vector<8x8xbf16>, vector<8x16xbf16>, vector<8x16xf32> -> vector<8x16xf32>
    %c-7_i32_193 = arith.constant -7 : i32
    %463 = vector.broadcast %c-7_i32_193 : i32 to vector<8x8xi32>
    %464 = arith.cmpi eq, %17, %463 : vector<8x8xi32>
    %cst_194 = arith.constant 0.000000e+00 : f32
    %465 = vector.broadcast %cst_194 : f32 to vector<8x8xf32>
    %466 = arith.select %464, %459, %465 : vector<8x8xi1>, vector<8x8xf32>
    %cst_195 = arith.constant dense<0.000000e+00> : vector<8xf32>
    %467 = vector.multi_reduction <add>, %466, %cst_195 [1] : vector<8x8xf32> to vector<8xf32>
    %468 = vector.shape_cast %467 : vector<8xf32> to vector<8x1xf32>
    %c-6_i32_196 = arith.constant -6 : i32
    %469 = vector.broadcast %c-6_i32_196 : i32 to vector<8x8xi32>
    %470 = arith.cmpi eq, %17, %469 : vector<8x8xi32>
    %cst_197 = arith.constant 0.000000e+00 : f32
    %471 = vector.broadcast %cst_197 : f32 to vector<8x8xf32>
    %472 = arith.select %470, %459, %471 : vector<8x8xi1>, vector<8x8xf32>
    %cst_198 = arith.constant dense<0.000000e+00> : vector<8xf32>
    %473 = vector.multi_reduction <add>, %472, %cst_198 [1] : vector<8x8xf32> to vector<8xf32>
    %474 = vector.shape_cast %473 : vector<8xf32> to vector<8x1xf32>
    %c-5_i32_199 = arith.constant -5 : i32
    %475 = vector.broadcast %c-5_i32_199 : i32 to vector<8x8xi32>
    %476 = arith.cmpi eq, %17, %475 : vector<8x8xi32>
    %cst_200 = arith.constant 0.000000e+00 : f32
    %477 = vector.broadcast %cst_200 : f32 to vector<8x8xf32>
    %478 = arith.select %476, %459, %477 : vector<8x8xi1>, vector<8x8xf32>
    %cst_201 = arith.constant dense<0.000000e+00> : vector<8xf32>
    %479 = vector.multi_reduction <add>, %478, %cst_201 [1] : vector<8x8xf32> to vector<8xf32>
    %480 = vector.shape_cast %479 : vector<8xf32> to vector<8x1xf32>
    %c-4_i32_202 = arith.constant -4 : i32
    %481 = vector.broadcast %c-4_i32_202 : i32 to vector<8x8xi32>
    %482 = arith.cmpi eq, %17, %481 : vector<8x8xi32>
    %cst_203 = arith.constant 0.000000e+00 : f32
    %483 = vector.broadcast %cst_203 : f32 to vector<8x8xf32>
    %484 = arith.select %482, %459, %483 : vector<8x8xi1>, vector<8x8xf32>
    %cst_204 = arith.constant dense<0.000000e+00> : vector<8xf32>
    %485 = vector.multi_reduction <add>, %484, %cst_204 [1] : vector<8x8xf32> to vector<8xf32>
    %486 = vector.shape_cast %485 : vector<8xf32> to vector<8x1xf32>
    %c-3_i32_205 = arith.constant -3 : i32
    %487 = vector.broadcast %c-3_i32_205 : i32 to vector<8x8xi32>
    %488 = arith.cmpi eq, %17, %487 : vector<8x8xi32>
    %cst_206 = arith.constant 0.000000e+00 : f32
    %489 = vector.broadcast %cst_206 : f32 to vector<8x8xf32>
    %490 = arith.select %488, %459, %489 : vector<8x8xi1>, vector<8x8xf32>
    %cst_207 = arith.constant dense<0.000000e+00> : vector<8xf32>
    %491 = vector.multi_reduction <add>, %490, %cst_207 [1] : vector<8x8xf32> to vector<8xf32>
    %492 = vector.shape_cast %491 : vector<8xf32> to vector<8x1xf32>
    %c-2_i32_208 = arith.constant -2 : i32
    %493 = vector.broadcast %c-2_i32_208 : i32 to vector<8x8xi32>
    %494 = arith.cmpi eq, %17, %493 : vector<8x8xi32>
    %cst_209 = arith.constant 0.000000e+00 : f32
    %495 = vector.broadcast %cst_209 : f32 to vector<8x8xf32>
    %496 = arith.select %494, %459, %495 : vector<8x8xi1>, vector<8x8xf32>
    %cst_210 = arith.constant dense<0.000000e+00> : vector<8xf32>
    %497 = vector.multi_reduction <add>, %496, %cst_210 [1] : vector<8x8xf32> to vector<8xf32>
    %498 = vector.shape_cast %497 : vector<8xf32> to vector<8x1xf32>
    %c-1_i32_211 = arith.constant -1 : i32
    %499 = vector.broadcast %c-1_i32_211 : i32 to vector<8x8xi32>
    %500 = arith.cmpi eq, %17, %499 : vector<8x8xi32>
    %cst_212 = arith.constant 0.000000e+00 : f32
    %501 = vector.broadcast %cst_212 : f32 to vector<8x8xf32>
    %502 = arith.select %500, %459, %501 : vector<8x8xi1>, vector<8x8xf32>
    %cst_213 = arith.constant dense<0.000000e+00> : vector<8xf32>
    %503 = vector.multi_reduction <add>, %502, %cst_213 [1] : vector<8x8xf32> to vector<8xf32>
    %504 = vector.shape_cast %503 : vector<8xf32> to vector<8x1xf32>
    %c0_i32_214 = arith.constant 0 : i32
    %505 = vector.broadcast %c0_i32_214 : i32 to vector<8x8xi32>
    %506 = arith.cmpi eq, %17, %505 : vector<8x8xi32>
    %cst_215 = arith.constant 0.000000e+00 : f32
    %507 = vector.broadcast %cst_215 : f32 to vector<8x8xf32>
    %508 = arith.select %506, %459, %507 : vector<8x8xi1>, vector<8x8xf32>
    %cst_216 = arith.constant dense<0.000000e+00> : vector<8xf32>
    %509 = vector.multi_reduction <add>, %508, %cst_216 [1] : vector<8x8xf32> to vector<8xf32>
    %510 = vector.shape_cast %509 : vector<8xf32> to vector<8x1xf32>
    %c1_i32_217 = arith.constant 1 : i32
    %511 = vector.broadcast %c1_i32_217 : i32 to vector<8x8xi32>
    %512 = arith.cmpi eq, %17, %511 : vector<8x8xi32>
    %cst_218 = arith.constant 0.000000e+00 : f32
    %513 = vector.broadcast %cst_218 : f32 to vector<8x8xf32>
    %514 = arith.select %512, %459, %513 : vector<8x8xi1>, vector<8x8xf32>
    %cst_219 = arith.constant dense<0.000000e+00> : vector<8xf32>
    %515 = vector.multi_reduction <add>, %514, %cst_219 [1] : vector<8x8xf32> to vector<8xf32>
    %516 = vector.shape_cast %515 : vector<8xf32> to vector<8x1xf32>
    %c2_i32_220 = arith.constant 2 : i32
    %517 = vector.broadcast %c2_i32_220 : i32 to vector<8x8xi32>
    %518 = arith.cmpi eq, %17, %517 : vector<8x8xi32>
    %cst_221 = arith.constant 0.000000e+00 : f32
    %519 = vector.broadcast %cst_221 : f32 to vector<8x8xf32>
    %520 = arith.select %518, %459, %519 : vector<8x8xi1>, vector<8x8xf32>
    %cst_222 = arith.constant dense<0.000000e+00> : vector<8xf32>
    %521 = vector.multi_reduction <add>, %520, %cst_222 [1] : vector<8x8xf32> to vector<8xf32>
    %522 = vector.shape_cast %521 : vector<8xf32> to vector<8x1xf32>
    %c3_i32_223 = arith.constant 3 : i32
    %523 = vector.broadcast %c3_i32_223 : i32 to vector<8x8xi32>
    %524 = arith.cmpi eq, %17, %523 : vector<8x8xi32>
    %cst_224 = arith.constant 0.000000e+00 : f32
    %525 = vector.broadcast %cst_224 : f32 to vector<8x8xf32>
    %526 = arith.select %524, %459, %525 : vector<8x8xi1>, vector<8x8xf32>
    %cst_225 = arith.constant dense<0.000000e+00> : vector<8xf32>
    %527 = vector.multi_reduction <add>, %526, %cst_225 [1] : vector<8x8xf32> to vector<8xf32>
    %528 = vector.shape_cast %527 : vector<8xf32> to vector<8x1xf32>
    %c4_i32_226 = arith.constant 4 : i32
    %529 = vector.broadcast %c4_i32_226 : i32 to vector<8x8xi32>
    %530 = arith.cmpi eq, %17, %529 : vector<8x8xi32>
    %cst_227 = arith.constant 0.000000e+00 : f32
    %531 = vector.broadcast %cst_227 : f32 to vector<8x8xf32>
    %532 = arith.select %530, %459, %531 : vector<8x8xi1>, vector<8x8xf32>
    %cst_228 = arith.constant dense<0.000000e+00> : vector<8xf32>
    %533 = vector.multi_reduction <add>, %532, %cst_228 [1] : vector<8x8xf32> to vector<8xf32>
    %534 = vector.shape_cast %533 : vector<8xf32> to vector<8x1xf32>
    %c5_i32_229 = arith.constant 5 : i32
    %535 = vector.broadcast %c5_i32_229 : i32 to vector<8x8xi32>
    %536 = arith.cmpi eq, %17, %535 : vector<8x8xi32>
    %cst_230 = arith.constant 0.000000e+00 : f32
    %537 = vector.broadcast %cst_230 : f32 to vector<8x8xf32>
    %538 = arith.select %536, %459, %537 : vector<8x8xi1>, vector<8x8xf32>
    %cst_231 = arith.constant dense<0.000000e+00> : vector<8xf32>
    %539 = vector.multi_reduction <add>, %538, %cst_231 [1] : vector<8x8xf32> to vector<8xf32>
    %540 = vector.shape_cast %539 : vector<8xf32> to vector<8x1xf32>
    %c6_i32_232 = arith.constant 6 : i32
    %541 = vector.broadcast %c6_i32_232 : i32 to vector<8x8xi32>
    %542 = arith.cmpi eq, %17, %541 : vector<8x8xi32>
    %cst_233 = arith.constant 0.000000e+00 : f32
    %543 = vector.broadcast %cst_233 : f32 to vector<8x8xf32>
    %544 = arith.select %542, %459, %543 : vector<8x8xi1>, vector<8x8xf32>
    %cst_234 = arith.constant dense<0.000000e+00> : vector<8xf32>
    %545 = vector.multi_reduction <add>, %544, %cst_234 [1] : vector<8x8xf32> to vector<8xf32>
    %546 = vector.shape_cast %545 : vector<8xf32> to vector<8x1xf32>
    %c7_i32_235 = arith.constant 7 : i32
    %547 = vector.broadcast %c7_i32_235 : i32 to vector<8x8xi32>
    %548 = arith.cmpi eq, %17, %547 : vector<8x8xi32>
    %cst_236 = arith.constant 0.000000e+00 : f32
    %549 = vector.broadcast %cst_236 : f32 to vector<8x8xf32>
    %550 = arith.select %548, %459, %549 : vector<8x8xi1>, vector<8x8xf32>
    %cst_237 = arith.constant dense<0.000000e+00> : vector<8xf32>
    %551 = vector.multi_reduction <add>, %550, %cst_237 [1] : vector<8x8xf32> to vector<8xf32>
    %552 = vector.shape_cast %551 : vector<8xf32> to vector<8x1xf32>
    %553 = tpu.concatenate %468, %474, %480, %486, %492, %498, %504, %510, %516, %522, %528, %534, %540, %546, %552 in 1 : vector<8x1xf32>, vector<8x1xf32>, vector<8x1xf32>, vector<8x1xf32>, vector<8x1xf32>, vector<8x1xf32>, vector<8x1xf32>, vector<8x1xf32>, vector<8x1xf32>, vector<8x1xf32>, vector<8x1xf32>, vector<8x1xf32>, vector<8x1xf32>, vector<8x1xf32>, vector<8x1xf32> -> vector<8x15xf32>
    %554 = arith.truncf %553 : vector<8x15xf32> to vector<8x15xbf16>
    %cst_238 = arith.constant dense<0.000000e+00> : vector<8x16xf32>
    %555 = tpu.matmul %554, %42, %cst_238 {dimension_numbers = #tpu.dot_dimension_numbers<[1], [0], [0], [1], [0, 0, 1, 1], [], []>} : vector<8x15xbf16>, vector<15x16xbf16>, vector<8x16xf32> -> vector<8x16xf32>
    %556 = arith.addf %462, %555 : vector<8x16xf32>
    %557 = arith.truncf %556 : vector<8x16xf32> to vector<8x16xbf16>
    %c0_239 = arith.constant 0 : index
    %c1_240 = arith.constant 1 : index
    %c0_241 = arith.constant 0 : index
    %c0_242 = arith.constant 0 : index
    %558 = vector.load %arg13[%c0_239, %c1_240, %c0_241, %c0_242] : memref<2x2x32x16xbf16, #tpu.memory_space<vmem>>, vector<1x1x32x16xbf16>
    %559 = vector.shape_cast %558 : vector<1x1x32x16xbf16> to vector<32x16xbf16>
    %cst_243 = arith.constant dense<0.000000e+00> : vector<8x32xf32>
    %560 = tpu.matmul %557, %559, %cst_243 {dimension_numbers = #tpu.dot_dimension_numbers<[1], [1], [0], [0], [0, 0, 1, 0], [], []>} : vector<8x16xbf16>, vector<32x16xbf16>, vector<8x32xf32> -> vector<8x32xf32>
    %561 = arith.addf %301, %560 : vector<8x32xf32>
    %c0_244 = arith.constant 0 : index
    %c0_245 = arith.constant 0 : index
    %c0_246 = arith.constant 0 : index
    %562 = vector.load %arg14[%c0_244, %c0_245, %c0_246] : memref<2x1x32xf32, #tpu.memory_space<vmem>>, vector<1x1x32xf32>
    %563 = vector.shape_cast %562 : vector<1x1x32xf32> to vector<1x32xf32>
    %564 = vector.broadcast %563 : vector<1x32xf32> to vector<8x32xf32>
    %565 = arith.addf %561, %564 : vector<8x32xf32>
    %566 = arith.addf %37, %565 : vector<8x32xf32>
    %c0_247 = arith.constant 0 : index
    %c0_248 = arith.constant 0 : index
    %c0_249 = arith.constant 0 : index
    %567 = vector.load %arg17[%c0_247, %c0_248, %c0_249] : memref<2x1x32xf32, #tpu.memory_space<vmem>>, vector<1x1x32xf32>
    %568 = vector.shape_cast %567 : vector<1x1x32xf32> to vector<1x32xf32>
    %c0_250 = arith.constant 0 : index
    %c0_251 = arith.constant 0 : index
    %c0_252 = arith.constant 0 : index
    %569 = vector.load %arg18[%c0_250, %c0_251, %c0_252] : memref<2x1x32xf32, #tpu.memory_space<vmem>>, vector<1x1x32xf32>
    %570 = vector.shape_cast %569 : vector<1x1x32xf32> to vector<1x32xf32>
    %cst_253 = arith.constant dense<0.000000e+00> : vector<8xf32>
    %571 = vector.multi_reduction <add>, %566, %cst_253 [1] : vector<8x32xf32> to vector<8xf32>
    %572 = vector.shape_cast %571 : vector<8xf32> to vector<8x1xf32>
    %cst_254 = arith.constant 3.200000e+01 : f32
    %573 = vector.broadcast %cst_254 : f32 to vector<8x1xf32>
    %574 = arith.divf %572, %573 : vector<8x1xf32>
    %575 = vector.broadcast %574 : vector<8x1xf32> to vector<8x32xf32>
    %576 = arith.subf %566, %575 : vector<8x32xf32>
    %577 = arith.mulf %576, %576 : vector<8x32xf32>
    %cst_255 = arith.constant dense<0.000000e+00> : vector<8xf32>
    %578 = vector.multi_reduction <add>, %577, %cst_255 [1] : vector<8x32xf32> to vector<8xf32>
    %579 = vector.shape_cast %578 : vector<8xf32> to vector<8x1xf32>
    %cst_256 = arith.constant 3.200000e+01 : f32
    %580 = vector.broadcast %cst_256 : f32 to vector<8x1xf32>
    %581 = arith.divf %579, %580 : vector<8x1xf32>
    %cst_257 = arith.constant 9.99999974E-6 : f32
    %582 = vector.broadcast %cst_257 : f32 to vector<8x1xf32>
    %583 = arith.addf %581, %582 : vector<8x1xf32>
    %584 = math.rsqrt %583 : vector<8x1xf32>
    %585 = vector.broadcast %584 : vector<8x1xf32> to vector<8x32xf32>
    %586 = arith.mulf %576, %585 : vector<8x32xf32>
    %587 = vector.broadcast %568 : vector<1x32xf32> to vector<8x32xf32>
    %588 = arith.mulf %586, %587 : vector<8x32xf32>
    %589 = vector.broadcast %570 : vector<1x32xf32> to vector<8x32xf32>
    %590 = arith.addf %588, %589 : vector<8x32xf32>
    %591 = vector.broadcast %5 : vector<8x1xf32> to vector<8x32xf32>
    %592 = arith.mulf %590, %591 : vector<8x32xf32>
    %c0_258 = arith.constant 0 : index
    %c0_259 = arith.constant 0 : index
    %c0_260 = arith.constant 0 : index
    %593 = vector.load %arg20[%c0_258, %c0_259, %c0_260] : memref<2x1x64xf32, #tpu.memory_space<vmem>>, vector<1x1x64xf32>
    %594 = vector.shape_cast %593 : vector<1x1x64xf32> to vector<1x64xf32>
    %c1_261 = arith.constant 1 : index
    %c0_262 = arith.constant 0 : index
    %595 = vector.load %arg28[%c1_261, %c0_262] : memref<10x32xf32, #tpu.memory_space<vmem>>, vector<8x32xf32>
    tpu.vector_store %arg28[%c1_261, %c0_262], %592 {strides = array<i32>} : memref<10x32xf32, #tpu.memory_space<vmem>>, vector<8x32xf32>,
    %c0_263 = arith.constant 0 : index
    %c0_264 = arith.constant 0 : index
    %596 = vector.load %arg28[%c0_263, %c0_264] : memref<10x32xf32, #tpu.memory_space<vmem>>, vector<8x32xf32>
    %597 = arith.truncf %596 : vector<8x32xf32> to vector<8x32xbf16>
    %c0_265 = arith.constant 0 : index
    %c0_266 = arith.constant 0 : index
    %c0_267 = arith.constant 0 : index
    %c0_268 = arith.constant 0 : index
    %598 = vector.load %arg19[%c0_265, %c0_266, %c0_267, %c0_268] : memref<2x3x64x32xbf16, #tpu.memory_space<vmem>>, vector<1x1x64x32xbf16>
    %599 = vector.shape_cast %598 : vector<1x1x64x32xbf16> to vector<64x32xbf16>
    %cst_269 = arith.constant dense<0.000000e+00> : vector<8x64xf32>
    %600 = tpu.matmul %597, %599, %cst_269 {dimension_numbers = #tpu.dot_dimension_numbers<[1], [1], [0], [0], [0, 0, 1, 0], [], []>} : vector<8x32xbf16>, vector<64x32xbf16>, vector<8x64xf32> -> vector<8x64xf32>
    %c1_270 = arith.constant 1 : index
    %c0_271 = arith.constant 0 : index
    %601 = vector.load %arg28[%c1_270, %c0_271] : memref<10x32xf32, #tpu.memory_space<vmem>>, vector<8x32xf32>
    %602 = arith.truncf %601 : vector<8x32xf32> to vector<8x32xbf16>
    %c0_272 = arith.constant 0 : index
    %c1_273 = arith.constant 1 : index
    %c0_274 = arith.constant 0 : index
    %c0_275 = arith.constant 0 : index
    %603 = vector.load %arg19[%c0_272, %c1_273, %c0_274, %c0_275] : memref<2x3x64x32xbf16, #tpu.memory_space<vmem>>, vector<1x1x64x32xbf16>
    %604 = vector.shape_cast %603 : vector<1x1x64x32xbf16> to vector<64x32xbf16>
    %cst_276 = arith.constant dense<0.000000e+00> : vector<8x64xf32>
    %605 = tpu.matmul %602, %604, %cst_276 {dimension_numbers = #tpu.dot_dimension_numbers<[1], [1], [0], [0], [0, 0, 1, 0], [], []>} : vector<8x32xbf16>, vector<64x32xbf16>, vector<8x64xf32> -> vector<8x64xf32>
    %606 = arith.addf %600, %605 : vector<8x64xf32>
    %c2 = arith.constant 2 : index
    %c0_277 = arith.constant 0 : index
    %607 = vector.load %arg28[%c2, %c0_277] : memref<10x32xf32, #tpu.memory_space<vmem>>, vector<8x32xf32>
    %608 = arith.truncf %607 : vector<8x32xf32> to vector<8x32xbf16>
    %c0_278 = arith.constant 0 : index
    %c2_279 = arith.constant 2 : index
    %c0_280 = arith.constant 0 : index
    %c0_281 = arith.constant 0 : index
    %609 = vector.load %arg19[%c0_278, %c2_279, %c0_280, %c0_281] : memref<2x3x64x32xbf16, #tpu.memory_space<vmem>>, vector<1x1x64x32xbf16>
    %610 = vector.shape_cast %609 : vector<1x1x64x32xbf16> to vector<64x32xbf16>
    %cst_282 = arith.constant dense<0.000000e+00> : vector<8x64xf32>
    %611 = tpu.matmul %608, %610, %cst_282 {dimension_numbers = #tpu.dot_dimension_numbers<[1], [1], [0], [0], [0, 0, 1, 0], [], []>} : vector<8x32xbf16>, vector<64x32xbf16>, vector<8x64xf32> -> vector<8x64xf32>
    %612 = arith.addf %606, %611 : vector<8x64xf32>
    %613 = vector.broadcast %594 : vector<1x64xf32> to vector<8x64xf32>
    %614 = arith.addf %612, %613 : vector<8x64xf32>
    %cst_283 = arith.constant 0.000000e+00 : f32
    %615 = vector.broadcast %cst_283 : f32 to vector<8x64xf32>
    %616 = arith.maximumf %614, %615 : vector<8x64xf32>
    %617 = vector.broadcast %5 : vector<8x1xf32> to vector<8x64xf32>
    %618 = arith.mulf %616, %617 : vector<8x64xf32>
    %c0_284 = arith.constant 0 : index
    %c0_285 = arith.constant 0 : index
    %c0_286 = arith.constant 0 : index
    %619 = vector.load %arg22[%c0_284, %c0_285, %c0_286] : memref<2x1x32xf32, #tpu.memory_space<vmem>>, vector<1x1x32xf32>
    %620 = vector.shape_cast %619 : vector<1x1x32xf32> to vector<1x32xf32>
    %c1_287 = arith.constant 1 : index
    %c0_288 = arith.constant 0 : index
    %621 = vector.load %arg29[%c1_287, %c0_288] : memref<10x64xf32, #tpu.memory_space<vmem>>, vector<8x64xf32>
    tpu.vector_store %arg29[%c1_287, %c0_288], %618 {strides = array<i32>} : memref<10x64xf32, #tpu.memory_space<vmem>>, vector<8x64xf32>,
    %c0_289 = arith.constant 0 : index
    %c0_290 = arith.constant 0 : index
    %622 = vector.load %arg29[%c0_289, %c0_290] : memref<10x64xf32, #tpu.memory_space<vmem>>, vector<8x64xf32>
    %623 = arith.truncf %622 : vector<8x64xf32> to vector<8x64xbf16>
    %c0_291 = arith.constant 0 : index
    %c0_292 = arith.constant 0 : index
    %c0_293 = arith.constant 0 : index
    %c0_294 = arith.constant 0 : index
    %624 = vector.load %arg21[%c0_291, %c0_292, %c0_293, %c0_294] : memref<2x3x32x64xbf16, #tpu.memory_space<vmem>>, vector<1x1x32x64xbf16>
    %625 = vector.shape_cast %624 : vector<1x1x32x64xbf16> to vector<32x64xbf16>
    %cst_295 = arith.constant dense<0.000000e+00> : vector<8x32xf32>
    %626 = tpu.matmul %623, %625, %cst_295 {dimension_numbers = #tpu.dot_dimension_numbers<[1], [1], [0], [0], [0, 0, 1, 0], [], []>} : vector<8x64xbf16>, vector<32x64xbf16>, vector<8x32xf32> -> vector<8x32xf32>
    %c1_296 = arith.constant 1 : index
    %c0_297 = arith.constant 0 : index
    %627 = vector.load %arg29[%c1_296, %c0_297] : memref<10x64xf32, #tpu.memory_space<vmem>>, vector<8x64xf32>
    %628 = arith.truncf %627 : vector<8x64xf32> to vector<8x64xbf16>
    %c0_298 = arith.constant 0 : index
    %c1_299 = arith.constant 1 : index
    %c0_300 = arith.constant 0 : index
    %c0_301 = arith.constant 0 : index
    %629 = vector.load %arg21[%c0_298, %c1_299, %c0_300, %c0_301] : memref<2x3x32x64xbf16, #tpu.memory_space<vmem>>, vector<1x1x32x64xbf16>
    %630 = vector.shape_cast %629 : vector<1x1x32x64xbf16> to vector<32x64xbf16>
    %cst_302 = arith.constant dense<0.000000e+00> : vector<8x32xf32>
    %631 = tpu.matmul %628, %630, %cst_302 {dimension_numbers = #tpu.dot_dimension_numbers<[1], [1], [0], [0], [0, 0, 1, 0], [], []>} : vector<8x64xbf16>, vector<32x64xbf16>, vector<8x32xf32> -> vector<8x32xf32>
    %632 = arith.addf %626, %631 : vector<8x32xf32>
    %c2_303 = arith.constant 2 : index
    %c0_304 = arith.constant 0 : index
    %633 = vector.load %arg29[%c2_303, %c0_304] : memref<10x64xf32, #tpu.memory_space<vmem>>, vector<8x64xf32>
    %634 = arith.truncf %633 : vector<8x64xf32> to vector<8x64xbf16>
    %c0_305 = arith.constant 0 : index
    %c2_306 = arith.constant 2 : index
    %c0_307 = arith.constant 0 : index
    %c0_308 = arith.constant 0 : index
    %635 = vector.load %arg21[%c0_305, %c2_306, %c0_307, %c0_308] : memref<2x3x32x64xbf16, #tpu.memory_space<vmem>>, vector<1x1x32x64xbf16>
    %636 = vector.shape_cast %635 : vector<1x1x32x64xbf16> to vector<32x64xbf16>
    %cst_309 = arith.constant dense<0.000000e+00> : vector<8x32xf32>
    %637 = tpu.matmul %634, %636, %cst_309 {dimension_numbers = #tpu.dot_dimension_numbers<[1], [1], [0], [0], [0, 0, 1, 0], [], []>} : vector<8x64xbf16>, vector<32x64xbf16>, vector<8x32xf32> -> vector<8x32xf32>
    %638 = arith.addf %632, %637 : vector<8x32xf32>
    %639 = vector.broadcast %620 : vector<1x32xf32> to vector<8x32xf32>
    %640 = arith.addf %638, %639 : vector<8x32xf32>
    %641 = vector.broadcast %5 : vector<8x1xf32> to vector<8x32xf32>
    %642 = arith.mulf %640, %641 : vector<8x32xf32>
    %643 = arith.addf %590, %642 : vector<8x32xf32>
    %c0_310 = arith.constant 0 : index
    %c0_311 = arith.constant 0 : index
    %c0_312 = arith.constant 0 : index
    %644 = vector.load %arg23[%c0_310, %c0_311, %c0_312] : memref<2x1x32xf32, #tpu.memory_space<vmem>>, vector<1x1x32xf32>
    %645 = vector.shape_cast %644 : vector<1x1x32xf32> to vector<1x32xf32>
    %c0_313 = arith.constant 0 : index
    %c0_314 = arith.constant 0 : index
    %c0_315 = arith.constant 0 : index
    %646 = vector.load %arg24[%c0_313, %c0_314, %c0_315] : memref<2x1x32xf32, #tpu.memory_space<vmem>>, vector<1x1x32xf32>
    %647 = vector.shape_cast %646 : vector<1x1x32xf32> to vector<1x32xf32>
    %cst_316 = arith.constant dense<0.000000e+00> : vector<8xf32>
    %648 = vector.multi_reduction <add>, %643, %cst_316 [1] : vector<8x32xf32> to vector<8xf32>
    %649 = vector.shape_cast %648 : vector<8xf32> to vector<8x1xf32>
    %cst_317 = arith.constant 3.200000e+01 : f32
    %650 = vector.broadcast %cst_317 : f32 to vector<8x1xf32>
    %651 = arith.divf %649, %650 : vector<8x1xf32>
    %652 = vector.broadcast %651 : vector<8x1xf32> to vector<8x32xf32>
    %653 = arith.subf %643, %652 : vector<8x32xf32>
    %654 = arith.mulf %653, %653 : vector<8x32xf32>
    %cst_318 = arith.constant dense<0.000000e+00> : vector<8xf32>
    %655 = vector.multi_reduction <add>, %654, %cst_318 [1] : vector<8x32xf32> to vector<8xf32>
    %656 = vector.shape_cast %655 : vector<8xf32> to vector<8x1xf32>
    %cst_319 = arith.constant 3.200000e+01 : f32
    %657 = vector.broadcast %cst_319 : f32 to vector<8x1xf32>
    %658 = arith.divf %656, %657 : vector<8x1xf32>
    %cst_320 = arith.constant 9.99999974E-6 : f32
    %659 = vector.broadcast %cst_320 : f32 to vector<8x1xf32>
    %660 = arith.addf %658, %659 : vector<8x1xf32>
    %661 = math.rsqrt %660 : vector<8x1xf32>
    %662 = vector.broadcast %661 : vector<8x1xf32> to vector<8x32xf32>
    %663 = arith.mulf %653, %662 : vector<8x32xf32>
    %664 = vector.broadcast %645 : vector<1x32xf32> to vector<8x32xf32>
    %665 = arith.mulf %663, %664 : vector<8x32xf32>
    %666 = vector.broadcast %647 : vector<1x32xf32> to vector<8x32xf32>
    %667 = arith.addf %665, %666 : vector<8x32xf32>
    %668 = arith.truncf %667 : vector<8x32xf32> to vector<8x32xbf16>
    %c1_321 = arith.constant 1 : index
    %c0_322 = arith.constant 0 : index
    %c0_323 = arith.constant 0 : index
    %669 = vector.load %arg15[%c1_321, %c0_322, %c0_323] : memref<2x15x16xbf16, #tpu.memory_space<vmem>>, vector<1x15x16xbf16>
    %670 = vector.shape_cast %669 : vector<1x15x16xbf16> to vector<15x16xbf16>
    %c1_324 = arith.constant 1 : index
    %c0_325 = arith.constant 0 : index
    %c0_326 = arith.constant 0 : index
    %671 = vector.load %arg16[%c1_324, %c0_325, %c0_326] : memref<2x15x16xbf16, #tpu.memory_space<vmem>>, vector<1x15x16xbf16>
    %672 = vector.shape_cast %671 : vector<1x15x16xbf16> to vector<15x16xbf16>
    %c1_327 = arith.constant 1 : index
    %c0_328 = arith.constant 0 : index
    %c0_329 = arith.constant 0 : index
    %c0_330 = arith.constant 0 : index
    %673 = vector.load %arg7[%c1_327, %c0_328, %c0_329, %c0_330] : memref<2x2x16x32xbf16, #tpu.memory_space<vmem>>, vector<1x1x16x32xbf16>
    %674 = vector.shape_cast %673 : vector<1x1x16x32xbf16> to vector<16x32xbf16>
    %cst_331 = arith.constant dense<0.000000e+00> : vector<8x16xf32>
    %675 = tpu.matmul %668, %674, %cst_331 {dimension_numbers = #tpu.dot_dimension_numbers<[1], [1], [0], [0], [0, 0, 1, 0], [], []>} : vector<8x32xbf16>, vector<16x32xbf16>, vector<8x16xf32> -> vector<8x16xf32>
    %c1_332 = arith.constant 1 : index
    %c0_333 = arith.constant 0 : index
    %c0_334 = arith.constant 0 : index
    %c0_335 = arith.constant 0 : index
    %676 = vector.load %arg8[%c1_332, %c0_333, %c0_334, %c0_335] : memref<2x2x1x16xf32, #tpu.memory_space<vmem>>, vector<1x1x1x16xf32>
    %677 = vector.shape_cast %676 : vector<1x1x1x16xf32> to vector<1x16xf32>
    %678 = vector.broadcast %677 : vector<1x16xf32> to vector<8x16xf32>
    %679 = arith.addf %675, %678 : vector<8x16xf32>
    %c1_336 = arith.constant 1 : index
    %c0_337 = arith.constant 0 : index
    %c0_338 = arith.constant 0 : index
    %c0_339 = arith.constant 0 : index
    %680 = vector.load %arg9[%c1_336, %c0_337, %c0_338, %c0_339] : memref<2x2x16x32xbf16, #tpu.memory_space<vmem>>, vector<1x1x16x32xbf16>
    %681 = vector.shape_cast %680 : vector<1x1x16x32xbf16> to vector<16x32xbf16>
    %cst_340 = arith.constant dense<0.000000e+00> : vector<8x16xf32>
    %682 = tpu.matmul %668, %681, %cst_340 {dimension_numbers = #tpu.dot_dimension_numbers<[1], [1], [0], [0], [0, 0, 1, 0], [], []>} : vector<8x32xbf16>, vector<16x32xbf16>, vector<8x16xf32> -> vector<8x16xf32>
    %c1_341 = arith.constant 1 : index
    %c0_342 = arith.constant 0 : index
    %c0_343 = arith.constant 0 : index
    %c0_344 = arith.constant 0 : index
    %683 = vector.load %arg10[%c1_341, %c0_342, %c0_343, %c0_344] : memref<2x2x1x16xf32, #tpu.memory_space<vmem>>, vector<1x1x1x16xf32>
    %684 = vector.shape_cast %683 : vector<1x1x1x16xf32> to vector<1x16xf32>
    %685 = vector.broadcast %684 : vector<1x16xf32> to vector<8x16xf32>
    %686 = arith.addf %682, %685 : vector<8x16xf32>
    %c1_345 = arith.constant 1 : index
    %c0_346 = arith.constant 0 : index
    %c0_347 = arith.constant 0 : index
    %c0_348 = arith.constant 0 : index
    %687 = vector.load %arg11[%c1_345, %c0_346, %c0_347, %c0_348] : memref<2x2x16x32xbf16, #tpu.memory_space<vmem>>, vector<1x1x16x32xbf16>
    %688 = vector.shape_cast %687 : vector<1x1x16x32xbf16> to vector<16x32xbf16>
    %cst_349 = arith.constant dense<0.000000e+00> : vector<8x16xf32>
    %689 = tpu.matmul %668, %688, %cst_349 {dimension_numbers = #tpu.dot_dimension_numbers<[1], [1], [0], [0], [0, 0, 1, 0], [], []>} : vector<8x32xbf16>, vector<16x32xbf16>, vector<8x16xf32> -> vector<8x16xf32>
    %c1_350 = arith.constant 1 : index
    %c0_351 = arith.constant 0 : index
    %c0_352 = arith.constant 0 : index
    %c0_353 = arith.constant 0 : index
    %690 = vector.load %arg12[%c1_350, %c0_351, %c0_352, %c0_353] : memref<2x2x1x16xf32, #tpu.memory_space<vmem>>, vector<1x1x1x16xf32>
    %691 = vector.shape_cast %690 : vector<1x1x1x16xf32> to vector<1x16xf32>
    %692 = vector.broadcast %691 : vector<1x16xf32> to vector<8x16xf32>
    %693 = arith.addf %689, %692 : vector<8x16xf32>
    %cst_354 = arith.constant 2.500000e-01 : f32
    %694 = vector.broadcast %cst_354 : f32 to vector<8x16xf32>
    %695 = arith.mulf %679, %694 : vector<8x16xf32>
    %696 = arith.truncf %695 : vector<8x16xf32> to vector<8x16xbf16>
    %697 = arith.truncf %686 : vector<8x16xf32> to vector<8x16xbf16>
    %cst_355 = arith.constant dense<0.000000e+00> : vector<8x8xf32>
    %698 = tpu.matmul %696, %697, %cst_355 {dimension_numbers = #tpu.dot_dimension_numbers<[1], [1], [0], [0], [0, 0, 1, 0], [], []>} : vector<8x16xbf16>, vector<8x16xbf16>, vector<8x8xf32> -> vector<8x8xf32>
    %699 = arith.addf %698, %14 : vector<8x8xf32>
    %cst_356 = arith.constant dense<0.000000e+00> : vector<8x15xf32>
    %700 = tpu.matmul %696, %670, %cst_356 {dimension_numbers = #tpu.dot_dimension_numbers<[1], [1], [0], [0], [0, 0, 1, 0], [], []>} : vector<8x16xbf16>, vector<15x16xbf16>, vector<8x15xf32> -> vector<8x15xf32>
    %c-7_i32_357 = arith.constant -7 : i32
    %701 = vector.broadcast %c-7_i32_357 : i32 to vector<8x8xi32>
    %702 = arith.cmpi eq, %17, %701 : vector<8x8xi32>
    %703 = vector.extract_strided_slice %700 {offsets = [0, 0], sizes = [8, 1], strides = [1, 1]} : vector<8x15xf32> to vector<8x1xf32>
    %cst_358 = arith.constant 0.000000e+00 : f32
    %704 = vector.shape_cast %703 : vector<8x1xf32> to vector<8x1xf32>
    %705 = vector.broadcast %704 : vector<8x1xf32> to vector<8x8xf32>
    %706 = vector.broadcast %cst_358 : f32 to vector<8x8xf32>
    %707 = arith.select %702, %705, %706 : vector<8x8xi1>, vector<8x8xf32>
    %708 = arith.addf %699, %707 : vector<8x8xf32>
    %c-6_i32_359 = arith.constant -6 : i32
    %709 = vector.broadcast %c-6_i32_359 : i32 to vector<8x8xi32>
    %710 = arith.cmpi eq, %17, %709 : vector<8x8xi32>
    %711 = vector.extract_strided_slice %700 {offsets = [0, 1], sizes = [8, 1], strides = [1, 1]} : vector<8x15xf32> to vector<8x1xf32>
    %cst_360 = arith.constant 0.000000e+00 : f32
    %712 = vector.shape_cast %711 : vector<8x1xf32> to vector<8x1xf32>
    %713 = vector.broadcast %712 : vector<8x1xf32> to vector<8x8xf32>
    %714 = vector.broadcast %cst_360 : f32 to vector<8x8xf32>
    %715 = arith.select %710, %713, %714 : vector<8x8xi1>, vector<8x8xf32>
    %716 = arith.addf %708, %715 : vector<8x8xf32>
    %c-5_i32_361 = arith.constant -5 : i32
    %717 = vector.broadcast %c-5_i32_361 : i32 to vector<8x8xi32>
    %718 = arith.cmpi eq, %17, %717 : vector<8x8xi32>
    %719 = vector.extract_strided_slice %700 {offsets = [0, 2], sizes = [8, 1], strides = [1, 1]} : vector<8x15xf32> to vector<8x1xf32>
    %cst_362 = arith.constant 0.000000e+00 : f32
    %720 = vector.shape_cast %719 : vector<8x1xf32> to vector<8x1xf32>
    %721 = vector.broadcast %720 : vector<8x1xf32> to vector<8x8xf32>
    %722 = vector.broadcast %cst_362 : f32 to vector<8x8xf32>
    %723 = arith.select %718, %721, %722 : vector<8x8xi1>, vector<8x8xf32>
    %724 = arith.addf %716, %723 : vector<8x8xf32>
    %c-4_i32_363 = arith.constant -4 : i32
    %725 = vector.broadcast %c-4_i32_363 : i32 to vector<8x8xi32>
    %726 = arith.cmpi eq, %17, %725 : vector<8x8xi32>
    %727 = vector.extract_strided_slice %700 {offsets = [0, 3], sizes = [8, 1], strides = [1, 1]} : vector<8x15xf32> to vector<8x1xf32>
    %cst_364 = arith.constant 0.000000e+00 : f32
    %728 = vector.shape_cast %727 : vector<8x1xf32> to vector<8x1xf32>
    %729 = vector.broadcast %728 : vector<8x1xf32> to vector<8x8xf32>
    %730 = vector.broadcast %cst_364 : f32 to vector<8x8xf32>
    %731 = arith.select %726, %729, %730 : vector<8x8xi1>, vector<8x8xf32>
    %732 = arith.addf %724, %731 : vector<8x8xf32>
    %c-3_i32_365 = arith.constant -3 : i32
    %733 = vector.broadcast %c-3_i32_365 : i32 to vector<8x8xi32>
    %734 = arith.cmpi eq, %17, %733 : vector<8x8xi32>
    %735 = vector.extract_strided_slice %700 {offsets = [0, 4], sizes = [8, 1], strides = [1, 1]} : vector<8x15xf32> to vector<8x1xf32>
    %cst_366 = arith.constant 0.000000e+00 : f32
    %736 = vector.shape_cast %735 : vector<8x1xf32> to vector<8x1xf32>
    %737 = vector.broadcast %736 : vector<8x1xf32> to vector<8x8xf32>
    %738 = vector.broadcast %cst_366 : f32 to vector<8x8xf32>
    %739 = arith.select %734, %737, %738 : vector<8x8xi1>, vector<8x8xf32>
    %740 = arith.addf %732, %739 : vector<8x8xf32>
    %c-2_i32_367 = arith.constant -2 : i32
    %741 = vector.broadcast %c-2_i32_367 : i32 to vector<8x8xi32>
    %742 = arith.cmpi eq, %17, %741 : vector<8x8xi32>
    %743 = vector.extract_strided_slice %700 {offsets = [0, 5], sizes = [8, 1], strides = [1, 1]} : vector<8x15xf32> to vector<8x1xf32>
    %cst_368 = arith.constant 0.000000e+00 : f32
    %744 = vector.shape_cast %743 : vector<8x1xf32> to vector<8x1xf32>
    %745 = vector.broadcast %744 : vector<8x1xf32> to vector<8x8xf32>
    %746 = vector.broadcast %cst_368 : f32 to vector<8x8xf32>
    %747 = arith.select %742, %745, %746 : vector<8x8xi1>, vector<8x8xf32>
    %748 = arith.addf %740, %747 : vector<8x8xf32>
    %c-1_i32_369 = arith.constant -1 : i32
    %749 = vector.broadcast %c-1_i32_369 : i32 to vector<8x8xi32>
    %750 = arith.cmpi eq, %17, %749 : vector<8x8xi32>
    %751 = vector.extract_strided_slice %700 {offsets = [0, 6], sizes = [8, 1], strides = [1, 1]} : vector<8x15xf32> to vector<8x1xf32>
    %cst_370 = arith.constant 0.000000e+00 : f32
    %752 = vector.shape_cast %751 : vector<8x1xf32> to vector<8x1xf32>
    %753 = vector.broadcast %752 : vector<8x1xf32> to vector<8x8xf32>
    %754 = vector.broadcast %cst_370 : f32 to vector<8x8xf32>
    %755 = arith.select %750, %753, %754 : vector<8x8xi1>, vector<8x8xf32>
    %756 = arith.addf %748, %755 : vector<8x8xf32>
    %c0_i32_371 = arith.constant 0 : i32
    %757 = vector.broadcast %c0_i32_371 : i32 to vector<8x8xi32>
    %758 = arith.cmpi eq, %17, %757 : vector<8x8xi32>
    %759 = vector.extract_strided_slice %700 {offsets = [0, 7], sizes = [8, 1], strides = [1, 1]} : vector<8x15xf32> to vector<8x1xf32>
    %cst_372 = arith.constant 0.000000e+00 : f32
    %760 = vector.shape_cast %759 : vector<8x1xf32> to vector<8x1xf32>
    %761 = vector.broadcast %760 : vector<8x1xf32> to vector<8x8xf32>
    %762 = vector.broadcast %cst_372 : f32 to vector<8x8xf32>
    %763 = arith.select %758, %761, %762 : vector<8x8xi1>, vector<8x8xf32>
    %764 = arith.addf %756, %763 : vector<8x8xf32>
    %c1_i32_373 = arith.constant 1 : i32
    %765 = vector.broadcast %c1_i32_373 : i32 to vector<8x8xi32>
    %766 = arith.cmpi eq, %17, %765 : vector<8x8xi32>
    %767 = vector.extract_strided_slice %700 {offsets = [0, 8], sizes = [8, 1], strides = [1, 1]} : vector<8x15xf32> to vector<8x1xf32>
    %cst_374 = arith.constant 0.000000e+00 : f32
    %768 = vector.shape_cast %767 : vector<8x1xf32> to vector<8x1xf32>
    %769 = vector.broadcast %768 : vector<8x1xf32> to vector<8x8xf32>
    %770 = vector.broadcast %cst_374 : f32 to vector<8x8xf32>
    %771 = arith.select %766, %769, %770 : vector<8x8xi1>, vector<8x8xf32>
    %772 = arith.addf %764, %771 : vector<8x8xf32>
    %c2_i32_375 = arith.constant 2 : i32
    %773 = vector.broadcast %c2_i32_375 : i32 to vector<8x8xi32>
    %774 = arith.cmpi eq, %17, %773 : vector<8x8xi32>
    %775 = vector.extract_strided_slice %700 {offsets = [0, 9], sizes = [8, 1], strides = [1, 1]} : vector<8x15xf32> to vector<8x1xf32>
    %cst_376 = arith.constant 0.000000e+00 : f32
    %776 = vector.shape_cast %775 : vector<8x1xf32> to vector<8x1xf32>
    %777 = vector.broadcast %776 : vector<8x1xf32> to vector<8x8xf32>
    %778 = vector.broadcast %cst_376 : f32 to vector<8x8xf32>
    %779 = arith.select %774, %777, %778 : vector<8x8xi1>, vector<8x8xf32>
    %780 = arith.addf %772, %779 : vector<8x8xf32>
    %c3_i32_377 = arith.constant 3 : i32
    %781 = vector.broadcast %c3_i32_377 : i32 to vector<8x8xi32>
    %782 = arith.cmpi eq, %17, %781 : vector<8x8xi32>
    %783 = vector.extract_strided_slice %700 {offsets = [0, 10], sizes = [8, 1], strides = [1, 1]} : vector<8x15xf32> to vector<8x1xf32>
    %cst_378 = arith.constant 0.000000e+00 : f32
    %784 = vector.shape_cast %783 : vector<8x1xf32> to vector<8x1xf32>
    %785 = vector.broadcast %784 : vector<8x1xf32> to vector<8x8xf32>
    %786 = vector.broadcast %cst_378 : f32 to vector<8x8xf32>
    %787 = arith.select %782, %785, %786 : vector<8x8xi1>, vector<8x8xf32>
    %788 = arith.addf %780, %787 : vector<8x8xf32>
    %c4_i32_379 = arith.constant 4 : i32
    %789 = vector.broadcast %c4_i32_379 : i32 to vector<8x8xi32>
    %790 = arith.cmpi eq, %17, %789 : vector<8x8xi32>
    %791 = vector.extract_strided_slice %700 {offsets = [0, 11], sizes = [8, 1], strides = [1, 1]} : vector<8x15xf32> to vector<8x1xf32>
    %cst_380 = arith.constant 0.000000e+00 : f32
    %792 = vector.shape_cast %791 : vector<8x1xf32> to vector<8x1xf32>
    %793 = vector.broadcast %792 : vector<8x1xf32> to vector<8x8xf32>
    %794 = vector.broadcast %cst_380 : f32 to vector<8x8xf32>
    %795 = arith.select %790, %793, %794 : vector<8x8xi1>, vector<8x8xf32>
    %796 = arith.addf %788, %795 : vector<8x8xf32>
    %c5_i32_381 = arith.constant 5 : i32
    %797 = vector.broadcast %c5_i32_381 : i32 to vector<8x8xi32>
    %798 = arith.cmpi eq, %17, %797 : vector<8x8xi32>
    %799 = vector.extract_strided_slice %700 {offsets = [0, 12], sizes = [8, 1], strides = [1, 1]} : vector<8x15xf32> to vector<8x1xf32>
    %cst_382 = arith.constant 0.000000e+00 : f32
    %800 = vector.shape_cast %799 : vector<8x1xf32> to vector<8x1xf32>
    %801 = vector.broadcast %800 : vector<8x1xf32> to vector<8x8xf32>
    %802 = vector.broadcast %cst_382 : f32 to vector<8x8xf32>
    %803 = arith.select %798, %801, %802 : vector<8x8xi1>, vector<8x8xf32>
    %804 = arith.addf %796, %803 : vector<8x8xf32>
    %c6_i32_383 = arith.constant 6 : i32
    %805 = vector.broadcast %c6_i32_383 : i32 to vector<8x8xi32>
    %806 = arith.cmpi eq, %17, %805 : vector<8x8xi32>
    %807 = vector.extract_strided_slice %700 {offsets = [0, 13], sizes = [8, 1], strides = [1, 1]} : vector<8x15xf32> to vector<8x1xf32>
    %cst_384 = arith.constant 0.000000e+00 : f32
    %808 = vector.shape_cast %807 : vector<8x1xf32> to vector<8x1xf32>
    %809 = vector.broadcast %808 : vector<8x1xf32> to vector<8x8xf32>
    %810 = vector.broadcast %cst_384 : f32 to vector<8x8xf32>
    %811 = arith.select %806, %809, %810 : vector<8x8xi1>, vector<8x8xf32>
    %812 = arith.addf %804, %811 : vector<8x8xf32>
    %c7_i32_385 = arith.constant 7 : i32
    %813 = vector.broadcast %c7_i32_385 : i32 to vector<8x8xi32>
    %814 = arith.cmpi eq, %17, %813 : vector<8x8xi32>
    %815 = vector.extract_strided_slice %700 {offsets = [0, 14], sizes = [8, 1], strides = [1, 1]} : vector<8x15xf32> to vector<8x1xf32>
    %cst_386 = arith.constant 0.000000e+00 : f32
    %816 = vector.shape_cast %815 : vector<8x1xf32> to vector<8x1xf32>
    %817 = vector.broadcast %816 : vector<8x1xf32> to vector<8x8xf32>
    %818 = vector.broadcast %cst_386 : f32 to vector<8x8xf32>
    %819 = arith.select %814, %817, %818 : vector<8x8xi1>, vector<8x8xf32>
    %820 = arith.addf %812, %819 : vector<8x8xf32>
    %cst_387 = arith.constant dense<0xFF800000> : vector<8xf32>
    %821 = vector.multi_reduction <maximumf>, %820, %cst_387 [1] : vector<8x8xf32> to vector<8xf32>
    %822 = vector.shape_cast %821 : vector<8xf32> to vector<8x1xf32>
    %823 = vector.broadcast %822 : vector<8x1xf32> to vector<8x8xf32>
    %824 = arith.subf %820, %823 : vector<8x8xf32>
    %825 = math.exp %824 : vector<8x8xf32>
    %cst_388 = arith.constant dense<0.000000e+00> : vector<8xf32>
    %826 = vector.multi_reduction <add>, %825, %cst_388 [1] : vector<8x8xf32> to vector<8xf32>
    %827 = vector.shape_cast %826 : vector<8xf32> to vector<8x1xf32>
    %828 = tpu.reciprocal %827 {approx = true} : vector<8x1xf32> -> vector<8x1xf32>
    %829 = vector.broadcast %828 : vector<8x1xf32> to vector<8x8xf32>
    %830 = arith.mulf %825, %829 : vector<8x8xf32>
    %831 = arith.truncf %830 : vector<8x8xf32> to vector<8x8xbf16>
    %832 = arith.truncf %693 : vector<8x16xf32> to vector<8x16xbf16>
    %cst_389 = arith.constant dense<0.000000e+00> : vector<8x16xf32>
    %833 = tpu.matmul %831, %832, %cst_389 {dimension_numbers = #tpu.dot_dimension_numbers<[1], [0], [0], [1], [0, 0, 1, 1], [], []>} : vector<8x8xbf16>, vector<8x16xbf16>, vector<8x16xf32> -> vector<8x16xf32>
    %c-7_i32_390 = arith.constant -7 : i32
    %834 = vector.broadcast %c-7_i32_390 : i32 to vector<8x8xi32>
    %835 = arith.cmpi eq, %17, %834 : vector<8x8xi32>
    %cst_391 = arith.constant 0.000000e+00 : f32
    %836 = vector.broadcast %cst_391 : f32 to vector<8x8xf32>
    %837 = arith.select %835, %830, %836 : vector<8x8xi1>, vector<8x8xf32>
    %cst_392 = arith.constant dense<0.000000e+00> : vector<8xf32>
    %838 = vector.multi_reduction <add>, %837, %cst_392 [1] : vector<8x8xf32> to vector<8xf32>
    %839 = vector.shape_cast %838 : vector<8xf32> to vector<8x1xf32>
    %c-6_i32_393 = arith.constant -6 : i32
    %840 = vector.broadcast %c-6_i32_393 : i32 to vector<8x8xi32>
    %841 = arith.cmpi eq, %17, %840 : vector<8x8xi32>
    %cst_394 = arith.constant 0.000000e+00 : f32
    %842 = vector.broadcast %cst_394 : f32 to vector<8x8xf32>
    %843 = arith.select %841, %830, %842 : vector<8x8xi1>, vector<8x8xf32>
    %cst_395 = arith.constant dense<0.000000e+00> : vector<8xf32>
    %844 = vector.multi_reduction <add>, %843, %cst_395 [1] : vector<8x8xf32> to vector<8xf32>
    %845 = vector.shape_cast %844 : vector<8xf32> to vector<8x1xf32>
    %c-5_i32_396 = arith.constant -5 : i32
    %846 = vector.broadcast %c-5_i32_396 : i32 to vector<8x8xi32>
    %847 = arith.cmpi eq, %17, %846 : vector<8x8xi32>
    %cst_397 = arith.constant 0.000000e+00 : f32
    %848 = vector.broadcast %cst_397 : f32 to vector<8x8xf32>
    %849 = arith.select %847, %830, %848 : vector<8x8xi1>, vector<8x8xf32>
    %cst_398 = arith.constant dense<0.000000e+00> : vector<8xf32>
    %850 = vector.multi_reduction <add>, %849, %cst_398 [1] : vector<8x8xf32> to vector<8xf32>
    %851 = vector.shape_cast %850 : vector<8xf32> to vector<8x1xf32>
    %c-4_i32_399 = arith.constant -4 : i32
    %852 = vector.broadcast %c-4_i32_399 : i32 to vector<8x8xi32>
    %853 = arith.cmpi eq, %17, %852 : vector<8x8xi32>
    %cst_400 = arith.constant 0.000000e+00 : f32
    %854 = vector.broadcast %cst_400 : f32 to vector<8x8xf32>
    %855 = arith.select %853, %830, %854 : vector<8x8xi1>, vector<8x8xf32>
    %cst_401 = arith.constant dense<0.000000e+00> : vector<8xf32>
    %856 = vector.multi_reduction <add>, %855, %cst_401 [1] : vector<8x8xf32> to vector<8xf32>
    %857 = vector.shape_cast %856 : vector<8xf32> to vector<8x1xf32>
    %c-3_i32_402 = arith.constant -3 : i32
    %858 = vector.broadcast %c-3_i32_402 : i32 to vector<8x8xi32>
    %859 = arith.cmpi eq, %17, %858 : vector<8x8xi32>
    %cst_403 = arith.constant 0.000000e+00 : f32
    %860 = vector.broadcast %cst_403 : f32 to vector<8x8xf32>
    %861 = arith.select %859, %830, %860 : vector<8x8xi1>, vector<8x8xf32>
    %cst_404 = arith.constant dense<0.000000e+00> : vector<8xf32>
    %862 = vector.multi_reduction <add>, %861, %cst_404 [1] : vector<8x8xf32> to vector<8xf32>
    %863 = vector.shape_cast %862 : vector<8xf32> to vector<8x1xf32>
    %c-2_i32_405 = arith.constant -2 : i32
    %864 = vector.broadcast %c-2_i32_405 : i32 to vector<8x8xi32>
    %865 = arith.cmpi eq, %17, %864 : vector<8x8xi32>
    %cst_406 = arith.constant 0.000000e+00 : f32
    %866 = vector.broadcast %cst_406 : f32 to vector<8x8xf32>
    %867 = arith.select %865, %830, %866 : vector<8x8xi1>, vector<8x8xf32>
    %cst_407 = arith.constant dense<0.000000e+00> : vector<8xf32>
    %868 = vector.multi_reduction <add>, %867, %cst_407 [1] : vector<8x8xf32> to vector<8xf32>
    %869 = vector.shape_cast %868 : vector<8xf32> to vector<8x1xf32>
    %c-1_i32_408 = arith.constant -1 : i32
    %870 = vector.broadcast %c-1_i32_408 : i32 to vector<8x8xi32>
    %871 = arith.cmpi eq, %17, %870 : vector<8x8xi32>
    %cst_409 = arith.constant 0.000000e+00 : f32
    %872 = vector.broadcast %cst_409 : f32 to vector<8x8xf32>
    %873 = arith.select %871, %830, %872 : vector<8x8xi1>, vector<8x8xf32>
    %cst_410 = arith.constant dense<0.000000e+00> : vector<8xf32>
    %874 = vector.multi_reduction <add>, %873, %cst_410 [1] : vector<8x8xf32> to vector<8xf32>
    %875 = vector.shape_cast %874 : vector<8xf32> to vector<8x1xf32>
    %c0_i32_411 = arith.constant 0 : i32
    %876 = vector.broadcast %c0_i32_411 : i32 to vector<8x8xi32>
    %877 = arith.cmpi eq, %17, %876 : vector<8x8xi32>
    %cst_412 = arith.constant 0.000000e+00 : f32
    %878 = vector.broadcast %cst_412 : f32 to vector<8x8xf32>
    %879 = arith.select %877, %830, %878 : vector<8x8xi1>, vector<8x8xf32>
    %cst_413 = arith.constant dense<0.000000e+00> : vector<8xf32>
    %880 = vector.multi_reduction <add>, %879, %cst_413 [1] : vector<8x8xf32> to vector<8xf32>
    %881 = vector.shape_cast %880 : vector<8xf32> to vector<8x1xf32>
    %c1_i32_414 = arith.constant 1 : i32
    %882 = vector.broadcast %c1_i32_414 : i32 to vector<8x8xi32>
    %883 = arith.cmpi eq, %17, %882 : vector<8x8xi32>
    %cst_415 = arith.constant 0.000000e+00 : f32
    %884 = vector.broadcast %cst_415 : f32 to vector<8x8xf32>
    %885 = arith.select %883, %830, %884 : vector<8x8xi1>, vector<8x8xf32>
    %cst_416 = arith.constant dense<0.000000e+00> : vector<8xf32>
    %886 = vector.multi_reduction <add>, %885, %cst_416 [1] : vector<8x8xf32> to vector<8xf32>
    %887 = vector.shape_cast %886 : vector<8xf32> to vector<8x1xf32>
    %c2_i32_417 = arith.constant 2 : i32
    %888 = vector.broadcast %c2_i32_417 : i32 to vector<8x8xi32>
    %889 = arith.cmpi eq, %17, %888 : vector<8x8xi32>
    %cst_418 = arith.constant 0.000000e+00 : f32
    %890 = vector.broadcast %cst_418 : f32 to vector<8x8xf32>
    %891 = arith.select %889, %830, %890 : vector<8x8xi1>, vector<8x8xf32>
    %cst_419 = arith.constant dense<0.000000e+00> : vector<8xf32>
    %892 = vector.multi_reduction <add>, %891, %cst_419 [1] : vector<8x8xf32> to vector<8xf32>
    %893 = vector.shape_cast %892 : vector<8xf32> to vector<8x1xf32>
    %c3_i32_420 = arith.constant 3 : i32
    %894 = vector.broadcast %c3_i32_420 : i32 to vector<8x8xi32>
    %895 = arith.cmpi eq, %17, %894 : vector<8x8xi32>
    %cst_421 = arith.constant 0.000000e+00 : f32
    %896 = vector.broadcast %cst_421 : f32 to vector<8x8xf32>
    %897 = arith.select %895, %830, %896 : vector<8x8xi1>, vector<8x8xf32>
    %cst_422 = arith.constant dense<0.000000e+00> : vector<8xf32>
    %898 = vector.multi_reduction <add>, %897, %cst_422 [1] : vector<8x8xf32> to vector<8xf32>
    %899 = vector.shape_cast %898 : vector<8xf32> to vector<8x1xf32>
    %c4_i32_423 = arith.constant 4 : i32
    %900 = vector.broadcast %c4_i32_423 : i32 to vector<8x8xi32>
    %901 = arith.cmpi eq, %17, %900 : vector<8x8xi32>
    %cst_424 = arith.constant 0.000000e+00 : f32
    %902 = vector.broadcast %cst_424 : f32 to vector<8x8xf32>
    %903 = arith.select %901, %830, %902 : vector<8x8xi1>, vector<8x8xf32>
    %cst_425 = arith.constant dense<0.000000e+00> : vector<8xf32>
    %904 = vector.multi_reduction <add>, %903, %cst_425 [1] : vector<8x8xf32> to vector<8xf32>
    %905 = vector.shape_cast %904 : vector<8xf32> to vector<8x1xf32>
    %c5_i32_426 = arith.constant 5 : i32
    %906 = vector.broadcast %c5_i32_426 : i32 to vector<8x8xi32>
    %907 = arith.cmpi eq, %17, %906 : vector<8x8xi32>
    %cst_427 = arith.constant 0.000000e+00 : f32
    %908 = vector.broadcast %cst_427 : f32 to vector<8x8xf32>
    %909 = arith.select %907, %830, %908 : vector<8x8xi1>, vector<8x8xf32>
    %cst_428 = arith.constant dense<0.000000e+00> : vector<8xf32>
    %910 = vector.multi_reduction <add>, %909, %cst_428 [1] : vector<8x8xf32> to vector<8xf32>
    %911 = vector.shape_cast %910 : vector<8xf32> to vector<8x1xf32>
    %c6_i32_429 = arith.constant 6 : i32
    %912 = vector.broadcast %c6_i32_429 : i32 to vector<8x8xi32>
    %913 = arith.cmpi eq, %17, %912 : vector<8x8xi32>
    %cst_430 = arith.constant 0.000000e+00 : f32
    %914 = vector.broadcast %cst_430 : f32 to vector<8x8xf32>
    %915 = arith.select %913, %830, %914 : vector<8x8xi1>, vector<8x8xf32>
    %cst_431 = arith.constant dense<0.000000e+00> : vector<8xf32>
    %916 = vector.multi_reduction <add>, %915, %cst_431 [1] : vector<8x8xf32> to vector<8xf32>
    %917 = vector.shape_cast %916 : vector<8xf32> to vector<8x1xf32>
    %c7_i32_432 = arith.constant 7 : i32
    %918 = vector.broadcast %c7_i32_432 : i32 to vector<8x8xi32>
    %919 = arith.cmpi eq, %17, %918 : vector<8x8xi32>
    %cst_433 = arith.constant 0.000000e+00 : f32
    %920 = vector.broadcast %cst_433 : f32 to vector<8x8xf32>
    %921 = arith.select %919, %830, %920 : vector<8x8xi1>, vector<8x8xf32>
    %cst_434 = arith.constant dense<0.000000e+00> : vector<8xf32>
    %922 = vector.multi_reduction <add>, %921, %cst_434 [1] : vector<8x8xf32> to vector<8xf32>
    %923 = vector.shape_cast %922 : vector<8xf32> to vector<8x1xf32>
    %924 = tpu.concatenate %839, %845, %851, %857, %863, %869, %875, %881, %887, %893, %899, %905, %911, %917, %923 in 1 : vector<8x1xf32>, vector<8x1xf32>, vector<8x1xf32>, vector<8x1xf32>, vector<8x1xf32>, vector<8x1xf32>, vector<8x1xf32>, vector<8x1xf32>, vector<8x1xf32>, vector<8x1xf32>, vector<8x1xf32>, vector<8x1xf32>, vector<8x1xf32>, vector<8x1xf32>, vector<8x1xf32> -> vector<8x15xf32>
    %925 = arith.truncf %924 : vector<8x15xf32> to vector<8x15xbf16>
    %cst_435 = arith.constant dense<0.000000e+00> : vector<8x16xf32>
    %926 = tpu.matmul %925, %672, %cst_435 {dimension_numbers = #tpu.dot_dimension_numbers<[1], [0], [0], [1], [0, 0, 1, 1], [], []>} : vector<8x15xbf16>, vector<15x16xbf16>, vector<8x16xf32> -> vector<8x16xf32>
    %927 = arith.addf %833, %926 : vector<8x16xf32>
    %928 = arith.truncf %927 : vector<8x16xf32> to vector<8x16xbf16>
    %c1_436 = arith.constant 1 : index
    %c0_437 = arith.constant 0 : index
    %c0_438 = arith.constant 0 : index
    %c0_439 = arith.constant 0 : index
    %929 = vector.load %arg13[%c1_436, %c0_437, %c0_438, %c0_439] : memref<2x2x32x16xbf16, #tpu.memory_space<vmem>>, vector<1x1x32x16xbf16>
    %930 = vector.shape_cast %929 : vector<1x1x32x16xbf16> to vector<32x16xbf16>
    %cst_440 = arith.constant dense<0.000000e+00> : vector<8x32xf32>
    %931 = tpu.matmul %928, %930, %cst_440 {dimension_numbers = #tpu.dot_dimension_numbers<[1], [1], [0], [0], [0, 0, 1, 0], [], []>} : vector<8x16xbf16>, vector<32x16xbf16>, vector<8x32xf32> -> vector<8x32xf32>
    %c1_441 = arith.constant 1 : index
    %c1_442 = arith.constant 1 : index
    %c0_443 = arith.constant 0 : index
    %c0_444 = arith.constant 0 : index
    %932 = vector.load %arg7[%c1_441, %c1_442, %c0_443, %c0_444] : memref<2x2x16x32xbf16, #tpu.memory_space<vmem>>, vector<1x1x16x32xbf16>
    %933 = vector.shape_cast %932 : vector<1x1x16x32xbf16> to vector<16x32xbf16>
    %cst_445 = arith.constant dense<0.000000e+00> : vector<8x16xf32>
    %934 = tpu.matmul %668, %933, %cst_445 {dimension_numbers = #tpu.dot_dimension_numbers<[1], [1], [0], [0], [0, 0, 1, 0], [], []>} : vector<8x32xbf16>, vector<16x32xbf16>, vector<8x16xf32> -> vector<8x16xf32>
    %c1_446 = arith.constant 1 : index
    %c1_447 = arith.constant 1 : index
    %c0_448 = arith.constant 0 : index
    %c0_449 = arith.constant 0 : index
    %935 = vector.load %arg8[%c1_446, %c1_447, %c0_448, %c0_449] : memref<2x2x1x16xf32, #tpu.memory_space<vmem>>, vector<1x1x1x16xf32>
    %936 = vector.shape_cast %935 : vector<1x1x1x16xf32> to vector<1x16xf32>
    %937 = vector.broadcast %936 : vector<1x16xf32> to vector<8x16xf32>
    %938 = arith.addf %934, %937 : vector<8x16xf32>
    %c1_450 = arith.constant 1 : index
    %c1_451 = arith.constant 1 : index
    %c0_452 = arith.constant 0 : index
    %c0_453 = arith.constant 0 : index
    %939 = vector.load %arg9[%c1_450, %c1_451, %c0_452, %c0_453] : memref<2x2x16x32xbf16, #tpu.memory_space<vmem>>, vector<1x1x16x32xbf16>
    %940 = vector.shape_cast %939 : vector<1x1x16x32xbf16> to vector<16x32xbf16>
    %cst_454 = arith.constant dense<0.000000e+00> : vector<8x16xf32>
    %941 = tpu.matmul %668, %940, %cst_454 {dimension_numbers = #tpu.dot_dimension_numbers<[1], [1], [0], [0], [0, 0, 1, 0], [], []>} : vector<8x32xbf16>, vector<16x32xbf16>, vector<8x16xf32> -> vector<8x16xf32>
    %c1_455 = arith.constant 1 : index
    %c1_456 = arith.constant 1 : index
    %c0_457 = arith.constant 0 : index
    %c0_458 = arith.constant 0 : index
    %942 = vector.load %arg10[%c1_455, %c1_456, %c0_457, %c0_458] : memref<2x2x1x16xf32, #tpu.memory_space<vmem>>, vector<1x1x1x16xf32>
    %943 = vector.shape_cast %942 : vector<1x1x1x16xf32> to vector<1x16xf32>
    %944 = vector.broadcast %943 : vector<1x16xf32> to vector<8x16xf32>
    %945 = arith.addf %941, %944 : vector<8x16xf32>
    %c1_459 = arith.constant 1 : index
    %c1_460 = arith.constant 1 : index
    %c0_461 = arith.constant 0 : index
    %c0_462 = arith.constant 0 : index
    %946 = vector.load %arg11[%c1_459, %c1_460, %c0_461, %c0_462] : memref<2x2x16x32xbf16, #tpu.memory_space<vmem>>, vector<1x1x16x32xbf16>
    %947 = vector.shape_cast %946 : vector<1x1x16x32xbf16> to vector<16x32xbf16>
    %cst_463 = arith.constant dense<0.000000e+00> : vector<8x16xf32>
    %948 = tpu.matmul %668, %947, %cst_463 {dimension_numbers = #tpu.dot_dimension_numbers<[1], [1], [0], [0], [0, 0, 1, 0], [], []>} : vector<8x32xbf16>, vector<16x32xbf16>, vector<8x16xf32> -> vector<8x16xf32>
    %c1_464 = arith.constant 1 : index
    %c1_465 = arith.constant 1 : index
    %c0_466 = arith.constant 0 : index
    %c0_467 = arith.constant 0 : index
    %949 = vector.load %arg12[%c1_464, %c1_465, %c0_466, %c0_467] : memref<2x2x1x16xf32, #tpu.memory_space<vmem>>, vector<1x1x1x16xf32>
    %950 = vector.shape_cast %949 : vector<1x1x1x16xf32> to vector<1x16xf32>
    %951 = vector.broadcast %950 : vector<1x16xf32> to vector<8x16xf32>
    %952 = arith.addf %948, %951 : vector<8x16xf32>
    %cst_468 = arith.constant 2.500000e-01 : f32
    %953 = vector.broadcast %cst_468 : f32 to vector<8x16xf32>
    %954 = arith.mulf %938, %953 : vector<8x16xf32>
    %955 = arith.truncf %954 : vector<8x16xf32> to vector<8x16xbf16>
    %956 = arith.truncf %945 : vector<8x16xf32> to vector<8x16xbf16>
    %cst_469 = arith.constant dense<0.000000e+00> : vector<8x8xf32>
    %957 = tpu.matmul %955, %956, %cst_469 {dimension_numbers = #tpu.dot_dimension_numbers<[1], [1], [0], [0], [0, 0, 1, 0], [], []>} : vector<8x16xbf16>, vector<8x16xbf16>, vector<8x8xf32> -> vector<8x8xf32>
    %958 = arith.addf %957, %14 : vector<8x8xf32>
    %cst_470 = arith.constant dense<0.000000e+00> : vector<8x15xf32>
    %959 = tpu.matmul %955, %670, %cst_470 {dimension_numbers = #tpu.dot_dimension_numbers<[1], [1], [0], [0], [0, 0, 1, 0], [], []>} : vector<8x16xbf16>, vector<15x16xbf16>, vector<8x15xf32> -> vector<8x15xf32>
    %c-7_i32_471 = arith.constant -7 : i32
    %960 = vector.broadcast %c-7_i32_471 : i32 to vector<8x8xi32>
    %961 = arith.cmpi eq, %17, %960 : vector<8x8xi32>
    %962 = vector.extract_strided_slice %959 {offsets = [0, 0], sizes = [8, 1], strides = [1, 1]} : vector<8x15xf32> to vector<8x1xf32>
    %cst_472 = arith.constant 0.000000e+00 : f32
    %963 = vector.shape_cast %962 : vector<8x1xf32> to vector<8x1xf32>
    %964 = vector.broadcast %963 : vector<8x1xf32> to vector<8x8xf32>
    %965 = vector.broadcast %cst_472 : f32 to vector<8x8xf32>
    %966 = arith.select %961, %964, %965 : vector<8x8xi1>, vector<8x8xf32>
    %967 = arith.addf %958, %966 : vector<8x8xf32>
    %c-6_i32_473 = arith.constant -6 : i32
    %968 = vector.broadcast %c-6_i32_473 : i32 to vector<8x8xi32>
    %969 = arith.cmpi eq, %17, %968 : vector<8x8xi32>
    %970 = vector.extract_strided_slice %959 {offsets = [0, 1], sizes = [8, 1], strides = [1, 1]} : vector<8x15xf32> to vector<8x1xf32>
    %cst_474 = arith.constant 0.000000e+00 : f32
    %971 = vector.shape_cast %970 : vector<8x1xf32> to vector<8x1xf32>
    %972 = vector.broadcast %971 : vector<8x1xf32> to vector<8x8xf32>
    %973 = vector.broadcast %cst_474 : f32 to vector<8x8xf32>
    %974 = arith.select %969, %972, %973 : vector<8x8xi1>, vector<8x8xf32>
    %975 = arith.addf %967, %974 : vector<8x8xf32>
    %c-5_i32_475 = arith.constant -5 : i32
    %976 = vector.broadcast %c-5_i32_475 : i32 to vector<8x8xi32>
    %977 = arith.cmpi eq, %17, %976 : vector<8x8xi32>
    %978 = vector.extract_strided_slice %959 {offsets = [0, 2], sizes = [8, 1], strides = [1, 1]} : vector<8x15xf32> to vector<8x1xf32>
    %cst_476 = arith.constant 0.000000e+00 : f32
    %979 = vector.shape_cast %978 : vector<8x1xf32> to vector<8x1xf32>
    %980 = vector.broadcast %979 : vector<8x1xf32> to vector<8x8xf32>
    %981 = vector.broadcast %cst_476 : f32 to vector<8x8xf32>
    %982 = arith.select %977, %980, %981 : vector<8x8xi1>, vector<8x8xf32>
    %983 = arith.addf %975, %982 : vector<8x8xf32>
    %c-4_i32_477 = arith.constant -4 : i32
    %984 = vector.broadcast %c-4_i32_477 : i32 to vector<8x8xi32>
    %985 = arith.cmpi eq, %17, %984 : vector<8x8xi32>
    %986 = vector.extract_strided_slice %959 {offsets = [0, 3], sizes = [8, 1], strides = [1, 1]} : vector<8x15xf32> to vector<8x1xf32>
    %cst_478 = arith.constant 0.000000e+00 : f32
    %987 = vector.shape_cast %986 : vector<8x1xf32> to vector<8x1xf32>
    %988 = vector.broadcast %987 : vector<8x1xf32> to vector<8x8xf32>
    %989 = vector.broadcast %cst_478 : f32 to vector<8x8xf32>
    %990 = arith.select %985, %988, %989 : vector<8x8xi1>, vector<8x8xf32>
    %991 = arith.addf %983, %990 : vector<8x8xf32>
    %c-3_i32_479 = arith.constant -3 : i32
    %992 = vector.broadcast %c-3_i32_479 : i32 to vector<8x8xi32>
    %993 = arith.cmpi eq, %17, %992 : vector<8x8xi32>
    %994 = vector.extract_strided_slice %959 {offsets = [0, 4], sizes = [8, 1], strides = [1, 1]} : vector<8x15xf32> to vector<8x1xf32>
    %cst_480 = arith.constant 0.000000e+00 : f32
    %995 = vector.shape_cast %994 : vector<8x1xf32> to vector<8x1xf32>
    %996 = vector.broadcast %995 : vector<8x1xf32> to vector<8x8xf32>
    %997 = vector.broadcast %cst_480 : f32 to vector<8x8xf32>
    %998 = arith.select %993, %996, %997 : vector<8x8xi1>, vector<8x8xf32>
    %999 = arith.addf %991, %998 : vector<8x8xf32>
    %c-2_i32_481 = arith.constant -2 : i32
    %1000 = vector.broadcast %c-2_i32_481 : i32 to vector<8x8xi32>
    %1001 = arith.cmpi eq, %17, %1000 : vector<8x8xi32>
    %1002 = vector.extract_strided_slice %959 {offsets = [0, 5], sizes = [8, 1], strides = [1, 1]} : vector<8x15xf32> to vector<8x1xf32>
    %cst_482 = arith.constant 0.000000e+00 : f32
    %1003 = vector.shape_cast %1002 : vector<8x1xf32> to vector<8x1xf32>
    %1004 = vector.broadcast %1003 : vector<8x1xf32> to vector<8x8xf32>
    %1005 = vector.broadcast %cst_482 : f32 to vector<8x8xf32>
    %1006 = arith.select %1001, %1004, %1005 : vector<8x8xi1>, vector<8x8xf32>
    %1007 = arith.addf %999, %1006 : vector<8x8xf32>
    %c-1_i32_483 = arith.constant -1 : i32
    %1008 = vector.broadcast %c-1_i32_483 : i32 to vector<8x8xi32>
    %1009 = arith.cmpi eq, %17, %1008 : vector<8x8xi32>
    %1010 = vector.extract_strided_slice %959 {offsets = [0, 6], sizes = [8, 1], strides = [1, 1]} : vector<8x15xf32> to vector<8x1xf32>
    %cst_484 = arith.constant 0.000000e+00 : f32
    %1011 = vector.shape_cast %1010 : vector<8x1xf32> to vector<8x1xf32>
    %1012 = vector.broadcast %1011 : vector<8x1xf32> to vector<8x8xf32>
    %1013 = vector.broadcast %cst_484 : f32 to vector<8x8xf32>
    %1014 = arith.select %1009, %1012, %1013 : vector<8x8xi1>, vector<8x8xf32>
    %1015 = arith.addf %1007, %1014 : vector<8x8xf32>
    %c0_i32_485 = arith.constant 0 : i32
    %1016 = vector.broadcast %c0_i32_485 : i32 to vector<8x8xi32>
    %1017 = arith.cmpi eq, %17, %1016 : vector<8x8xi32>
    %1018 = vector.extract_strided_slice %959 {offsets = [0, 7], sizes = [8, 1], strides = [1, 1]} : vector<8x15xf32> to vector<8x1xf32>
    %cst_486 = arith.constant 0.000000e+00 : f32
    %1019 = vector.shape_cast %1018 : vector<8x1xf32> to vector<8x1xf32>
    %1020 = vector.broadcast %1019 : vector<8x1xf32> to vector<8x8xf32>
    %1021 = vector.broadcast %cst_486 : f32 to vector<8x8xf32>
    %1022 = arith.select %1017, %1020, %1021 : vector<8x8xi1>, vector<8x8xf32>
    %1023 = arith.addf %1015, %1022 : vector<8x8xf32>
    %c1_i32_487 = arith.constant 1 : i32
    %1024 = vector.broadcast %c1_i32_487 : i32 to vector<8x8xi32>
    %1025 = arith.cmpi eq, %17, %1024 : vector<8x8xi32>
    %1026 = vector.extract_strided_slice %959 {offsets = [0, 8], sizes = [8, 1], strides = [1, 1]} : vector<8x15xf32> to vector<8x1xf32>
    %cst_488 = arith.constant 0.000000e+00 : f32
    %1027 = vector.shape_cast %1026 : vector<8x1xf32> to vector<8x1xf32>
    %1028 = vector.broadcast %1027 : vector<8x1xf32> to vector<8x8xf32>
    %1029 = vector.broadcast %cst_488 : f32 to vector<8x8xf32>
    %1030 = arith.select %1025, %1028, %1029 : vector<8x8xi1>, vector<8x8xf32>
    %1031 = arith.addf %1023, %1030 : vector<8x8xf32>
    %c2_i32_489 = arith.constant 2 : i32
    %1032 = vector.broadcast %c2_i32_489 : i32 to vector<8x8xi32>
    %1033 = arith.cmpi eq, %17, %1032 : vector<8x8xi32>
    %1034 = vector.extract_strided_slice %959 {offsets = [0, 9], sizes = [8, 1], strides = [1, 1]} : vector<8x15xf32> to vector<8x1xf32>
    %cst_490 = arith.constant 0.000000e+00 : f32
    %1035 = vector.shape_cast %1034 : vector<8x1xf32> to vector<8x1xf32>
    %1036 = vector.broadcast %1035 : vector<8x1xf32> to vector<8x8xf32>
    %1037 = vector.broadcast %cst_490 : f32 to vector<8x8xf32>
    %1038 = arith.select %1033, %1036, %1037 : vector<8x8xi1>, vector<8x8xf32>
    %1039 = arith.addf %1031, %1038 : vector<8x8xf32>
    %c3_i32_491 = arith.constant 3 : i32
    %1040 = vector.broadcast %c3_i32_491 : i32 to vector<8x8xi32>
    %1041 = arith.cmpi eq, %17, %1040 : vector<8x8xi32>
    %1042 = vector.extract_strided_slice %959 {offsets = [0, 10], sizes = [8, 1], strides = [1, 1]} : vector<8x15xf32> to vector<8x1xf32>
    %cst_492 = arith.constant 0.000000e+00 : f32
    %1043 = vector.shape_cast %1042 : vector<8x1xf32> to vector<8x1xf32>
    %1044 = vector.broadcast %1043 : vector<8x1xf32> to vector<8x8xf32>
    %1045 = vector.broadcast %cst_492 : f32 to vector<8x8xf32>
    %1046 = arith.select %1041, %1044, %1045 : vector<8x8xi1>, vector<8x8xf32>
    %1047 = arith.addf %1039, %1046 : vector<8x8xf32>
    %c4_i32_493 = arith.constant 4 : i32
    %1048 = vector.broadcast %c4_i32_493 : i32 to vector<8x8xi32>
    %1049 = arith.cmpi eq, %17, %1048 : vector<8x8xi32>
    %1050 = vector.extract_strided_slice %959 {offsets = [0, 11], sizes = [8, 1], strides = [1, 1]} : vector<8x15xf32> to vector<8x1xf32>
    %cst_494 = arith.constant 0.000000e+00 : f32
    %1051 = vector.shape_cast %1050 : vector<8x1xf32> to vector<8x1xf32>
    %1052 = vector.broadcast %1051 : vector<8x1xf32> to vector<8x8xf32>
    %1053 = vector.broadcast %cst_494 : f32 to vector<8x8xf32>
    %1054 = arith.select %1049, %1052, %1053 : vector<8x8xi1>, vector<8x8xf32>
    %1055 = arith.addf %1047, %1054 : vector<8x8xf32>
    %c5_i32_495 = arith.constant 5 : i32
    %1056 = vector.broadcast %c5_i32_495 : i32 to vector<8x8xi32>
    %1057 = arith.cmpi eq, %17, %1056 : vector<8x8xi32>
    %1058 = vector.extract_strided_slice %959 {offsets = [0, 12], sizes = [8, 1], strides = [1, 1]} : vector<8x15xf32> to vector<8x1xf32>
    %cst_496 = arith.constant 0.000000e+00 : f32
    %1059 = vector.shape_cast %1058 : vector<8x1xf32> to vector<8x1xf32>
    %1060 = vector.broadcast %1059 : vector<8x1xf32> to vector<8x8xf32>
    %1061 = vector.broadcast %cst_496 : f32 to vector<8x8xf32>
    %1062 = arith.select %1057, %1060, %1061 : vector<8x8xi1>, vector<8x8xf32>
    %1063 = arith.addf %1055, %1062 : vector<8x8xf32>
    %c6_i32_497 = arith.constant 6 : i32
    %1064 = vector.broadcast %c6_i32_497 : i32 to vector<8x8xi32>
    %1065 = arith.cmpi eq, %17, %1064 : vector<8x8xi32>
    %1066 = vector.extract_strided_slice %959 {offsets = [0, 13], sizes = [8, 1], strides = [1, 1]} : vector<8x15xf32> to vector<8x1xf32>
    %cst_498 = arith.constant 0.000000e+00 : f32
    %1067 = vector.shape_cast %1066 : vector<8x1xf32> to vector<8x1xf32>
    %1068 = vector.broadcast %1067 : vector<8x1xf32> to vector<8x8xf32>
    %1069 = vector.broadcast %cst_498 : f32 to vector<8x8xf32>
    %1070 = arith.select %1065, %1068, %1069 : vector<8x8xi1>, vector<8x8xf32>
    %1071 = arith.addf %1063, %1070 : vector<8x8xf32>
    %c7_i32_499 = arith.constant 7 : i32
    %1072 = vector.broadcast %c7_i32_499 : i32 to vector<8x8xi32>
    %1073 = arith.cmpi eq, %17, %1072 : vector<8x8xi32>
    %1074 = vector.extract_strided_slice %959 {offsets = [0, 14], sizes = [8, 1], strides = [1, 1]} : vector<8x15xf32> to vector<8x1xf32>
    %cst_500 = arith.constant 0.000000e+00 : f32
    %1075 = vector.shape_cast %1074 : vector<8x1xf32> to vector<8x1xf32>
    %1076 = vector.broadcast %1075 : vector<8x1xf32> to vector<8x8xf32>
    %1077 = vector.broadcast %cst_500 : f32 to vector<8x8xf32>
    %1078 = arith.select %1073, %1076, %1077 : vector<8x8xi1>, vector<8x8xf32>
    %1079 = arith.addf %1071, %1078 : vector<8x8xf32>
    %cst_501 = arith.constant dense<0xFF800000> : vector<8xf32>
    %1080 = vector.multi_reduction <maximumf>, %1079, %cst_501 [1] : vector<8x8xf32> to vector<8xf32>
    %1081 = vector.shape_cast %1080 : vector<8xf32> to vector<8x1xf32>
    %1082 = vector.broadcast %1081 : vector<8x1xf32> to vector<8x8xf32>
    %1083 = arith.subf %1079, %1082 : vector<8x8xf32>
    %1084 = math.exp %1083 : vector<8x8xf32>
    %cst_502 = arith.constant dense<0.000000e+00> : vector<8xf32>
    %1085 = vector.multi_reduction <add>, %1084, %cst_502 [1] : vector<8x8xf32> to vector<8xf32>
    %1086 = vector.shape_cast %1085 : vector<8xf32> to vector<8x1xf32>
    %1087 = tpu.reciprocal %1086 {approx = true} : vector<8x1xf32> -> vector<8x1xf32>
    %1088 = vector.broadcast %1087 : vector<8x1xf32> to vector<8x8xf32>
    %1089 = arith.mulf %1084, %1088 : vector<8x8xf32>
    %1090 = arith.truncf %1089 : vector<8x8xf32> to vector<8x8xbf16>
    %1091 = arith.truncf %952 : vector<8x16xf32> to vector<8x16xbf16>
    %cst_503 = arith.constant dense<0.000000e+00> : vector<8x16xf32>
    %1092 = tpu.matmul %1090, %1091, %cst_503 {dimension_numbers = #tpu.dot_dimension_numbers<[1], [0], [0], [1], [0, 0, 1, 1], [], []>} : vector<8x8xbf16>, vector<8x16xbf16>, vector<8x16xf32> -> vector<8x16xf32>
    %c-7_i32_504 = arith.constant -7 : i32
    %1093 = vector.broadcast %c-7_i32_504 : i32 to vector<8x8xi32>
    %1094 = arith.cmpi eq, %17, %1093 : vector<8x8xi32>
    %cst_505 = arith.constant 0.000000e+00 : f32
    %1095 = vector.broadcast %cst_505 : f32 to vector<8x8xf32>
    %1096 = arith.select %1094, %1089, %1095 : vector<8x8xi1>, vector<8x8xf32>
    %cst_506 = arith.constant dense<0.000000e+00> : vector<8xf32>
    %1097 = vector.multi_reduction <add>, %1096, %cst_506 [1] : vector<8x8xf32> to vector<8xf32>
    %1098 = vector.shape_cast %1097 : vector<8xf32> to vector<8x1xf32>
    %c-6_i32_507 = arith.constant -6 : i32
    %1099 = vector.broadcast %c-6_i32_507 : i32 to vector<8x8xi32>
    %1100 = arith.cmpi eq, %17, %1099 : vector<8x8xi32>
    %cst_508 = arith.constant 0.000000e+00 : f32
    %1101 = vector.broadcast %cst_508 : f32 to vector<8x8xf32>
    %1102 = arith.select %1100, %1089, %1101 : vector<8x8xi1>, vector<8x8xf32>
    %cst_509 = arith.constant dense<0.000000e+00> : vector<8xf32>
    %1103 = vector.multi_reduction <add>, %1102, %cst_509 [1] : vector<8x8xf32> to vector<8xf32>
    %1104 = vector.shape_cast %1103 : vector<8xf32> to vector<8x1xf32>
    %c-5_i32_510 = arith.constant -5 : i32
    %1105 = vector.broadcast %c-5_i32_510 : i32 to vector<8x8xi32>
    %1106 = arith.cmpi eq, %17, %1105 : vector<8x8xi32>
    %cst_511 = arith.constant 0.000000e+00 : f32
    %1107 = vector.broadcast %cst_511 : f32 to vector<8x8xf32>
    %1108 = arith.select %1106, %1089, %1107 : vector<8x8xi1>, vector<8x8xf32>
    %cst_512 = arith.constant dense<0.000000e+00> : vector<8xf32>
    %1109 = vector.multi_reduction <add>, %1108, %cst_512 [1] : vector<8x8xf32> to vector<8xf32>
    %1110 = vector.shape_cast %1109 : vector<8xf32> to vector<8x1xf32>
    %c-4_i32_513 = arith.constant -4 : i32
    %1111 = vector.broadcast %c-4_i32_513 : i32 to vector<8x8xi32>
    %1112 = arith.cmpi eq, %17, %1111 : vector<8x8xi32>
    %cst_514 = arith.constant 0.000000e+00 : f32
    %1113 = vector.broadcast %cst_514 : f32 to vector<8x8xf32>
    %1114 = arith.select %1112, %1089, %1113 : vector<8x8xi1>, vector<8x8xf32>
    %cst_515 = arith.constant dense<0.000000e+00> : vector<8xf32>
    %1115 = vector.multi_reduction <add>, %1114, %cst_515 [1] : vector<8x8xf32> to vector<8xf32>
    %1116 = vector.shape_cast %1115 : vector<8xf32> to vector<8x1xf32>
    %c-3_i32_516 = arith.constant -3 : i32
    %1117 = vector.broadcast %c-3_i32_516 : i32 to vector<8x8xi32>
    %1118 = arith.cmpi eq, %17, %1117 : vector<8x8xi32>
    %cst_517 = arith.constant 0.000000e+00 : f32
    %1119 = vector.broadcast %cst_517 : f32 to vector<8x8xf32>
    %1120 = arith.select %1118, %1089, %1119 : vector<8x8xi1>, vector<8x8xf32>
    %cst_518 = arith.constant dense<0.000000e+00> : vector<8xf32>
    %1121 = vector.multi_reduction <add>, %1120, %cst_518 [1] : vector<8x8xf32> to vector<8xf32>
    %1122 = vector.shape_cast %1121 : vector<8xf32> to vector<8x1xf32>
    %c-2_i32_519 = arith.constant -2 : i32
    %1123 = vector.broadcast %c-2_i32_519 : i32 to vector<8x8xi32>
    %1124 = arith.cmpi eq, %17, %1123 : vector<8x8xi32>
    %cst_520 = arith.constant 0.000000e+00 : f32
    %1125 = vector.broadcast %cst_520 : f32 to vector<8x8xf32>
    %1126 = arith.select %1124, %1089, %1125 : vector<8x8xi1>, vector<8x8xf32>
    %cst_521 = arith.constant dense<0.000000e+00> : vector<8xf32>
    %1127 = vector.multi_reduction <add>, %1126, %cst_521 [1] : vector<8x8xf32> to vector<8xf32>
    %1128 = vector.shape_cast %1127 : vector<8xf32> to vector<8x1xf32>
    %c-1_i32_522 = arith.constant -1 : i32
    %1129 = vector.broadcast %c-1_i32_522 : i32 to vector<8x8xi32>
    %1130 = arith.cmpi eq, %17, %1129 : vector<8x8xi32>
    %cst_523 = arith.constant 0.000000e+00 : f32
    %1131 = vector.broadcast %cst_523 : f32 to vector<8x8xf32>
    %1132 = arith.select %1130, %1089, %1131 : vector<8x8xi1>, vector<8x8xf32>
    %cst_524 = arith.constant dense<0.000000e+00> : vector<8xf32>
    %1133 = vector.multi_reduction <add>, %1132, %cst_524 [1] : vector<8x8xf32> to vector<8xf32>
    %1134 = vector.shape_cast %1133 : vector<8xf32> to vector<8x1xf32>
    %c0_i32_525 = arith.constant 0 : i32
    %1135 = vector.broadcast %c0_i32_525 : i32 to vector<8x8xi32>
    %1136 = arith.cmpi eq, %17, %1135 : vector<8x8xi32>
    %cst_526 = arith.constant 0.000000e+00 : f32
    %1137 = vector.broadcast %cst_526 : f32 to vector<8x8xf32>
    %1138 = arith.select %1136, %1089, %1137 : vector<8x8xi1>, vector<8x8xf32>
    %cst_527 = arith.constant dense<0.000000e+00> : vector<8xf32>
    %1139 = vector.multi_reduction <add>, %1138, %cst_527 [1] : vector<8x8xf32> to vector<8xf32>
    %1140 = vector.shape_cast %1139 : vector<8xf32> to vector<8x1xf32>
    %c1_i32_528 = arith.constant 1 : i32
    %1141 = vector.broadcast %c1_i32_528 : i32 to vector<8x8xi32>
    %1142 = arith.cmpi eq, %17, %1141 : vector<8x8xi32>
    %cst_529 = arith.constant 0.000000e+00 : f32
    %1143 = vector.broadcast %cst_529 : f32 to vector<8x8xf32>
    %1144 = arith.select %1142, %1089, %1143 : vector<8x8xi1>, vector<8x8xf32>
    %cst_530 = arith.constant dense<0.000000e+00> : vector<8xf32>
    %1145 = vector.multi_reduction <add>, %1144, %cst_530 [1] : vector<8x8xf32> to vector<8xf32>
    %1146 = vector.shape_cast %1145 : vector<8xf32> to vector<8x1xf32>
    %c2_i32_531 = arith.constant 2 : i32
    %1147 = vector.broadcast %c2_i32_531 : i32 to vector<8x8xi32>
    %1148 = arith.cmpi eq, %17, %1147 : vector<8x8xi32>
    %cst_532 = arith.constant 0.000000e+00 : f32
    %1149 = vector.broadcast %cst_532 : f32 to vector<8x8xf32>
    %1150 = arith.select %1148, %1089, %1149 : vector<8x8xi1>, vector<8x8xf32>
    %cst_533 = arith.constant dense<0.000000e+00> : vector<8xf32>
    %1151 = vector.multi_reduction <add>, %1150, %cst_533 [1] : vector<8x8xf32> to vector<8xf32>
    %1152 = vector.shape_cast %1151 : vector<8xf32> to vector<8x1xf32>
    %c3_i32_534 = arith.constant 3 : i32
    %1153 = vector.broadcast %c3_i32_534 : i32 to vector<8x8xi32>
    %1154 = arith.cmpi eq, %17, %1153 : vector<8x8xi32>
    %cst_535 = arith.constant 0.000000e+00 : f32
    %1155 = vector.broadcast %cst_535 : f32 to vector<8x8xf32>
    %1156 = arith.select %1154, %1089, %1155 : vector<8x8xi1>, vector<8x8xf32>
    %cst_536 = arith.constant dense<0.000000e+00> : vector<8xf32>
    %1157 = vector.multi_reduction <add>, %1156, %cst_536 [1] : vector<8x8xf32> to vector<8xf32>
    %1158 = vector.shape_cast %1157 : vector<8xf32> to vector<8x1xf32>
    %c4_i32_537 = arith.constant 4 : i32
    %1159 = vector.broadcast %c4_i32_537 : i32 to vector<8x8xi32>
    %1160 = arith.cmpi eq, %17, %1159 : vector<8x8xi32>
    %cst_538 = arith.constant 0.000000e+00 : f32
    %1161 = vector.broadcast %cst_538 : f32 to vector<8x8xf32>
    %1162 = arith.select %1160, %1089, %1161 : vector<8x8xi1>, vector<8x8xf32>
    %cst_539 = arith.constant dense<0.000000e+00> : vector<8xf32>
    %1163 = vector.multi_reduction <add>, %1162, %cst_539 [1] : vector<8x8xf32> to vector<8xf32>
    %1164 = vector.shape_cast %1163 : vector<8xf32> to vector<8x1xf32>
    %c5_i32_540 = arith.constant 5 : i32
    %1165 = vector.broadcast %c5_i32_540 : i32 to vector<8x8xi32>
    %1166 = arith.cmpi eq, %17, %1165 : vector<8x8xi32>
    %cst_541 = arith.constant 0.000000e+00 : f32
    %1167 = vector.broadcast %cst_541 : f32 to vector<8x8xf32>
    %1168 = arith.select %1166, %1089, %1167 : vector<8x8xi1>, vector<8x8xf32>
    %cst_542 = arith.constant dense<0.000000e+00> : vector<8xf32>
    %1169 = vector.multi_reduction <add>, %1168, %cst_542 [1] : vector<8x8xf32> to vector<8xf32>
    %1170 = vector.shape_cast %1169 : vector<8xf32> to vector<8x1xf32>
    %c6_i32_543 = arith.constant 6 : i32
    %1171 = vector.broadcast %c6_i32_543 : i32 to vector<8x8xi32>
    %1172 = arith.cmpi eq, %17, %1171 : vector<8x8xi32>
    %cst_544 = arith.constant 0.000000e+00 : f32
    %1173 = vector.broadcast %cst_544 : f32 to vector<8x8xf32>
    %1174 = arith.select %1172, %1089, %1173 : vector<8x8xi1>, vector<8x8xf32>
    %cst_545 = arith.constant dense<0.000000e+00> : vector<8xf32>
    %1175 = vector.multi_reduction <add>, %1174, %cst_545 [1] : vector<8x8xf32> to vector<8xf32>
    %1176 = vector.shape_cast %1175 : vector<8xf32> to vector<8x1xf32>
    %c7_i32_546 = arith.constant 7 : i32
    %1177 = vector.broadcast %c7_i32_546 : i32 to vector<8x8xi32>
    %1178 = arith.cmpi eq, %17, %1177 : vector<8x8xi32>
    %cst_547 = arith.constant 0.000000e+00 : f32
    %1179 = vector.broadcast %cst_547 : f32 to vector<8x8xf32>
    %1180 = arith.select %1178, %1089, %1179 : vector<8x8xi1>, vector<8x8xf32>
    %cst_548 = arith.constant dense<0.000000e+00> : vector<8xf32>
    %1181 = vector.multi_reduction <add>, %1180, %cst_548 [1] : vector<8x8xf32> to vector<8xf32>
    %1182 = vector.shape_cast %1181 : vector<8xf32> to vector<8x1xf32>
    %1183 = tpu.concatenate %1098, %1104, %1110, %1116, %1122, %1128, %1134, %1140, %1146, %1152, %1158, %1164, %1170, %1176, %1182 in 1 : vector<8x1xf32>, vector<8x1xf32>, vector<8x1xf32>, vector<8x1xf32>, vector<8x1xf32>, vector<8x1xf32>, vector<8x1xf32>, vector<8x1xf32>, vector<8x1xf32>, vector<8x1xf32>, vector<8x1xf32>, vector<8x1xf32>, vector<8x1xf32>, vector<8x1xf32>, vector<8x1xf32> -> vector<8x15xf32>
    %1184 = arith.truncf %1183 : vector<8x15xf32> to vector<8x15xbf16>
    %cst_549 = arith.constant dense<0.000000e+00> : vector<8x16xf32>
    %1185 = tpu.matmul %1184, %672, %cst_549 {dimension_numbers = #tpu.dot_dimension_numbers<[1], [0], [0], [1], [0, 0, 1, 1], [], []>} : vector<8x15xbf16>, vector<15x16xbf16>, vector<8x16xf32> -> vector<8x16xf32>
    %1186 = arith.addf %1092, %1185 : vector<8x16xf32>
    %1187 = arith.truncf %1186 : vector<8x16xf32> to vector<8x16xbf16>
    %c1_550 = arith.constant 1 : index
    %c1_551 = arith.constant 1 : index
    %c0_552 = arith.constant 0 : index
    %c0_553 = arith.constant 0 : index
    %1188 = vector.load %arg13[%c1_550, %c1_551, %c0_552, %c0_553] : memref<2x2x32x16xbf16, #tpu.memory_space<vmem>>, vector<1x1x32x16xbf16>
    %1189 = vector.shape_cast %1188 : vector<1x1x32x16xbf16> to vector<32x16xbf16>
    %cst_554 = arith.constant dense<0.000000e+00> : vector<8x32xf32>
    %1190 = tpu.matmul %1187, %1189, %cst_554 {dimension_numbers = #tpu.dot_dimension_numbers<[1], [1], [0], [0], [0, 0, 1, 0], [], []>} : vector<8x16xbf16>, vector<32x16xbf16>, vector<8x32xf32> -> vector<8x32xf32>
    %1191 = arith.addf %931, %1190 : vector<8x32xf32>
    %c1_555 = arith.constant 1 : index
    %c0_556 = arith.constant 0 : index
    %c0_557 = arith.constant 0 : index
    %1192 = vector.load %arg14[%c1_555, %c0_556, %c0_557] : memref<2x1x32xf32, #tpu.memory_space<vmem>>, vector<1x1x32xf32>
    %1193 = vector.shape_cast %1192 : vector<1x1x32xf32> to vector<1x32xf32>
    %1194 = vector.broadcast %1193 : vector<1x32xf32> to vector<8x32xf32>
    %1195 = arith.addf %1191, %1194 : vector<8x32xf32>
    %1196 = arith.addf %667, %1195 : vector<8x32xf32>
    %c1_558 = arith.constant 1 : index
    %c0_559 = arith.constant 0 : index
    %c0_560 = arith.constant 0 : index
    %1197 = vector.load %arg17[%c1_558, %c0_559, %c0_560] : memref<2x1x32xf32, #tpu.memory_space<vmem>>, vector<1x1x32xf32>
    %1198 = vector.shape_cast %1197 : vector<1x1x32xf32> to vector<1x32xf32>
    %c1_561 = arith.constant 1 : index
    %c0_562 = arith.constant 0 : index
    %c0_563 = arith.constant 0 : index
    %1199 = vector.load %arg18[%c1_561, %c0_562, %c0_563] : memref<2x1x32xf32, #tpu.memory_space<vmem>>, vector<1x1x32xf32>
    %1200 = vector.shape_cast %1199 : vector<1x1x32xf32> to vector<1x32xf32>
    %cst_564 = arith.constant dense<0.000000e+00> : vector<8xf32>
    %1201 = vector.multi_reduction <add>, %1196, %cst_564 [1] : vector<8x32xf32> to vector<8xf32>
    %1202 = vector.shape_cast %1201 : vector<8xf32> to vector<8x1xf32>
    %cst_565 = arith.constant 3.200000e+01 : f32
    %1203 = vector.broadcast %cst_565 : f32 to vector<8x1xf32>
    %1204 = arith.divf %1202, %1203 : vector<8x1xf32>
    %1205 = vector.broadcast %1204 : vector<8x1xf32> to vector<8x32xf32>
    %1206 = arith.subf %1196, %1205 : vector<8x32xf32>
    %1207 = arith.mulf %1206, %1206 : vector<8x32xf32>
    %cst_566 = arith.constant dense<0.000000e+00> : vector<8xf32>
    %1208 = vector.multi_reduction <add>, %1207, %cst_566 [1] : vector<8x32xf32> to vector<8xf32>
    %1209 = vector.shape_cast %1208 : vector<8xf32> to vector<8x1xf32>
    %cst_567 = arith.constant 3.200000e+01 : f32
    %1210 = vector.broadcast %cst_567 : f32 to vector<8x1xf32>
    %1211 = arith.divf %1209, %1210 : vector<8x1xf32>
    %cst_568 = arith.constant 9.99999974E-6 : f32
    %1212 = vector.broadcast %cst_568 : f32 to vector<8x1xf32>
    %1213 = arith.addf %1211, %1212 : vector<8x1xf32>
    %1214 = math.rsqrt %1213 : vector<8x1xf32>
    %1215 = vector.broadcast %1214 : vector<8x1xf32> to vector<8x32xf32>
    %1216 = arith.mulf %1206, %1215 : vector<8x32xf32>
    %1217 = vector.broadcast %1198 : vector<1x32xf32> to vector<8x32xf32>
    %1218 = arith.mulf %1216, %1217 : vector<8x32xf32>
    %1219 = vector.broadcast %1200 : vector<1x32xf32> to vector<8x32xf32>
    %1220 = arith.addf %1218, %1219 : vector<8x32xf32>
    %1221 = vector.broadcast %5 : vector<8x1xf32> to vector<8x32xf32>
    %1222 = arith.mulf %1220, %1221 : vector<8x32xf32>
    %c1_569 = arith.constant 1 : index
    %c0_570 = arith.constant 0 : index
    %c0_571 = arith.constant 0 : index
    %1223 = vector.load %arg20[%c1_569, %c0_570, %c0_571] : memref<2x1x64xf32, #tpu.memory_space<vmem>>, vector<1x1x64xf32>
    %1224 = vector.shape_cast %1223 : vector<1x1x64xf32> to vector<1x64xf32>
    %c1_572 = arith.constant 1 : index
    %c0_573 = arith.constant 0 : index
    %1225 = vector.load %arg28[%c1_572, %c0_573] : memref<10x32xf32, #tpu.memory_space<vmem>>, vector<8x32xf32>
    tpu.vector_store %arg28[%c1_572, %c0_573], %1222 {strides = array<i32>} : memref<10x32xf32, #tpu.memory_space<vmem>>, vector<8x32xf32>,
    %c0_574 = arith.constant 0 : index
    %c0_575 = arith.constant 0 : index
    %1226 = vector.load %arg28[%c0_574, %c0_575] : memref<10x32xf32, #tpu.memory_space<vmem>>, vector<8x32xf32>
    %1227 = arith.truncf %1226 : vector<8x32xf32> to vector<8x32xbf16>
    %c1_576 = arith.constant 1 : index
    %c0_577 = arith.constant 0 : index
    %c0_578 = arith.constant 0 : index
    %c0_579 = arith.constant 0 : index
    %1228 = vector.load %arg19[%c1_576, %c0_577, %c0_578, %c0_579] : memref<2x3x64x32xbf16, #tpu.memory_space<vmem>>, vector<1x1x64x32xbf16>
    %1229 = vector.shape_cast %1228 : vector<1x1x64x32xbf16> to vector<64x32xbf16>
    %cst_580 = arith.constant dense<0.000000e+00> : vector<8x64xf32>
    %1230 = tpu.matmul %1227, %1229, %cst_580 {dimension_numbers = #tpu.dot_dimension_numbers<[1], [1], [0], [0], [0, 0, 1, 0], [], []>} : vector<8x32xbf16>, vector<64x32xbf16>, vector<8x64xf32> -> vector<8x64xf32>
    %c1_581 = arith.constant 1 : index
    %c0_582 = arith.constant 0 : index
    %1231 = vector.load %arg28[%c1_581, %c0_582] : memref<10x32xf32, #tpu.memory_space<vmem>>, vector<8x32xf32>
    %1232 = arith.truncf %1231 : vector<8x32xf32> to vector<8x32xbf16>
    %c1_583 = arith.constant 1 : index
    %c1_584 = arith.constant 1 : index
    %c0_585 = arith.constant 0 : index
    %c0_586 = arith.constant 0 : index
    %1233 = vector.load %arg19[%c1_583, %c1_584, %c0_585, %c0_586] : memref<2x3x64x32xbf16, #tpu.memory_space<vmem>>, vector<1x1x64x32xbf16>
    %1234 = vector.shape_cast %1233 : vector<1x1x64x32xbf16> to vector<64x32xbf16>
    %cst_587 = arith.constant dense<0.000000e+00> : vector<8x64xf32>
    %1235 = tpu.matmul %1232, %1234, %cst_587 {dimension_numbers = #tpu.dot_dimension_numbers<[1], [1], [0], [0], [0, 0, 1, 0], [], []>} : vector<8x32xbf16>, vector<64x32xbf16>, vector<8x64xf32> -> vector<8x64xf32>
    %1236 = arith.addf %1230, %1235 : vector<8x64xf32>
    %c2_588 = arith.constant 2 : index
    %c0_589 = arith.constant 0 : index
    %1237 = vector.load %arg28[%c2_588, %c0_589] : memref<10x32xf32, #tpu.memory_space<vmem>>, vector<8x32xf32>
    %1238 = arith.truncf %1237 : vector<8x32xf32> to vector<8x32xbf16>
    %c1_590 = arith.constant 1 : index
    %c2_591 = arith.constant 2 : index
    %c0_592 = arith.constant 0 : index
    %c0_593 = arith.constant 0 : index
    %1239 = vector.load %arg19[%c1_590, %c2_591, %c0_592, %c0_593] : memref<2x3x64x32xbf16, #tpu.memory_space<vmem>>, vector<1x1x64x32xbf16>
    %1240 = vector.shape_cast %1239 : vector<1x1x64x32xbf16> to vector<64x32xbf16>
    %cst_594 = arith.constant dense<0.000000e+00> : vector<8x64xf32>
    %1241 = tpu.matmul %1238, %1240, %cst_594 {dimension_numbers = #tpu.dot_dimension_numbers<[1], [1], [0], [0], [0, 0, 1, 0], [], []>} : vector<8x32xbf16>, vector<64x32xbf16>, vector<8x64xf32> -> vector<8x64xf32>
    %1242 = arith.addf %1236, %1241 : vector<8x64xf32>
    %1243 = vector.broadcast %1224 : vector<1x64xf32> to vector<8x64xf32>
    %1244 = arith.addf %1242, %1243 : vector<8x64xf32>
    %cst_595 = arith.constant 0.000000e+00 : f32
    %1245 = vector.broadcast %cst_595 : f32 to vector<8x64xf32>
    %1246 = arith.maximumf %1244, %1245 : vector<8x64xf32>
    %1247 = vector.broadcast %5 : vector<8x1xf32> to vector<8x64xf32>
    %1248 = arith.mulf %1246, %1247 : vector<8x64xf32>
    %c1_596 = arith.constant 1 : index
    %c0_597 = arith.constant 0 : index
    %c0_598 = arith.constant 0 : index
    %1249 = vector.load %arg22[%c1_596, %c0_597, %c0_598] : memref<2x1x32xf32, #tpu.memory_space<vmem>>, vector<1x1x32xf32>
    %1250 = vector.shape_cast %1249 : vector<1x1x32xf32> to vector<1x32xf32>
    %c1_599 = arith.constant 1 : index
    %c0_600 = arith.constant 0 : index
    %1251 = vector.load %arg29[%c1_599, %c0_600] : memref<10x64xf32, #tpu.memory_space<vmem>>, vector<8x64xf32>
    tpu.vector_store %arg29[%c1_599, %c0_600], %1248 {strides = array<i32>} : memref<10x64xf32, #tpu.memory_space<vmem>>, vector<8x64xf32>,
    %c0_601 = arith.constant 0 : index
    %c0_602 = arith.constant 0 : index
    %1252 = vector.load %arg29[%c0_601, %c0_602] : memref<10x64xf32, #tpu.memory_space<vmem>>, vector<8x64xf32>
    %1253 = arith.truncf %1252 : vector<8x64xf32> to vector<8x64xbf16>
    %c1_603 = arith.constant 1 : index
    %c0_604 = arith.constant 0 : index
    %c0_605 = arith.constant 0 : index
    %c0_606 = arith.constant 0 : index
    %1254 = vector.load %arg21[%c1_603, %c0_604, %c0_605, %c0_606] : memref<2x3x32x64xbf16, #tpu.memory_space<vmem>>, vector<1x1x32x64xbf16>
    %1255 = vector.shape_cast %1254 : vector<1x1x32x64xbf16> to vector<32x64xbf16>
    %cst_607 = arith.constant dense<0.000000e+00> : vector<8x32xf32>
    %1256 = tpu.matmul %1253, %1255, %cst_607 {dimension_numbers = #tpu.dot_dimension_numbers<[1], [1], [0], [0], [0, 0, 1, 0], [], []>} : vector<8x64xbf16>, vector<32x64xbf16>, vector<8x32xf32> -> vector<8x32xf32>
    %c1_608 = arith.constant 1 : index
    %c0_609 = arith.constant 0 : index
    %1257 = vector.load %arg29[%c1_608, %c0_609] : memref<10x64xf32, #tpu.memory_space<vmem>>, vector<8x64xf32>
    %1258 = arith.truncf %1257 : vector<8x64xf32> to vector<8x64xbf16>
    %c1_610 = arith.constant 1 : index
    %c1_611 = arith.constant 1 : index
    %c0_612 = arith.constant 0 : index
    %c0_613 = arith.constant 0 : index
    %1259 = vector.load %arg21[%c1_610, %c1_611, %c0_612, %c0_613] : memref<2x3x32x64xbf16, #tpu.memory_space<vmem>>, vector<1x1x32x64xbf16>
    %1260 = vector.shape_cast %1259 : vector<1x1x32x64xbf16> to vector<32x64xbf16>
    %cst_614 = arith.constant dense<0.000000e+00> : vector<8x32xf32>
    %1261 = tpu.matmul %1258, %1260, %cst_614 {dimension_numbers = #tpu.dot_dimension_numbers<[1], [1], [0], [0], [0, 0, 1, 0], [], []>} : vector<8x64xbf16>, vector<32x64xbf16>, vector<8x32xf32> -> vector<8x32xf32>
    %1262 = arith.addf %1256, %1261 : vector<8x32xf32>
    %c2_615 = arith.constant 2 : index
    %c0_616 = arith.constant 0 : index
    %1263 = vector.load %arg29[%c2_615, %c0_616] : memref<10x64xf32, #tpu.memory_space<vmem>>, vector<8x64xf32>
    %1264 = arith.truncf %1263 : vector<8x64xf32> to vector<8x64xbf16>
    %c1_617 = arith.constant 1 : index
    %c2_618 = arith.constant 2 : index
    %c0_619 = arith.constant 0 : index
    %c0_620 = arith.constant 0 : index
    %1265 = vector.load %arg21[%c1_617, %c2_618, %c0_619, %c0_620] : memref<2x3x32x64xbf16, #tpu.memory_space<vmem>>, vector<1x1x32x64xbf16>
    %1266 = vector.shape_cast %1265 : vector<1x1x32x64xbf16> to vector<32x64xbf16>
    %cst_621 = arith.constant dense<0.000000e+00> : vector<8x32xf32>
    %1267 = tpu.matmul %1264, %1266, %cst_621 {dimension_numbers = #tpu.dot_dimension_numbers<[1], [1], [0], [0], [0, 0, 1, 0], [], []>} : vector<8x64xbf16>, vector<32x64xbf16>, vector<8x32xf32> -> vector<8x32xf32>
    %1268 = arith.addf %1262, %1267 : vector<8x32xf32>
    %1269 = vector.broadcast %1250 : vector<1x32xf32> to vector<8x32xf32>
    %1270 = arith.addf %1268, %1269 : vector<8x32xf32>
    %1271 = vector.broadcast %5 : vector<8x1xf32> to vector<8x32xf32>
    %1272 = arith.mulf %1270, %1271 : vector<8x32xf32>
    %1273 = arith.addf %1220, %1272 : vector<8x32xf32>
    %c1_622 = arith.constant 1 : index
    %c0_623 = arith.constant 0 : index
    %c0_624 = arith.constant 0 : index
    %1274 = vector.load %arg23[%c1_622, %c0_623, %c0_624] : memref<2x1x32xf32, #tpu.memory_space<vmem>>, vector<1x1x32xf32>
    %1275 = vector.shape_cast %1274 : vector<1x1x32xf32> to vector<1x32xf32>
    %c1_625 = arith.constant 1 : index
    %c0_626 = arith.constant 0 : index
    %c0_627 = arith.constant 0 : index
    %1276 = vector.load %arg24[%c1_625, %c0_626, %c0_627] : memref<2x1x32xf32, #tpu.memory_space<vmem>>, vector<1x1x32xf32>
    %1277 = vector.shape_cast %1276 : vector<1x1x32xf32> to vector<1x32xf32>
    %cst_628 = arith.constant dense<0.000000e+00> : vector<8xf32>
    %1278 = vector.multi_reduction <add>, %1273, %cst_628 [1] : vector<8x32xf32> to vector<8xf32>
    %1279 = vector.shape_cast %1278 : vector<8xf32> to vector<8x1xf32>
    %cst_629 = arith.constant 3.200000e+01 : f32
    %1280 = vector.broadcast %cst_629 : f32 to vector<8x1xf32>
    %1281 = arith.divf %1279, %1280 : vector<8x1xf32>
    %1282 = vector.broadcast %1281 : vector<8x1xf32> to vector<8x32xf32>
    %1283 = arith.subf %1273, %1282 : vector<8x32xf32>
    %1284 = arith.mulf %1283, %1283 : vector<8x32xf32>
    %cst_630 = arith.constant dense<0.000000e+00> : vector<8xf32>
    %1285 = vector.multi_reduction <add>, %1284, %cst_630 [1] : vector<8x32xf32> to vector<8xf32>
    %1286 = vector.shape_cast %1285 : vector<8xf32> to vector<8x1xf32>
    %cst_631 = arith.constant 3.200000e+01 : f32
    %1287 = vector.broadcast %cst_631 : f32 to vector<8x1xf32>
    %1288 = arith.divf %1286, %1287 : vector<8x1xf32>
    %cst_632 = arith.constant 9.99999974E-6 : f32
    %1289 = vector.broadcast %cst_632 : f32 to vector<8x1xf32>
    %1290 = arith.addf %1288, %1289 : vector<8x1xf32>
    %1291 = math.rsqrt %1290 : vector<8x1xf32>
    %1292 = vector.broadcast %1291 : vector<8x1xf32> to vector<8x32xf32>
    %1293 = arith.mulf %1283, %1292 : vector<8x32xf32>
    %1294 = vector.broadcast %1275 : vector<1x32xf32> to vector<8x32xf32>
    %1295 = arith.mulf %1293, %1294 : vector<8x32xf32>
    %1296 = vector.broadcast %1277 : vector<1x32xf32> to vector<8x32xf32>
    %1297 = arith.addf %1295, %1296 : vector<8x32xf32>
    %1298 = vector.broadcast %5 : vector<8x1xf32> to vector<8x32xf32>
    %1299 = arith.mulf %1297, %1298 : vector<8x32xf32>
    %1300 = arith.truncf %1299 : vector<8x32xf32> to vector<8x32xbf16>
    %c0_633 = arith.constant 0 : index
    %c0_634 = arith.constant 0 : index
    %1301 = vector.load %arg25[%c0_633, %c0_634] : memref<128x32xbf16, #tpu.memory_space<vmem>>, vector<128x32xbf16>
    %cst_635 = arith.constant dense<0.000000e+00> : vector<8x128xf32>
    %1302 = tpu.matmul %1300, %1301, %cst_635 {dimension_numbers = #tpu.dot_dimension_numbers<[1], [1], [0], [0], [0, 0, 1, 0], [], []>} : vector<8x32xbf16>, vector<128x32xbf16>, vector<8x128xf32> -> vector<8x128xf32>
    %c0_636 = arith.constant 0 : index
    %c0_637 = arith.constant 0 : index
    %1303 = vector.load %arg26[%c0_636, %c0_637] : memref<1x128xf32, #tpu.memory_space<vmem>>, vector<1x128xf32>
    %1304 = vector.broadcast %1303 : vector<1x128xf32> to vector<8x128xf32>
    %1305 = arith.addf %1302, %1304 : vector<8x128xf32>
    %1306 = vector.broadcast %5 : vector<8x1xf32> to vector<8x128xf32>
    %1307 = arith.mulf %1305, %1306 : vector<8x128xf32>
    %c0_638 = arith.constant 0 : index
    %c0_639 = arith.constant 0 : index
    %c0_640 = arith.constant 0 : index
    %1308 = vector.load %arg27[%c0_638, %c0_639, %c0_640] : memref<1x8x128xf32, #tpu.memory_space<vmem>>, vector<1x8x128xf32>
    %1309 = vector.shape_cast %1308 : vector<1x8x128xf32> to vector<8x128xf32>
    %1310 = vector.shape_cast %1307 : vector<8x128xf32> to vector<1x8x128xf32>
    tpu.vector_store %arg27[%c0_638, %c0_639, %c0_640], %1310 {strides = array<i32>} : memref<1x8x128xf32, #tpu.memory_space<vmem>>, vector<1x8x128xf32>,
    return
  }
  func.func @transform_0(%arg0: i32) -> (i32, i32, i32) {
    %c0_i32 = arith.constant 0 : i32
    %c0_i32_0 = arith.constant 0 : i32
    %c0_i32_1 = arith.constant 0 : i32
    return %arg0, %c0_i32, %c0_i32_0 : i32, i32, i32
  }
  func.func @transform_1(%arg0: i32) -> (i32, i32, i32) {
    %c0_i32 = arith.constant 0 : i32
    %c0_i32_0 = arith.constant 0 : i32
    %c0_i32_1 = arith.constant 0 : i32
    return %arg0, %c0_i32, %c0_i32_0 : i32, i32, i32
  }
  func.func @transform_2(%arg0: i32) -> (i32, i32, i32) {
    %c0_i32 = arith.constant 0 : i32
    %c0_i32_0 = arith.constant 0 : i32
    %c0_i32_1 = arith.constant 0 : i32
    return %arg0, %c0_i32, %c0_i32_0 : i32, i32, i32
  }
  func.func @transform_3(%arg0: i32) -> (i32, i32, i32) {
    %c0_i32 = arith.constant 0 : i32
    %c0_i32_0 = arith.constant 0 : i32
    %c0_i32_1 = arith.constant 0 : i32
    return %arg0, %c0_i32, %c0_i32_0 : i32, i32, i32
  }
  func.func @transform_4(%arg0: i32) -> (i32, i32) {
    %c0_i32 = arith.constant 0 : i32
    %c0_i32_0 = arith.constant 0 : i32
    %c0_i32_1 = arith.constant 0 : i32
    return %c0_i32, %c0_i32_0 : i32, i32
  }
  func.func @transform_5(%arg0: i32) -> (i32, i32) {
    %c0_i32 = arith.constant 0 : i32
    %c0_i32_0 = arith.constant 0 : i32
    %c0_i32_1 = arith.constant 0 : i32
    return %c0_i32, %c0_i32_0 : i32, i32
  }
  func.func @transform_6(%arg0: i32) -> (i32, i32, i32, i32) {
    %c0_i32 = arith.constant 0 : i32
    %c0_i32_0 = arith.constant 0 : i32
    %c0_i32_1 = arith.constant 0 : i32
    %c0_i32_2 = arith.constant 0 : i32
    %c0_i32_3 = arith.constant 0 : i32
    return %c0_i32, %c0_i32_0, %c0_i32_1, %c0_i32_2 : i32, i32, i32, i32
  }
  func.func @transform_7(%arg0: i32) -> (i32, i32, i32, i32) {
    %c0_i32 = arith.constant 0 : i32
    %c0_i32_0 = arith.constant 0 : i32
    %c0_i32_1 = arith.constant 0 : i32
    %c0_i32_2 = arith.constant 0 : i32
    %c0_i32_3 = arith.constant 0 : i32
    return %c0_i32, %c0_i32_0, %c0_i32_1, %c0_i32_2 : i32, i32, i32, i32
  }
  func.func @transform_8(%arg0: i32) -> (i32, i32, i32, i32) {
    %c0_i32 = arith.constant 0 : i32
    %c0_i32_0 = arith.constant 0 : i32
    %c0_i32_1 = arith.constant 0 : i32
    %c0_i32_2 = arith.constant 0 : i32
    %c0_i32_3 = arith.constant 0 : i32
    return %c0_i32, %c0_i32_0, %c0_i32_1, %c0_i32_2 : i32, i32, i32, i32
  }
  func.func @transform_9(%arg0: i32) -> (i32, i32, i32, i32) {
    %c0_i32 = arith.constant 0 : i32
    %c0_i32_0 = arith.constant 0 : i32
    %c0_i32_1 = arith.constant 0 : i32
    %c0_i32_2 = arith.constant 0 : i32
    %c0_i32_3 = arith.constant 0 : i32
    return %c0_i32, %c0_i32_0, %c0_i32_1, %c0_i32_2 : i32, i32, i32, i32
  }
  func.func @transform_10(%arg0: i32) -> (i32, i32, i32, i32) {
    %c0_i32 = arith.constant 0 : i32
    %c0_i32_0 = arith.constant 0 : i32
    %c0_i32_1 = arith.constant 0 : i32
    %c0_i32_2 = arith.constant 0 : i32
    %c0_i32_3 = arith.constant 0 : i32
    return %c0_i32, %c0_i32_0, %c0_i32_1, %c0_i32_2 : i32, i32, i32, i32
  }
  func.func @transform_11(%arg0: i32) -> (i32, i32, i32, i32) {
    %c0_i32 = arith.constant 0 : i32
    %c0_i32_0 = arith.constant 0 : i32
    %c0_i32_1 = arith.constant 0 : i32
    %c0_i32_2 = arith.constant 0 : i32
    %c0_i32_3 = arith.constant 0 : i32
    return %c0_i32, %c0_i32_0, %c0_i32_1, %c0_i32_2 : i32, i32, i32, i32
  }
  func.func @transform_12(%arg0: i32) -> (i32, i32, i32, i32) {
    %c0_i32 = arith.constant 0 : i32
    %c0_i32_0 = arith.constant 0 : i32
    %c0_i32_1 = arith.constant 0 : i32
    %c0_i32_2 = arith.constant 0 : i32
    %c0_i32_3 = arith.constant 0 : i32
    return %c0_i32, %c0_i32_0, %c0_i32_1, %c0_i32_2 : i32, i32, i32, i32
  }
  func.func @transform_13(%arg0: i32) -> (i32, i32, i32) {
    %c0_i32 = arith.constant 0 : i32
    %c0_i32_0 = arith.constant 0 : i32
    %c0_i32_1 = arith.constant 0 : i32
    %c0_i32_2 = arith.constant 0 : i32
    return %c0_i32, %c0_i32_0, %c0_i32_1 : i32, i32, i32
  }
  func.func @transform_14(%arg0: i32) -> (i32, i32, i32) {
    %c0_i32 = arith.constant 0 : i32
    %c0_i32_0 = arith.constant 0 : i32
    %c0_i32_1 = arith.constant 0 : i32
    %c0_i32_2 = arith.constant 0 : i32
    return %c0_i32, %c0_i32_0, %c0_i32_1 : i32, i32, i32
  }
  func.func @transform_15(%arg0: i32) -> (i32, i32, i32) {
    %c0_i32 = arith.constant 0 : i32
    %c0_i32_0 = arith.constant 0 : i32
    %c0_i32_1 = arith.constant 0 : i32
    %c0_i32_2 = arith.constant 0 : i32
    return %c0_i32, %c0_i32_0, %c0_i32_1 : i32, i32, i32
  }
  func.func @transform_16(%arg0: i32) -> (i32, i32, i32) {
    %c0_i32 = arith.constant 0 : i32
    %c0_i32_0 = arith.constant 0 : i32
    %c0_i32_1 = arith.constant 0 : i32
    %c0_i32_2 = arith.constant 0 : i32
    return %c0_i32, %c0_i32_0, %c0_i32_1 : i32, i32, i32
  }
  func.func @transform_17(%arg0: i32) -> (i32, i32, i32) {
    %c0_i32 = arith.constant 0 : i32
    %c0_i32_0 = arith.constant 0 : i32
    %c0_i32_1 = arith.constant 0 : i32
    %c0_i32_2 = arith.constant 0 : i32
    return %c0_i32, %c0_i32_0, %c0_i32_1 : i32, i32, i32
  }
  func.func @transform_18(%arg0: i32) -> (i32, i32, i32, i32) {
    %c0_i32 = arith.constant 0 : i32
    %c0_i32_0 = arith.constant 0 : i32
    %c0_i32_1 = arith.constant 0 : i32
    %c0_i32_2 = arith.constant 0 : i32
    %c0_i32_3 = arith.constant 0 : i32
    return %c0_i32, %c0_i32_0, %c0_i32_1, %c0_i32_2 : i32, i32, i32, i32
  }
  func.func @transform_19(%arg0: i32) -> (i32, i32, i32) {
    %c0_i32 = arith.constant 0 : i32
    %c0_i32_0 = arith.constant 0 : i32
    %c0_i32_1 = arith.constant 0 : i32
    %c0_i32_2 = arith.constant 0 : i32
    return %c0_i32, %c0_i32_0, %c0_i32_1 : i32, i32, i32
  }
  func.func @transform_20(%arg0: i32) -> (i32, i32, i32, i32) {
    %c0_i32 = arith.constant 0 : i32
    %c0_i32_0 = arith.constant 0 : i32
    %c0_i32_1 = arith.constant 0 : i32
    %c0_i32_2 = arith.constant 0 : i32
    %c0_i32_3 = arith.constant 0 : i32
    return %c0_i32, %c0_i32_0, %c0_i32_1, %c0_i32_2 : i32, i32, i32, i32
  }
  func.func @transform_21(%arg0: i32) -> (i32, i32, i32) {
    %c0_i32 = arith.constant 0 : i32
    %c0_i32_0 = arith.constant 0 : i32
    %c0_i32_1 = arith.constant 0 : i32
    %c0_i32_2 = arith.constant 0 : i32
    return %c0_i32, %c0_i32_0, %c0_i32_1 : i32, i32, i32
  }
  func.func @transform_22(%arg0: i32) -> (i32, i32, i32) {
    %c0_i32 = arith.constant 0 : i32
    %c0_i32_0 = arith.constant 0 : i32
    %c0_i32_1 = arith.constant 0 : i32
    %c0_i32_2 = arith.constant 0 : i32
    return %c0_i32, %c0_i32_0, %c0_i32_1 : i32, i32, i32
  }
  func.func @transform_23(%arg0: i32) -> (i32, i32, i32) {
    %c0_i32 = arith.constant 0 : i32
    %c0_i32_0 = arith.constant 0 : i32
    %c0_i32_1 = arith.constant 0 : i32
    %c0_i32_2 = arith.constant 0 : i32
    return %c0_i32, %c0_i32_0, %c0_i32_1 : i32, i32, i32
  }
  func.func @transform_24(%arg0: i32) -> (i32, i32) {
    %c0_i32 = arith.constant 0 : i32
    %c0_i32_0 = arith.constant 0 : i32
    %c0_i32_1 = arith.constant 0 : i32
    return %c0_i32, %c0_i32_0 : i32, i32
  }
  func.func @transform_25(%arg0: i32) -> (i32, i32) {
    %c0_i32 = arith.constant 0 : i32
    %c0_i32_0 = arith.constant 0 : i32
    %c0_i32_1 = arith.constant 0 : i32
    return %c0_i32, %c0_i32_0 : i32, i32
  }
  func.func @transform_26(%arg0: i32) -> (i32, i32, i32) {
    %c0_i32 = arith.constant 0 : i32
    %c0_i32_0 = arith.constant 0 : i32
    %c0_i32_1 = arith.constant 0 : i32
    return %arg0, %c0_i32, %c0_i32_0 : i32, i32, i32
  }
}

</mosaic_0001>

<llo_original>
// kernel: tpu_custom_call.1
$region0: #{tpu_custom_call.1}
  #allocation0 [shape = 'u32[]', space=smem, size = 0x4, offset = 0x4, fixed_abs, tag = 'smem constant byte address 0x4 - core index']
  #allocation1 [shape = 'u32[144,128]{1,0:T(1,128)}', space=vmem, size = 0x12000, scoped, tag = 'internal scratch']
  #allocation2 [shape = 'f32[10,32]{1,0:T(8,128)}', space=vmem, size = 0x2000, scoped, tag = 'scratch operand']
  #allocation3 [shape = 'f32[10,64]{1,0:T(8,128)}', space=vmem, size = 0x2000, scoped, tag = 'scratch operand']
  %s0 = inlined_call_operand.vmem [shape: f32[2,8,16], index: 0, kind: input, shape index: {}]
  %s1 = inlined_call_operand.vmem [shape: f32[2,8,32], index: 1, kind: input, shape index: {}]
  %s2 = inlined_call_operand.vmem [shape: f32[2,8,1], index: 2, kind: input, shape index: {}]
  %s3 = inlined_call_operand.vmem [shape: f32[2,1,8], index: 3, kind: input, shape index: {}]
  %s4 = inlined_call_operand.vmem [shape: bf16[32,16], index: 4, kind: input, shape index: {}]
  %s5 = inlined_call_operand.vmem [shape: f32[1,32], index: 5, kind: input, shape index: {}]
  %s6 = inlined_call_operand.vmem [shape: bf16[2,2,16,32], index: 6, kind: input, shape index: {}]
  %s7 = inlined_call_operand.vmem [shape: f32[2,2,1,16], index: 7, kind: input, shape index: {}]
  %s8 = inlined_call_operand.vmem [shape: bf16[2,2,16,32], index: 8, kind: input, shape index: {}]
  %s9 = inlined_call_operand.vmem [shape: f32[2,2,1,16], index: 9, kind: input, shape index: {}]
  %s10 = inlined_call_operand.vmem [shape: bf16[2,2,16,32], index: 10, kind: input, shape index: {}]
  %s11 = inlined_call_operand.vmem [shape: f32[2,2,1,16], index: 11, kind: input, shape index: {}]
  %s12 = inlined_call_operand.vmem [shape: bf16[2,2,32,16], index: 12, kind: input, shape index: {}]
  %s13 = inlined_call_operand.vmem [shape: f32[2,1,32], index: 13, kind: input, shape index: {}]
  %s14 = inlined_call_operand.vmem [shape: bf16[2,15,16], index: 14, kind: input, shape index: {}]
  %s15 = inlined_call_operand.vmem [shape: bf16[2,15,16], index: 15, kind: input, shape index: {}]
  %s16 = inlined_call_operand.vmem [shape: f32[2,1,32], index: 16, kind: input, shape index: {}]
  %s17 = inlined_call_operand.vmem [shape: f32[2,1,32], index: 17, kind: input, shape index: {}]
  %s18 = inlined_call_operand.vmem [shape: bf16[2,3,64,32], index: 18, kind: input, shape index: {}]
  %s19 = inlined_call_operand.vmem [shape: f32[2,1,64], index: 19, kind: input, shape index: {}]
  %s20 = inlined_call_operand.vmem [shape: bf16[2,3,32,64], index: 20, kind: input, shape index: {}]
  %s21 = inlined_call_operand.vmem [shape: f32[2,1,32], index: 21, kind: input, shape index: {}]
  %s22 = inlined_call_operand.vmem [shape: f32[2,1,32], index: 22, kind: input, shape index: {}]
  %s23 = inlined_call_operand.vmem [shape: f32[2,1,32], index: 23, kind: input, shape index: {}]
  %s24 = inlined_call_operand.vmem [shape: bf16[128,32], index: 24, kind: input, shape index: {}]
  %s25 = inlined_call_operand.vmem [shape: f32[1,128], index: 25, kind: input, shape index: {}]
  %s26 = inlined_call_operand.hbm [shape: f32[2,8,128], index: 26, kind: output, shape index: {}]
  %s27 = sld [smem:[#allocation0]]
  $region137: #{tpu_custom_call.1} parent=0
    _
  %s29 = ssub.s32 1, %s27
  %s30 = scalar_select 0, %s29, %s27
  $region1: #{tpu_custom_call.1} parent=0
    #allocation4 [shape = 'u8[8192]{0}', space=vmem, size = 0x2000, scoped, tag = 'output window, operand 0']
    #allocation5 [shape = 's32[2]{0}', space=sflag, size = 0x8, scoped, tag = 'scoped memory for tpu_custom_call.1']
    %31 = vsyncpa [#allocation5], 0
    %s32 = scalar_lea.sflag [#allocation5], 1
    %33 = vsyncpa %s32, 0
    loop: start=0, step=1, limit=4
    $region2: #{tpu_custom_call.1} parent=1 // loop_pre_header
      _
    $region3: #{tpu_custom_call.1} parent=1 // loop_header
      %s35 = sphi 0, %s39
      %p36 = scmp.ge.s32.totalorder %s35, 4
      %s45 = sphi 0, %s47
      %s48 = sphi 0, %s45
      %s49 = sphi 0, %s48
      %s65 = sphi 0, %s49
      %s71 = sphi 0, %s73
      %s74 = sphi 0, %s71
      %s75 = sphi 0, %s74
      %s91 = sphi 0, %s75
      %s97 = sphi 0, %s99
      %s100 = sphi 0, %s97
      %s101 = sphi 0, %s100
      %s117 = sphi 0, %s101
      %s123 = sphi 0, %s125
      %s126 = sphi 0, %s123
      %s127 = sphi 0, %s126
      %s143 = sphi 0, %s127
      %s147 = sphi 0, %s147
      %s149 = sphi 0, %s147
      %s150 = sphi 0, %s149
      %s164 = sphi 0, %s150
      %s168 = sphi 0, %s168
      %s170 = sphi 0, %s168
      %s171 = sphi 0, %s170
      %s185 = sphi 0, %s171
      %s189 = sphi 0, %s189
      %s191 = sphi 0, %s189
      %s192 = sphi 0, %s191
      %s206 = sphi 0, %s192
      %s210 = sphi 0, %s210
      %s212 = sphi 0, %s210
      %s213 = sphi 0, %s212
      %s227 = sphi 0, %s213
      %s231 = sphi 0, %s231
      %s233 = sphi 0, %s231
      %s234 = sphi 0, %s233
      %s248 = sphi 0, %s234
      %s252 = sphi 0, %s252
      %s254 = sphi 0, %s252
      %s255 = sphi 0, %s254
      %s269 = sphi 0, %s255
      %s273 = sphi 0, %s273
      %s275 = sphi 0, %s273
      %s276 = sphi 0, %s275
      %s290 = sphi 0, %s276
      %s294 = sphi 0, %s294
      %s296 = sphi 0, %s294
      %s297 = sphi 0, %s296
      %s311 = sphi 0, %s297
      %s315 = sphi 0, %s315
      %s317 = sphi 0, %s315
      %s318 = sphi 0, %s317
      %s332 = sphi 0, %s318
      %s336 = sphi 0, %s336
      %s338 = sphi 0, %s336
      %s339 = sphi 0, %s338
      %s353 = sphi 0, %s339
      %s357 = sphi 0, %s357
      %s359 = sphi 0, %s357
      %s360 = sphi 0, %s359
      %s374 = sphi 0, %s360
      %s378 = sphi 0, %s378
      %s380 = sphi 0, %s378
      %s381 = sphi 0, %s380
      %s395 = sphi 0, %s381
      %s399 = sphi 0, %s399
      %s401 = sphi 0, %s399
      %s402 = sphi 0, %s401
      %s416 = sphi 0, %s402
      %s420 = sphi 0, %s420
      %s422 = sphi 0, %s420
      %s423 = sphi 0, %s422
      %s437 = sphi 0, %s423
      %s441 = sphi 0, %s441
      %s443 = sphi 0, %s441
      %s444 = sphi 0, %s443
      %s458 = sphi 0, %s444
      %s462 = sphi 0, %s462
      %s464 = sphi 0, %s462
      %s465 = sphi 0, %s464
      %s479 = sphi 0, %s465
      %s483 = sphi 0, %s483
      %s485 = sphi 0, %s483
      %s486 = sphi 0, %s485
      %s500 = sphi 0, %s486
      %s504 = sphi 0, %s504
      %s506 = sphi 0, %s504
      %s507 = sphi 0, %s506
      %s521 = sphi 0, %s507
      %s525 = sphi 0, %s525
      %s527 = sphi 0, %s525
      %s528 = sphi 0, %s527
      %s542 = sphi 0, %s528
      %s546 = sphi 0, %s546
      %s548 = sphi 0, %s546
      %s549 = sphi 0, %s548
      %s563 = sphi 0, %s549
      %s567 = sphi 0, %s567
      %s569 = sphi 0, %s567
      %s570 = sphi 0, %s569
      %s584 = sphi 0, %s570
      %s588 = sphi 0, %s588
      %s590 = sphi 0, %s588
      %s591 = sphi 0, %s590
      %s605 = sphi 0, %s591
      %s611 = sphi 0, %s613
      %s614 = sphi 0, %s611
      %s615 = sphi 0, %s614
      %s631 = sphi 0, %s615
    $region4: #{tpu_custom_call.1} parent=1 // loop_header_branch
      %38 = sbr.rel (%p36) target = $region8
    $region5: #{tpu_custom_call.1} parent=1 // loop_body
      %s40 = ssub.s32 %s35, 1
      %s41 = ssub.s32 %s35, 2
      %s42 = sadd.s32 %s35, 1
      %s43 = ssub.s32 %s35, %s42
      %p44 = scmp.eq.s32.totalorder %s43, 0
      %s46 = sadd.s32 %s45, 1
      %s47 = scalar_select %p44, %s45, %s46
      %p50 = pneg %p44
      %p51 = scmp.eq.s32.totalorder %s35, 1
      %p52 = por %p50, %p51
      %p53 = scmp.ne.s32.totalorder %s45, %s48
      %p54 = scmp.eq.s32.totalorder %s35, 0
      %p55 = por %p53, %p54
      %p56 = scmp.ne.s32.totalorder %s45, %s48
      %p57 = scmp.eq.s32.totalorder %s40, 1
      %p58 = por %p56, %p57
      %p59 = scmp.ne.s32.totalorder %s48, %s49
      %p60 = scmp.eq.s32.totalorder %s40, 0
      %p61 = por %p59, %p60
      %p62 = scmp.ne.s32.totalorder %s48, %s49
      %p63 = scmp.eq.s32.totalorder %s41, 1
      %p64 = por %p62, %p63
      %p66 = scmp.ne.s32.totalorder %s49, %s65
      %p67 = scmp.eq.s32.totalorder %s41, 0
      %p68 = por %p66, %p67
      %s69 = ssub.s32 %s35, %s42
      %p70 = scmp.eq.s32.totalorder %s69, 0
      %s72 = sadd.s32 %s71, 1
      %s73 = scalar_select %p70, %s71, %s72
      %p76 = pneg %p70
      %p77 = scmp.eq.s32.totalorder %s35, 1
      %p78 = por %p76, %p77
      %p79 = scmp.ne.s32.totalorder %s71, %s74
      %p80 = scmp.eq.s32.totalorder %s35, 0
      %p81 = por %p79, %p80
      %p82 = scmp.ne.s32.totalorder %s71, %s74
      %p83 = scmp.eq.s32.totalorder %s40, 1
      %p84 = por %p82, %p83
      %p85 = scmp.ne.s32.totalorder %s74, %s75
      %p86 = scmp.eq.s32.totalorder %s40, 0
      %p87 = por %p85, %p86
      %p88 = scmp.ne.s32.totalorder %s74, %s75
      %p89 = scmp.eq.s32.totalorder %s41, 1
      %p90 = por %p88, %p89
      %p92 = scmp.ne.s32.totalorder %s75, %s91
      %p93 = scmp.eq.s32.totalorder %s41, 0
      %p94 = por %p92, %p93
      %s95 = ssub.s32 %s35, %s42
      %p96 = scmp.eq.s32.totalorder %s95, 0
      %s98 = sadd.s32 %s97, 1
      %s99 = scalar_select %p96, %s97, %s98
      %p102 = pneg %p96
      %p103 = scmp.eq.s32.totalorder %s35, 1
      %p104 = por %p102, %p103
      %p105 = scmp.ne.s32.totalorder %s97, %s100
      %p106 = scmp.eq.s32.totalorder %s35, 0
      %p107 = por %p105, %p106
      %p108 = scmp.ne.s32.totalorder %s97, %s100
      %p109 = scmp.eq.s32.totalorder %s40, 1
      %p110 = por %p108, %p109
      %p111 = scmp.ne.s32.totalorder %s100, %s101
      %p112 = scmp.eq.s32.totalorder %s40, 0
      %p113 = por %p111, %p112
      %p114 = scmp.ne.s32.totalorder %s100, %s101
      %p115 = scmp.eq.s32.totalorder %s41, 1
      %p116 = por %p114, %p115
      %p118 = scmp.ne.s32.totalorder %s101, %s117
      %p119 = scmp.eq.s32.totalorder %s41, 0
      %p120 = por %p118, %p119
      %s121 = ssub.s32 %s35, %s42
      %p122 = scmp.eq.s32.totalorder %s121, 0
      %s124 = sadd.s32 %s123, 1
      %s125 = scalar_select %p122, %s123, %s124
      %p128 = pneg %p122
      %p129 = scmp.eq.s32.totalorder %s35, 1
      %p130 = por %p128, %p129
      %p131 = scmp.ne.s32.totalorder %s123, %s126
      %p132 = scmp.eq.s32.totalorder %s35, 0
      %p133 = por %p131, %p132
      %p134 = scmp.ne.s32.totalorder %s123, %s126
      %p135 = scmp.eq.s32.totalorder %s40, 1
      %p136 = por %p134, %p135
      %p137 = scmp.ne.s32.totalorder %s126, %s127
      %p138 = scmp.eq.s32.totalorder %s40, 0
      %p139 = por %p137, %p138
      %p140 = scmp.ne.s32.totalorder %s126, %s127
      %p141 = scmp.eq.s32.totalorder %s41, 1
      %p142 = por %p140, %p141
      %p144 = scmp.ne.s32.totalorder %s127, %s143
      %p145 = scmp.eq.s32.totalorder %s41, 0
      %p146 = por %p144, %p145
      %s148 = sadd.s32 %s147, 1
      %p151 = scmp.eq.s32.totalorder %s35, 1
      %p152 = scmp.ne.s32.totalorder %s147, %s149
      %p153 = scmp.eq.s32.totalorder %s35, 0
      %p154 = por %p152, %p153
      %p155 = scmp.ne.s32.totalorder %s147, %s149
      %p156 = scmp.eq.s32.totalorder %s40, 1
      %p157 = por %p155, %p156
      %p158 = scmp.ne.s32.totalorder %s149, %s150
      %p159 = scmp.eq.s32.totalorder %s40, 0
      %p160 = por %p158, %p159
      %p161 = scmp.ne.s32.totalorder %s149, %s150
      %p162 = scmp.eq.s32.totalorder %s41, 1
      %p163 = por %p161, %p162
      %p165 = scmp.ne.s32.totalorder %s150, %s164
      %p166 = scmp.eq.s32.totalorder %s41, 0
      %p167 = por %p165, %p166
      %s169 = sadd.s32 %s168, 1
      %p172 = scmp.eq.s32.totalorder %s35, 1
      %p173 = scmp.ne.s32.totalorder %s168, %s170
      %p174 = scmp.eq.s32.totalorder %s35, 0
      %p175 = por %p173, %p174
      %p176 = scmp.ne.s32.totalorder %s168, %s170
      %p177 = scmp.eq.s32.totalorder %s40, 1
      %p178 = por %p176, %p177
      %p179 = scmp.ne.s32.totalorder %s170, %s171
      %p180 = scmp.eq.s32.totalorder %s40, 0
      %p181 = por %p179, %p180
      %p182 = scmp.ne.s32.totalorder %s170, %s171
      %p183 = scmp.eq.s32.totalorder %s41, 1
      %p184 = por %p182, %p183
      %p186 = scmp.ne.s32.totalorder %s171, %s185
      %p187 = scmp.eq.s32.totalorder %s41, 0
      %p188 = por %p186, %p187
      %s190 = sadd.s32 %s189, 1
      %p193 = scmp.eq.s32.totalorder %s35, 1
      %p194 = scmp.ne.s32.totalorder %s189, %s191
      %p195 = scmp.eq.s32.totalorder %s35, 0
      %p196 = por %p194, %p195
      %p197 = scmp.ne.s32.totalorder %s189, %s191
      %p198 = scmp.eq.s32.totalorder %s40, 1
      %p199 = por %p197, %p198
      %p200 = scmp.ne.s32.totalorder %s191, %s192
      %p201 = scmp.eq.s32.totalorder %s40, 0
      %p202 = por %p200, %p201
      %p203 = scmp.ne.s32.totalorder %s191, %s192
      %p204 = scmp.eq.s32.totalorder %s41, 1
      %p205 = por %p203, %p204
      %p207 = scmp.ne.s32.totalorder %s192, %s206
      %p208 = scmp.eq.s32.totalorder %s41, 0
      %p209 = por %p207, %p208
      %s211 = sadd.s32 %s210, 1
      %p214 = scmp.eq.s32.totalorder %s35, 1
      %p215 = scmp.ne.s32.totalorder %s210, %s212
      %p216 = scmp.eq.s32.totalorder %s35, 0
      %p217 = por %p215, %p216
      %p218 = scmp.ne.s32.totalorder %s210, %s212
      %p219 = scmp.eq.s32.totalorder %s40, 1
      %p220 = por %p218, %p219
      %p221 = scmp.ne.s32.totalorder %s212, %s213
      %p222 = scmp.eq.s32.totalorder %s40, 0
      %p223 = por %p221, %p222
      %p224 = scmp.ne.s32.totalorder %s212, %s213
      %p225 = scmp.eq.s32.totalorder %s41, 1
      %p226 = por %p224, %p225
      %p228 = scmp.ne.s32.totalorder %s213, %s227
      %p229 = scmp.eq.s32.totalorder %s41, 0
      %p230 = por %p228, %p229
      %s232 = sadd.s32 %s231, 1
      %p235 = scmp.eq.s32.totalorder %s35, 1
      %p236 = scmp.ne.s32.totalorder %s231, %s233
      %p237 = scmp.eq.s32.totalorder %s35, 0
      %p238 = por %p236, %p237
      %p239 = scmp.ne.s32.totalorder %s231, %s233
      %p240 = scmp.eq.s32.totalorder %s40, 1
      %p241 = por %p239, %p240
      %p242 = scmp.ne.s32.totalorder %s233, %s234
      %p243 = scmp.eq.s32.totalorder %s40, 0
      %p244 = por %p242, %p243
      %p245 = scmp.ne.s32.totalorder %s233, %s234
      %p246 = scmp.eq.s32.totalorder %s41, 1
      %p247 = por %p245, %p246
      %p249 = scmp.ne.s32.totalorder %s234, %s248
      %p250 = scmp.eq.s32.totalorder %s41, 0
      %p251 = por %p249, %p250
      %s253 = sadd.s32 %s252, 1
      %p256 = scmp.eq.s32.totalorder %s35, 1
      %p257 = scmp.ne.s32.totalorder %s252, %s254
      %p258 = scmp.eq.s32.totalorder %s35, 0
      %p259 = por %p257, %p258
      %p260 = scmp.ne.s32.totalorder %s252, %s254
      %p261 = scmp.eq.s32.totalorder %s40, 1
      %p262 = por %p260, %p261
      %p263 = scmp.ne.s32.totalorder %s254, %s255
      %p264 = scmp.eq.s32.totalorder %s40, 0
      %p265 = por %p263, %p264
      %p266 = scmp.ne.s32.totalorder %s254, %s255
      %p267 = scmp.eq.s32.totalorder %s41, 1
      %p268 = por %p266, %p267
      %p270 = scmp.ne.s32.totalorder %s255, %s269
      %p271 = scmp.eq.s32.totalorder %s41, 0
      %p272 = por %p270, %p271
      %s274 = sadd.s32 %s273, 1
      %p277 = scmp.eq.s32.totalorder %s35, 1
      %p278 = scmp.ne.s32.totalorder %s273, %s275
      %p279 = scmp.eq.s32.totalorder %s35, 0
      %p280 = por %p278, %p279
      %p281 = scmp.ne.s32.totalorder %s273, %s275
      %p282 = scmp.eq.s32.totalorder %s40, 1
      %p283 = por %p281, %p282
      %p284 = scmp.ne.s32.totalorder %s275, %s276
      %p285 = scmp.eq.s32.totalorder %s40, 0
      %p286 = por %p284, %p285
      %p287 = scmp.ne.s32.totalorder %s275, %s276
      %p288 = scmp.eq.s32.totalorder %s41, 1
      %p289 = por %p287, %p288
      %p291 = scmp.ne.s32.totalorder %s276, %s290
      %p292 = scmp.eq.s32.totalorder %s41, 0
      %p293 = por %p291, %p292
      %s295 = sadd.s32 %s294, 1
      %p298 = scmp.eq.s32.totalorder %s35, 1
      %p299 = scmp.ne.s32.totalorder %s294, %s296
      %p300 = scmp.eq.s32.totalorder %s35, 0
      %p301 = por %p299, %p300
      %p302 = scmp.ne.s32.totalorder %s294, %s296
      %p303 = scmp.eq.s32.totalorder %s40, 1
      %p304 = por %p302, %p303
      %p305 = scmp.ne.s32.totalorder %s296, %s297
      %p306 = scmp.eq.s32.totalorder %s40, 0
      %p307 = por %p305, %p306
      %p308 = scmp.ne.s32.totalorder %s296, %s297
      %p309 = scmp.eq.s32.totalorder %s41, 1
      %p310 = por %p308, %p309
      %p312 = scmp.ne.s32.totalorder %s297, %s311
      %p313 = scmp.eq.s32.totalorder %s41, 0
      %p314 = por %p312, %p313
      %s316 = sadd.s32 %s315, 1
      %p319 = scmp.eq.s32.totalorder %s35, 1
      %p320 = scmp.ne.s32.totalorder %s315, %s317
      %p321 = scmp.eq.s32.totalorder %s35, 0
      %p322 = por %p320, %p321
      %p323 = scmp.ne.s32.totalorder %s315, %s317
      %p324 = scmp.eq.s32.totalorder %s40, 1
      %p325 = por %p323, %p324
      %p326 = scmp.ne.s32.totalorder %s317, %s318
      %p327 = scmp.eq.s32.totalorder %s40, 0
      %p328 = por %p326, %p327
      %p329 = scmp.ne.s32.totalorder %s317, %s318
      %p330 = scmp.eq.s32.totalorder %s41, 1
      %p331 = por %p329, %p330
      %p333 = scmp.ne.s32.totalorder %s318, %s332
      %p334 = scmp.eq.s32.totalorder %s41, 0
      %p335 = por %p333, %p334
      %s337 = sadd.s32 %s336, 1
      %p340 = scmp.eq.s32.totalorder %s35, 1
      %p341 = scmp.ne.s32.totalorder %s336, %s338
      %p342 = scmp.eq.s32.totalorder %s35, 0
      %p343 = por %p341, %p342
      %p344 = scmp.ne.s32.totalorder %s336, %s338
      %p345 = scmp.eq.s32.totalorder %s40, 1
      %p346 = por %p344, %p345
      %p347 = scmp.ne.s32.totalorder %s338, %s339
      %p348 = scmp.eq.s32.totalorder %s40, 0
      %p349 = por %p347, %p348
      %p350 = scmp.ne.s32.totalorder %s338, %s339
      %p351 = scmp.eq.s32.totalorder %s41, 1
      %p352 = por %p350, %p351
      %p354 = scmp.ne.s32.totalorder %s339, %s353
      %p355 = scmp.eq.s32.totalorder %s41, 0
      %p356 = por %p354, %p355
      %s358 = sadd.s32 %s357, 1
      %p361 = scmp.eq.s32.totalorder %s35, 1
      %p362 = scmp.ne.s32.totalorder %s357, %s359
      %p363 = scmp.eq.s32.totalorder %s35, 0
      %p364 = por %p362, %p363
      %p365 = scmp.ne.s32.totalorder %s357, %s359
      %p366 = scmp.eq.s32.totalorder %s40, 1
      %p367 = por %p365, %p366
      %p368 = scmp.ne.s32.totalorder %s359, %s360
      %p369 = scmp.eq.s32.totalorder %s40, 0
      %p370 = por %p368, %p369
      %p371 = scmp.ne.s32.totalorder %s359, %s360
      %p372 = scmp.eq.s32.totalorder %s41, 1
      %p373 = por %p371, %p372
      %p375 = scmp.ne.s32.totalorder %s360, %s374
      %p376 = scmp.eq.s32.totalorder %s41, 0
      %p377 = por %p375, %p376
      %s379 = sadd.s32 %s378, 1
      %p382 = scmp.eq.s32.totalorder %s35, 1
      %p383 = scmp.ne.s32.totalorder %s378, %s380
      %p384 = scmp.eq.s32.totalorder %s35, 0
      %p385 = por %p383, %p384
      %p386 = scmp.ne.s32.totalorder %s378, %s380
      %p387 = scmp.eq.s32.totalorder %s40, 1
      %p388 = por %p386, %p387
      %p389 = scmp.ne.s32.totalorder %s380, %s381
      %p390 = scmp.eq.s32.totalorder %s40, 0
      %p391 = por %p389, %p390
      %p392 = scmp.ne.s32.totalorder %s380, %s381
      %p393 = scmp.eq.s32.totalorder %s41, 1
      %p394 = por %p392, %p393
      %p396 = scmp.ne.s32.totalorder %s381, %s395
      %p397 = scmp.eq.s32.totalorder %s41, 0
      %p398 = por %p396, %p397
      %s400 = sadd.s32 %s399, 1
      %p403 = scmp.eq.s32.totalorder %s35, 1
      %p404 = scmp.ne.s32.totalorder %s399, %s401
      %p405 = scmp.eq.s32.totalorder %s35, 0
      %p406 = por %p404, %p405
      %p407 = scmp.ne.s32.totalorder %s399, %s401
      %p408 = scmp.eq.s32.totalorder %s40, 1
      %p409 = por %p407, %p408
      %p410 = scmp.ne.s32.totalorder %s401, %s402
      %p411 = scmp.eq.s32.totalorder %s40, 0
      %p412 = por %p410, %p411
      %p413 = scmp.ne.s32.totalorder %s401, %s402
      %p414 = scmp.eq.s32.totalorder %s41, 1
      %p415 = por %p413, %p414
      %p417 = scmp.ne.s32.totalorder %s402, %s416
      %p418 = scmp.eq.s32.totalorder %s41, 0
      %p419 = por %p417, %p418
      %s421 = sadd.s32 %s420, 1
      %p424 = scmp.eq.s32.totalorder %s35, 1
      %p425 = scmp.ne.s32.totalorder %s420, %s422
      %p426 = scmp.eq.s32.totalorder %s35, 0
      %p427 = por %p425, %p426
      %p428 = scmp.ne.s32.totalorder %s420, %s422
      %p429 = scmp.eq.s32.totalorder %s40, 1
      %p430 = por %p428, %p429
      %p431 = scmp.ne.s32.totalorder %s422, %s423
      %p432 = scmp.eq.s32.totalorder %s40, 0
      %p433 = por %p431, %p432
      %p434 = scmp.ne.s32.totalorder %s422, %s423
      %p435 = scmp.eq.s32.totalorder %s41, 1
      %p436 = por %p434, %p435
      %p438 = scmp.ne.s32.totalorder %s423, %s437
      %p439 = scmp.eq.s32.totalorder %s41, 0
      %p440 = por %p438, %p439
      %s442 = sadd.s32 %s441, 1
      %p445 = scmp.eq.s32.totalorder %s35, 1
      %p446 = scmp.ne.s32.totalorder %s441, %s443
      %p447 = scmp.eq.s32.totalorder %s35, 0
      %p448 = por %p446, %p447
      %p449 = scmp.ne.s32.totalorder %s441, %s443
      %p450 = scmp.eq.s32.totalorder %s40, 1
      %p451 = por %p449, %p450
      %p452 = scmp.ne.s32.totalorder %s443, %s444
      %p453 = scmp.eq.s32.totalorder %s40, 0
      %p454 = por %p452, %p453
      %p455 = scmp.ne.s32.totalorder %s443, %s444
      %p456 = scmp.eq.s32.totalorder %s41, 1
      %p457 = por %p455, %p456
      %p459 = scmp.ne.s32.totalorder %s444, %s458
      %p460 = scmp.eq.s32.totalorder %s41, 0
      %p461 = por %p459, %p460
      %s463 = sadd.s32 %s462, 1
      %p466 = scmp.eq.s32.totalorder %s35, 1
      %p467 = scmp.ne.s32.totalorder %s462, %s464
      %p468 = scmp.eq.s32.totalorder %s35, 0
      %p469 = por %p467, %p468
      %p470 = scmp.ne.s32.totalorder %s462, %s464
      %p471 = scmp.eq.s32.totalorder %s40, 1
      %p472 = por %p470, %p471
      %p473 = scmp.ne.s32.totalorder %s464, %s465
      %p474 = scmp.eq.s32.totalorder %s40, 0
      %p475 = por %p473, %p474
      %p476 = scmp.ne.s32.totalorder %s464, %s465
      %p477 = scmp.eq.s32.totalorder %s41, 1
      %p478 = por %p476, %p477
      %p480 = scmp.ne.s32.totalorder %s465, %s479
      %p481 = scmp.eq.s32.totalorder %s41, 0
      %p482 = por %p480, %p481
      %s484 = sadd.s32 %s483, 1
      %p487 = scmp.eq.s32.totalorder %s35, 1
      %p488 = scmp.ne.s32.totalorder %s483, %s485
      %p489 = scmp.eq.s32.totalorder %s35, 0
      %p490 = por %p488, %p489
      %p491 = scmp.ne.s32.totalorder %s483, %s485
      %p492 = scmp.eq.s32.totalorder %s40, 1
      %p493 = por %p491, %p492
      %p494 = scmp.ne.s32.totalorder %s485, %s486
      %p495 = scmp.eq.s32.totalorder %s40, 0
      %p496 = por %p494, %p495
      %p497 = scmp.ne.s32.totalorder %s485, %s486
      %p498 = scmp.eq.s32.totalorder %s41, 1
      %p499 = por %p497, %p498
      %p501 = scmp.ne.s32.totalorder %s486, %s500
      %p502 = scmp.eq.s32.totalorder %s41, 0
      %p503 = por %p501, %p502
      %s505 = sadd.s32 %s504, 1
      %p508 = scmp.eq.s32.totalorder %s35, 1
      %p509 = scmp.ne.s32.totalorder %s504, %s506
      %p510 = scmp.eq.s32.totalorder %s35, 0
      %p511 = por %p509, %p510
      %p512 = scmp.ne.s32.totalorder %s504, %s506
      %p513 = scmp.eq.s32.totalorder %s40, 1
      %p514 = por %p512, %p513
      %p515 = scmp.ne.s32.totalorder %s506, %s507
      %p516 = scmp.eq.s32.totalorder %s40, 0
      %p517 = por %p515, %p516
      %p518 = scmp.ne.s32.totalorder %s506, %s507
      %p519 = scmp.eq.s32.totalorder %s41, 1
      %p520 = por %p518, %p519
      %p522 = scmp.ne.s32.totalorder %s507, %s521
      %p523 = scmp.eq.s32.totalorder %s41, 0
      %p524 = por %p522, %p523
      %s526 = sadd.s32 %s525, 1
      %p529 = scmp.eq.s32.totalorder %s35, 1
      %p530 = scmp.ne.s32.totalorder %s525, %s527
      %p531 = scmp.eq.s32.totalorder %s35, 0
      %p532 = por %p530, %p531
      %p533 = scmp.ne.s32.totalorder %s525, %s527
      %p534 = scmp.eq.s32.totalorder %s40, 1
      %p535 = por %p533, %p534
      %p536 = scmp.ne.s32.totalorder %s527, %s528
      %p537 = scmp.eq.s32.totalorder %s40, 0
      %p538 = por %p536, %p537
      %p539 = scmp.ne.s32.totalorder %s527, %s528
      %p540 = scmp.eq.s32.totalorder %s41, 1
      %p541 = por %p539, %p540
      %p543 = scmp.ne.s32.totalorder %s528, %s542
      %p544 = scmp.eq.s32.totalorder %s41, 0
      %p545 = por %p543, %p544
      %s547 = sadd.s32 %s546, 1
      %p550 = scmp.eq.s32.totalorder %s35, 1
      %p551 = scmp.ne.s32.totalorder %s546, %s548
      %p552 = scmp.eq.s32.totalorder %s35, 0
      %p553 = por %p551, %p552
      %p554 = scmp.ne.s32.totalorder %s546, %s548
      %p555 = scmp.eq.s32.totalorder %s40, 1
      %p556 = por %p554, %p555
      %p557 = scmp.ne.s32.totalorder %s548, %s549
      %p558 = scmp.eq.s32.totalorder %s40, 0
      %p559 = por %p557, %p558
      %p560 = scmp.ne.s32.totalorder %s548, %s549
      %p561 = scmp.eq.s32.totalorder %s41, 1
      %p562 = por %p560, %p561
      %p564 = scmp.ne.s32.totalorder %s549, %s563
      %p565 = scmp.eq.s32.totalorder %s41, 0
      %p566 = por %p564, %p565
      %s568 = sadd.s32 %s567, 1
      %p571 = scmp.eq.s32.totalorder %s35, 1
      %p572 = scmp.ne.s32.totalorder %s567, %s569
      %p573 = scmp.eq.s32.totalorder %s35, 0
      %p574 = por %p572, %p573
      %p575 = scmp.ne.s32.totalorder %s567, %s569
      %p576 = scmp.eq.s32.totalorder %s40, 1
      %p577 = por %p575, %p576
      %p578 = scmp.ne.s32.totalorder %s569, %s570
      %p579 = scmp.eq.s32.totalorder %s40, 0
      %p580 = por %p578, %p579
      %p581 = scmp.ne.s32.totalorder %s569, %s570
      %p582 = scmp.eq.s32.totalorder %s41, 1
      %p583 = por %p581, %p582
      %p585 = scmp.ne.s32.totalorder %s570, %s584
      %p586 = scmp.eq.s32.totalorder %s41, 0
      %p587 = por %p585, %p586
      %s589 = sadd.s32 %s588, 1
      %p592 = scmp.eq.s32.totalorder %s35, 1
      %p593 = scmp.ne.s32.totalorder %s588, %s590
      %p594 = scmp.eq.s32.totalorder %s35, 0
      %p595 = por %p593, %p594
      %p596 = scmp.ne.s32.totalorder %s588, %s590
      %p597 = scmp.eq.s32.totalorder %s40, 1
      %p598 = por %p596, %p597
      %p599 = scmp.ne.s32.totalorder %s590, %s591
      %p600 = scmp.eq.s32.totalorder %s40, 0
      %p601 = por %p599, %p600
      %p602 = scmp.ne.s32.totalorder %s590, %s591
      %p603 = scmp.eq.s32.totalorder %s41, 1
      %p604 = por %p602, %p603
      %p606 = scmp.ne.s32.totalorder %s591, %s605
      %p607 = scmp.eq.s32.totalorder %s41, 0
      %p608 = por %p606, %p607
      %s609 = ssub.s32 %s35, %s42
      %p610 = scmp.eq.s32.totalorder %s609, 0
      %s612 = sadd.s32 %s611, 1
      %s613 = scalar_select %p610, %s611, %s612
      %p616 = pneg %p610
      %p617 = scmp.eq.s32.totalorder %s35, 1
      %p618 = por %p616, %p617
      %p619 = scmp.ne.s32.totalorder %s611, %s614
      %p620 = scmp.eq.s32.totalorder %s35, 0
      %p621 = por %p619, %p620
      %p622 = scmp.ne.s32.totalorder %s611, %s614
      %p623 = scmp.eq.s32.totalorder %s40, 1
      %p624 = por %p622, %p623
      %p625 = scmp.ne.s32.totalorder %s614, %s615
      %p626 = scmp.eq.s32.totalorder %s40, 0
      %p627 = por %p625, %p626
      %p628 = scmp.ne.s32.totalorder %s614, %s615
      %p629 = scmp.eq.s32.totalorder %s41, 1
      %p630 = por %p628, %p629
      %p632 = scmp.ne.s32.totalorder %s615, %s631
      %p633 = scmp.eq.s32.totalorder %s41, 0
      %p634 = por %p632, %p633
      %p635 = scmp.le.s32.totalorder 1, %s35
      %p636 = scmp.lt.s32.totalorder %s35, 3
      %p637 = pnand %p635, %p636
      %p638 = pneg %p637
      // Predicated region
      $region9: #{tpu_custom_call.1} parent=5 // pred_check
        _
      $region10: #{tpu_custom_call.1} parent=5 // pred_check_branch
        %640 = sbr.rel (%p637) target = $region12
      $region11: #{tpu_custom_call.1} parent=5 // pred_region
        %s641 = ssub.s32 %s35, 1
        // Predicated region
        $region13: #{tpu_custom_call.1} parent=11 // pred_check
          %p642 = pneg %p160
        $region14: #{tpu_custom_call.1} parent=11 // pred_check_branch
          %644 = sbr.rel (%p642) target = $region16
        $region15: #{tpu_custom_call.1} parent=11 // pred_region
          _
        $region16: #{tpu_custom_call.1} parent=11 // pred_fallthru
          _
        // Predicated region
        $region17: #{tpu_custom_call.1} parent=11 // pred_check
          %p645 = pneg %p181
        $region18: #{tpu_custom_call.1} parent=11 // pred_check_branch
          %647 = sbr.rel (%p645) target = $region20
        $region19: #{tpu_custom_call.1} parent=11 // pred_region
          _
        $region20: #{tpu_custom_call.1} parent=11 // pred_fallthru
          _
        // Predicated region
        $region21: #{tpu_custom_call.1} parent=11 // pred_check
          %p648 = pneg %p202
        $region22: #{tpu_custom_call.1} parent=11 // pred_check_branch
          %650 = sbr.rel (%p648) target = $region24
        $region23: #{tpu_custom_call.1} parent=11 // pred_region
          _
        $region24: #{tpu_custom_call.1} parent=11 // pred_fallthru
          _
        // Predicated region
        $region25: #{tpu_custom_call.1} parent=11 // pred_check
          %p651 = pneg %p223
        $region26: #{tpu_custom_call.1} parent=11 // pred_check_branch
          %653 = sbr.rel (%p651) target = $region28
        $region27: #{tpu_custom_call.1} parent=11 // pred_region
          _
        $region28: #{tpu_custom_call.1} parent=11 // pred_fallthru
          _
        // Predicated region
        $region29: #{tpu_custom_call.1} parent=11 // pred_check
          %p654 = pneg %p244
        $region30: #{tpu_custom_call.1} parent=11 // pred_check_branch
          %656 = sbr.rel (%p654) target = $region32
        $region31: #{tpu_custom_call.1} parent=11 // pred_region
          _
        $region32: #{tpu_custom_call.1} parent=11 // pred_fallthru
          _
        // Predicated region
        $region33: #{tpu_custom_call.1} parent=11 // pred_check
          %p657 = pneg %p265
        $region34: #{tpu_custom_call.1} parent=11 // pred_check_branch
          %659 = sbr.rel (%p657) target = $region36
        $region35: #{tpu_custom_call.1} parent=11 // pred_region
          _
        $region36: #{tpu_custom_call.1} parent=11 // pred_fallthru
          _
        // Predicated region
        $region37: #{tpu_custom_call.1} parent=11 // pred_check
          %p660 = pneg %p286
        $region38: #{tpu_custom_call.1} parent=11 // pred_check_branch
          %662 = sbr.rel (%p660) target = $region40
        $region39: #{tpu_custom_call.1} parent=11 // pred_region
          _
        $region40: #{tpu_custom_call.1} parent=11 // pred_fallthru
          _
        // Predicated region
        $region41: #{tpu_custom_call.1} parent=11 // pred_check
          %p663 = pneg %p307
        $region42: #{tpu_custom_call.1} parent=11 // pred_check_branch
          %665 = sbr.rel (%p663) target = $region44
        $region43: #{tpu_custom_call.1} parent=11 // pred_region
          _
        $region44: #{tpu_custom_call.1} parent=11 // pred_fallthru
          _
        // Predicated region
        $region45: #{tpu_custom_call.1} parent=11 // pred_check
          %p666 = pneg %p328
        $region46: #{tpu_custom_call.1} parent=11 // pred_check_branch
          %668 = sbr.rel (%p666) target = $region48
        $region47: #{tpu_custom_call.1} parent=11 // pred_region
          _
        $region48: #{tpu_custom_call.1} parent=11 // pred_fallthru
          _
        // Predicated region
        $region49: #{tpu_custom_call.1} parent=11 // pred_check
          %p669 = pneg %p349
        $region50: #{tpu_custom_call.1} parent=11 // pred_check_branch
          %671 = sbr.rel (%p669) target = $region52
        $region51: #{tpu_custom_call.1} parent=11 // pred_region
          _
        $region52: #{tpu_custom_call.1} parent=11 // pred_fallthru
          _
        // Predicated region
        $region53: #{tpu_custom_call.1} parent=11 // pred_check
          %p672 = pneg %p370
        $region54: #{tpu_custom_call.1} parent=11 // pred_check_branch
          %674 = sbr.rel (%p672) target = $region56
        $region55: #{tpu_custom_call.1} parent=11 // pred_region
          _
        $region56: #{tpu_custom_call.1} parent=11 // pred_fallthru
          _
        // Predicated region
        $region57: #{tpu_custom_call.1} parent=11 // pred_check
          %p675 = pneg %p391
        $region58: #{tpu_custom_call.1} parent=11 // pred_check_branch
          %677 = sbr.rel (%p675) target = $region60
        $region59: #{tpu_custom_call.1} parent=11 // pred_region
          _
        $region60: #{tpu_custom_call.1} parent=11 // pred_fallthru
          _
        // Predicated region
        $region61: #{tpu_custom_call.1} parent=11 // pred_check
          %p678 = pneg %p412
        $region62: #{tpu_custom_call.1} parent=11 // pred_check_branch
          %680 = sbr.rel (%p678) target = $region64
        $region63: #{tpu_custom_call.1} parent=11 // pred_region
          _
        $region64: #{tpu_custom_call.1} parent=11 // pred_fallthru
          _
        // Predicated region
        $region65: #{tpu_custom_call.1} parent=11 // pred_check
          %p681 = pneg %p433
        $region66: #{tpu_custom_call.1} parent=11 // pred_check_branch
          %683 = sbr.rel (%p681) target = $region68
        $region67: #{tpu_custom_call.1} parent=11 // pred_region
          _
        $region68: #{tpu_custom_call.1} parent=11 // pred_fallthru
          _
        // Predicated region
        $region69: #{tpu_custom_call.1} parent=11 // pred_check
          %p684 = pneg %p454
        $region70: #{tpu_custom_call.1} parent=11 // pred_check_branch
          %686 = sbr.rel (%p684) target = $region72
        $region71: #{tpu_custom_call.1} parent=11 // pred_region
          _
        $region72: #{tpu_custom_call.1} parent=11 // pred_fallthru
          _
        // Predicated region
        $region73: #{tpu_custom_call.1} parent=11 // pred_check
          %p687 = pneg %p475
        $region74: #{tpu_custom_call.1} parent=11 // pred_check_branch
          %689 = sbr.rel (%p687) target = $region76
        $region75: #{tpu_custom_call.1} parent=11 // pred_region
          _
        $region76: #{tpu_custom_call.1} parent=11 // pred_fallthru
          _
        // Predicated region
        $region77: #{tpu_custom_call.1} parent=11 // pred_check
          %p690 = pneg %p496
        $region78: #{tpu_custom_call.1} parent=11 // pred_check_branch
          %692 = sbr.rel (%p690) target = $region80
        $region79: #{tpu_custom_call.1} parent=11 // pred_region
          _
        $region80: #{tpu_custom_call.1} parent=11 // pred_fallthru
          _
        // Predicated region
        $region81: #{tpu_custom_call.1} parent=11 // pred_check
          %p693 = pneg %p517
        $region82: #{tpu_custom_call.1} parent=11 // pred_check_branch
          %695 = sbr.rel (%p693) target = $region84
        $region83: #{tpu_custom_call.1} parent=11 // pred_region
          _
        $region84: #{tpu_custom_call.1} parent=11 // pred_fallthru
          _
        // Predicated region
        $region85: #{tpu_custom_call.1} parent=11 // pred_check
          %p696 = pneg %p538
        $region86: #{tpu_custom_call.1} parent=11 // pred_check_branch
          %698 = sbr.rel (%p696) target = $region88
        $region87: #{tpu_custom_call.1} parent=11 // pred_region
          _
        $region88: #{tpu_custom_call.1} parent=11 // pred_fallthru
          _
        // Predicated region
        $region89: #{tpu_custom_call.1} parent=11 // pred_check
          %p699 = pneg %p559
        $region90: #{tpu_custom_call.1} parent=11 // pred_check_branch
          %701 = sbr.rel (%p699) target = $region92
        $region91: #{tpu_custom_call.1} parent=11 // pred_region
          _
        $region92: #{tpu_custom_call.1} parent=11 // pred_fallthru
          _
        // Predicated region
        $region93: #{tpu_custom_call.1} parent=11 // pred_check
          %p702 = pneg %p580
        $region94: #{tpu_custom_call.1} parent=11 // pred_check_branch
          %704 = sbr.rel (%p702) target = $region96
        $region95: #{tpu_custom_call.1} parent=11 // pred_region
          _
        $region96: #{tpu_custom_call.1} parent=11 // pred_fallthru
          _
        // Predicated region
        $region97: #{tpu_custom_call.1} parent=11 // pred_check
          %p705 = pneg %p601
        $region98: #{tpu_custom_call.1} parent=11 // pred_check_branch
          %707 = sbr.rel (%p705) target = $region100
        $region99: #{tpu_custom_call.1} parent=11 // pred_region
          _
        $region100: #{tpu_custom_call.1} parent=11 // pred_fallthru
          _
      $region12: #{tpu_custom_call.1} parent=5 // pred_fallthru
        _
      %p708 = scmp.lt.s32.totalorder %s35, 2
      // Predicated region
      $region101: #{tpu_custom_call.1} parent=5 // pred_check
        %p709 = pneg %p708
      $region102: #{tpu_custom_call.1} parent=5 // pred_check_branch
        %711 = sbr.rel (%p709) target = $region104
      $region103: #{tpu_custom_call.1} parent=5 // pred_region
        // Predicated region
        $region105: #{tpu_custom_call.1} parent=103 // pred_check
          %p712 = pneg %p55
        $region106: #{tpu_custom_call.1} parent=103 // pred_check_branch
          %714 = sbr.rel (%p712) target = $region108
        $region107: #{tpu_custom_call.1} parent=103 // pred_region
          %p715 = scmp.lt.s32.totalorder %s35, 1
          %s716 = scalar_select %p715, %s35, 1
          %s717 = smul.addr %s716, 8
          %s718 = scalar_lea.vmem %s0, %s717
        $region108: #{tpu_custom_call.1} parent=103 // pred_fallthru
          _
        // Predicated region
        $region109: #{tpu_custom_call.1} parent=103 // pred_check
          %p719 = pneg %p81
        $region110: #{tpu_custom_call.1} parent=103 // pred_check_branch
          %721 = sbr.rel (%p719) target = $region112
        $region111: #{tpu_custom_call.1} parent=103 // pred_region
          %p722 = scmp.lt.s32.totalorder %s35, 1
          %s723 = scalar_select %p722, %s35, 1
          %s724 = smul.addr %s723, 8
          %s725 = scalar_lea.vmem %s1, %s724
        $region112: #{tpu_custom_call.1} parent=103 // pred_fallthru
          _
        // Predicated region
        $region113: #{tpu_custom_call.1} parent=103 // pred_check
          %p726 = pneg %p107
        $region114: #{tpu_custom_call.1} parent=103 // pred_check_branch
          %728 = sbr.rel (%p726) target = $region116
        $region115: #{tpu_custom_call.1} parent=103 // pred_region
          %p729 = scmp.lt.s32.totalorder %s35, 1
          %s730 = scalar_select %p729, %s35, 1
          %s731 = smul.addr %s730, 8
          %s732 = scalar_lea.vmem %s2, %s731
        $region116: #{tpu_custom_call.1} parent=103 // pred_fallthru
          _
        // Predicated region
        $region117: #{tpu_custom_call.1} parent=103 // pred_check
          %p733 = pneg %p133
        $region118: #{tpu_custom_call.1} parent=103 // pred_check_branch
          %735 = sbr.rel (%p733) target = $region120
        $region119: #{tpu_custom_call.1} parent=103 // pred_region
          %p736 = scmp.lt.s32.totalorder %s35, 1
          %s737 = scalar_select %p736, %s35, 1
          %s738 = scalar_lea.vmem %s3, %s737
        $region120: #{tpu_custom_call.1} parent=103 // pred_fallthru
          _
      $region104: #{tpu_custom_call.1} parent=5 // pred_fallthru
        _
      %p739 = scmp.le.s32.totalorder 1, %s35
      %p740 = scmp.lt.s32.totalorder %s35, 3
      %p741 = pnand %p739, %p740
      %p742 = pneg %p741
      // Predicated region
      $region121: #{tpu_custom_call.1} parent=5 // pred_check
        _
      $region122: #{tpu_custom_call.1} parent=5 // pred_check_branch
        %744 = sbr.rel (%p741) target = $region124
      $region123: #{tpu_custom_call.1} parent=5 // pred_region
        %s745 = ssub.s32 %s35, 1
        %p746 = scmp.lt.s32.totalorder %s40, 1
        %s747 = scalar_select %p746, %s40, 1
        %s748 = smul.addr %s747, 8
        %s749 = scalar_lea.vmem %s0, %s748
        %p750 = pneg %p61
        %p751 = pneg %p58
        %p752 = scmp.lt.s32.totalorder %s40, 1
        %s753 = scalar_select %p752, %s40, 1
        %s754 = smul.addr %s753, 8
        %s755 = scalar_lea.vmem %s1, %s754
        %p756 = pneg %p87
        %p757 = pneg %p84
        %p758 = scmp.lt.s32.totalorder %s40, 1
        %s759 = scalar_select %p758, %s40, 1
        %s760 = smul.addr %s759, 8
        %s761 = scalar_lea.vmem %s2, %s760
        %p762 = pneg %p113
        %p763 = pneg %p110
        %p764 = scmp.lt.s32.totalorder %s40, 1
        %s765 = scalar_select %p764, %s40, 1
        %s766 = scalar_lea.vmem %s3, %s765
        %p767 = pneg %p139
        %p768 = pneg %p136
        %p769 = pneg %p160
        %p770 = pneg %p157
        %p771 = pneg %p181
        %p772 = pneg %p178
        %p773 = pneg %p202
        %p774 = pneg %p199
        %p775 = pneg %p223
        %p776 = pneg %p220
        %p777 = pneg %p244
        %p778 = pneg %p241
        %p779 = pneg %p265
        %p780 = pneg %p262
        %p781 = pneg %p286
        %p782 = pneg %p283
        %p783 = pneg %p307
        %p784 = pneg %p304
        %p785 = pneg %p328
        %p786 = pneg %p325
        %p787 = pneg %p349
        %p788 = pneg %p346
        %p789 = pneg %p370
        %p790 = pneg %p367
        %p791 = pneg %p391
        %p792 = pneg %p388
        %p793 = pneg %p412
        %p794 = pneg %p409
        %p795 = pneg %p433
        %p796 = pneg %p430
        %p797 = pneg %p454
        %p798 = pneg %p451
        %p799 = pneg %p475
        %p800 = pneg %p472
        %p801 = pneg %p496
        %p802 = pneg %p493
        %p803 = pneg %p517
        %p804 = pneg %p514
        %p805 = pneg %p538
        %p806 = pneg %p535
        %p807 = pneg %p559
        %p808 = pneg %p556
        %p809 = pneg %p580
        %p810 = pneg %p577
        %p811 = pneg %p601
        %p812 = pneg %p598
        %p813 = pneg %p627
        %p814 = pneg %p624
        %s815 = sand.u32 %s614, 1
        %s816 = scalar_lea.sflag [#allocation5], %s815
        %s817 = sand.u32 %s614, 1
        %s818 = smul.addr %s817, 8
        %s819 = scalar_lea.vmem [#allocation4], %s818
        %p820 = scmp.lt.s32.totalorder %s40, 1
        %s821 = scalar_select %p820, %s40, 1
        %s822 = smul.addr %s821, 8
        %s823 = scalar_lea.vmem %s0, %s822
        %p824 = scmp.lt.s32.totalorder %s40, 1
        %s825 = scalar_select %p824, %s40, 1
        %s826 = smul.addr %s825, 8
        %s827 = scalar_lea.vmem %s1, %s826
        %p828 = scmp.lt.s32.totalorder %s40, 1
        %s829 = scalar_select %p828, %s40, 1
        %s830 = smul.addr %s829, 8
        %s831 = scalar_lea.vmem %s2, %s830
        %p832 = scmp.lt.s32.totalorder %s40, 1
        %s833 = scalar_select %p832, %s40, 1
        %s834 = scalar_lea.vmem %s3, %s833
        %vm836 = vcmask 261120
        %837 = vst.msk [vmem:[#allocation2] sm:$0xff] %vm836, 0.0
        %vm838 = vcmask 254976
        %839 = vst.msk [vmem:[#allocation2 + $0x8] sm:$0x3] %vm838, 0.0
        %vm840 = vcmask 523264
        %841 = vst.msk [vmem:[#allocation3] sm:$0xff] %vm840, 0.0
        %vm842 = vcmask 517120
        %843 = vst.msk [vmem:[#allocation3 + $0x8] sm:$0x3] %vm842, 0.0
        %v844 = vld [vmem:[%s831] sm:$0xff]
        %v845 = vld [vmem:[%s834] sm:$0x1]
        %847 = vset.pattern.permute.xlu0 0
        %848 = vperm.xlu0 %847, %v844
        %v849 = vpop.permute.xlu0 %848
        %v852 = vlaneseq
        %v853 = vshrl.u32 %v852, 7
        %v854 = vsub.s32 0, %v853
        %v855 = vrot.slane %v845, %v854
        %v857 = vmul.f32 %v849, %v855
        %v858 = vsub.f32 %v857, 1.0
        %v859 = vmul.f32 %v858, 10000.0
        %v860 = vlaneseq
        %v861 = vshrl.u32 %v860, 7
        %v862 = vlaneseq
        %v863 = vand.u32 %v862, 127
        %v864 = vsub.s32 %v863, %v861
        %v865 = vld [vmem:[%s823] sm:$0xff]
        %v866 = vpack.c.bf16 %v865, %v865
        %v867 = vld [vmem:[%s4] sm:$0xf]
        %v868 = vld [vmem:[%s4 + $0x4] sm:$0xf]
        %v869 = vld [vmem:[%s4 + $0x8] sm:$0xf]
        %v870 = vld [vmem:[%s4 + $0xc] sm:$0xf]
        %v871 = vld [vmem:[%s5] sm:$0x1]
        %v873 = vlaneseq
        %v874 = vshrl.u32 %v873, 7
        %v875 = vsub.s32 0, %v874
        %v876 = vrot.slane %v871, %v875
        %v882 = vunpack.c.l.b16 %v867
        %v883 = vunpack.c.l.b16 %v868
        %v884 = vunpack.c.l.b16 %v869
        %v885 = vunpack.c.l.b16 %v870
        %v886 = vpack.c.b16 %v883, %v882
        %v887 = vpack.c.b16 %v885, %v884
        %vm888 = vcmask 130048
        %v890 = vsel %vm888, %v866, 0
        %v893 = vsel %vm888, %v886, 0
        %v896 = vsel %vm888, %v887, 0
        %898 = vmatprep.subr.bf16.mxu0 0
        %899 = vmatpush1.bf16.xpose.msra.mxu0 0
        %900 = vmatprep.subr.bf16.mxu0 0
        %901 = vmatpush1.bf16.xpose.msra.mxu0 0
        %902 = vmatprep.subr.bf16.mxu0 0
        %903 = vmatpush1.bf16.xpose.msra.mxu0 0
        %904 = vmatprep.subr.bf16.mxu0 0
        %905 = vmatpush1.bf16.xpose.msra.mxu0 0
        %906 = vmatprep.subr.bf16.mxu0 0
        %907 = vmatpush1.bf16.xpose.msra.mxu0 0
        %908 = vmatprep.subr.bf16.mxu0 0
        %909 = vmatpush1.bf16.xpose.msra.mxu0 0
        %910 = vmatprep.subr.bf16.mxu0 0
        %911 = vmatpush1.bf16.xpose.msra.mxu0 %v896
        %912 = vmatprep.subr.bf16.mxu0 0
        %913 = vmatpush1.bf16.xpose.msra.mxu0 %v893
        %914 = vmatprep.subr.bf16.mxu0 0
        %915 = vmatpush2.bf16.xpose.msra.mxu0 0
        %916 = vmatprep.subr.bf16.mxu0 0
        %917 = vmatpush2.bf16.xpose.msra.mxu0 0
        %918 = vmatprep.subr.bf16.mxu0 0
        %919 = vmatpush2.bf16.xpose.msra.mxu0 0
        %920 = vmatprep.subr.bf16.mxu0 0
        %921 = vmatpush2.bf16.xpose.msra.mxu0 0
        %922 = vmatprep.subr.bf16.mxu0 0
        %923 = vmatpush2.bf16.xpose.msra.mxu0 0
        %924 = vmatprep.subr.bf16.mxu0 0
        %925 = vmatpush2.bf16.xpose.msra.mxu0 0
        %926 = vmatprep.subr.bf16.mxu0 0
        %927 = vmatpush2.bf16.xpose.msra.mxu0 0
        %928 = vmatprep.subr.bf16.mxu0 0
        %929 = vmatpush2.bf16.xpose.msra.mxu0 0
        %930 = vmatprep.mubr.bf16.mxu0 0
        %931 = vmatmul.mubr.bf16.gmra.mxu0 %v890
        %v932 = vpop.f32.mrf.mxu0
        %v933 = vadd.f32 %v876, %v932
        %v934 = vpop.f32.mrf.mxu0
        %v935 = vpop.f32.mrf.mxu0
        %v936 = vpop.f32.mrf.mxu0
        %937 = vdwg.mxu0
        %v938 = vld [vmem:[%s827] sm:$0xff]
        %v939 = vadd.f32 %v933, %v938
        %v940 = vmul.f32 %v939, 5.656854
        %vm941 = vcmp.ge.f32.partialorder %v940, 0.0
        %v942 = vmul.f32 %v940, 0.1
        %v943 = vsel %vm941, %v940, %v942
        %v944 = vmul.f32 %v943, %v849
        %v945 = vpack.c.bf16 %v944, %v944
        %v946 = vld [vmem:[%s14] sm:$0xf]
        %v947 = vld [vmem:[%s14 + $0x4] sm:$0xf]
        %v948 = vld [vmem:[%s15] sm:$0xf]
        %v949 = vld [vmem:[%s15 + $0x4] sm:$0xf]
        %v950 = vld [vmem:[%s6] sm:$0xf]
        %v951 = vld [vmem:[%s6 + $0x4] sm:$0xf]
        %v952 = vld [vmem:[%s7] sm:$0x1]
        %v954 = vlaneseq
        %v955 = vshrl.u32 %v954, 7
        %v956 = vsub.s32 0, %v955
        %v957 = vrot.slane %v952, %v956
        %v961 = vunpack.c.l.b16 %v950
        %v962 = vunpack.c.l.b16 %v951
        %v963 = vpack.c.b16 %v962, %v961
        %v965 = vsel %vm836, %v945, 0
        %v968 = vsel %vm836, %v963, 0
        %970 = vmatprep.subr.bf16.mxu0 0
        %971 = vmatpush1.bf16.xpose.msra.mxu0 0
        %972 = vmatprep.subr.bf16.mxu0 0
        %973 = vmatpush1.bf16.xpose.msra.mxu0 0
        %974 = vmatprep.subr.bf16.mxu0 0
        %975 = vmatpush1.bf16.xpose.msra.mxu0 0
        %976 = vmatprep.subr.bf16.mxu0 0
        %977 = vmatpush1.bf16.xpose.msra.mxu0 0
        %978 = vmatprep.subr.bf16.mxu0 0
        %979 = vmatpush1.bf16.xpose.msra.mxu0 0
        %980 = vmatprep.subr.bf16.mxu0 0
        %981 = vmatpush1.bf16.xpose.msra.mxu0 0
        %982 = vmatprep.subr.bf16.mxu0 0
        %983 = vmatpush1.bf16.xpose.msra.mxu0 0
        %984 = vmatprep.subr.bf16.mxu0 0
        %985 = vmatpush1.bf16.xpose.msra.mxu0 %v968
        %986 = vmatprep.subr.bf16.mxu0 0
        %987 = vmatpush2.bf16.xpose.msra.mxu0 0
        %988 = vmatprep.subr.bf16.mxu0 0
        %989 = vmatpush2.bf16.xpose.msra.mxu0 0
        %990 = vmatprep.subr.bf16.mxu0 0
        %991 = vmatpush2.bf16.xpose.msra.mxu0 0
        %992 = vmatprep.subr.bf16.mxu0 0
        %993 = vmatpush2.bf16.xpose.msra.mxu0 0
        %994 = vmatprep.subr.bf16.mxu0 0
        %995 = vmatpush2.bf16.xpose.msra.mxu0 0
        %996 = vmatprep.subr.bf16.mxu0 0
        %997 = vmatpush2.bf16.xpose.msra.mxu0 0
        %998 = vmatprep.subr.bf16.mxu0 0
        %999 = vmatpush2.bf16.xpose.msra.mxu0 0
        %1000 = vmatprep.subr.bf16.mxu0 0
        %1001 = vmatpush2.bf16.xpose.msra.mxu0 0
        %1002 = vmatprep.mubr.bf16.mxu0 0
        %1003 = vmatmul.mubr.bf16.gmra.mxu0 %v965
        %v1004 = vpop.f32.mrf.mxu0
        %v1005 = vadd.f32 %v957, %v1004
        %v1006 = vpop.f32.mrf.mxu0
        %v1007 = vpop.f32.mrf.mxu0
        %v1008 = vpop.f32.mrf.mxu0
        %1009 = vdwg.mxu0
        %v1010 = vld [vmem:[%s8] sm:$0xf]
        %v1011 = vld [vmem:[%s8 + $0x4] sm:$0xf]
        %v1012 = vld [vmem:[%s9] sm:$0x1]
        %v1014 = vlaneseq
        %v1015 = vshrl.u32 %v1014, 7
        %v1016 = vsub.s32 0, %v1015
        %v1017 = vrot.slane %v1012, %v1016
        %v1021 = vunpack.c.l.b16 %v1010
        %v1022 = vunpack.c.l.b16 %v1011
        %v1023 = vpack.c.b16 %v1022, %v1021
        %v1025 = vsel %vm836, %v1023, 0
        %1027 = vmatprep.subr.bf16.mxu0 0
        %1028 = vmatpush1.bf16.xpose.msra.mxu0 0
        %1029 = vmatprep.subr.bf16.mxu0 0
        %1030 = vmatpush1.bf16.xpose.msra.mxu0 0
        %1031 = vmatprep.subr.bf16.mxu0 0
        %1032 = vmatpush1.bf16.xpose.msra.mxu0 0
        %1033 = vmatprep.subr.bf16.mxu0 0
        %1034 = vmatpush1.bf16.xpose.msra.mxu0 0
        %1035 = vmatprep.subr.bf16.mxu0 0
        %1036 = vmatpush1.bf16.xpose.msra.mxu0 0
        %1037 = vmatprep.subr.bf16.mxu0 0
        %1038 = vmatpush1.bf16.xpose.msra.mxu0 0
        %1039 = vmatprep.subr.bf16.mxu0 0
        %1040 = vmatpush1.bf16.xpose.msra.mxu0 0
        %1041 = vmatprep.subr.bf16.mxu0 0
        %1042 = vmatpush1.bf16.xpose.msra.mxu0 %v1025
        %1043 = vmatprep.subr.bf16.mxu0 0
        %1044 = vmatpush2.bf16.xpose.msra.mxu0 0
        %1045 = vmatprep.subr.bf16.mxu0 0
        %1046 = vmatpush2.bf16.xpose.msra.mxu0 0
        %1047 = vmatprep.subr.bf16.mxu0 0
        %1048 = vmatpush2.bf16.xpose.msra.mxu0 0
        %1049 = vmatprep.subr.bf16.mxu0 0
        %1050 = vmatpush2.bf16.xpose.msra.mxu0 0
        %1051 = vmatprep.subr.bf16.mxu0 0
        %1052 = vmatpush2.bf16.xpose.msra.mxu0 0
        %1053 = vmatprep.subr.bf16.mxu0 0
        %1054 = vmatpush2.bf16.xpose.msra.mxu0 0
        %1055 = vmatprep.subr.bf16.mxu0 0
        %1056 = vmatpush2.bf16.xpose.msra.mxu0 0
        %1057 = vmatprep.subr.bf16.mxu0 0
        %1058 = vmatpush2.bf16.xpose.msra.mxu0 0
        %1059 = vmatprep.mubr.bf16.mxu0 0
        %1060 = vmatmul.mubr.bf16.gmra.mxu0 %v965
        %v1061 = vpop.f32.mrf.mxu0
        %v1062 = vadd.f32 %v1017, %v1061
        %v1063 = vpop.f32.mrf.mxu0
        %v1064 = vpop.f32.mrf.mxu0
        %v1065 = vpop.f32.mrf.mxu0
        %1066 = vdwg.mxu0
        %v1067 = vld [vmem:[%s10] sm:$0xf]
        %v1068 = vld [vmem:[%s10 + $0x4] sm:$0xf]
        %v1069 = vld [vmem:[%s11] sm:$0x1]
        %v1071 = vlaneseq
        %v1072 = vshrl.u32 %v1071, 7
        %v1073 = vsub.s32 0, %v1072
        %v1074 = vrot.slane %v1069, %v1073
        %v1078 = vunpack.c.l.b16 %v1067
        %v1079 = vunpack.c.l.b16 %v1068
        %v1080 = vpack.c.b16 %v1079, %v1078
        %v1082 = vsel %vm836, %v1080, 0
        %1084 = vmatprep.subr.bf16.mxu0 0
        %1085 = vmatpush1.bf16.xpose.msra.mxu0 0
        %1086 = vmatprep.subr.bf16.mxu0 0
        %1087 = vmatpush1.bf16.xpose.msra.mxu0 0
        %1088 = vmatprep.subr.bf16.mxu0 0
        %1089 = vmatpush1.bf16.xpose.msra.mxu0 0
        %1090 = vmatprep.subr.bf16.mxu0 0
        %1091 = vmatpush1.bf16.xpose.msra.mxu0 0
        %1092 = vmatprep.subr.bf16.mxu0 0
        %1093 = vmatpush1.bf16.xpose.msra.mxu0 0
        %1094 = vmatprep.subr.bf16.mxu0 0
        %1095 = vmatpush1.bf16.xpose.msra.mxu0 0
        %1096 = vmatprep.subr.bf16.mxu0 0
        %1097 = vmatpush1.bf16.xpose.msra.mxu0 0
        %1098 = vmatprep.subr.bf16.mxu0 0
        %1099 = vmatpush1.bf16.xpose.msra.mxu0 %v1082
        %1100 = vmatprep.subr.bf16.mxu0 0
        %1101 = vmatpush2.bf16.xpose.msra.mxu0 0
        %1102 = vmatprep.subr.bf16.mxu0 0
        %1103 = vmatpush2.bf16.xpose.msra.mxu0 0
        %1104 = vmatprep.subr.bf16.mxu0 0
        %1105 = vmatpush2.bf16.xpose.msra.mxu0 0
        %1106 = vmatprep.subr.bf16.mxu0 0
        %1107 = vmatpush2.bf16.xpose.msra.mxu0 0
        %1108 = vmatprep.subr.bf16.mxu0 0
        %1109 = vmatpush2.bf16.xpose.msra.mxu0 0
        %1110 = vmatprep.subr.bf16.mxu0 0
        %1111 = vmatpush2.bf16.xpose.msra.mxu0 0
        %1112 = vmatprep.subr.bf16.mxu0 0
        %1113 = vmatpush2.bf16.xpose.msra.mxu0 0
        %1114 = vmatprep.subr.bf16.mxu0 0
        %1115 = vmatpush2.bf16.xpose.msra.mxu0 0
        %1116 = vmatprep.mubr.bf16.mxu0 0
        %1117 = vmatmul.mubr.bf16.gmra.mxu0 %v965
        %v1118 = vpop.f32.mrf.mxu0
        %v1119 = vadd.f32 %v1074, %v1118
        %v1120 = vpop.f32.mrf.mxu0
        %v1121 = vpop.f32.mrf.mxu0
        %v1122 = vpop.f32.mrf.mxu0
        %1123 = vdwg.mxu0
        %v1124 = vmul.f32 %v1005, 0.25
        %v1125 = vpack.c.bf16 %v1124, %v1124
        %v1126 = vpack.c.bf16 %v1062, %v1062
        %v1128 = vsel %vm888, %v1125, 0
        %v1131 = vsel %vm888, %v1126, 0
        %1133 = vmatprep.subr.bf16.mxu0 0
        %1134 = vmatpush1.bf16.xpose.msra.mxu0 0
        %1135 = vmatprep.subr.bf16.mxu0 0
        %1136 = vmatpush1.bf16.xpose.msra.mxu0 0
        %1137 = vmatprep.subr.bf16.mxu0 0
        %1138 = vmatpush1.bf16.xpose.msra.mxu0 0
        %1139 = vmatprep.subr.bf16.mxu0 0
        %1140 = vmatpush1.bf16.xpose.msra.mxu0 0
        %1141 = vmatprep.subr.bf16.mxu0 0
        %1142 = vmatpush1.bf16.xpose.msra.mxu0 0
        %1143 = vmatprep.subr.bf16.mxu0 0
        %1144 = vmatpush1.bf16.xpose.msra.mxu0 0
        %1145 = vmatprep.subr.bf16.mxu0 0
        %1146 = vmatpush1.bf16.xpose.msra.mxu0 0
        %1147 = vmatprep.subr.bf16.mxu0 0
        %1148 = vmatpush1.bf16.xpose.msra.mxu0 %v1131
        %1149 = vmatprep.subr.bf16.mxu0 0
        %1150 = vmatpush2.bf16.xpose.msra.mxu0 0
        %1151 = vmatprep.subr.bf16.mxu0 0
        %1152 = vmatpush2.bf16.xpose.msra.mxu0 0
        %1153 = vmatprep.subr.bf16.mxu0 0
        %1154 = vmatpush2.bf16.xpose.msra.mxu0 0
        %1155 = vmatprep.subr.bf16.mxu0 0
        %1156 = vmatpush2.bf16.xpose.msra.mxu0 0
        %1157 = vmatprep.subr.bf16.mxu0 0
        %1158 = vmatpush2.bf16.xpose.msra.mxu0 0
        %1159 = vmatprep.subr.bf16.mxu0 0
        %1160 = vmatpush2.bf16.xpose.msra.mxu0 0
        %1161 = vmatprep.subr.bf16.mxu0 0
        %1162 = vmatpush2.bf16.xpose.msra.mxu0 0
        %1163 = vmatprep.subr.bf16.mxu0 0
        %1164 = vmatpush2.bf16.xpose.msra.mxu0 0
        %1165 = vmatprep.mubr.bf16.mxu0 0
        %1166 = vmatmul.mubr.bf16.gmra.mxu0 %v1128
        %v1167 = vpop.f32.mrf.mxu0
        %v1168 = vadd.f32 %v859, %v1167
        %v1169 = vpop.f32.mrf.mxu0
        %v1170 = vpop.f32.mrf.mxu0
        %v1171 = vpop.f32.mrf.mxu0
        %1172 = vdwg.mxu0
        %v1175 = vunpack.c.l.b16 %v946
        %v1176 = vunpack.c.l.b16 %v947
        %v1177 = vpack.c.b16 %v1176, %v1175
        %v1179 = vsel %vm888, %v1177, 0
        %1181 = vmatprep.subr.bf16.mxu0 0
        %1182 = vmatpush1.bf16.xpose.msra.mxu0 0
        %1183 = vmatprep.subr.bf16.mxu0 0
        %1184 = vmatpush1.bf16.xpose.msra.mxu0 0
        %1185 = vmatprep.subr.bf16.mxu0 0
        %1186 = vmatpush1.bf16.xpose.msra.mxu0 0
        %1187 = vmatprep.subr.bf16.mxu0 0
        %1188 = vmatpush1.bf16.xpose.msra.mxu0 0
        %1189 = vmatprep.subr.bf16.mxu0 0
        %1190 = vmatpush1.bf16.xpose.msra.mxu0 0
        %1191 = vmatprep.subr.bf16.mxu0 0
        %1192 = vmatpush1.bf16.xpose.msra.mxu0 0
        %1193 = vmatprep.subr.bf16.mxu0 0
        %1194 = vmatpush1.bf16.xpose.msra.mxu0 0
        %1195 = vmatprep.subr.bf16.mxu0 0
        %1196 = vmatpush1.bf16.xpose.msra.mxu0 %v1179
        %1197 = vmatprep.subr.bf16.mxu0 0
        %1198 = vmatpush2.bf16.xpose.msra.mxu0 0
        %1199 = vmatprep.subr.bf16.mxu0 0
        %1200 = vmatpush2.bf16.xpose.msra.mxu0 0
        %1201 = vmatprep.subr.bf16.mxu0 0
        %1202 = vmatpush2.bf16.xpose.msra.mxu0 0
        %1203 = vmatprep.subr.bf16.mxu0 0
        %1204 = vmatpush2.bf16.xpose.msra.mxu0 0
        %1205 = vmatprep.subr.bf16.mxu0 0
        %1206 = vmatpush2.bf16.xpose.msra.mxu0 0
        %1207 = vmatprep.subr.bf16.mxu0 0
        %1208 = vmatpush2.bf16.xpose.msra.mxu0 0
        %1209 = vmatprep.subr.bf16.mxu0 0
        %1210 = vmatpush2.bf16.xpose.msra.mxu0 0
        %1211 = vmatprep.subr.bf16.mxu0 0
        %1212 = vmatpush2.bf16.xpose.msra.mxu0 0
        %1213 = vmatprep.mubr.bf16.mxu0 0
        %1214 = vmatmul.mubr.bf16.gmra.mxu0 %v1128
        %v1215 = vpop.f32.mrf.mxu0
        %v1216 = vadd.f32 0.0, %v1215
        %v1217 = vpop.f32.mrf.mxu0
        %v1218 = vpop.f32.mrf.mxu0
        %v1219 = vpop.f32.mrf.mxu0
        %1220 = vdwg.mxu0
        %vm1221 = vcmp.eq.s32.totalorder %v864, 4294967289
        %1223 = vset.pattern.permute.xlu0 0
        %1224 = vperm.xlu0 %1223, %v1216
        %v1225 = vpop.permute.xlu0 %1224
        %v1227 = vsel %vm1221, %v1225, 0.0
        %v1228 = vadd.f32 %v1168, %v1227
        %vm1229 = vcmp.eq.s32.totalorder %v864, 4294967290
        %1230 = vset.pattern.permute.xlu0 1
        %1231 = vperm.xlu0 %1230, %v1216
        %v1232 = vpop.permute.xlu0 %1231
        %v1234 = vsel %vm1229, %v1232, 0.0
        %v1235 = vadd.f32 %v1228, %v1234
        %vm1236 = vcmp.eq.s32.totalorder %v864, 4294967291
        %1237 = vset.pattern.permute.xlu0 2
        %1238 = vperm.xlu0 %1237, %v1216
        %v1239 = vpop.permute.xlu0 %1238
        %v1241 = vsel %vm1236, %v1239, 0.0
        %v1242 = vadd.f32 %v1235, %v1241
        %vm1243 = vcmp.eq.s32.totalorder %v864, 4294967292
        %1244 = vset.pattern.permute.xlu0 3
        %1245 = vperm.xlu0 %1244, %v1216
        %v1246 = vpop.permute.xlu0 %1245
        %v1248 = vsel %vm1243, %v1246, 0.0
        %v1249 = vadd.f32 %v1242, %v1248
        %vm1250 = vcmp.eq.s32.totalorder %v864, 4294967293
        %1251 = vset.pattern.permute.xlu0 4
        %1252 = vperm.xlu0 %1251, %v1216
        %v1253 = vpop.permute.xlu0 %1252
        %v1255 = vsel %vm1250, %v1253, 0.0
        %v1256 = vadd.f32 %v1249, %v1255
        %vm1257 = vcmp.eq.s32.totalorder %v864, 4294967294
        %1258 = vset.pattern.permute.xlu0 5
        %1259 = vperm.xlu0 %1258, %v1216
        %v1260 = vpop.permute.xlu0 %1259
        %v1262 = vsel %vm1257, %v1260, 0.0
        %v1263 = vadd.f32 %v1256, %v1262
        %vm1264 = vcmp.eq.s32.totalorder %v864, 4294967295
        %1265 = vset.pattern.permute.xlu0 6
        %1266 = vperm.xlu0 %1265, %v1216
        %v1267 = vpop.permute.xlu0 %1266
        %v1269 = vsel %vm1264, %v1267, 0.0
        %v1270 = vadd.f32 %v1263, %v1269
        %vm1271 = vcmp.eq.s32.totalorder %v864, 0
        %1272 = vset.pattern.permute.xlu0 7
        %1273 = vperm.xlu0 %1272, %v1216
        %v1274 = vpop.permute.xlu0 %1273
        %v1276 = vsel %vm1271, %v1274, 0.0
        %v1277 = vadd.f32 %v1270, %v1276
        %vm1278 = vcmp.eq.s32.totalorder %v864, 1
        %1279 = vset.pattern.permute.xlu0 8
        %1280 = vperm.xlu0 %1279, %v1216
        %v1281 = vpop.permute.xlu0 %1280
        %v1283 = vsel %vm1278, %v1281, 0.0
        %v1284 = vadd.f32 %v1277, %v1283
        %vm1285 = vcmp.eq.s32.totalorder %v864, 2
        %1286 = vset.pattern.permute.xlu0 9
        %1287 = vperm.xlu0 %1286, %v1216
        %v1288 = vpop.permute.xlu0 %1287
        %v1290 = vsel %vm1285, %v1288, 0.0
        %v1291 = vadd.f32 %v1284, %v1290
        %vm1292 = vcmp.eq.s32.totalorder %v864, 3
        %1293 = vset.pattern.permute.xlu0 10
        %1294 = vperm.xlu0 %1293, %v1216
        %v1295 = vpop.permute.xlu0 %1294
        %v1297 = vsel %vm1292, %v1295, 0.0
        %v1298 = vadd.f32 %v1291, %v1297
        %vm1299 = vcmp.eq.s32.totalorder %v864, 4
        %1300 = vset.pattern.permute.xlu0 11
        %1301 = vperm.xlu0 %1300, %v1216
        %v1302 = vpop.permute.xlu0 %1301
        %v1304 = vsel %vm1299, %v1302, 0.0
        %v1305 = vadd.f32 %v1298, %v1304
        %vm1306 = vcmp.eq.s32.totalorder %v864, 5
        %1307 = vset.pattern.permute.xlu0 12
        %1308 = vperm.xlu0 %1307, %v1216
        %v1309 = vpop.permute.xlu0 %1308
        %v1311 = vsel %vm1306, %v1309, 0.0
        %v1312 = vadd.f32 %v1305, %v1311
        %vm1313 = vcmp.eq.s32.totalorder %v864, 6
        %1314 = vset.pattern.permute.xlu0 13
        %1315 = vperm.xlu0 %1314, %v1216
        %v1316 = vpop.permute.xlu0 %1315
        %v1318 = vsel %vm1313, %v1316, 0.0
        %v1319 = vadd.f32 %v1312, %v1318
        %vm1320 = vcmp.eq.s32.totalorder %v864, 7
        %1321 = vset.pattern.permute.xlu0 14
        %1322 = vperm.xlu0 %1321, %v1216
        %v1323 = vpop.permute.xlu0 %1322
        %v1325 = vsel %vm1320, %v1323, 0.0
        %v1326 = vadd.f32 %v1319, %v1325
        %vm1327 = vcmask 64512
        %v1328 = vsel %vm1327, %v1326, -inf
        %1329 = vmax.xlane.f32.xlu0 %v1328
        %v1330 = vpop.xlane.xlu0 %1329
        %v1331 = vsub.f32 %v1326, %v1330
        %v1332 = vmul.f32 %v1331, 1.442695
        %v1333 = vpow.pop %v1332
        %v1334 = vsel %vm1327, %v1333, 0.0
        %1335 = vadd.xlane.f32.xlu0 %v1334
        %v1336 = vpop.xlane.xlu0 %1335
        %v1337 = vrcp.pop %v1336
        %v1338 = vmul.f32 %v1333, %v1337
        %v1339 = vpack.c.bf16 %v1338, %v1338
        %v1340 = vpack.c.bf16 %v1119, %v1119
        %v1341 = vsel %vm1221, %v1338, 0.0
        %v1342 = vsel %vm1327, %v1341, 0.0
        %1343 = vadd.xlane.f32.xlu0 %v1342
        %v1344 = vpop.xlane.xlu0 %1343
        %v1345 = vsel %vm1229, %v1338, 0.0
        %v1346 = vsel %vm1327, %v1345, 0.0
        %1347 = vadd.xlane.f32.xlu0 %v1346
        %v1348 = vpop.xlane.xlu0 %1347
        %v1349 = vsel %vm1236, %v1338, 0.0
        %v1350 = vsel %vm1327, %v1349, 0.0
        %1351 = vadd.xlane.f32.xlu0 %v1350
        %v1352 = vpop.xlane.xlu0 %1351
        %v1353 = vsel %vm1243, %v1338, 0.0
        %v1354 = vsel %vm1327, %v1353, 0.0
        %1355 = vadd.xlane.f32.xlu0 %v1354
        %v1356 = vpop.xlane.xlu0 %1355
        %v1357 = vsel %vm1250, %v1338, 0.0
        %v1358 = vsel %vm1327, %v1357, 0.0
        %1359 = vadd.xlane.f32.xlu0 %v1358
        %v1360 = vpop.xlane.xlu0 %1359
        %v1361 = vsel %vm1257, %v1338, 0.0
        %v1362 = vsel %vm1327, %v1361, 0.0
        %1363 = vadd.xlane.f32.xlu0 %v1362
        %v1364 = vpop.xlane.xlu0 %1363
        %v1365 = vsel %vm1264, %v1338, 0.0
        %v1366 = vsel %vm1327, %v1365, 0.0
        %1367 = vadd.xlane.f32.xlu0 %v1366
        %v1368 = vpop.xlane.xlu0 %1367
        %v1369 = vsel %vm1271, %v1338, 0.0
        %v1370 = vsel %vm1327, %v1369, 0.0
        %1371 = vadd.xlane.f32.xlu0 %v1370
        %v1372 = vpop.xlane.xlu0 %1371
        %v1373 = vsel %vm1278, %v1338, 0.0
        %v1374 = vsel %vm1327, %v1373, 0.0
        %1375 = vadd.xlane.f32.xlu0 %v1374
        %v1376 = vpop.xlane.xlu0 %1375
        %v1377 = vsel %vm1285, %v1338, 0.0
        %v1378 = vsel %vm1327, %v1377, 0.0
        %1379 = vadd.xlane.f32.xlu0 %v1378
        %v1380 = vpop.xlane.xlu0 %1379
        %v1381 = vsel %vm1292, %v1338, 0.0
        %v1382 = vsel %vm1327, %v1381, 0.0
        %1383 = vadd.xlane.f32.xlu0 %v1382
        %v1384 = vpop.xlane.xlu0 %1383
        %v1385 = vsel %vm1299, %v1338, 0.0
        %v1386 = vsel %vm1327, %v1385, 0.0
        %1387 = vadd.xlane.f32.xlu0 %v1386
        %v1388 = vpop.xlane.xlu0 %1387
        %v1389 = vsel %vm1306, %v1338, 0.0
        %v1390 = vsel %vm1327, %v1389, 0.0
        %1391 = vadd.xlane.f32.xlu0 %v1390
        %v1392 = vpop.xlane.xlu0 %1391
        %v1393 = vsel %vm1313, %v1338, 0.0
        %v1394 = vsel %vm1327, %v1393, 0.0
        %1395 = vadd.xlane.f32.xlu0 %v1394
        %v1396 = vpop.xlane.xlu0 %1395
        %v1397 = vsel %vm1320, %v1338, 0.0
        %v1398 = vsel %vm1327, %v1397, 0.0
        %1399 = vadd.xlane.f32.xlu0 %v1398
        %v1400 = vpop.xlane.xlu0 %1399
        %vm1401 = vcmask 7168
        %v1402 = vsel %vm1401, %v1344, %v1348
        %vm1403 = vcmask 15360
        %v1404 = vsel %vm1403, %v1402, %v1352
        %vm1405 = vcmask 23552
        %v1406 = vsel %vm1405, %v1404, %v1356
        %vm1407 = vcmask 31744
        %v1408 = vsel %vm1407, %v1406, %v1360
        %vm1409 = vcmask 39936
        %v1410 = vsel %vm1409, %v1408, %v1364
        %vm1411 = vcmask 48128
        %v1412 = vsel %vm1411, %v1410, %v1368
        %vm1413 = vcmask 56320
        %v1414 = vsel %vm1413, %v1412, %v1372
        %v1415 = vsel %vm1327, %v1414, %v1376
        %vm1416 = vcmask 72704
        %v1417 = vsel %vm1416, %v1415, %v1380
        %vm1418 = vcmask 80896
        %v1419 = vsel %vm1418, %v1417, %v1384
        %vm1420 = vcmask 89088
        %v1421 = vsel %vm1420, %v1419, %v1388
        %vm1422 = vcmask 97280
        %v1423 = vsel %vm1422, %v1421, %v1392
        %vm1424 = vcmask 105472
        %v1425 = vsel %vm1424, %v1423, %v1396
        %vm1426 = vcmask 113664
        %v1427 = vsel %vm1426, %v1425, %v1400
        %v1428 = vpack.c.bf16 %v1427, %v1427
        %v1431 = vunpack.c.l.b16 %v948
        %v1432 = vunpack.c.l.b16 %v949
        %v1433 = vpack.c.b16 %v1432, %v1431
        %vm1434 = vcmask 121856
        %v1436 = vsel %vm1434, %v1428, 0
        %vm1438 = vcmask 1046528
        %vm1439 = vcmask 1047552
        %v1440 = vsel %vm1438, 4294967295, 65535
        %v1441 = vsel %vm1439, %v1440, 0
        %v1443 = vand.u32 %v1433, %v1441
        %1445 = vmatprep.subr.bf16.mxu0 0
        %1446 = vmatpush1.bf16.msra.mxu0 0
        %1447 = vmatprep.subr.bf16.mxu0 0
        %1448 = vmatpush1.bf16.msra.mxu0 0
        %1449 = vmatprep.subr.bf16.mxu0 0
        %1450 = vmatpush1.bf16.msra.mxu0 0
        %1451 = vmatprep.subr.bf16.mxu0 0
        %1452 = vmatpush1.bf16.msra.mxu0 0
        %1453 = vmatprep.subr.bf16.mxu0 0
        %1454 = vmatpush1.bf16.msra.mxu0 0
        %1455 = vmatprep.subr.bf16.mxu0 0
        %1456 = vmatpush1.bf16.msra.mxu0 0
        %1457 = vmatprep.subr.bf16.mxu0 0
        %1458 = vmatpush1.bf16.msra.mxu0 0
        %1459 = vmatprep.subr.bf16.mxu0 0
        %1460 = vmatpush1.bf16.msra.mxu0 %v1443
        %1461 = vmatprep.subr.bf16.mxu0 0
        %1462 = vmatpush2.bf16.msra.mxu0 0
        %1463 = vmatprep.subr.bf16.mxu0 0
        %1464 = vmatpush2.bf16.msra.mxu0 0
        %1465 = vmatprep.subr.bf16.mxu0 0
        %1466 = vmatpush2.bf16.msra.mxu0 0
        %1467 = vmatprep.subr.bf16.mxu0 0
        %1468 = vmatpush2.bf16.msra.mxu0 0
        %1469 = vmatprep.subr.bf16.mxu0 0
        %1470 = vmatpush2.bf16.msra.mxu0 0
        %1471 = vmatprep.subr.bf16.mxu0 0
        %1472 = vmatpush2.bf16.msra.mxu0 0
        %1473 = vmatprep.subr.bf16.mxu0 0
        %1474 = vmatpush2.bf16.msra.mxu0 0
        %1475 = vmatprep.subr.bf16.mxu0 0
        %1476 = vmatpush2.bf16.msra.mxu0 0
        %1477 = vmatprep.mubr.bf16.mxu0 0
        %1478 = vmatmul.mubr.bf16.gmra.mxu0 %v1436
        %v1479 = vpop.f32.mrf.mxu0
        %v1480 = vadd.f32 0.0, %v1479
        %v1481 = vpop.f32.mrf.mxu0
        %v1482 = vpop.f32.mrf.mxu0
        %v1483 = vpop.f32.mrf.mxu0
        %1484 = vdwg.mxu0
        %v1486 = vsel %vm1327, %v1339, 0
        %vm1488 = vcmask 1043456
        %v1490 = vsel %vm1488, %v1340, 0
        %1492 = vmatprep.subr.bf16.mxu0 0
        %1493 = vmatpush1.bf16.msra.mxu0 0
        %1494 = vmatprep.subr.bf16.mxu0 0
        %1495 = vmatpush1.bf16.msra.mxu0 0
        %1496 = vmatprep.subr.bf16.mxu0 0
        %1497 = vmatpush1.bf16.msra.mxu0 0
        %1498 = vmatprep.subr.bf16.mxu0 0
        %1499 = vmatpush1.bf16.msra.mxu0 0
        %1500 = vmatprep.subr.bf16.mxu0 0
        %1501 = vmatpush1.bf16.msra.mxu0 0
        %1502 = vmatprep.subr.bf16.mxu0 0
        %1503 = vmatpush1.bf16.msra.mxu0 0
        %1504 = vmatprep.subr.bf16.mxu0 0
        %1505 = vmatpush1.bf16.msra.mxu0 0
        %1506 = vmatprep.subr.bf16.mxu0 0
        %1507 = vmatpush1.bf16.msra.mxu0 %v1490
        %1508 = vmatprep.subr.bf16.mxu0 0
        %1509 = vmatpush2.bf16.msra.mxu0 0
        %1510 = vmatprep.subr.bf16.mxu0 0
        %1511 = vmatpush2.bf16.msra.mxu0 0
        %1512 = vmatprep.subr.bf16.mxu0 0
        %1513 = vmatpush2.bf16.msra.mxu0 0
        %1514 = vmatprep.subr.bf16.mxu0 0
        %1515 = vmatpush2.bf16.msra.mxu0 0
        %1516 = vmatprep.subr.bf16.mxu0 0
        %1517 = vmatpush2.bf16.msra.mxu0 0
        %1518 = vmatprep.subr.bf16.mxu0 0
        %1519 = vmatpush2.bf16.msra.mxu0 0
        %1520 = vmatprep.subr.bf16.mxu0 0
        %1521 = vmatpush2.bf16.msra.mxu0 0
        %1522 = vmatprep.subr.bf16.mxu0 0
        %1523 = vmatpush2.bf16.msra.mxu0 0
        %1524 = vmatprep.mubr.bf16.mxu0 0
        %1525 = vmatmul.mubr.bf16.gmra.mxu0 %v1486
        %v1526 = vpop.f32.mrf.mxu0
        %v1527 = vadd.f32 %v1480, %v1526
        %v1528 = vpop.f32.mrf.mxu0
        %v1529 = vpop.f32.mrf.mxu0
        %v1530 = vpop.f32.mrf.mxu0
        %1531 = vdwg.mxu0
        %v1532 = vpack.c.bf16 %v1527, %v1527
        %v1533 = vld [vmem:[%s12] sm:$0xf]
        %v1534 = vld [vmem:[%s12 + $0x4] sm:$0xf]
        %v1535 = vld [vmem:[%s12 + $0x8] sm:$0xf]
        %v1536 = vld [vmem:[%s12 + $0xc] sm:$0xf]
        %s1537 = scalar_lea.vmem %s6, 8
        %v1538 = vld [vmem:[%s1537] sm:$0xf]
        %v1539 = vld [vmem:[%s1537 + $0x4] sm:$0xf]
        %s1540 = scalar_lea.vmem %s7, 1
        %v1541 = vld [vmem:[%s1540] sm:$0x1]
        %v1543 = vlaneseq
        %v1544 = vshrl.u32 %v1543, 7
        %v1545 = vsub.s32 0, %v1544
        %v1546 = vrot.slane %v1541, %v1545
        %v1550 = vunpack.c.l.b16 %v1538
        %v1551 = vunpack.c.l.b16 %v1539
        %v1552 = vpack.c.b16 %v1551, %v1550
        %v1554 = vsel %vm836, %v1552, 0
        %1556 = vmatprep.subr.bf16.mxu0 0
        %1557 = vmatpush1.bf16.xpose.msra.mxu0 0
        %1558 = vmatprep.subr.bf16.mxu0 0
        %1559 = vmatpush1.bf16.xpose.msra.mxu0 0
        %1560 = vmatprep.subr.bf16.mxu0 0
        %1561 = vmatpush1.bf16.xpose.msra.mxu0 0
        %1562 = vmatprep.subr.bf16.mxu0 0
        %1563 = vmatpush1.bf16.xpose.msra.mxu0 0
        %1564 = vmatprep.subr.bf16.mxu0 0
        %1565 = vmatpush1.bf16.xpose.msra.mxu0 0
        %1566 = vmatprep.subr.bf16.mxu0 0
        %1567 = vmatpush1.bf16.xpose.msra.mxu0 0
        %1568 = vmatprep.subr.bf16.mxu0 0
        %1569 = vmatpush1.bf16.xpose.msra.mxu0 0
        %1570 = vmatprep.subr.bf16.mxu0 0
        %1571 = vmatpush1.bf16.xpose.msra.mxu0 %v1554
        %1572 = vmatprep.subr.bf16.mxu0 0
        %1573 = vmatpush2.bf16.xpose.msra.mxu0 0
        %1574 = vmatprep.subr.bf16.mxu0 0
        %1575 = vmatpush2.bf16.xpose.msra.mxu0 0
        %1576 = vmatprep.subr.bf16.mxu0 0
        %1577 = vmatpush2.bf16.xpose.msra.mxu0 0
        %1578 = vmatprep.subr.bf16.mxu0 0
        %1579 = vmatpush2.bf16.xpose.msra.mxu0 0
        %1580 = vmatprep.subr.bf16.mxu0 0
        %1581 = vmatpush2.bf16.xpose.msra.mxu0 0
        %1582 = vmatprep.subr.bf16.mxu0 0
        %1583 = vmatpush2.bf16.xpose.msra.mxu0 0
        %1584 = vmatprep.subr.bf16.mxu0 0
        %1585 = vmatpush2.bf16.xpose.msra.mxu0 0
        %1586 = vmatprep.subr.bf16.mxu0 0
        %1587 = vmatpush2.bf16.xpose.msra.mxu0 0
        %1588 = vmatprep.mubr.bf16.mxu0 0
        %1589 = vmatmul.mubr.bf16.gmra.mxu0 %v965
        %v1590 = vpop.f32.mrf.mxu0
        %v1591 = vadd.f32 %v1546, %v1590
        %v1592 = vpop.f32.mrf.mxu0
        %v1593 = vpop.f32.mrf.mxu0
        %v1594 = vpop.f32.mrf.mxu0
        %1595 = vdwg.mxu0
        %s1596 = scalar_lea.vmem %s8, 8
        %v1597 = vld [vmem:[%s1596] sm:$0xf]
        %v1598 = vld [vmem:[%s1596 + $0x4] sm:$0xf]
        %s1599 = scalar_lea.vmem %s9, 1
        %v1600 = vld [vmem:[%s1599] sm:$0x1]
        %v1602 = vlaneseq
        %v1603 = vshrl.u32 %v1602, 7
        %v1604 = vsub.s32 0, %v1603
        %v1605 = vrot.slane %v1600, %v1604
        %v1609 = vunpack.c.l.b16 %v1597
        %v1610 = vunpack.c.l.b16 %v1598
        %v1611 = vpack.c.b16 %v1610, %v1609
        %v1613 = vsel %vm836, %v1611, 0
        %1615 = vmatprep.subr.bf16.mxu0 0
        %1616 = vmatpush1.bf16.xpose.msra.mxu0 0
        %1617 = vmatprep.subr.bf16.mxu0 0
        %1618 = vmatpush1.bf16.xpose.msra.mxu0 0
        %1619 = vmatprep.subr.bf16.mxu0 0
        %1620 = vmatpush1.bf16.xpose.msra.mxu0 0
        %1621 = vmatprep.subr.bf16.mxu0 0
        %1622 = vmatpush1.bf16.xpose.msra.mxu0 0
        %1623 = vmatprep.subr.bf16.mxu0 0
        %1624 = vmatpush1.bf16.xpose.msra.mxu0 0
        %1625 = vmatprep.subr.bf16.mxu0 0
        %1626 = vmatpush1.bf16.xpose.msra.mxu0 0
        %1627 = vmatprep.subr.bf16.mxu0 0
        %1628 = vmatpush1.bf16.xpose.msra.mxu0 0
        %1629 = vmatprep.subr.bf16.mxu0 0
        %1630 = vmatpush1.bf16.xpose.msra.mxu0 %v1613
        %1631 = vmatprep.subr.bf16.mxu0 0
        %1632 = vmatpush2.bf16.xpose.msra.mxu0 0
        %1633 = vmatprep.subr.bf16.mxu0 0
        %1634 = vmatpush2.bf16.xpose.msra.mxu0 0
        %1635 = vmatprep.subr.bf16.mxu0 0
        %1636 = vmatpush2.bf16.xpose.msra.mxu0 0
        %1637 = vmatprep.subr.bf16.mxu0 0
        %1638 = vmatpush2.bf16.xpose.msra.mxu0 0
        %1639 = vmatprep.subr.bf16.mxu0 0
        %1640 = vmatpush2.bf16.xpose.msra.mxu0 0
        %1641 = vmatprep.subr.bf16.mxu0 0
        %1642 = vmatpush2.bf16.xpose.msra.mxu0 0
        %1643 = vmatprep.subr.bf16.mxu0 0
        %1644 = vmatpush2.bf16.xpose.msra.mxu0 0
        %1645 = vmatprep.subr.bf16.mxu0 0
        %1646 = vmatpush2.bf16.xpose.msra.mxu0 0
        %1647 = vmatprep.mubr.bf16.mxu0 0
        %1648 = vmatmul.mubr.bf16.gmra.mxu0 %v965
        %v1649 = vpop.f32.mrf.mxu0
        %v1650 = vadd.f32 %v1605, %v1649
        %v1651 = vpop.f32.mrf.mxu0
        %v1652 = vpop.f32.mrf.mxu0
        %v1653 = vpop.f32.mrf.mxu0
        %1654 = vdwg.mxu0
        %s1655 = scalar_lea.vmem %s10, 8
        %v1656 = vld [vmem:[%s1655] sm:$0xf]
        %v1657 = vld [vmem:[%s1655 + $0x4] sm:$0xf]
        %s1658 = scalar_lea.vmem %s11, 1
        %v1659 = vld [vmem:[%s1658] sm:$0x1]
        %v1661 = vlaneseq
        %v1662 = vshrl.u32 %v1661, 7
        %v1663 = vsub.s32 0, %v1662
        %v1664 = vrot.slane %v1659, %v1663
        %v1668 = vunpack.c.l.b16 %v1656
        %v1669 = vunpack.c.l.b16 %v1657
        %v1670 = vpack.c.b16 %v1669, %v1668
        %v1672 = vsel %vm836, %v1670, 0
        %1674 = vmatprep.subr.bf16.mxu0 0
        %1675 = vmatpush1.bf16.xpose.msra.mxu0 0
        %1676 = vmatprep.subr.bf16.mxu0 0
        %1677 = vmatpush1.bf16.xpose.msra.mxu0 0
        %1678 = vmatprep.subr.bf16.mxu0 0
        %1679 = vmatpush1.bf16.xpose.msra.mxu0 0
        %1680 = vmatprep.subr.bf16.mxu0 0
        %1681 = vmatpush1.bf16.xpose.msra.mxu0 0
        %1682 = vmatprep.subr.bf16.mxu0 0
        %1683 = vmatpush1.bf16.xpose.msra.mxu0 0
        %1684 = vmatprep.subr.bf16.mxu0 0
        %1685 = vmatpush1.bf16.xpose.msra.mxu0 0
        %1686 = vmatprep.subr.bf16.mxu0 0
        %1687 = vmatpush1.bf16.xpose.msra.mxu0 0
        %1688 = vmatprep.subr.bf16.mxu0 0
        %1689 = vmatpush1.bf16.xpose.msra.mxu0 %v1672
        %1690 = vmatprep.subr.bf16.mxu0 0
        %1691 = vmatpush2.bf16.xpose.msra.mxu0 0
        %1692 = vmatprep.subr.bf16.mxu0 0
        %1693 = vmatpush2.bf16.xpose.msra.mxu0 0
        %1694 = vmatprep.subr.bf16.mxu0 0
        %1695 = vmatpush2.bf16.xpose.msra.mxu0 0
        %1696 = vmatprep.subr.bf16.mxu0 0
        %1697 = vmatpush2.bf16.xpose.msra.mxu0 0
        %1698 = vmatprep.subr.bf16.mxu0 0
        %1699 = vmatpush2.bf16.xpose.msra.mxu0 0
        %1700 = vmatprep.subr.bf16.mxu0 0
        %1701 = vmatpush2.bf16.xpose.msra.mxu0 0
        %1702 = vmatprep.subr.bf16.mxu0 0
        %1703 = vmatpush2.bf16.xpose.msra.mxu0 0
        %1704 = vmatprep.subr.bf16.mxu0 0
        %1705 = vmatpush2.bf16.xpose.msra.mxu0 0
        %1706 = vmatprep.mubr.bf16.mxu0 0
        %1707 = vmatmul.mubr.bf16.gmra.mxu0 %v965
        %v1708 = vpop.f32.mrf.mxu0
        %v1709 = vadd.f32 %v1664, %v1708
        %v1710 = vpop.f32.mrf.mxu0
        %v1711 = vpop.f32.mrf.mxu0
        %v1712 = vpop.f32.mrf.mxu0
        %1713 = vdwg.mxu0
        %v1714 = vmul.f32 %v1591, 0.25
        %v1715 = vpack.c.bf16 %v1714, %v1714
        %v1716 = vpack.c.bf16 %v1650, %v1650
        %v1718 = vsel %vm888, %v1715, 0
        %v1721 = vsel %vm888, %v1716, 0
        %1723 = vmatprep.subr.bf16.mxu0 0
        %1724 = vmatpush1.bf16.xpose.msra.mxu0 0
        %1725 = vmatprep.subr.bf16.mxu0 0
        %1726 = vmatpush1.bf16.xpose.msra.mxu0 0
        %1727 = vmatprep.subr.bf16.mxu0 0
        %1728 = vmatpush1.bf16.xpose.msra.mxu0 0
        %1729 = vmatprep.subr.bf16.mxu0 0
        %1730 = vmatpush1.bf16.xpose.msra.mxu0 0
        %1731 = vmatprep.subr.bf16.mxu0 0
        %1732 = vmatpush1.bf16.xpose.msra.mxu0 0
        %1733 = vmatprep.subr.bf16.mxu0 0
        %1734 = vmatpush1.bf16.xpose.msra.mxu0 0
        %1735 = vmatprep.subr.bf16.mxu0 0
        %1736 = vmatpush1.bf16.xpose.msra.mxu0 0
        %1737 = vmatprep.subr.bf16.mxu0 0
        %1738 = vmatpush1.bf16.xpose.msra.mxu0 %v1721
        %1739 = vmatprep.subr.bf16.mxu0 0
        %1740 = vmatpush2.bf16.xpose.msra.mxu0 0
        %1741 = vmatprep.subr.bf16.mxu0 0
        %1742 = vmatpush2.bf16.xpose.msra.mxu0 0
        %1743 = vmatprep.subr.bf16.mxu0 0
        %1744 = vmatpush2.bf16.xpose.msra.mxu0 0
        %1745 = vmatprep.subr.bf16.mxu0 0
        %1746 = vmatpush2.bf16.xpose.msra.mxu0 0
        %1747 = vmatprep.subr.bf16.mxu0 0
        %1748 = vmatpush2.bf16.xpose.msra.mxu0 0
        %1749 = vmatprep.subr.bf16.mxu0 0
        %1750 = vmatpush2.bf16.xpose.msra.mxu0 0
        %1751 = vmatprep.subr.bf16.mxu0 0
        %1752 = vmatpush2.bf16.xpose.msra.mxu0 0
        %1753 = vmatprep.subr.bf16.mxu0 0
        %1754 = vmatpush2.bf16.xpose.msra.mxu0 0
        %1755 = vmatprep.mubr.bf16.mxu0 0
        %1756 = vmatmul.mubr.bf16.gmra.mxu0 %v1718
        %v1757 = vpop.f32.mrf.mxu0
        %v1758 = vadd.f32 %v859, %v1757
        %v1759 = vpop.f32.mrf.mxu0
        %v1760 = vpop.f32.mrf.mxu0
        %v1761 = vpop.f32.mrf.mxu0
        %1762 = vdwg.mxu0
        %1763 = vmatprep.subr.bf16.mxu0 0
        %1764 = vmatpush1.bf16.xpose.msra.mxu0 0
        %1765 = vmatprep.subr.bf16.mxu0 0
        %1766 = vmatpush1.bf16.xpose.msra.mxu0 0
        %1767 = vmatprep.subr.bf16.mxu0 0
        %1768 = vmatpush1.bf16.xpose.msra.mxu0 0
        %1769 = vmatprep.subr.bf16.mxu0 0
        %1770 = vmatpush1.bf16.xpose.msra.mxu0 0
        %1771 = vmatprep.subr.bf16.mxu0 0
        %1772 = vmatpush1.bf16.xpose.msra.mxu0 0
        %1773 = vmatprep.subr.bf16.mxu0 0
        %1774 = vmatpush1.bf16.xpose.msra.mxu0 0
        %1775 = vmatprep.subr.bf16.mxu0 0
        %1776 = vmatpush1.bf16.xpose.msra.mxu0 0
        %1777 = vmatprep.subr.bf16.mxu0 0
        %1778 = vmatpush1.bf16.xpose.msra.mxu0 %v1179
        %1779 = vmatprep.subr.bf16.mxu0 0
        %1780 = vmatpush2.bf16.xpose.msra.mxu0 0
        %1781 = vmatprep.subr.bf16.mxu0 0
        %1782 = vmatpush2.bf16.xpose.msra.mxu0 0
        %1783 = vmatprep.subr.bf16.mxu0 0
        %1784 = vmatpush2.bf16.xpose.msra.mxu0 0
        %1785 = vmatprep.subr.bf16.mxu0 0
        %1786 = vmatpush2.bf16.xpose.msra.mxu0 0
        %1787 = vmatprep.subr.bf16.mxu0 0
        %1788 = vmatpush2.bf16.xpose.msra.mxu0 0
        %1789 = vmatprep.subr.bf16.mxu0 0
        %1790 = vmatpush2.bf16.xpose.msra.mxu0 0
        %1791 = vmatprep.subr.bf16.mxu0 0
        %1792 = vmatpush2.bf16.xpose.msra.mxu0 0
        %1793 = vmatprep.subr.bf16.mxu0 0
        %1794 = vmatpush2.bf16.xpose.msra.mxu0 0
        %1795 = vmatprep.mubr.bf16.mxu0 0
        %1796 = vmatmul.mubr.bf16.gmra.mxu0 %v1718
        %v1797 = vpop.f32.mrf.mxu0
        %v1798 = vadd.f32 0.0, %v1797
        %v1799 = vpop.f32.mrf.mxu0
        %v1800 = vpop.f32.mrf.mxu0
        %v1801 = vpop.f32.mrf.mxu0
        %1802 = vdwg.mxu0
        %1804 = vset.pattern.permute.xlu0 0
        %1805 = vperm.xlu0 %1804, %v1798
        %v1806 = vpop.permute.xlu0 %1805
        %v1808 = vsel %vm1221, %v1806, 0.0
        %v1809 = vadd.f32 %v1758, %v1808
        %1810 = vset.pattern.permute.xlu0 1
        %1811 = vperm.xlu0 %1810, %v1798
        %v1812 = vpop.permute.xlu0 %1811
        %v1814 = vsel %vm1229, %v1812, 0.0
        %v1815 = vadd.f32 %v1809, %v1814
        %1816 = vset.pattern.permute.xlu0 2
        %1817 = vperm.xlu0 %1816, %v1798
        %v1818 = vpop.permute.xlu0 %1817
        %v1820 = vsel %vm1236, %v1818, 0.0
        %v1821 = vadd.f32 %v1815, %v1820
        %1822 = vset.pattern.permute.xlu0 3
        %1823 = vperm.xlu0 %1822, %v1798
        %v1824 = vpop.permute.xlu0 %1823
        %v1826 = vsel %vm1243, %v1824, 0.0
        %v1827 = vadd.f32 %v1821, %v1826
        %1828 = vset.pattern.permute.xlu0 4
        %1829 = vperm.xlu0 %1828, %v1798
        %v1830 = vpop.permute.xlu0 %1829
        %v1832 = vsel %vm1250, %v1830, 0.0
        %v1833 = vadd.f32 %v1827, %v1832
        %1834 = vset.pattern.permute.xlu0 5
        %1835 = vperm.xlu0 %1834, %v1798
        %v1836 = vpop.permute.xlu0 %1835
        %v1838 = vsel %vm1257, %v1836, 0.0
        %v1839 = vadd.f32 %v1833, %v1838
        %1840 = vset.pattern.permute.xlu0 6
        %1841 = vperm.xlu0 %1840, %v1798
        %v1842 = vpop.permute.xlu0 %1841
        %v1844 = vsel %vm1264, %v1842, 0.0
        %v1845 = vadd.f32 %v1839, %v1844
        %1846 = vset.pattern.permute.xlu0 7
        %1847 = vperm.xlu0 %1846, %v1798
        %v1848 = vpop.permute.xlu0 %1847
        %v1850 = vsel %vm1271, %v1848, 0.0
        %v1851 = vadd.f32 %v1845, %v1850
        %1852 = vset.pattern.permute.xlu0 8
        %1853 = vperm.xlu0 %1852, %v1798
        %v1854 = vpop.permute.xlu0 %1853
        %v1856 = vsel %vm1278, %v1854, 0.0
        %v1857 = vadd.f32 %v1851, %v1856
        %1858 = vset.pattern.permute.xlu0 9
        %1859 = vperm.xlu0 %1858, %v1798
        %v1860 = vpop.permute.xlu0 %1859
        %v1862 = vsel %vm1285, %v1860, 0.0
        %v1863 = vadd.f32 %v1857, %v1862
        %1864 = vset.pattern.permute.xlu0 10
        %1865 = vperm.xlu0 %1864, %v1798
        %v1866 = vpop.permute.xlu0 %1865
        %v1868 = vsel %vm1292, %v1866, 0.0
        %v1869 = vadd.f32 %v1863, %v1868
        %1870 = vset.pattern.permute.xlu0 11
        %1871 = vperm.xlu0 %1870, %v1798
        %v1872 = vpop.permute.xlu0 %1871
        %v1874 = vsel %vm1299, %v1872, 0.0
        %v1875 = vadd.f32 %v1869, %v1874
        %1876 = vset.pattern.permute.xlu0 12
        %1877 = vperm.xlu0 %1876, %v1798
        %v1878 = vpop.permute.xlu0 %1877
        %v1880 = vsel %vm1306, %v1878, 0.0
        %v1881 = vadd.f32 %v1875, %v1880
        %1882 = vset.pattern.permute.xlu0 13
        %1883 = vperm.xlu0 %1882, %v1798
        %v1884 = vpop.permute.xlu0 %1883
        %v1886 = vsel %vm1313, %v1884, 0.0
        %v1887 = vadd.f32 %v1881, %v1886
        %1888 = vset.pattern.permute.xlu0 14
        %1889 = vperm.xlu0 %1888, %v1798
        %v1890 = vpop.permute.xlu0 %1889
        %v1892 = vsel %vm1320, %v1890, 0.0
        %v1893 = vadd.f32 %v1887, %v1892
        %v1894 = vsel %vm1327, %v1893, -inf
        %1895 = vmax.xlane.f32.xlu0 %v1894
        %v1896 = vpop.xlane.xlu0 %1895
        %v1897 = vsub.f32 %v1893, %v1896
        %v1898 = vmul.f32 %v1897, 1.442695
        %v1899 = vpow.pop %v1898
        %v1900 = vsel %vm1327, %v1899, 0.0
        %1901 = vadd.xlane.f32.xlu0 %v1900
        %v1902 = vpop.xlane.xlu0 %1901
        %v1903 = vrcp.pop %v1902
        %v1904 = vmul.f32 %v1899, %v1903
        %v1905 = vpack.c.bf16 %v1904, %v1904
        %v1906 = vpack.c.bf16 %v1709, %v1709
        %v1907 = vsel %vm1221, %v1904, 0.0
        %v1908 = vsel %vm1327, %v1907, 0.0
        %1909 = vadd.xlane.f32.xlu0 %v1908
        %v1910 = vpop.xlane.xlu0 %1909
        %v1911 = vsel %vm1229, %v1904, 0.0
        %v1912 = vsel %vm1327, %v1911, 0.0
        %1913 = vadd.xlane.f32.xlu0 %v1912
        %v1914 = vpop.xlane.xlu0 %1913
        %v1915 = vsel %vm1236, %v1904, 0.0
        %v1916 = vsel %vm1327, %v1915, 0.0
        %1917 = vadd.xlane.f32.xlu0 %v1916
        %v1918 = vpop.xlane.xlu0 %1917
        %v1919 = vsel %vm1243, %v1904, 0.0
        %v1920 = vsel %vm1327, %v1919, 0.0
        %1921 = vadd.xlane.f32.xlu0 %v1920
        %v1922 = vpop.xlane.xlu0 %1921
        %v1923 = vsel %vm1250, %v1904, 0.0
        %v1924 = vsel %vm1327, %v1923, 0.0
        %1925 = vadd.xlane.f32.xlu0 %v1924
        %v1926 = vpop.xlane.xlu0 %1925
        %v1927 = vsel %vm1257, %v1904, 0.0
        %v1928 = vsel %vm1327, %v1927, 0.0
        %1929 = vadd.xlane.f32.xlu0 %v1928
        %v1930 = vpop.xlane.xlu0 %1929
        %v1931 = vsel %vm1264, %v1904, 0.0
        %v1932 = vsel %vm1327, %v1931, 0.0
        %1933 = vadd.xlane.f32.xlu0 %v1932
        %v1934 = vpop.xlane.xlu0 %1933
        %v1935 = vsel %vm1271, %v1904, 0.0
        %v1936 = vsel %vm1327, %v1935, 0.0
        %1937 = vadd.xlane.f32.xlu0 %v1936
        %v1938 = vpop.xlane.xlu0 %1937
        %v1939 = vsel %vm1278, %v1904, 0.0
        %v1940 = vsel %vm1327, %v1939, 0.0
        %1941 = vadd.xlane.f32.xlu0 %v1940
        %v1942 = vpop.xlane.xlu0 %1941
        %v1943 = vsel %vm1285, %v1904, 0.0
        %v1944 = vsel %vm1327, %v1943, 0.0
        %1945 = vadd.xlane.f32.xlu0 %v1944
        %v1946 = vpop.xlane.xlu0 %1945
        %v1947 = vsel %vm1292, %v1904, 0.0
        %v1948 = vsel %vm1327, %v1947, 0.0
        %1949 = vadd.xlane.f32.xlu0 %v1948
        %v1950 = vpop.xlane.xlu0 %1949
        %v1951 = vsel %vm1299, %v1904, 0.0
        %v1952 = vsel %vm1327, %v1951, 0.0
        %1953 = vadd.xlane.f32.xlu0 %v1952
        %v1954 = vpop.xlane.xlu0 %1953
        %v1955 = vsel %vm1306, %v1904, 0.0
        %v1956 = vsel %vm1327, %v1955, 0.0
        %1957 = vadd.xlane.f32.xlu0 %v1956
        %v1958 = vpop.xlane.xlu0 %1957
        %v1959 = vsel %vm1313, %v1904, 0.0
        %v1960 = vsel %vm1327, %v1959, 0.0
        %1961 = vadd.xlane.f32.xlu0 %v1960
        %v1962 = vpop.xlane.xlu0 %1961
        %v1963 = vsel %vm1320, %v1904, 0.0
        %v1964 = vsel %vm1327, %v1963, 0.0
        %1965 = vadd.xlane.f32.xlu0 %v1964
        %v1966 = vpop.xlane.xlu0 %1965
        %v1967 = vsel %vm1401, %v1910, %v1914
        %v1968 = vsel %vm1403, %v1967, %v1918
        %v1969 = vsel %vm1405, %v1968, %v1922
        %v1970 = vsel %vm1407, %v1969, %v1926
        %v1971 = vsel %vm1409, %v1970, %v1930
        %v1972 = vsel %vm1411, %v1971, %v1934
        %v1973 = vsel %vm1413, %v1972, %v1938
        %v1974 = vsel %vm1327, %v1973, %v1942
        %v1975 = vsel %vm1416, %v1974, %v1946
        %v1976 = vsel %vm1418, %v1975, %v1950
        %v1977 = vsel %vm1420, %v1976, %v1954
        %v1978 = vsel %vm1422, %v1977, %v1958
        %v1979 = vsel %vm1424, %v1978, %v1962
        %v1980 = vsel %vm1426, %v1979, %v1966
        %v1981 = vpack.c.bf16 %v1980, %v1980
        %v1983 = vsel %vm1434, %v1981, 0
        %1985 = vmatprep.subr.bf16.mxu0 0
        %1986 = vmatpush1.bf16.msra.mxu0 0
        %1987 = vmatprep.subr.bf16.mxu0 0
        %1988 = vmatpush1.bf16.msra.mxu0 0
        %1989 = vmatprep.subr.bf16.mxu0 0
        %1990 = vmatpush1.bf16.msra.mxu0 0
        %1991 = vmatprep.subr.bf16.mxu0 0
        %1992 = vmatpush1.bf16.msra.mxu0 0
        %1993 = vmatprep.subr.bf16.mxu0 0
        %1994 = vmatpush1.bf16.msra.mxu0 0
        %1995 = vmatprep.subr.bf16.mxu0 0
        %1996 = vmatpush1.bf16.msra.mxu0 0
        %1997 = vmatprep.subr.bf16.mxu0 0
        %1998 = vmatpush1.bf16.msra.mxu0 0
        %1999 = vmatprep.subr.bf16.mxu0 0
        %2000 = vmatpush1.bf16.msra.mxu0 %v1443
        %2001 = vmatprep.subr.bf16.mxu0 0
        %2002 = vmatpush2.bf16.msra.mxu0 0
        %2003 = vmatprep.subr.bf16.mxu0 0
        %2004 = vmatpush2.bf16.msra.mxu0 0
        %2005 = vmatprep.subr.bf16.mxu0 0
        %2006 = vmatpush2.bf16.msra.mxu0 0
        %2007 = vmatprep.subr.bf16.mxu0 0
        %2008 = vmatpush2.bf16.msra.mxu0 0
        %2009 = vmatprep.subr.bf16.mxu0 0
        %2010 = vmatpush2.bf16.msra.mxu0 0
        %2011 = vmatprep.subr.bf16.mxu0 0
        %2012 = vmatpush2.bf16.msra.mxu0 0
        %2013 = vmatprep.subr.bf16.mxu0 0
        %2014 = vmatpush2.bf16.msra.mxu0 0
        %2015 = vmatprep.subr.bf16.mxu0 0
        %2016 = vmatpush2.bf16.msra.mxu0 0
        %2017 = vmatprep.mubr.bf16.mxu0 0
        %2018 = vmatmul.mubr.bf16.gmra.mxu0 %v1983
        %v2019 = vpop.f32.mrf.mxu0
        %v2020 = vadd.f32 0.0, %v2019
        %v2021 = vpop.f32.mrf.mxu0
        %v2022 = vpop.f32.mrf.mxu0
        %v2023 = vpop.f32.mrf.mxu0
        %2024 = vdwg.mxu0
        %v2026 = vsel %vm1327, %v1905, 0
        %v2029 = vsel %vm1488, %v1906, 0
        %2031 = vmatprep.subr.bf16.mxu0 0
        %2032 = vmatpush1.bf16.msra.mxu0 0
        %2033 = vmatprep.subr.bf16.mxu0 0
        %2034 = vmatpush1.bf16.msra.mxu0 0
        %2035 = vmatprep.subr.bf16.mxu0 0
        %2036 = vmatpush1.bf16.msra.mxu0 0
        %2037 = vmatprep.subr.bf16.mxu0 0
        %2038 = vmatpush1.bf16.msra.mxu0 0
        %2039 = vmatprep.subr.bf16.mxu0 0
        %2040 = vmatpush1.bf16.msra.mxu0 0
        %2041 = vmatprep.subr.bf16.mxu0 0
        %2042 = vmatpush1.bf16.msra.mxu0 0
        %2043 = vmatprep.subr.bf16.mxu0 0
        %2044 = vmatpush1.bf16.msra.mxu0 0
        %2045 = vmatprep.subr.bf16.mxu0 0
        %2046 = vmatpush1.bf16.msra.mxu0 %v2029
        %2047 = vmatprep.subr.bf16.mxu0 0
        %2048 = vmatpush2.bf16.msra.mxu0 0
        %2049 = vmatprep.subr.bf16.mxu0 0
        %2050 = vmatpush2.bf16.msra.mxu0 0
        %2051 = vmatprep.subr.bf16.mxu0 0
        %2052 = vmatpush2.bf16.msra.mxu0 0
        %2053 = vmatprep.subr.bf16.mxu0 0
        %2054 = vmatpush2.bf16.msra.mxu0 0
        %2055 = vmatprep.subr.bf16.mxu0 0
        %2056 = vmatpush2.bf16.msra.mxu0 0
        %2057 = vmatprep.subr.bf16.mxu0 0
        %2058 = vmatpush2.bf16.msra.mxu0 0
        %2059 = vmatprep.subr.bf16.mxu0 0
        %2060 = vmatpush2.bf16.msra.mxu0 0
        %2061 = vmatprep.subr.bf16.mxu0 0
        %2062 = vmatpush2.bf16.msra.mxu0 0
        %2063 = vmatprep.mubr.bf16.mxu0 0
        %2064 = vmatmul.mubr.bf16.gmra.mxu0 %v2026
        %v2065 = vpop.f32.mrf.mxu0
        %v2066 = vadd.f32 %v2020, %v2065
        %v2067 = vpop.f32.mrf.mxu0
        %v2068 = vpop.f32.mrf.mxu0
        %v2069 = vpop.f32.mrf.mxu0
        %2070 = vdwg.mxu0
        %v2071 = vpack.c.bf16 %v2066, %v2066
        %s2072 = scalar_lea.vmem %s12, 16
        %v2073 = vld [vmem:[%s2072] sm:$0xf]
        %v2074 = vld [vmem:[%s2072 + $0x4] sm:$0xf]
        %v2075 = vld [vmem:[%s2072 + $0x8] sm:$0xf]
        %v2076 = vld [vmem:[%s2072 + $0xc] sm:$0xf]
        %v2081 = vunpack.c.l.b16 %v2073
        %v2082 = vunpack.c.l.b16 %v2074
        %v2083 = vunpack.c.l.b16 %v2075
        %v2084 = vunpack.c.l.b16 %v2076
        %v2085 = vpack.c.b16 %v2082, %v2081
        %v2086 = vpack.c.b16 %v2084, %v2083
        %v2088 = vsel %vm888, %v2071, 0
        %v2091 = vsel %vm888, %v2085, 0
        %v2094 = vsel %vm888, %v2086, 0
        %2096 = vmatprep.subr.bf16.mxu0 0
        %2097 = vmatpush1.bf16.xpose.msra.mxu0 0
        %2098 = vmatprep.subr.bf16.mxu0 0
        %2099 = vmatpush1.bf16.xpose.msra.mxu0 0
        %2100 = vmatprep.subr.bf16.mxu0 0
        %2101 = vmatpush1.bf16.xpose.msra.mxu0 0
        %2102 = vmatprep.subr.bf16.mxu0 0
        %2103 = vmatpush1.bf16.xpose.msra.mxu0 0
        %2104 = vmatprep.subr.bf16.mxu0 0
        %2105 = vmatpush1.bf16.xpose.msra.mxu0 0
        %2106 = vmatprep.subr.bf16.mxu0 0
        %2107 = vmatpush1.bf16.xpose.msra.mxu0 0
        %2108 = vmatprep.subr.bf16.mxu0 0
        %2109 = vmatpush1.bf16.xpose.msra.mxu0 %v2094
        %2110 = vmatprep.subr.bf16.mxu0 0
        %2111 = vmatpush1.bf16.xpose.msra.mxu0 %v2091
        %2112 = vmatprep.subr.bf16.mxu0 0
        %2113 = vmatpush2.bf16.xpose.msra.mxu0 0
        %2114 = vmatprep.subr.bf16.mxu0 0
        %2115 = vmatpush2.bf16.xpose.msra.mxu0 0
        %2116 = vmatprep.subr.bf16.mxu0 0
        %2117 = vmatpush2.bf16.xpose.msra.mxu0 0
        %2118 = vmatprep.subr.bf16.mxu0 0
        %2119 = vmatpush2.bf16.xpose.msra.mxu0 0
        %2120 = vmatprep.subr.bf16.mxu0 0
        %2121 = vmatpush2.bf16.xpose.msra.mxu0 0
        %2122 = vmatprep.subr.bf16.mxu0 0
        %2123 = vmatpush2.bf16.xpose.msra.mxu0 0
        %2124 = vmatprep.subr.bf16.mxu0 0
        %2125 = vmatpush2.bf16.xpose.msra.mxu0 0
        %2126 = vmatprep.subr.bf16.mxu0 0
        %2127 = vmatpush2.bf16.xpose.msra.mxu0 0
        %2128 = vmatprep.mubr.bf16.mxu0 0
        %2129 = vmatmul.mubr.bf16.gmra.mxu0 %v2088
        %v2130 = vpop.f32.mrf.mxu0
        %v2131 = vadd.f32 0.0, %v2130
        %v2132 = vpop.f32.mrf.mxu0
        %v2133 = vpop.f32.mrf.mxu0
        %v2134 = vpop.f32.mrf.mxu0
        %2135 = vdwg.mxu0
        %v2140 = vunpack.c.l.b16 %v1533
        %v2141 = vunpack.c.l.b16 %v1534
        %v2142 = vunpack.c.l.b16 %v1535
        %v2143 = vunpack.c.l.b16 %v1536
        %v2144 = vpack.c.b16 %v2141, %v2140
        %v2145 = vpack.c.b16 %v2143, %v2142
        %v2147 = vsel %vm888, %v1532, 0
        %v2150 = vsel %vm888, %v2144, 0
        %v2153 = vsel %vm888, %v2145, 0
        %2155 = vmatprep.subr.bf16.mxu0 0
        %2156 = vmatpush1.bf16.xpose.msra.mxu0 0
        %2157 = vmatprep.subr.bf16.mxu0 0
        %2158 = vmatpush1.bf16.xpose.msra.mxu0 0
        %2159 = vmatprep.subr.bf16.mxu0 0
        %2160 = vmatpush1.bf16.xpose.msra.mxu0 0
        %2161 = vmatprep.subr.bf16.mxu0 0
        %2162 = vmatpush1.bf16.xpose.msra.mxu0 0
        %2163 = vmatprep.subr.bf16.mxu0 0
        %2164 = vmatpush1.bf16.xpose.msra.mxu0 0
        %2165 = vmatprep.subr.bf16.mxu0 0
        %2166 = vmatpush1.bf16.xpose.msra.mxu0 0
        %2167 = vmatprep.subr.bf16.mxu0 0
        %2168 = vmatpush1.bf16.xpose.msra.mxu0 %v2153
        %2169 = vmatprep.subr.bf16.mxu0 0
        %2170 = vmatpush1.bf16.xpose.msra.mxu0 %v2150
        %2171 = vmatprep.subr.bf16.mxu0 0
        %2172 = vmatpush2.bf16.xpose.msra.mxu0 0
        %2173 = vmatprep.subr.bf16.mxu0 0
        %2174 = vmatpush2.bf16.xpose.msra.mxu0 0
        %2175 = vmatprep.subr.bf16.mxu0 0
        %2176 = vmatpush2.bf16.xpose.msra.mxu0 0
        %2177 = vmatprep.subr.bf16.mxu0 0
        %2178 = vmatpush2.bf16.xpose.msra.mxu0 0
        %2179 = vmatprep.subr.bf16.mxu0 0
        %2180 = vmatpush2.bf16.xpose.msra.mxu0 0
        %2181 = vmatprep.subr.bf16.mxu0 0
        %2182 = vmatpush2.bf16.xpose.msra.mxu0 0
        %2183 = vmatprep.subr.bf16.mxu0 0
        %2184 = vmatpush2.bf16.xpose.msra.mxu0 0
        %2185 = vmatprep.subr.bf16.mxu0 0
        %2186 = vmatpush2.bf16.xpose.msra.mxu0 0
        %2187 = vmatprep.mubr.bf16.mxu0 0
        %2188 = vmatmul.mubr.bf16.gmra.mxu0 %v2147
        %v2189 = vpop.f32.mrf.mxu0
        %v2190 = vadd.f32 %v2131, %v2189
        %v2191 = vpop.f32.mrf.mxu0
        %v2192 = vpop.f32.mrf.mxu0
        %v2193 = vpop.f32.mrf.mxu0
        %2194 = vdwg.mxu0
        %v2195 = vld [vmem:[%s13] sm:$0x1]
        %v2197 = vlaneseq
        %v2198 = vshrl.u32 %v2197, 7
        %v2199 = vsub.s32 0, %v2198
        %v2200 = vrot.slane %v2195, %v2199
        %v2202 = vadd.f32 %v2190, %v2200
        %v2203 = vadd.f32 %v944, %v2202
        %v2204 = vld [vmem:[%s16] sm:$0x1]
        %v2205 = vld [vmem:[%s17] sm:$0x1]
        %v2206 = vsel %vm836, %v2203, 0.0
        %2207 = vadd.xlane.f32.xlu0 %v2206
        %v2208 = vpop.xlane.xlu0 %2207
        %v2209 = vrcp.pop 32.0
        %v2210 = vmul.f32 %v2208, %v2209
        %v2211 = vsub.f32 %v2203, %v2210
        %v2212 = vmul.f32 %v2211, %v2211
        %v2213 = vsel %vm836, %v2212, 0.0
        %2214 = vadd.xlane.f32.xlu0 %v2213
        %v2215 = vpop.xlane.xlu0 %2214
        %v2216 = vmul.f32 %v2215, %v2209
        %v2217 = vadd.f32 %v2216, 1e-05
        %v2218 = vrsqrt.pop %v2217
        %v2219 = vmul.f32 %v2211, %v2218
        %v2221 = vlaneseq
        %v2222 = vshrl.u32 %v2221, 7
        %v2223 = vsub.s32 0, %v2222
        %v2224 = vrot.slane %v2204, %v2223
        %v2226 = vmul.f32 %v2219, %v2224
        %v2228 = vlaneseq
        %v2229 = vshrl.u32 %v2228, 7
        %v2230 = vsub.s32 0, %v2229
        %v2231 = vrot.slane %v2205, %v2230
        %v2233 = vadd.f32 %v2226, %v2231
        %v2234 = vmul.f32 %v2233, %v849
        %v2235 = vld [vmem:[%s19] sm:$0x1]
        %2236 = vst.msk [vmem:[#allocation2 + $0x1] sm:$0xff] %vm836, %v2234
        %v2237 = vld [vmem:[#allocation2] sm:$0xff]
        %v2238 = vpack.c.bf16 %v2237, %v2237
        %v2239 = vld [vmem:[%s18] sm:$0xf]
        %v2240 = vld [vmem:[%s18 + $0x4] sm:$0xf]
        %v2241 = vld [vmem:[%s18 + $0x8] sm:$0xf]
        %v2242 = vld [vmem:[%s18 + $0xc] sm:$0xf]
        %v2243 = vld [vmem:[%s18 + $0x10] sm:$0xf]
        %v2244 = vld [vmem:[%s18 + $0x14] sm:$0xf]
        %v2245 = vld [vmem:[%s18 + $0x18] sm:$0xf]
        %v2246 = vld [vmem:[%s18 + $0x1c] sm:$0xf]
        %v2247 = vld [vmem:[#allocation2 + $0x1] sm:$0xff]
        %v2248 = vpack.c.bf16 %v2247, %v2247
        %s2249 = scalar_lea.vmem %s18, 32
        %v2250 = vld [vmem:[%s2249] sm:$0xf]
        %v2251 = vld [vmem:[%s2249 + $0x4] sm:$0xf]
        %v2252 = vld [vmem:[%s2249 + $0x8] sm:$0xf]
        %v2253 = vld [vmem:[%s2249 + $0xc] sm:$0xf]
        %v2254 = vld [vmem:[%s2249 + $0x10] sm:$0xf]
        %v2255 = vld [vmem:[%s2249 + $0x14] sm:$0xf]
        %v2256 = vld [vmem:[%s2249 + $0x18] sm:$0xf]
        %v2257 = vld [vmem:[%s2249 + $0x1c] sm:$0xf]
        %v2266 = vunpack.c.l.b16 %v2250
        %v2267 = vunpack.c.l.b16 %v2251
        %v2268 = vunpack.c.l.b16 %v2252
        %v2269 = vunpack.c.l.b16 %v2253
        %v2270 = vunpack.c.l.b16 %v2254
        %v2271 = vunpack.c.l.b16 %v2255
        %v2272 = vunpack.c.l.b16 %v2256
        %v2273 = vunpack.c.l.b16 %v2257
        %v2274 = vpack.c.b16 %v2267, %v2266
        %v2275 = vpack.c.b16 %v2269, %v2268
        %v2276 = vpack.c.b16 %v2271, %v2270
        %v2277 = vpack.c.b16 %v2273, %v2272
        %v2279 = vsel %vm836, %v2248, 0
        %v2282 = vsel %vm836, %v2274, 0
        %v2285 = vsel %vm836, %v2275, 0
        %v2288 = vsel %vm836, %v2276, 0
        %v2291 = vsel %vm836, %v2277, 0
        %2293 = vmatprep.subr.bf16.mxu0 0
        %2294 = vmatpush1.bf16.xpose.msra.mxu0 0
        %2295 = vmatprep.subr.bf16.mxu0 0
        %2296 = vmatpush1.bf16.xpose.msra.mxu0 0
        %2297 = vmatprep.subr.bf16.mxu0 0
        %2298 = vmatpush1.bf16.xpose.msra.mxu0 0
        %2299 = vmatprep.subr.bf16.mxu0 0
        %2300 = vmatpush1.bf16.xpose.msra.mxu0 0
        %2301 = vmatprep.subr.bf16.mxu0 0
        %2302 = vmatpush1.bf16.xpose.msra.mxu0 %v2291
        %2303 = vmatprep.subr.bf16.mxu0 0
        %2304 = vmatpush1.bf16.xpose.msra.mxu0 %v2288
        %2305 = vmatprep.subr.bf16.mxu0 0
        %2306 = vmatpush1.bf16.xpose.msra.mxu0 %v2285
        %2307 = vmatprep.subr.bf16.mxu0 0
        %2308 = vmatpush1.bf16.xpose.msra.mxu0 %v2282
        %2309 = vmatprep.subr.bf16.mxu0 0
        %2310 = vmatpush2.bf16.xpose.msra.mxu0 0
        %2311 = vmatprep.subr.bf16.mxu0 0
        %2312 = vmatpush2.bf16.xpose.msra.mxu0 0
        %2313 = vmatprep.subr.bf16.mxu0 0
        %2314 = vmatpush2.bf16.xpose.msra.mxu0 0
        %2315 = vmatprep.subr.bf16.mxu0 0
        %2316 = vmatpush2.bf16.xpose.msra.mxu0 0
        %2317 = vmatprep.subr.bf16.mxu0 0
        %2318 = vmatpush2.bf16.xpose.msra.mxu0 0
        %2319 = vmatprep.subr.bf16.mxu0 0
        %2320 = vmatpush2.bf16.xpose.msra.mxu0 0
        %2321 = vmatprep.subr.bf16.mxu0 0
        %2322 = vmatpush2.bf16.xpose.msra.mxu0 0
        %2323 = vmatprep.subr.bf16.mxu0 0
        %2324 = vmatpush2.bf16.xpose.msra.mxu0 0
        %2325 = vmatprep.mubr.bf16.mxu0 0
        %2326 = vmatmul.mubr.bf16.gmra.mxu0 %v2279
        %v2327 = vpop.f32.mrf.mxu0
        %v2328 = vadd.f32 0.0, %v2327
        %v2329 = vpop.f32.mrf.mxu0
        %v2330 = vpop.f32.mrf.mxu0
        %v2331 = vpop.f32.mrf.mxu0
        %2332 = vdwg.mxu0
        %v2341 = vunpack.c.l.b16 %v2239
        %v2342 = vunpack.c.l.b16 %v2240
        %v2343 = vunpack.c.l.b16 %v2241
        %v2344 = vunpack.c.l.b16 %v2242
        %v2345 = vunpack.c.l.b16 %v2243
        %v2346 = vunpack.c.l.b16 %v2244
        %v2347 = vunpack.c.l.b16 %v2245
        %v2348 = vunpack.c.l.b16 %v2246
        %v2349 = vpack.c.b16 %v2342, %v2341
        %v2350 = vpack.c.b16 %v2344, %v2343
        %v2351 = vpack.c.b16 %v2346, %v2345
        %v2352 = vpack.c.b16 %v2348, %v2347
        %v2354 = vsel %vm836, %v2238, 0
        %v2357 = vsel %vm836, %v2349, 0
        %v2360 = vsel %vm836, %v2350, 0
        %v2363 = vsel %vm836, %v2351, 0
        %v2366 = vsel %vm836, %v2352, 0
        %2368 = vmatprep.subr.bf16.mxu0 0
        %2369 = vmatpush1.bf16.xpose.msra.mxu0 0
        %2370 = vmatprep.subr.bf16.mxu0 0
        %2371 = vmatpush1.bf16.xpose.msra.mxu0 0
        %2372 = vmatprep.subr.bf16.mxu0 0
        %2373 = vmatpush1.bf16.xpose.msra.mxu0 0
        %2374 = vmatprep.subr.bf16.mxu0 0
        %2375 = vmatpush1.bf16.xpose.msra.mxu0 0
        %2376 = vmatprep.subr.bf16.mxu0 0
        %2377 = vmatpush1.bf16.xpose.msra.mxu0 %v2366
        %2378 = vmatprep.subr.bf16.mxu0 0
        %2379 = vmatpush1.bf16.xpose.msra.mxu0 %v2363
        %2380 = vmatprep.subr.bf16.mxu0 0
        %2381 = vmatpush1.bf16.xpose.msra.mxu0 %v2360
        %2382 = vmatprep.subr.bf16.mxu0 0
        %2383 = vmatpush1.bf16.xpose.msra.mxu0 %v2357
        %2384 = vmatprep.subr.bf16.mxu0 0
        %2385 = vmatpush2.bf16.xpose.msra.mxu0 0
        %2386 = vmatprep.subr.bf16.mxu0 0
        %2387 = vmatpush2.bf16.xpose.msra.mxu0 0
        %2388 = vmatprep.subr.bf16.mxu0 0
        %2389 = vmatpush2.bf16.xpose.msra.mxu0 0
        %2390 = vmatprep.subr.bf16.mxu0 0
        %2391 = vmatpush2.bf16.xpose.msra.mxu0 0
        %2392 = vmatprep.subr.bf16.mxu0 0
        %2393 = vmatpush2.bf16.xpose.msra.mxu0 0
        %2394 = vmatprep.subr.bf16.mxu0 0
        %2395 = vmatpush2.bf16.xpose.msra.mxu0 0
        %2396 = vmatprep.subr.bf16.mxu0 0
        %2397 = vmatpush2.bf16.xpose.msra.mxu0 0
        %2398 = vmatprep.subr.bf16.mxu0 0
        %2399 = vmatpush2.bf16.xpose.msra.mxu0 0
        %2400 = vmatprep.mubr.bf16.mxu0 0
        %2401 = vmatmul.mubr.bf16.gmra.mxu0 %v2354
        %v2402 = vpop.f32.mrf.mxu0
        %v2403 = vadd.f32 %v2328, %v2402
        %v2404 = vpop.f32.mrf.mxu0
        %v2405 = vpop.f32.mrf.mxu0
        %v2406 = vpop.f32.mrf.mxu0
        %2407 = vdwg.mxu0
        %v2408 = vld [vmem:[#allocation2 + $0x2] sm:$0xff]
        %v2409 = vpack.c.bf16 %v2408, %v2408
        %s2410 = scalar_lea.vmem %s18, 64
        %v2411 = vld [vmem:[%s2410] sm:$0xf]
        %v2412 = vld [vmem:[%s2410 + $0x4] sm:$0xf]
        %v2413 = vld [vmem:[%s2410 + $0x8] sm:$0xf]
        %v2414 = vld [vmem:[%s2410 + $0xc] sm:$0xf]
        %v2415 = vld [vmem:[%s2410 + $0x10] sm:$0xf]
        %v2416 = vld [vmem:[%s2410 + $0x14] sm:$0xf]
        %v2417 = vld [vmem:[%s2410 + $0x18] sm:$0xf]
        %v2418 = vld [vmem:[%s2410 + $0x1c] sm:$0xf]
        %v2427 = vunpack.c.l.b16 %v2411
        %v2428 = vunpack.c.l.b16 %v2412
        %v2429 = vunpack.c.l.b16 %v2413
        %v2430 = vunpack.c.l.b16 %v2414
        %v2431 = vunpack.c.l.b16 %v2415
        %v2432 = vunpack.c.l.b16 %v2416
        %v2433 = vunpack.c.l.b16 %v2417
        %v2434 = vunpack.c.l.b16 %v2418
        %v2435 = vpack.c.b16 %v2428, %v2427
        %v2436 = vpack.c.b16 %v2430, %v2429
        %v2437 = vpack.c.b16 %v2432, %v2431
        %v2438 = vpack.c.b16 %v2434, %v2433
        %v2440 = vsel %vm836, %v2409, 0
        %v2443 = vsel %vm836, %v2435, 0
        %v2446 = vsel %vm836, %v2436, 0
        %v2449 = vsel %vm836, %v2437, 0
        %v2452 = vsel %vm836, %v2438, 0
        %2454 = vmatprep.subr.bf16.mxu0 0
        %2455 = vmatpush1.bf16.xpose.msra.mxu0 0
        %2456 = vmatprep.subr.bf16.mxu0 0
        %2457 = vmatpush1.bf16.xpose.msra.mxu0 0
        %2458 = vmatprep.subr.bf16.mxu0 0
        %2459 = vmatpush1.bf16.xpose.msra.mxu0 0
        %2460 = vmatprep.subr.bf16.mxu0 0
        %2461 = vmatpush1.bf16.xpose.msra.mxu0 0
        %2462 = vmatprep.subr.bf16.mxu0 0
        %2463 = vmatpush1.bf16.xpose.msra.mxu0 %v2452
        %2464 = vmatprep.subr.bf16.mxu0 0
        %2465 = vmatpush1.bf16.xpose.msra.mxu0 %v2449
        %2466 = vmatprep.subr.bf16.mxu0 0
        %2467 = vmatpush1.bf16.xpose.msra.mxu0 %v2446
        %2468 = vmatprep.subr.bf16.mxu0 0
        %2469 = vmatpush1.bf16.xpose.msra.mxu0 %v2443
        %2470 = vmatprep.subr.bf16.mxu0 0
        %2471 = vmatpush2.bf16.xpose.msra.mxu0 0
        %2472 = vmatprep.subr.bf16.mxu0 0
        %2473 = vmatpush2.bf16.xpose.msra.mxu0 0
        %2474 = vmatprep.subr.bf16.mxu0 0
        %2475 = vmatpush2.bf16.xpose.msra.mxu0 0
        %2476 = vmatprep.subr.bf16.mxu0 0
        %2477 = vmatpush2.bf16.xpose.msra.mxu0 0
        %2478 = vmatprep.subr.bf16.mxu0 0
        %2479 = vmatpush2.bf16.xpose.msra.mxu0 0
        %2480 = vmatprep.subr.bf16.mxu0 0
        %2481 = vmatpush2.bf16.xpose.msra.mxu0 0
        %2482 = vmatprep.subr.bf16.mxu0 0
        %2483 = vmatpush2.bf16.xpose.msra.mxu0 0
        %2484 = vmatprep.subr.bf16.mxu0 0
        %2485 = vmatpush2.bf16.xpose.msra.mxu0 0
        %2486 = vmatprep.mubr.bf16.mxu0 0
        %2487 = vmatmul.mubr.bf16.gmra.mxu0 %v2440
        %v2488 = vpop.f32.mrf.mxu0
        %v2489 = vadd.f32 0.0, %v2488
        %v2490 = vpop.f32.mrf.mxu0
        %v2491 = vpop.f32.mrf.mxu0
        %v2492 = vpop.f32.mrf.mxu0
        %2493 = vdwg.mxu0
        %v2494 = vadd.f32 %v2403, %v2489
        %v2496 = vlaneseq
        %v2497 = vshrl.u32 %v2496, 7
        %v2498 = vsub.s32 0, %v2497
        %v2499 = vrot.slane %v2235, %v2498
        %v2501 = vadd.f32 %v2494, %v2499
        %v2502 = vmax.f32 %v2501, 0.0
        %v2503 = vmul.f32 %v2502, %v849
        %v2504 = vld [vmem:[%s21] sm:$0x1]
        %2505 = vst.msk [vmem:[#allocation3 + $0x1] sm:$0xff] %vm840, %v2503
        %v2506 = vld [vmem:[#allocation3] sm:$0xff]
        %v2507 = vpack.c.bf16 %v2506, %v2506
        %v2508 = vld [vmem:[%s20] sm:$0xf]
        %v2509 = vld [vmem:[%s20 + $0x4] sm:$0xf]
        %v2510 = vld [vmem:[%s20 + $0x8] sm:$0xf]
        %v2511 = vld [vmem:[%s20 + $0xc] sm:$0xf]
        %v2512 = vld [vmem:[#allocation3 + $0x1] sm:$0xff]
        %v2513 = vpack.c.bf16 %v2512, %v2512
        %s2514 = scalar_lea.vmem %s20, 16
        %v2515 = vld [vmem:[%s2514] sm:$0xf]
        %v2516 = vld [vmem:[%s2514 + $0x4] sm:$0xf]
        %v2517 = vld [vmem:[%s2514 + $0x8] sm:$0xf]
        %v2518 = vld [vmem:[%s2514 + $0xc] sm:$0xf]
        %v2523 = vunpack.c.l.b16 %v2515
        %v2524 = vunpack.c.l.b16 %v2516
        %v2525 = vunpack.c.l.b16 %v2517
        %v2526 = vunpack.c.l.b16 %v2518
        %v2527 = vpack.c.b16 %v2524, %v2523
        %v2528 = vpack.c.b16 %v2526, %v2525
        %v2530 = vsel %vm840, %v2513, 0
        %v2533 = vsel %vm840, %v2527, 0
        %v2536 = vsel %vm840, %v2528, 0
        %2538 = vmatprep.subr.bf16.mxu0 0
        %2539 = vmatpush1.bf16.xpose.msra.mxu0 0
        %2540 = vmatprep.subr.bf16.mxu0 0
        %2541 = vmatpush1.bf16.xpose.msra.mxu0 0
        %2542 = vmatprep.subr.bf16.mxu0 0
        %2543 = vmatpush1.bf16.xpose.msra.mxu0 0
        %2544 = vmatprep.subr.bf16.mxu0 0
        %2545 = vmatpush1.bf16.xpose.msra.mxu0 0
        %2546 = vmatprep.subr.bf16.mxu0 0
        %2547 = vmatpush1.bf16.xpose.msra.mxu0 0
        %2548 = vmatprep.subr.bf16.mxu0 0
        %2549 = vmatpush1.bf16.xpose.msra.mxu0 0
        %2550 = vmatprep.subr.bf16.mxu0 0
        %2551 = vmatpush1.bf16.xpose.msra.mxu0 %v2536
        %2552 = vmatprep.subr.bf16.mxu0 0
        %2553 = vmatpush1.bf16.xpose.msra.mxu0 %v2533
        %2554 = vmatprep.subr.bf16.mxu0 0
        %2555 = vmatpush2.bf16.xpose.msra.mxu0 0
        %2556 = vmatprep.subr.bf16.mxu0 0
        %2557 = vmatpush2.bf16.xpose.msra.mxu0 0
        %2558 = vmatprep.subr.bf16.mxu0 0
        %2559 = vmatpush2.bf16.xpose.msra.mxu0 0
        %2560 = vmatprep.subr.bf16.mxu0 0
        %2561 = vmatpush2.bf16.xpose.msra.mxu0 0
        %2562 = vmatprep.subr.bf16.mxu0 0
        %2563 = vmatpush2.bf16.xpose.msra.mxu0 0
        %2564 = vmatprep.subr.bf16.mxu0 0
        %2565 = vmatpush2.bf16.xpose.msra.mxu0 0
        %2566 = vmatprep.subr.bf16.mxu0 0
        %2567 = vmatpush2.bf16.xpose.msra.mxu0 0
        %2568 = vmatprep.subr.bf16.mxu0 0
        %2569 = vmatpush2.bf16.xpose.msra.mxu0 0
        %2570 = vmatprep.mubr.bf16.mxu0 0
        %2571 = vmatmul.mubr.bf16.gmra.mxu0 %v2530
        %v2572 = vpop.f32.mrf.mxu0
        %v2573 = vadd.f32 0.0, %v2572
        %v2574 = vpop.f32.mrf.mxu0
        %v2575 = vpop.f32.mrf.mxu0
        %v2576 = vpop.f32.mrf.mxu0
        %2577 = vdwg.mxu0
        %v2582 = vunpack.c.l.b16 %v2508
        %v2583 = vunpack.c.l.b16 %v2509
        %v2584 = vunpack.c.l.b16 %v2510
        %v2585 = vunpack.c.l.b16 %v2511
        %v2586 = vpack.c.b16 %v2583, %v2582
        %v2587 = vpack.c.b16 %v2585, %v2584
        %v2589 = vsel %vm840, %v2507, 0
        %v2592 = vsel %vm840, %v2586, 0
        %v2595 = vsel %vm840, %v2587, 0
        %2597 = vmatprep.subr.bf16.mxu0 0
        %2598 = vmatpush1.bf16.xpose.msra.mxu0 0
        %2599 = vmatprep.subr.bf16.mxu0 0
        %2600 = vmatpush1.bf16.xpose.msra.mxu0 0
        %2601 = vmatprep.subr.bf16.mxu0 0
        %2602 = vmatpush1.bf16.xpose.msra.mxu0 0
        %2603 = vmatprep.subr.bf16.mxu0 0
        %2604 = vmatpush1.bf16.xpose.msra.mxu0 0
        %2605 = vmatprep.subr.bf16.mxu0 0
        %2606 = vmatpush1.bf16.xpose.msra.mxu0 0
        %2607 = vmatprep.subr.bf16.mxu0 0
        %2608 = vmatpush1.bf16.xpose.msra.mxu0 0
        %2609 = vmatprep.subr.bf16.mxu0 0
        %2610 = vmatpush1.bf16.xpose.msra.mxu0 %v2595
        %2611 = vmatprep.subr.bf16.mxu0 0
        %2612 = vmatpush1.bf16.xpose.msra.mxu0 %v2592
        %2613 = vmatprep.subr.bf16.mxu0 0
        %2614 = vmatpush2.bf16.xpose.msra.mxu0 0
        %2615 = vmatprep.subr.bf16.mxu0 0
        %2616 = vmatpush2.bf16.xpose.msra.mxu0 0
        %2617 = vmatprep.subr.bf16.mxu0 0
        %2618 = vmatpush2.bf16.xpose.msra.mxu0 0
        %2619 = vmatprep.subr.bf16.mxu0 0
        %2620 = vmatpush2.bf16.xpose.msra.mxu0 0
        %2621 = vmatprep.subr.bf16.mxu0 0
        %2622 = vmatpush2.bf16.xpose.msra.mxu0 0
        %2623 = vmatprep.subr.bf16.mxu0 0
        %2624 = vmatpush2.bf16.xpose.msra.mxu0 0
        %2625 = vmatprep.subr.bf16.mxu0 0
        %2626 = vmatpush2.bf16.xpose.msra.mxu0 0
        %2627 = vmatprep.subr.bf16.mxu0 0
        %2628 = vmatpush2.bf16.xpose.msra.mxu0 0
        %2629 = vmatprep.mubr.bf16.mxu0 0
        %2630 = vmatmul.mubr.bf16.gmra.mxu0 %v2589
        %v2631 = vpop.f32.mrf.mxu0
        %v2632 = vadd.f32 %v2573, %v2631
        %v2633 = vpop.f32.mrf.mxu0
        %v2634 = vpop.f32.mrf.mxu0
        %v2635 = vpop.f32.mrf.mxu0
        %2636 = vdwg.mxu0
        %v2637 = vld [vmem:[#allocation3 + $0x2] sm:$0xff]
        %v2638 = vpack.c.bf16 %v2637, %v2637
        %s2639 = scalar_lea.vmem %s20, 32
        %v2640 = vld [vmem:[%s2639] sm:$0xf]
        %v2641 = vld [vmem:[%s2639 + $0x4] sm:$0xf]
        %v2642 = vld [vmem:[%s2639 + $0x8] sm:$0xf]
        %v2643 = vld [vmem:[%s2639 + $0xc] sm:$0xf]
        %v2648 = vunpack.c.l.b16 %v2640
        %v2649 = vunpack.c.l.b16 %v2641
        %v2650 = vunpack.c.l.b16 %v2642
        %v2651 = vunpack.c.l.b16 %v2643
        %v2652 = vpack.c.b16 %v2649, %v2648
        %v2653 = vpack.c.b16 %v2651, %v2650
        %v2655 = vsel %vm840, %v2638, 0
        %v2658 = vsel %vm840, %v2652, 0
        %v2661 = vsel %vm840, %v2653, 0
        %2663 = vmatprep.subr.bf16.mxu0 0
        %2664 = vmatpush1.bf16.xpose.msra.mxu0 0
        %2665 = vmatprep.subr.bf16.mxu0 0
        %2666 = vmatpush1.bf16.xpose.msra.mxu0 0
        %2667 = vmatprep.subr.bf16.mxu0 0
        %2668 = vmatpush1.bf16.xpose.msra.mxu0 0
        %2669 = vmatprep.subr.bf16.mxu0 0
        %2670 = vmatpush1.bf16.xpose.msra.mxu0 0
        %2671 = vmatprep.subr.bf16.mxu0 0
        %2672 = vmatpush1.bf16.xpose.msra.mxu0 0
        %2673 = vmatprep.subr.bf16.mxu0 0
        %2674 = vmatpush1.bf16.xpose.msra.mxu0 0
        %2675 = vmatprep.subr.bf16.mxu0 0
        %2676 = vmatpush1.bf16.xpose.msra.mxu0 %v2661
        %2677 = vmatprep.subr.bf16.mxu0 0
        %2678 = vmatpush1.bf16.xpose.msra.mxu0 %v2658
        %2679 = vmatprep.subr.bf16.mxu0 0
        %2680 = vmatpush2.bf16.xpose.msra.mxu0 0
        %2681 = vmatprep.subr.bf16.mxu0 0
        %2682 = vmatpush2.bf16.xpose.msra.mxu0 0
        %2683 = vmatprep.subr.bf16.mxu0 0
        %2684 = vmatpush2.bf16.xpose.msra.mxu0 0
        %2685 = vmatprep.subr.bf16.mxu0 0
        %2686 = vmatpush2.bf16.xpose.msra.mxu0 0
        %2687 = vmatprep.subr.bf16.mxu0 0
        %2688 = vmatpush2.bf16.xpose.msra.mxu0 0
        %2689 = vmatprep.subr.bf16.mxu0 0
        %2690 = vmatpush2.bf16.xpose.msra.mxu0 0
        %2691 = vmatprep.subr.bf16.mxu0 0
        %2692 = vmatpush2.bf16.xpose.msra.mxu0 0
        %2693 = vmatprep.subr.bf16.mxu0 0
        %2694 = vmatpush2.bf16.xpose.msra.mxu0 0
        %2695 = vmatprep.mubr.bf16.mxu0 0
        %2696 = vmatmul.mubr.bf16.gmra.mxu0 %v2655
        %v2697 = vpop.f32.mrf.mxu0
        %v2698 = vadd.f32 0.0, %v2697
        %v2699 = vpop.f32.mrf.mxu0
        %v2700 = vpop.f32.mrf.mxu0
        %v2701 = vpop.f32.mrf.mxu0
        %2702 = vdwg.mxu0
        %v2703 = vadd.f32 %v2632, %v2698
        %v2705 = vlaneseq
        %v2706 = vshrl.u32 %v2705, 7
        %v2707 = vsub.s32 0, %v2706
        %v2708 = vrot.slane %v2504, %v2707
        %v2710 = vadd.f32 %v2703, %v2708
        %v2711 = vmul.f32 %v2710, %v849
        %v2712 = vadd.f32 %v2233, %v2711
        %v2713 = vld [vmem:[%s22] sm:$0x1]
        %v2714 = vld [vmem:[%s23] sm:$0x1]
        %v2715 = vsel %vm836, %v2712, 0.0
        %2716 = vadd.xlane.f32.xlu0 %v2715
        %v2717 = vpop.xlane.xlu0 %2716
        %v2718 = vmul.f32 %v2717, %v2209
        %v2719 = vsub.f32 %v2712, %v2718
        %v2720 = vmul.f32 %v2719, %v2719
        %v2721 = vsel %vm836, %v2720, 0.0
        %2722 = vadd.xlane.f32.xlu0 %v2721
        %v2723 = vpop.xlane.xlu0 %2722
        %v2724 = vmul.f32 %v2723, %v2209
        %v2725 = vadd.f32 %v2724, 1e-05
        %v2726 = vrsqrt.pop %v2725
        %v2727 = vmul.f32 %v2719, %v2726
        %v2729 = vlaneseq
        %v2730 = vshrl.u32 %v2729, 7
        %v2731 = vsub.s32 0, %v2730
        %v2732 = vrot.slane %v2713, %v2731
        %v2734 = vmul.f32 %v2727, %v2732
        %v2736 = vlaneseq
        %v2737 = vshrl.u32 %v2736, 7
        %v2738 = vsub.s32 0, %v2737
        %v2739 = vrot.slane %v2714, %v2738
        %v2741 = vadd.f32 %v2734, %v2739
        %v2742 = vpack.c.bf16 %v2741, %v2741
        %s2743 = scalar_lea.vmem %s14, 8
        %v2744 = vld [vmem:[%s2743] sm:$0xf]
        %v2745 = vld [vmem:[%s2743 + $0x4] sm:$0xf]
        %s2746 = scalar_lea.vmem %s15, 8
        %v2747 = vld [vmem:[%s2746] sm:$0xf]
        %v2748 = vld [vmem:[%s2746 + $0x4] sm:$0xf]
        %s2749 = scalar_lea.vmem %s6, 16
        %v2750 = vld [vmem:[%s2749] sm:$0xf]
        %v2751 = vld [vmem:[%s2749 + $0x4] sm:$0xf]
        %s2752 = scalar_lea.vmem %s7, 2
        %v2753 = vld [vmem:[%s2752] sm:$0x1]
        %v2755 = vlaneseq
        %v2756 = vshrl.u32 %v2755, 7
        %v2757 = vsub.s32 0, %v2756
        %v2758 = vrot.slane %v2753, %v2757
        %v2762 = vunpack.c.l.b16 %v2750
        %v2763 = vunpack.c.l.b16 %v2751
        %v2764 = vpack.c.b16 %v2763, %v2762
        %v2766 = vsel %vm836, %v2742, 0
        %v2769 = vsel %vm836, %v2764, 0
        %2771 = vmatprep.subr.bf16.mxu0 0
        %2772 = vmatpush1.bf16.xpose.msra.mxu0 0
        %2773 = vmatprep.subr.bf16.mxu0 0
        %2774 = vmatpush1.bf16.xpose.msra.mxu0 0
        %2775 = vmatprep.subr.bf16.mxu0 0
        %2776 = vmatpush1.bf16.xpose.msra.mxu0 0
        %2777 = vmatprep.subr.bf16.mxu0 0
        %2778 = vmatpush1.bf16.xpose.msra.mxu0 0
        %2779 = vmatprep.subr.bf16.mxu0 0
        %2780 = vmatpush1.bf16.xpose.msra.mxu0 0
        %2781 = vmatprep.subr.bf16.mxu0 0
        %2782 = vmatpush1.bf16.xpose.msra.mxu0 0
        %2783 = vmatprep.subr.bf16.mxu0 0
        %2784 = vmatpush1.bf16.xpose.msra.mxu0 0
        %2785 = vmatprep.subr.bf16.mxu0 0
        %2786 = vmatpush1.bf16.xpose.msra.mxu0 %v2769
        %2787 = vmatprep.subr.bf16.mxu0 0
        %2788 = vmatpush2.bf16.xpose.msra.mxu0 0
        %2789 = vmatprep.subr.bf16.mxu0 0
        %2790 = vmatpush2.bf16.xpose.msra.mxu0 0
        %2791 = vmatprep.subr.bf16.mxu0 0
        %2792 = vmatpush2.bf16.xpose.msra.mxu0 0
        %2793 = vmatprep.subr.bf16.mxu0 0
        %2794 = vmatpush2.bf16.xpose.msra.mxu0 0
        %2795 = vmatprep.subr.bf16.mxu0 0
        %2796 = vmatpush2.bf16.xpose.msra.mxu0 0
        %2797 = vmatprep.subr.bf16.mxu0 0
        %2798 = vmatpush2.bf16.xpose.msra.mxu0 0
        %2799 = vmatprep.subr.bf16.mxu0 0
        %2800 = vmatpush2.bf16.xpose.msra.mxu0 0
        %2801 = vmatprep.subr.bf16.mxu0 0
        %2802 = vmatpush2.bf16.xpose.msra.mxu0 0
        %2803 = vmatprep.mubr.bf16.mxu0 0
        %2804 = vmatmul.mubr.bf16.gmra.mxu0 %v2766
        %v2805 = vpop.f32.mrf.mxu0
        %v2806 = vadd.f32 %v2758, %v2805
        %v2807 = vpop.f32.mrf.mxu0
        %v2808 = vpop.f32.mrf.mxu0
        %v2809 = vpop.f32.mrf.mxu0
        %2810 = vdwg.mxu0
        %s2811 = scalar_lea.vmem %s8, 16
        %v2812 = vld [vmem:[%s2811] sm:$0xf]
        %v2813 = vld [vmem:[%s2811 + $0x4] sm:$0xf]
        %s2814 = scalar_lea.vmem %s9, 2
        %v2815 = vld [vmem:[%s2814] sm:$0x1]
        %v2817 = vlaneseq
        %v2818 = vshrl.u32 %v2817, 7
        %v2819 = vsub.s32 0, %v2818
        %v2820 = vrot.slane %v2815, %v2819
        %v2824 = vunpack.c.l.b16 %v2812
        %v2825 = vunpack.c.l.b16 %v2813
        %v2826 = vpack.c.b16 %v2825, %v2824
        %v2828 = vsel %vm836, %v2826, 0
        %2830 = vmatprep.subr.bf16.mxu0 0
        %2831 = vmatpush1.bf16.xpose.msra.mxu0 0
        %2832 = vmatprep.subr.bf16.mxu0 0
        %2833 = vmatpush1.bf16.xpose.msra.mxu0 0
        %2834 = vmatprep.subr.bf16.mxu0 0
        %2835 = vmatpush1.bf16.xpose.msra.mxu0 0
        %2836 = vmatprep.subr.bf16.mxu0 0
        %2837 = vmatpush1.bf16.xpose.msra.mxu0 0
        %2838 = vmatprep.subr.bf16.mxu0 0
        %2839 = vmatpush1.bf16.xpose.msra.mxu0 0
        %2840 = vmatprep.subr.bf16.mxu0 0
        %2841 = vmatpush1.bf16.xpose.msra.mxu0 0
        %2842 = vmatprep.subr.bf16.mxu0 0
        %2843 = vmatpush1.bf16.xpose.msra.mxu0 0
        %2844 = vmatprep.subr.bf16.mxu0 0
        %2845 = vmatpush1.bf16.xpose.msra.mxu0 %v2828
        %2846 = vmatprep.subr.bf16.mxu0 0
        %2847 = vmatpush2.bf16.xpose.msra.mxu0 0
        %2848 = vmatprep.subr.bf16.mxu0 0
        %2849 = vmatpush2.bf16.xpose.msra.mxu0 0
        %2850 = vmatprep.subr.bf16.mxu0 0
        %2851 = vmatpush2.bf16.xpose.msra.mxu0 0
        %2852 = vmatprep.subr.bf16.mxu0 0
        %2853 = vmatpush2.bf16.xpose.msra.mxu0 0
        %2854 = vmatprep.subr.bf16.mxu0 0
        %2855 = vmatpush2.bf16.xpose.msra.mxu0 0
        %2856 = vmatprep.subr.bf16.mxu0 0
        %2857 = vmatpush2.bf16.xpose.msra.mxu0 0
        %2858 = vmatprep.subr.bf16.mxu0 0
        %2859 = vmatpush2.bf16.xpose.msra.mxu0 0
        %2860 = vmatprep.subr.bf16.mxu0 0
        %2861 = vmatpush2.bf16.xpose.msra.mxu0 0
        %2862 = vmatprep.mubr.bf16.mxu0 0
        %2863 = vmatmul.mubr.bf16.gmra.mxu0 %v2766
        %v2864 = vpop.f32.mrf.mxu0
        %v2865 = vadd.f32 %v2820, %v2864
        %v2866 = vpop.f32.mrf.mxu0
        %v2867 = vpop.f32.mrf.mxu0
        %v2868 = vpop.f32.mrf.mxu0
        %2869 = vdwg.mxu0
        %s2870 = scalar_lea.vmem %s10, 16
        %v2871 = vld [vmem:[%s2870] sm:$0xf]
        %v2872 = vld [vmem:[%s2870 + $0x4] sm:$0xf]
        %s2873 = scalar_lea.vmem %s11, 2
        %v2874 = vld [vmem:[%s2873] sm:$0x1]
        %v2876 = vlaneseq
        %v2877 = vshrl.u32 %v2876, 7
        %v2878 = vsub.s32 0, %v2877
        %v2879 = vrot.slane %v2874, %v2878
        %v2883 = vunpack.c.l.b16 %v2871
        %v2884 = vunpack.c.l.b16 %v2872
        %v2885 = vpack.c.b16 %v2884, %v2883
        %v2887 = vsel %vm836, %v2885, 0
        %2889 = vmatprep.subr.bf16.mxu0 0
        %2890 = vmatpush1.bf16.xpose.msra.mxu0 0
        %2891 = vmatprep.subr.bf16.mxu0 0
        %2892 = vmatpush1.bf16.xpose.msra.mxu0 0
        %2893 = vmatprep.subr.bf16.mxu0 0
        %2894 = vmatpush1.bf16.xpose.msra.mxu0 0
        %2895 = vmatprep.subr.bf16.mxu0 0
        %2896 = vmatpush1.bf16.xpose.msra.mxu0 0
        %2897 = vmatprep.subr.bf16.mxu0 0
        %2898 = vmatpush1.bf16.xpose.msra.mxu0 0
        %2899 = vmatprep.subr.bf16.mxu0 0
        %2900 = vmatpush1.bf16.xpose.msra.mxu0 0
        %2901 = vmatprep.subr.bf16.mxu0 0
        %2902 = vmatpush1.bf16.xpose.msra.mxu0 0
        %2903 = vmatprep.subr.bf16.mxu0 0
        %2904 = vmatpush1.bf16.xpose.msra.mxu0 %v2887
        %2905 = vmatprep.subr.bf16.mxu0 0
        %2906 = vmatpush2.bf16.xpose.msra.mxu0 0
        %2907 = vmatprep.subr.bf16.mxu0 0
        %2908 = vmatpush2.bf16.xpose.msra.mxu0 0
        %2909 = vmatprep.subr.bf16.mxu0 0
        %2910 = vmatpush2.bf16.xpose.msra.mxu0 0
        %2911 = vmatprep.subr.bf16.mxu0 0
        %2912 = vmatpush2.bf16.xpose.msra.mxu0 0
        %2913 = vmatprep.subr.bf16.mxu0 0
        %2914 = vmatpush2.bf16.xpose.msra.mxu0 0
        %2915 = vmatprep.subr.bf16.mxu0 0
        %2916 = vmatpush2.bf16.xpose.msra.mxu0 0
        %2917 = vmatprep.subr.bf16.mxu0 0
        %2918 = vmatpush2.bf16.xpose.msra.mxu0 0
        %2919 = vmatprep.subr.bf16.mxu0 0
        %2920 = vmatpush2.bf16.xpose.msra.mxu0 0
        %2921 = vmatprep.mubr.bf16.mxu0 0
        %2922 = vmatmul.mubr.bf16.gmra.mxu0 %v2766
        %v2923 = vpop.f32.mrf.mxu0
        %v2924 = vadd.f32 %v2879, %v2923
        %v2925 = vpop.f32.mrf.mxu0
        %v2926 = vpop.f32.mrf.mxu0
        %v2927 = vpop.f32.mrf.mxu0
        %2928 = vdwg.mxu0
        %v2929 = vmul.f32 %v2806, 0.25
        %v2930 = vpack.c.bf16 %v2929, %v2929
        %v2931 = vpack.c.bf16 %v2865, %v2865
        %v2933 = vsel %vm888, %v2930, 0
        %v2936 = vsel %vm888, %v2931, 0
        %2938 = vmatprep.subr.bf16.mxu0 0
        %2939 = vmatpush1.bf16.xpose.msra.mxu0 0
        %2940 = vmatprep.subr.bf16.mxu0 0
        %2941 = vmatpush1.bf16.xpose.msra.mxu0 0
        %2942 = vmatprep.subr.bf16.mxu0 0
        %2943 = vmatpush1.bf16.xpose.msra.mxu0 0
        %2944 = vmatprep.subr.bf16.mxu0 0
        %2945 = vmatpush1.bf16.xpose.msra.mxu0 0
        %2946 = vmatprep.subr.bf16.mxu0 0
        %2947 = vmatpush1.bf16.xpose.msra.mxu0 0
        %2948 = vmatprep.subr.bf16.mxu0 0
        %2949 = vmatpush1.bf16.xpose.msra.mxu0 0
        %2950 = vmatprep.subr.bf16.mxu0 0
        %2951 = vmatpush1.bf16.xpose.msra.mxu0 0
        %2952 = vmatprep.subr.bf16.mxu0 0
        %2953 = vmatpush1.bf16.xpose.msra.mxu0 %v2936
        %2954 = vmatprep.subr.bf16.mxu0 0
        %2955 = vmatpush2.bf16.xpose.msra.mxu0 0
        %2956 = vmatprep.subr.bf16.mxu0 0
        %2957 = vmatpush2.bf16.xpose.msra.mxu0 0
        %2958 = vmatprep.subr.bf16.mxu0 0
        %2959 = vmatpush2.bf16.xpose.msra.mxu0 0
        %2960 = vmatprep.subr.bf16.mxu0 0
        %2961 = vmatpush2.bf16.xpose.msra.mxu0 0
        %2962 = vmatprep.subr.bf16.mxu0 0
        %2963 = vmatpush2.bf16.xpose.msra.mxu0 0
        %2964 = vmatprep.subr.bf16.mxu0 0
        %2965 = vmatpush2.bf16.xpose.msra.mxu0 0
        %2966 = vmatprep.subr.bf16.mxu0 0
        %2967 = vmatpush2.bf16.xpose.msra.mxu0 0
        %2968 = vmatprep.subr.bf16.mxu0 0
        %2969 = vmatpush2.bf16.xpose.msra.mxu0 0
        %2970 = vmatprep.mubr.bf16.mxu0 0
        %2971 = vmatmul.mubr.bf16.gmra.mxu0 %v2933
        %v2972 = vpop.f32.mrf.mxu0
        %v2973 = vadd.f32 %v859, %v2972
        %v2974 = vpop.f32.mrf.mxu0
        %v2975 = vpop.f32.mrf.mxu0
        %v2976 = vpop.f32.mrf.mxu0
        %2977 = vdwg.mxu0
        %v2980 = vunpack.c.l.b16 %v2744
        %v2981 = vunpack.c.l.b16 %v2745
        %v2982 = vpack.c.b16 %v2981, %v2980
        %v2984 = vsel %vm888, %v2982, 0
        %2986 = vmatprep.subr.bf16.mxu0 0
        %2987 = vmatpush1.bf16.xpose.msra.mxu0 0
        %2988 = vmatprep.subr.bf16.mxu0 0
        %2989 = vmatpush1.bf16.xpose.msra.mxu0 0
        %2990 = vmatprep.subr.bf16.mxu0 0
        %2991 = vmatpush1.bf16.xpose.msra.mxu0 0
        %2992 = vmatprep.subr.bf16.mxu0 0
        %2993 = vmatpush1.bf16.xpose.msra.mxu0 0
        %2994 = vmatprep.subr.bf16.mxu0 0
        %2995 = vmatpush1.bf16.xpose.msra.mxu0 0
        %2996 = vmatprep.subr.bf16.mxu0 0
        %2997 = vmatpush1.bf16.xpose.msra.mxu0 0
        %2998 = vmatprep.subr.bf16.mxu0 0
        %2999 = vmatpush1.bf16.xpose.msra.mxu0 0
        %3000 = vmatprep.subr.bf16.mxu0 0
        %3001 = vmatpush1.bf16.xpose.msra.mxu0 %v2984
        %3002 = vmatprep.subr.bf16.mxu0 0
        %3003 = vmatpush2.bf16.xpose.msra.mxu0 0
        %3004 = vmatprep.subr.bf16.mxu0 0
        %3005 = vmatpush2.bf16.xpose.msra.mxu0 0
        %3006 = vmatprep.subr.bf16.mxu0 0
        %3007 = vmatpush2.bf16.xpose.msra.mxu0 0
        %3008 = vmatprep.subr.bf16.mxu0 0
        %3009 = vmatpush2.bf16.xpose.msra.mxu0 0
        %3010 = vmatprep.subr.bf16.mxu0 0
        %3011 = vmatpush2.bf16.xpose.msra.mxu0 0
        %3012 = vmatprep.subr.bf16.mxu0 0
        %3013 = vmatpush2.bf16.xpose.msra.mxu0 0
        %3014 = vmatprep.subr.bf16.mxu0 0
        %3015 = vmatpush2.bf16.xpose.msra.mxu0 0
        %3016 = vmatprep.subr.bf16.mxu0 0
        %3017 = vmatpush2.bf16.xpose.msra.mxu0 0
        %3018 = vmatprep.mubr.bf16.mxu0 0
        %3019 = vmatmul.mubr.bf16.gmra.mxu0 %v2933
        %v3020 = vpop.f32.mrf.mxu0
        %v3021 = vadd.f32 0.0, %v3020
        %v3022 = vpop.f32.mrf.mxu0
        %v3023 = vpop.f32.mrf.mxu0
        %v3024 = vpop.f32.mrf.mxu0
        %3025 = vdwg.mxu0
        %3027 = vset.pattern.permute.xlu0 0
        %3028 = vperm.xlu0 %3027, %v3021
        %v3029 = vpop.permute.xlu0 %3028
        %v3031 = vsel %vm1221, %v3029, 0.0
        %v3032 = vadd.f32 %v2973, %v3031
        %3033 = vset.pattern.permute.xlu0 1
        %3034 = vperm.xlu0 %3033, %v3021
        %v3035 = vpop.permute.xlu0 %3034
        %v3037 = vsel %vm1229, %v3035, 0.0
        %v3038 = vadd.f32 %v3032, %v3037
        %3039 = vset.pattern.permute.xlu0 2
        %3040 = vperm.xlu0 %3039, %v3021
        %v3041 = vpop.permute.xlu0 %3040
        %v3043 = vsel %vm1236, %v3041, 0.0
        %v3044 = vadd.f32 %v3038, %v3043
        %3045 = vset.pattern.permute.xlu0 3
        %3046 = vperm.xlu0 %3045, %v3021
        %v3047 = vpop.permute.xlu0 %3046
        %v3049 = vsel %vm1243, %v3047, 0.0
        %v3050 = vadd.f32 %v3044, %v3049
        %3051 = vset.pattern.permute.xlu0 4
        %3052 = vperm.xlu0 %3051, %v3021
        %v3053 = vpop.permute.xlu0 %3052
        %v3055 = vsel %vm1250, %v3053, 0.0
        %v3056 = vadd.f32 %v3050, %v3055
        %3057 = vset.pattern.permute.xlu0 5
        %3058 = vperm.xlu0 %3057, %v3021
        %v3059 = vpop.permute.xlu0 %3058
        %v3061 = vsel %vm1257, %v3059, 0.0
        %v3062 = vadd.f32 %v3056, %v3061
        %3063 = vset.pattern.permute.xlu0 6
        %3064 = vperm.xlu0 %3063, %v3021
        %v3065 = vpop.permute.xlu0 %3064
        %v3067 = vsel %vm1264, %v3065, 0.0
        %v3068 = vadd.f32 %v3062, %v3067
        %3069 = vset.pattern.permute.xlu0 7
        %3070 = vperm.xlu0 %3069, %v3021
        %v3071 = vpop.permute.xlu0 %3070
        %v3073 = vsel %vm1271, %v3071, 0.0
        %v3074 = vadd.f32 %v3068, %v3073
        %3075 = vset.pattern.permute.xlu0 8
        %3076 = vperm.xlu0 %3075, %v3021
        %v3077 = vpop.permute.xlu0 %3076
        %v3079 = vsel %vm1278, %v3077, 0.0
        %v3080 = vadd.f32 %v3074, %v3079
        %3081 = vset.pattern.permute.xlu0 9
        %3082 = vperm.xlu0 %3081, %v3021
        %v3083 = vpop.permute.xlu0 %3082
        %v3085 = vsel %vm1285, %v3083, 0.0
        %v3086 = vadd.f32 %v3080, %v3085
        %3087 = vset.pattern.permute.xlu0 10
        %3088 = vperm.xlu0 %3087, %v3021
        %v3089 = vpop.permute.xlu0 %3088
        %v3091 = vsel %vm1292, %v3089, 0.0
        %v3092 = vadd.f32 %v3086, %v3091
        %3093 = vset.pattern.permute.xlu0 11
        %3094 = vperm.xlu0 %3093, %v3021
        %v3095 = vpop.permute.xlu0 %3094
        %v3097 = vsel %vm1299, %v3095, 0.0
        %v3098 = vadd.f32 %v3092, %v3097
        %3099 = vset.pattern.permute.xlu0 12
        %3100 = vperm.xlu0 %3099, %v3021
        %v3101 = vpop.permute.xlu0 %3100
        %v3103 = vsel %vm1306, %v3101, 0.0
        %v3104 = vadd.f32 %v3098, %v3103
        %3105 = vset.pattern.permute.xlu0 13
        %3106 = vperm.xlu0 %3105, %v3021
        %v3107 = vpop.permute.xlu0 %3106
        %v3109 = vsel %vm1313, %v3107, 0.0
        %v3110 = vadd.f32 %v3104, %v3109
        %3111 = vset.pattern.permute.xlu0 14
        %3112 = vperm.xlu0 %3111, %v3021
        %v3113 = vpop.permute.xlu0 %3112
        %v3115 = vsel %vm1320, %v3113, 0.0
        %v3116 = vadd.f32 %v3110, %v3115
        %v3117 = vsel %vm1327, %v3116, -inf
        %3118 = vmax.xlane.f32.xlu0 %v3117
        %v3119 = vpop.xlane.xlu0 %3118
        %v3120 = vsub.f32 %v3116, %v3119
        %v3121 = vmul.f32 %v3120, 1.442695
        %v3122 = vpow.pop %v3121
        %v3123 = vsel %vm1327, %v3122, 0.0
        %3124 = vadd.xlane.f32.xlu0 %v3123
        %v3125 = vpop.xlane.xlu0 %3124
        %v3126 = vrcp.pop %v3125
        %v3127 = vmul.f32 %v3122, %v3126
        %v3128 = vpack.c.bf16 %v3127, %v3127
        %v3129 = vpack.c.bf16 %v2924, %v2924
        %v3130 = vsel %vm1221, %v3127, 0.0
        %v3131 = vsel %vm1327, %v3130, 0.0
        %3132 = vadd.xlane.f32.xlu0 %v3131
        %v3133 = vpop.xlane.xlu0 %3132
        %v3134 = vsel %vm1229, %v3127, 0.0
        %v3135 = vsel %vm1327, %v3134, 0.0
        %3136 = vadd.xlane.f32.xlu0 %v3135
        %v3137 = vpop.xlane.xlu0 %3136
        %v3138 = vsel %vm1236, %v3127, 0.0
        %v3139 = vsel %vm1327, %v3138, 0.0
        %3140 = vadd.xlane.f32.xlu0 %v3139
        %v3141 = vpop.xlane.xlu0 %3140
        %v3142 = vsel %vm1243, %v3127, 0.0
        %v3143 = vsel %vm1327, %v3142, 0.0
        %3144 = vadd.xlane.f32.xlu0 %v3143
        %v3145 = vpop.xlane.xlu0 %3144
        %v3146 = vsel %vm1250, %v3127, 0.0
        %v3147 = vsel %vm1327, %v3146, 0.0
        %3148 = vadd.xlane.f32.xlu0 %v3147
        %v3149 = vpop.xlane.xlu0 %3148
        %v3150 = vsel %vm1257, %v3127, 0.0
        %v3151 = vsel %vm1327, %v3150, 0.0
        %3152 = vadd.xlane.f32.xlu0 %v3151
        %v3153 = vpop.xlane.xlu0 %3152
        %v3154 = vsel %vm1264, %v3127, 0.0
        %v3155 = vsel %vm1327, %v3154, 0.0
        %3156 = vadd.xlane.f32.xlu0 %v3155
        %v3157 = vpop.xlane.xlu0 %3156
        %v3158 = vsel %vm1271, %v3127, 0.0
        %v3159 = vsel %vm1327, %v3158, 0.0
        %3160 = vadd.xlane.f32.xlu0 %v3159
        %v3161 = vpop.xlane.xlu0 %3160
        %v3162 = vsel %vm1278, %v3127, 0.0
        %v3163 = vsel %vm1327, %v3162, 0.0
        %3164 = vadd.xlane.f32.xlu0 %v3163
        %v3165 = vpop.xlane.xlu0 %3164
        %v3166 = vsel %vm1285, %v3127, 0.0
        %v3167 = vsel %vm1327, %v3166, 0.0
        %3168 = vadd.xlane.f32.xlu0 %v3167
        %v3169 = vpop.xlane.xlu0 %3168
        %v3170 = vsel %vm1292, %v3127, 0.0
        %v3171 = vsel %vm1327, %v3170, 0.0
        %3172 = vadd.xlane.f32.xlu0 %v3171
        %v3173 = vpop.xlane.xlu0 %3172
        %v3174 = vsel %vm1299, %v3127, 0.0
        %v3175 = vsel %vm1327, %v3174, 0.0
        %3176 = vadd.xlane.f32.xlu0 %v3175
        %v3177 = vpop.xlane.xlu0 %3176
        %v3178 = vsel %vm1306, %v3127, 0.0
        %v3179 = vsel %vm1327, %v3178, 0.0
        %3180 = vadd.xlane.f32.xlu0 %v3179
        %v3181 = vpop.xlane.xlu0 %3180
        %v3182 = vsel %vm1313, %v3127, 0.0
        %v3183 = vsel %vm1327, %v3182, 0.0
        %3184 = vadd.xlane.f32.xlu0 %v3183
        %v3185 = vpop.xlane.xlu0 %3184
        %v3186 = vsel %vm1320, %v3127, 0.0
        %v3187 = vsel %vm1327, %v3186, 0.0
        %3188 = vadd.xlane.f32.xlu0 %v3187
        %v3189 = vpop.xlane.xlu0 %3188
        %v3190 = vsel %vm1401, %v3133, %v3137
        %v3191 = vsel %vm1403, %v3190, %v3141
        %v3192 = vsel %vm1405, %v3191, %v3145
        %v3193 = vsel %vm1407, %v3192, %v3149
        %v3194 = vsel %vm1409, %v3193, %v3153
        %v3195 = vsel %vm1411, %v3194, %v3157
        %v3196 = vsel %vm1413, %v3195, %v3161
        %v3197 = vsel %vm1327, %v3196, %v3165
        %v3198 = vsel %vm1416, %v3197, %v3169
        %v3199 = vsel %vm1418, %v3198, %v3173
        %v3200 = vsel %vm1420, %v3199, %v3177
        %v3201 = vsel %vm1422, %v3200, %v3181
        %v3202 = vsel %vm1424, %v3201, %v3185
        %v3203 = vsel %vm1426, %v3202, %v3189
        %v3204 = vpack.c.bf16 %v3203, %v3203
        %v3207 = vunpack.c.l.b16 %v2747
        %v3208 = vunpack.c.l.b16 %v2748
        %v3209 = vpack.c.b16 %v3208, %v3207
        %v3211 = vsel %vm1434, %v3204, 0
        %v3214 = vand.u32 %v3209, %v1441
        %3216 = vmatprep.subr.bf16.mxu0 0
        %3217 = vmatpush1.bf16.msra.mxu0 0
        %3218 = vmatprep.subr.bf16.mxu0 0
        %3219 = vmatpush1.bf16.msra.mxu0 0
        %3220 = vmatprep.subr.bf16.mxu0 0
        %3221 = vmatpush1.bf16.msra.mxu0 0
        %3222 = vmatprep.subr.bf16.mxu0 0
        %3223 = vmatpush1.bf16.msra.mxu0 0
        %3224 = vmatprep.subr.bf16.mxu0 0
        %3225 = vmatpush1.bf16.msra.mxu0 0
        %3226 = vmatprep.subr.bf16.mxu0 0
        %3227 = vmatpush1.bf16.msra.mxu0 0
        %3228 = vmatprep.subr.bf16.mxu0 0
        %3229 = vmatpush1.bf16.msra.mxu0 0
        %3230 = vmatprep.subr.bf16.mxu0 0
        %3231 = vmatpush1.bf16.msra.mxu0 %v3214
        %3232 = vmatprep.subr.bf16.mxu0 0
        %3233 = vmatpush2.bf16.msra.mxu0 0
        %3234 = vmatprep.subr.bf16.mxu0 0
        %3235 = vmatpush2.bf16.msra.mxu0 0
        %3236 = vmatprep.subr.bf16.mxu0 0
        %3237 = vmatpush2.bf16.msra.mxu0 0
        %3238 = vmatprep.subr.bf16.mxu0 0
        %3239 = vmatpush2.bf16.msra.mxu0 0
        %3240 = vmatprep.subr.bf16.mxu0 0
        %3241 = vmatpush2.bf16.msra.mxu0 0
        %3242 = vmatprep.subr.bf16.mxu0 0
        %3243 = vmatpush2.bf16.msra.mxu0 0
        %3244 = vmatprep.subr.bf16.mxu0 0
        %3245 = vmatpush2.bf16.msra.mxu0 0
        %3246 = vmatprep.subr.bf16.mxu0 0
        %3247 = vmatpush2.bf16.msra.mxu0 0
        %3248 = vmatprep.mubr.bf16.mxu0 0
        %3249 = vmatmul.mubr.bf16.gmra.mxu0 %v3211
        %v3250 = vpop.f32.mrf.mxu0
        %v3251 = vadd.f32 0.0, %v3250
        %v3252 = vpop.f32.mrf.mxu0
        %v3253 = vpop.f32.mrf.mxu0
        %v3254 = vpop.f32.mrf.mxu0
        %3255 = vdwg.mxu0
        %v3257 = vsel %vm1327, %v3128, 0
        %v3260 = vsel %vm1488, %v3129, 0
        %3262 = vmatprep.subr.bf16.mxu0 0
        %3263 = vmatpush1.bf16.msra.mxu0 0
        %3264 = vmatprep.subr.bf16.mxu0 0
        %3265 = vmatpush1.bf16.msra.mxu0 0
        %3266 = vmatprep.subr.bf16.mxu0 0
        %3267 = vmatpush1.bf16.msra.mxu0 0
        %3268 = vmatprep.subr.bf16.mxu0 0
        %3269 = vmatpush1.bf16.msra.mxu0 0
        %3270 = vmatprep.subr.bf16.mxu0 0
        %3271 = vmatpush1.bf16.msra.mxu0 0
        %3272 = vmatprep.subr.bf16.mxu0 0
        %3273 = vmatpush1.bf16.msra.mxu0 0
        %3274 = vmatprep.subr.bf16.mxu0 0
        %3275 = vmatpush1.bf16.msra.mxu0 0
        %3276 = vmatprep.subr.bf16.mxu0 0
        %3277 = vmatpush1.bf16.msra.mxu0 %v3260
        %3278 = vmatprep.subr.bf16.mxu0 0
        %3279 = vmatpush2.bf16.msra.mxu0 0
        %3280 = vmatprep.subr.bf16.mxu0 0
        %3281 = vmatpush2.bf16.msra.mxu0 0
        %3282 = vmatprep.subr.bf16.mxu0 0
        %3283 = vmatpush2.bf16.msra.mxu0 0
        %3284 = vmatprep.subr.bf16.mxu0 0
        %3285 = vmatpush2.bf16.msra.mxu0 0
        %3286 = vmatprep.subr.bf16.mxu0 0
        %3287 = vmatpush2.bf16.msra.mxu0 0
        %3288 = vmatprep.subr.bf16.mxu0 0
        %3289 = vmatpush2.bf16.msra.mxu0 0
        %3290 = vmatprep.subr.bf16.mxu0 0
        %3291 = vmatpush2.bf16.msra.mxu0 0
        %3292 = vmatprep.subr.bf16.mxu0 0
        %3293 = vmatpush2.bf16.msra.mxu0 0
        %3294 = vmatprep.mubr.bf16.mxu0 0
        %3295 = vmatmul.mubr.bf16.gmra.mxu0 %v3257
        %v3296 = vpop.f32.mrf.mxu0
        %v3297 = vadd.f32 %v3251, %v3296
        %v3298 = vpop.f32.mrf.mxu0
        %v3299 = vpop.f32.mrf.mxu0
        %v3300 = vpop.f32.mrf.mxu0
        %3301 = vdwg.mxu0
        %v3302 = vpack.c.bf16 %v3297, %v3297
        %s3303 = scalar_lea.vmem %s12, 32
        %v3304 = vld [vmem:[%s3303] sm:$0xf]
        %v3305 = vld [vmem:[%s3303 + $0x4] sm:$0xf]
        %v3306 = vld [vmem:[%s3303 + $0x8] sm:$0xf]
        %v3307 = vld [vmem:[%s3303 + $0xc] sm:$0xf]
        %s3308 = scalar_lea.vmem %s6, 24
        %v3309 = vld [vmem:[%s3308] sm:$0xf]
        %v3310 = vld [vmem:[%s3308 + $0x4] sm:$0xf]
        %s3311 = scalar_lea.vmem %s7, 3
        %v3312 = vld [vmem:[%s3311] sm:$0x1]
        %v3314 = vlaneseq
        %v3315 = vshrl.u32 %v3314, 7
        %v3316 = vsub.s32 0, %v3315
        %v3317 = vrot.slane %v3312, %v3316
        %v3321 = vunpack.c.l.b16 %v3309
        %v3322 = vunpack.c.l.b16 %v3310
        %v3323 = vpack.c.b16 %v3322, %v3321
        %v3325 = vsel %vm836, %v3323, 0
        %3327 = vmatprep.subr.bf16.mxu0 0
        %3328 = vmatpush1.bf16.xpose.msra.mxu0 0
        %3329 = vmatprep.subr.bf16.mxu0 0
        %3330 = vmatpush1.bf16.xpose.msra.mxu0 0
        %3331 = vmatprep.subr.bf16.mxu0 0
        %3332 = vmatpush1.bf16.xpose.msra.mxu0 0
        %3333 = vmatprep.subr.bf16.mxu0 0
        %3334 = vmatpush1.bf16.xpose.msra.mxu0 0
        %3335 = vmatprep.subr.bf16.mxu0 0
        %3336 = vmatpush1.bf16.xpose.msra.mxu0 0
        %3337 = vmatprep.subr.bf16.mxu0 0
        %3338 = vmatpush1.bf16.xpose.msra.mxu0 0
        %3339 = vmatprep.subr.bf16.mxu0 0
        %3340 = vmatpush1.bf16.xpose.msra.mxu0 0
        %3341 = vmatprep.subr.bf16.mxu0 0
        %3342 = vmatpush1.bf16.xpose.msra.mxu0 %v3325
        %3343 = vmatprep.subr.bf16.mxu0 0
        %3344 = vmatpush2.bf16.xpose.msra.mxu0 0
        %3345 = vmatprep.subr.bf16.mxu0 0
        %3346 = vmatpush2.bf16.xpose.msra.mxu0 0
        %3347 = vmatprep.subr.bf16.mxu0 0
        %3348 = vmatpush2.bf16.xpose.msra.mxu0 0
        %3349 = vmatprep.subr.bf16.mxu0 0
        %3350 = vmatpush2.bf16.xpose.msra.mxu0 0
        %3351 = vmatprep.subr.bf16.mxu0 0
        %3352 = vmatpush2.bf16.xpose.msra.mxu0 0
        %3353 = vmatprep.subr.bf16.mxu0 0
        %3354 = vmatpush2.bf16.xpose.msra.mxu0 0
        %3355 = vmatprep.subr.bf16.mxu0 0
        %3356 = vmatpush2.bf16.xpose.msra.mxu0 0
        %3357 = vmatprep.subr.bf16.mxu0 0
        %3358 = vmatpush2.bf16.xpose.msra.mxu0 0
        %3359 = vmatprep.mubr.bf16.mxu0 0
        %3360 = vmatmul.mubr.bf16.gmra.mxu0 %v2766
        %v3361 = vpop.f32.mrf.mxu0
        %v3362 = vadd.f32 %v3317, %v3361
        %v3363 = vpop.f32.mrf.mxu0
        %v3364 = vpop.f32.mrf.mxu0
        %v3365 = vpop.f32.mrf.mxu0
        %3366 = vdwg.mxu0
        %s3367 = scalar_lea.vmem %s8, 24
        %v3368 = vld [vmem:[%s3367] sm:$0xf]
        %v3369 = vld [vmem:[%s3367 + $0x4] sm:$0xf]
        %s3370 = scalar_lea.vmem %s9, 3
        %v3371 = vld [vmem:[%s3370] sm:$0x1]
        %v3373 = vlaneseq
        %v3374 = vshrl.u32 %v3373, 7
        %v3375 = vsub.s32 0, %v3374
        %v3376 = vrot.slane %v3371, %v3375
        %v3380 = vunpack.c.l.b16 %v3368
        %v3381 = vunpack.c.l.b16 %v3369
        %v3382 = vpack.c.b16 %v3381, %v3380
        %v3384 = vsel %vm836, %v3382, 0
        %3386 = vmatprep.subr.bf16.mxu0 0
        %3387 = vmatpush1.bf16.xpose.msra.mxu0 0
        %3388 = vmatprep.subr.bf16.mxu0 0
        %3389 = vmatpush1.bf16.xpose.msra.mxu0 0
        %3390 = vmatprep.subr.bf16.mxu0 0
        %3391 = vmatpush1.bf16.xpose.msra.mxu0 0
        %3392 = vmatprep.subr.bf16.mxu0 0
        %3393 = vmatpush1.bf16.xpose.msra.mxu0 0
        %3394 = vmatprep.subr.bf16.mxu0 0
        %3395 = vmatpush1.bf16.xpose.msra.mxu0 0
        %3396 = vmatprep.subr.bf16.mxu0 0
        %3397 = vmatpush1.bf16.xpose.msra.mxu0 0
        %3398 = vmatprep.subr.bf16.mxu0 0
        %3399 = vmatpush1.bf16.xpose.msra.mxu0 0
        %3400 = vmatprep.subr.bf16.mxu0 0
        %3401 = vmatpush1.bf16.xpose.msra.mxu0 %v3384
        %3402 = vmatprep.subr.bf16.mxu0 0
        %3403 = vmatpush2.bf16.xpose.msra.mxu0 0
        %3404 = vmatprep.subr.bf16.mxu0 0
        %3405 = vmatpush2.bf16.xpose.msra.mxu0 0
        %3406 = vmatprep.subr.bf16.mxu0 0
        %3407 = vmatpush2.bf16.xpose.msra.mxu0 0
        %3408 = vmatprep.subr.bf16.mxu0 0
        %3409 = vmatpush2.bf16.xpose.msra.mxu0 0
        %3410 = vmatprep.subr.bf16.mxu0 0
        %3411 = vmatpush2.bf16.xpose.msra.mxu0 0
        %3412 = vmatprep.subr.bf16.mxu0 0
        %3413 = vmatpush2.bf16.xpose.msra.mxu0 0
        %3414 = vmatprep.subr.bf16.mxu0 0
        %3415 = vmatpush2.bf16.xpose.msra.mxu0 0
        %3416 = vmatprep.subr.bf16.mxu0 0
        %3417 = vmatpush2.bf16.xpose.msra.mxu0 0
        %3418 = vmatprep.mubr.bf16.mxu0 0
        %3419 = vmatmul.mubr.bf16.gmra.mxu0 %v2766
        %v3420 = vpop.f32.mrf.mxu0
        %v3421 = vadd.f32 %v3376, %v3420
        %v3422 = vpop.f32.mrf.mxu0
        %v3423 = vpop.f32.mrf.mxu0
        %v3424 = vpop.f32.mrf.mxu0
        %3425 = vdwg.mxu0
        %s3426 = scalar_lea.vmem %s10, 24
        %v3427 = vld [vmem:[%s3426] sm:$0xf]
        %v3428 = vld [vmem:[%s3426 + $0x4] sm:$0xf]
        %s3429 = scalar_lea.vmem %s11, 3
        %v3430 = vld [vmem:[%s3429] sm:$0x1]
        %v3432 = vlaneseq
        %v3433 = vshrl.u32 %v3432, 7
        %v3434 = vsub.s32 0, %v3433
        %v3435 = vrot.slane %v3430, %v3434
        %v3439 = vunpack.c.l.b16 %v3427
        %v3440 = vunpack.c.l.b16 %v3428
        %v3441 = vpack.c.b16 %v3440, %v3439
        %v3443 = vsel %vm836, %v3441, 0
        %3445 = vmatprep.subr.bf16.mxu0 0
        %3446 = vmatpush1.bf16.xpose.msra.mxu0 0
        %3447 = vmatprep.subr.bf16.mxu0 0
        %3448 = vmatpush1.bf16.xpose.msra.mxu0 0
        %3449 = vmatprep.subr.bf16.mxu0 0
        %3450 = vmatpush1.bf16.xpose.msra.mxu0 0
        %3451 = vmatprep.subr.bf16.mxu0 0
        %3452 = vmatpush1.bf16.xpose.msra.mxu0 0
        %3453 = vmatprep.subr.bf16.mxu0 0
        %3454 = vmatpush1.bf16.xpose.msra.mxu0 0
        %3455 = vmatprep.subr.bf16.mxu0 0
        %3456 = vmatpush1.bf16.xpose.msra.mxu0 0
        %3457 = vmatprep.subr.bf16.mxu0 0
        %3458 = vmatpush1.bf16.xpose.msra.mxu0 0
        %3459 = vmatprep.subr.bf16.mxu0 0
        %3460 = vmatpush1.bf16.xpose.msra.mxu0 %v3443
        %3461 = vmatprep.subr.bf16.mxu0 0
        %3462 = vmatpush2.bf16.xpose.msra.mxu0 0
        %3463 = vmatprep.subr.bf16.mxu0 0
        %3464 = vmatpush2.bf16.xpose.msra.mxu0 0
        %3465 = vmatprep.subr.bf16.mxu0 0
        %3466 = vmatpush2.bf16.xpose.msra.mxu0 0
        %3467 = vmatprep.subr.bf16.mxu0 0
        %3468 = vmatpush2.bf16.xpose.msra.mxu0 0
        %3469 = vmatprep.subr.bf16.mxu0 0
        %3470 = vmatpush2.bf16.xpose.msra.mxu0 0
        %3471 = vmatprep.subr.bf16.mxu0 0
        %3472 = vmatpush2.bf16.xpose.msra.mxu0 0
        %3473 = vmatprep.subr.bf16.mxu0 0
        %3474 = vmatpush2.bf16.xpose.msra.mxu0 0
        %3475 = vmatprep.subr.bf16.mxu0 0
        %3476 = vmatpush2.bf16.xpose.msra.mxu0 0
        %3477 = vmatprep.mubr.bf16.mxu0 0
        %3478 = vmatmul.mubr.bf16.gmra.mxu0 %v2766
        %v3479 = vpop.f32.mrf.mxu0
        %v3480 = vadd.f32 %v3435, %v3479
        %v3481 = vpop.f32.mrf.mxu0
        %v3482 = vpop.f32.mrf.mxu0
        %v3483 = vpop.f32.mrf.mxu0
        %3484 = vdwg.mxu0
        %v3485 = vmul.f32 %v3362, 0.25
        %v3486 = vpack.c.bf16 %v3485, %v3485
        %v3487 = vpack.c.bf16 %v3421, %v3421
        %v3489 = vsel %vm888, %v3486, 0
        %v3492 = vsel %vm888, %v3487, 0
        %3494 = vmatprep.subr.bf16.mxu0 0
        %3495 = vmatpush1.bf16.xpose.msra.mxu0 0
        %3496 = vmatprep.subr.bf16.mxu0 0
        %3497 = vmatpush1.bf16.xpose.msra.mxu0 0
        %3498 = vmatprep.subr.bf16.mxu0 0
        %3499 = vmatpush1.bf16.xpose.msra.mxu0 0
        %3500 = vmatprep.subr.bf16.mxu0 0
        %3501 = vmatpush1.bf16.xpose.msra.mxu0 0
        %3502 = vmatprep.subr.bf16.mxu0 0
        %3503 = vmatpush1.bf16.xpose.msra.mxu0 0
        %3504 = vmatprep.subr.bf16.mxu0 0
        %3505 = vmatpush1.bf16.xpose.msra.mxu0 0
        %3506 = vmatprep.subr.bf16.mxu0 0
        %3507 = vmatpush1.bf16.xpose.msra.mxu0 0
        %3508 = vmatprep.subr.bf16.mxu0 0
        %3509 = vmatpush1.bf16.xpose.msra.mxu0 %v3492
        %3510 = vmatprep.subr.bf16.mxu0 0
        %3511 = vmatpush2.bf16.xpose.msra.mxu0 0
        %3512 = vmatprep.subr.bf16.mxu0 0
        %3513 = vmatpush2.bf16.xpose.msra.mxu0 0
        %3514 = vmatprep.subr.bf16.mxu0 0
        %3515 = vmatpush2.bf16.xpose.msra.mxu0 0
        %3516 = vmatprep.subr.bf16.mxu0 0
        %3517 = vmatpush2.bf16.xpose.msra.mxu0 0
        %3518 = vmatprep.subr.bf16.mxu0 0
        %3519 = vmatpush2.bf16.xpose.msra.mxu0 0
        %3520 = vmatprep.subr.bf16.mxu0 0
        %3521 = vmatpush2.bf16.xpose.msra.mxu0 0
        %3522 = vmatprep.subr.bf16.mxu0 0
        %3523 = vmatpush2.bf16.xpose.msra.mxu0 0
        %3524 = vmatprep.subr.bf16.mxu0 0
        %3525 = vmatpush2.bf16.xpose.msra.mxu0 0
        %3526 = vmatprep.mubr.bf16.mxu0 0
        %3527 = vmatmul.mubr.bf16.gmra.mxu0 %v3489
        %v3528 = vpop.f32.mrf.mxu0
        %v3529 = vadd.f32 %v859, %v3528
        %v3530 = vpop.f32.mrf.mxu0
        %v3531 = vpop.f32.mrf.mxu0
        %v3532 = vpop.f32.mrf.mxu0
        %3533 = vdwg.mxu0
        %3534 = vmatprep.subr.bf16.mxu0 0
        %3535 = vmatpush1.bf16.xpose.msra.mxu0 0
        %3536 = vmatprep.subr.bf16.mxu0 0
        %3537 = vmatpush1.bf16.xpose.msra.mxu0 0
        %3538 = vmatprep.subr.bf16.mxu0 0
        %3539 = vmatpush1.bf16.xpose.msra.mxu0 0
        %3540 = vmatprep.subr.bf16.mxu0 0
        %3541 = vmatpush1.bf16.xpose.msra.mxu0 0
        %3542 = vmatprep.subr.bf16.mxu0 0
        %3543 = vmatpush1.bf16.xpose.msra.mxu0 0
        %3544 = vmatprep.subr.bf16.mxu0 0
        %3545 = vmatpush1.bf16.xpose.msra.mxu0 0
        %3546 = vmatprep.subr.bf16.mxu0 0
        %3547 = vmatpush1.bf16.xpose.msra.mxu0 0
        %3548 = vmatprep.subr.bf16.mxu0 0
        %3549 = vmatpush1.bf16.xpose.msra.mxu0 %v2984
        %3550 = vmatprep.subr.bf16.mxu0 0
        %3551 = vmatpush2.bf16.xpose.msra.mxu0 0
        %3552 = vmatprep.subr.bf16.mxu0 0
        %3553 = vmatpush2.bf16.xpose.msra.mxu0 0
        %3554 = vmatprep.subr.bf16.mxu0 0
        %3555 = vmatpush2.bf16.xpose.msra.mxu0 0
        %3556 = vmatprep.subr.bf16.mxu0 0
        %3557 = vmatpush2.bf16.xpose.msra.mxu0 0
        %3558 = vmatprep.subr.bf16.mxu0 0
        %3559 = vmatpush2.bf16.xpose.msra.mxu0 0
        %3560 = vmatprep.subr.bf16.mxu0 0
        %3561 = vmatpush2.bf16.xpose.msra.mxu0 0
        %3562 = vmatprep.subr.bf16.mxu0 0
        %3563 = vmatpush2.bf16.xpose.msra.mxu0 0
        %3564 = vmatprep.subr.bf16.mxu0 0
        %3565 = vmatpush2.bf16.xpose.msra.mxu0 0
        %3566 = vmatprep.mubr.bf16.mxu0 0
        %3567 = vmatmul.mubr.bf16.gmra.mxu0 %v3489
        %v3568 = vpop.f32.mrf.mxu0
        %v3569 = vadd.f32 0.0, %v3568
        %v3570 = vpop.f32.mrf.mxu0
        %v3571 = vpop.f32.mrf.mxu0
        %v3572 = vpop.f32.mrf.mxu0
        %3573 = vdwg.mxu0
        %3575 = vset.pattern.permute.xlu0 0
        %3576 = vperm.xlu0 %3575, %v3569
        %v3577 = vpop.permute.xlu0 %3576
        %v3579 = vsel %vm1221, %v3577, 0.0
        %v3580 = vadd.f32 %v3529, %v3579
        %3581 = vset.pattern.permute.xlu0 1
        %3582 = vperm.xlu0 %3581, %v3569
        %v3583 = vpop.permute.xlu0 %3582
        %v3585 = vsel %vm1229, %v3583, 0.0
        %v3586 = vadd.f32 %v3580, %v3585
        %3587 = vset.pattern.permute.xlu0 2
        %3588 = vperm.xlu0 %3587, %v3569
        %v3589 = vpop.permute.xlu0 %3588
        %v3591 = vsel %vm1236, %v3589, 0.0
        %v3592 = vadd.f32 %v3586, %v3591
        %3593 = vset.pattern.permute.xlu0 3
        %3594 = vperm.xlu0 %3593, %v3569
        %v3595 = vpop.permute.xlu0 %3594
        %v3597 = vsel %vm1243, %v3595, 0.0
        %v3598 = vadd.f32 %v3592, %v3597
        %3599 = vset.pattern.permute.xlu0 4
        %3600 = vperm.xlu0 %3599, %v3569
        %v3601 = vpop.permute.xlu0 %3600
        %v3603 = vsel %vm1250, %v3601, 0.0
        %v3604 = vadd.f32 %v3598, %v3603
        %3605 = vset.pattern.permute.xlu0 5
        %3606 = vperm.xlu0 %3605, %v3569
        %v3607 = vpop.permute.xlu0 %3606
        %v3609 = vsel %vm1257, %v3607, 0.0
        %v3610 = vadd.f32 %v3604, %v3609
        %3611 = vset.pattern.permute.xlu0 6
        %3612 = vperm.xlu0 %3611, %v3569
        %v3613 = vpop.permute.xlu0 %3612
        %v3615 = vsel %vm1264, %v3613, 0.0
        %v3616 = vadd.f32 %v3610, %v3615
        %3617 = vset.pattern.permute.xlu0 7
        %3618 = vperm.xlu0 %3617, %v3569
        %v3619 = vpop.permute.xlu0 %3618
        %v3621 = vsel %vm1271, %v3619, 0.0
        %v3622 = vadd.f32 %v3616, %v3621
        %3623 = vset.pattern.permute.xlu0 8
        %3624 = vperm.xlu0 %3623, %v3569
        %v3625 = vpop.permute.xlu0 %3624
        %v3627 = vsel %vm1278, %v3625, 0.0
        %v3628 = vadd.f32 %v3622, %v3627
        %3629 = vset.pattern.permute.xlu0 9
        %3630 = vperm.xlu0 %3629, %v3569
        %v3631 = vpop.permute.xlu0 %3630
        %v3633 = vsel %vm1285, %v3631, 0.0
        %v3634 = vadd.f32 %v3628, %v3633
        %3635 = vset.pattern.permute.xlu0 10
        %3636 = vperm.xlu0 %3635, %v3569
        %v3637 = vpop.permute.xlu0 %3636
        %v3639 = vsel %vm1292, %v3637, 0.0
        %v3640 = vadd.f32 %v3634, %v3639
        %3641 = vset.pattern.permute.xlu0 11
        %3642 = vperm.xlu0 %3641, %v3569
        %v3643 = vpop.permute.xlu0 %3642
        %v3645 = vsel %vm1299, %v3643, 0.0
        %v3646 = vadd.f32 %v3640, %v3645
        %3647 = vset.pattern.permute.xlu0 12
        %3648 = vperm.xlu0 %3647, %v3569
        %v3649 = vpop.permute.xlu0 %3648
        %v3651 = vsel %vm1306, %v3649, 0.0
        %v3652 = vadd.f32 %v3646, %v3651
        %3653 = vset.pattern.permute.xlu0 13
        %3654 = vperm.xlu0 %3653, %v3569
        %v3655 = vpop.permute.xlu0 %3654
        %v3657 = vsel %vm1313, %v3655, 0.0
        %v3658 = vadd.f32 %v3652, %v3657
        %3659 = vset.pattern.permute.xlu0 14
        %3660 = vperm.xlu0 %3659, %v3569
        %v3661 = vpop.permute.xlu0 %3660
        %v3663 = vsel %vm1320, %v3661, 0.0
        %v3664 = vadd.f32 %v3658, %v3663
        %v3665 = vsel %vm1327, %v3664, -inf
        %3666 = vmax.xlane.f32.xlu0 %v3665
        %v3667 = vpop.xlane.xlu0 %3666
        %v3668 = vsub.f32 %v3664, %v3667
        %v3669 = vmul.f32 %v3668, 1.442695
        %v3670 = vpow.pop %v3669
        %v3671 = vsel %vm1327, %v3670, 0.0
        %3672 = vadd.xlane.f32.xlu0 %v3671
        %v3673 = vpop.xlane.xlu0 %3672
        %v3674 = vrcp.pop %v3673
        %v3675 = vmul.f32 %v3670, %v3674
        %v3676 = vpack.c.bf16 %v3675, %v3675
        %v3677 = vpack.c.bf16 %v3480, %v3480
        %v3678 = vsel %vm1221, %v3675, 0.0
        %v3679 = vsel %vm1327, %v3678, 0.0
        %3680 = vadd.xlane.f32.xlu0 %v3679
        %v3681 = vpop.xlane.xlu0 %3680
        %v3682 = vsel %vm1229, %v3675, 0.0
        %v3683 = vsel %vm1327, %v3682, 0.0
        %3684 = vadd.xlane.f32.xlu0 %v3683
        %v3685 = vpop.xlane.xlu0 %3684
        %v3686 = vsel %vm1236, %v3675, 0.0
        %v3687 = vsel %vm1327, %v3686, 0.0
        %3688 = vadd.xlane.f32.xlu0 %v3687
        %v3689 = vpop.xlane.xlu0 %3688
        %v3690 = vsel %vm1243, %v3675, 0.0
        %v3691 = vsel %vm1327, %v3690, 0.0
        %3692 = vadd.xlane.f32.xlu0 %v3691
        %v3693 = vpop.xlane.xlu0 %3692
        %v3694 = vsel %vm1250, %v3675, 0.0
        %v3695 = vsel %vm1327, %v3694, 0.0
        %3696 = vadd.xlane.f32.xlu0 %v3695
        %v3697 = vpop.xlane.xlu0 %3696
        %v3698 = vsel %vm1257, %v3675, 0.0
        %v3699 = vsel %vm1327, %v3698, 0.0
        %3700 = vadd.xlane.f32.xlu0 %v3699
        %v3701 = vpop.xlane.xlu0 %3700
        %v3702 = vsel %vm1264, %v3675, 0.0
        %v3703 = vsel %vm1327, %v3702, 0.0
        %3704 = vadd.xlane.f32.xlu0 %v3703
        %v3705 = vpop.xlane.xlu0 %3704
        %v3706 = vsel %vm1271, %v3675, 0.0
        %v3707 = vsel %vm1327, %v3706, 0.0
        %3708 = vadd.xlane.f32.xlu0 %v3707
        %v3709 = vpop.xlane.xlu0 %3708
        %v3710 = vsel %vm1278, %v3675, 0.0
        %v3711 = vsel %vm1327, %v3710, 0.0
        %3712 = vadd.xlane.f32.xlu0 %v3711
        %v3713 = vpop.xlane.xlu0 %3712
        %v3714 = vsel %vm1285, %v3675, 0.0
        %v3715 = vsel %vm1327, %v3714, 0.0
        %3716 = vadd.xlane.f32.xlu0 %v3715
        %v3717 = vpop.xlane.xlu0 %3716
        %v3718 = vsel %vm1292, %v3675, 0.0
        %v3719 = vsel %vm1327, %v3718, 0.0
        %3720 = vadd.xlane.f32.xlu0 %v3719
        %v3721 = vpop.xlane.xlu0 %3720
        %v3722 = vsel %vm1299, %v3675, 0.0
        %v3723 = vsel %vm1327, %v3722, 0.0
        %3724 = vadd.xlane.f32.xlu0 %v3723
        %v3725 = vpop.xlane.xlu0 %3724
        %v3726 = vsel %vm1306, %v3675, 0.0
        %v3727 = vsel %vm1327, %v3726, 0.0
        %3728 = vadd.xlane.f32.xlu0 %v3727
        %v3729 = vpop.xlane.xlu0 %3728
        %v3730 = vsel %vm1313, %v3675, 0.0
        %v3731 = vsel %vm1327, %v3730, 0.0
        %3732 = vadd.xlane.f32.xlu0 %v3731
        %v3733 = vpop.xlane.xlu0 %3732
        %v3734 = vsel %vm1320, %v3675, 0.0
        %v3735 = vsel %vm1327, %v3734, 0.0
        %3736 = vadd.xlane.f32.xlu0 %v3735
        %v3737 = vpop.xlane.xlu0 %3736
        %v3738 = vsel %vm1401, %v3681, %v3685
        %v3739 = vsel %vm1403, %v3738, %v3689
        %v3740 = vsel %vm1405, %v3739, %v3693
        %v3741 = vsel %vm1407, %v3740, %v3697
        %v3742 = vsel %vm1409, %v3741, %v3701
        %v3743 = vsel %vm1411, %v3742, %v3705
        %v3744 = vsel %vm1413, %v3743, %v3709
        %v3745 = vsel %vm1327, %v3744, %v3713
        %v3746 = vsel %vm1416, %v3745, %v3717
        %v3747 = vsel %vm1418, %v3746, %v3721
        %v3748 = vsel %vm1420, %v3747, %v3725
        %v3749 = vsel %vm1422, %v3748, %v3729
        %v3750 = vsel %vm1424, %v3749, %v3733
        %v3751 = vsel %vm1426, %v3750, %v3737
        %v3752 = vpack.c.bf16 %v3751, %v3751
        %v3754 = vsel %vm1434, %v3752, 0
        %3756 = vmatprep.subr.bf16.mxu0 0
        %3757 = vmatpush1.bf16.msra.mxu0 0
        %3758 = vmatprep.subr.bf16.mxu0 0
        %3759 = vmatpush1.bf16.msra.mxu0 0
        %3760 = vmatprep.subr.bf16.mxu0 0
        %3761 = vmatpush1.bf16.msra.mxu0 0
        %3762 = vmatprep.subr.bf16.mxu0 0
        %3763 = vmatpush1.bf16.msra.mxu0 0
        %3764 = vmatprep.subr.bf16.mxu0 0
        %3765 = vmatpush1.bf16.msra.mxu0 0
        %3766 = vmatprep.subr.bf16.mxu0 0
        %3767 = vmatpush1.bf16.msra.mxu0 0
        %3768 = vmatprep.subr.bf16.mxu0 0
        %3769 = vmatpush1.bf16.msra.mxu0 0
        %3770 = vmatprep.subr.bf16.mxu0 0
        %3771 = vmatpush1.bf16.msra.mxu0 %v3214
        %3772 = vmatprep.subr.bf16.mxu0 0
        %3773 = vmatpush2.bf16.msra.mxu0 0
        %3774 = vmatprep.subr.bf16.mxu0 0
        %3775 = vmatpush2.bf16.msra.mxu0 0
        %3776 = vmatprep.subr.bf16.mxu0 0
        %3777 = vmatpush2.bf16.msra.mxu0 0
        %3778 = vmatprep.subr.bf16.mxu0 0
        %3779 = vmatpush2.bf16.msra.mxu0 0
        %3780 = vmatprep.subr.bf16.mxu0 0
        %3781 = vmatpush2.bf16.msra.mxu0 0
        %3782 = vmatprep.subr.bf16.mxu0 0
        %3783 = vmatpush2.bf16.msra.mxu0 0
        %3784 = vmatprep.subr.bf16.mxu0 0
        %3785 = vmatpush2.bf16.msra.mxu0 0
        %3786 = vmatprep.subr.bf16.mxu0 0
        %3787 = vmatpush2.bf16.msra.mxu0 0
        %3788 = vmatprep.mubr.bf16.mxu0 0
        %3789 = vmatmul.mubr.bf16.gmra.mxu0 %v3754
        %v3790 = vpop.f32.mrf.mxu0
        %v3791 = vadd.f32 0.0, %v3790
        %v3792 = vpop.f32.mrf.mxu0
        %v3793 = vpop.f32.mrf.mxu0
        %v3794 = vpop.f32.mrf.mxu0
        %3795 = vdwg.mxu0
        %v3797 = vsel %vm1327, %v3676, 0
        %v3800 = vsel %vm1488, %v3677, 0
        %3802 = vmatprep.subr.bf16.mxu0 0
        %3803 = vmatpush1.bf16.msra.mxu0 0
        %3804 = vmatprep.subr.bf16.mxu0 0
        %3805 = vmatpush1.bf16.msra.mxu0 0
        %3806 = vmatprep.subr.bf16.mxu0 0
        %3807 = vmatpush1.bf16.msra.mxu0 0
        %3808 = vmatprep.subr.bf16.mxu0 0
        %3809 = vmatpush1.bf16.msra.mxu0 0
        %3810 = vmatprep.subr.bf16.mxu0 0
        %3811 = vmatpush1.bf16.msra.mxu0 0
        %3812 = vmatprep.subr.bf16.mxu0 0
        %3813 = vmatpush1.bf16.msra.mxu0 0
        %3814 = vmatprep.subr.bf16.mxu0 0
        %3815 = vmatpush1.bf16.msra.mxu0 0
        %3816 = vmatprep.subr.bf16.mxu0 0
        %3817 = vmatpush1.bf16.msra.mxu0 %v3800
        %3818 = vmatprep.subr.bf16.mxu0 0
        %3819 = vmatpush2.bf16.msra.mxu0 0
        %3820 = vmatprep.subr.bf16.mxu0 0
        %3821 = vmatpush2.bf16.msra.mxu0 0
        %3822 = vmatprep.subr.bf16.mxu0 0
        %3823 = vmatpush2.bf16.msra.mxu0 0
        %3824 = vmatprep.subr.bf16.mxu0 0
        %3825 = vmatpush2.bf16.msra.mxu0 0
        %3826 = vmatprep.subr.bf16.mxu0 0
        %3827 = vmatpush2.bf16.msra.mxu0 0
        %3828 = vmatprep.subr.bf16.mxu0 0
        %3829 = vmatpush2.bf16.msra.mxu0 0
        %3830 = vmatprep.subr.bf16.mxu0 0
        %3831 = vmatpush2.bf16.msra.mxu0 0
        %3832 = vmatprep.subr.bf16.mxu0 0
        %3833 = vmatpush2.bf16.msra.mxu0 0
        %3834 = vmatprep.mubr.bf16.mxu0 0
        %3835 = vmatmul.mubr.bf16.gmra.mxu0 %v3797
        %v3836 = vpop.f32.mrf.mxu0
        %v3837 = vadd.f32 %v3791, %v3836
        %v3838 = vpop.f32.mrf.mxu0
        %v3839 = vpop.f32.mrf.mxu0
        %v3840 = vpop.f32.mrf.mxu0
        %3841 = vdwg.mxu0
        %v3842 = vpack.c.bf16 %v3837, %v3837
        %s3843 = scalar_lea.vmem %s12, 48
        %v3844 = vld [vmem:[%s3843] sm:$0xf]
        %v3845 = vld [vmem:[%s3843 + $0x4] sm:$0xf]
        %v3846 = vld [vmem:[%s3843 + $0x8] sm:$0xf]
        %v3847 = vld [vmem:[%s3843 + $0xc] sm:$0xf]
        %v3852 = vunpack.c.l.b16 %v3844
        %v3853 = vunpack.c.l.b16 %v3845
        %v3854 = vunpack.c.l.b16 %v3846
        %v3855 = vunpack.c.l.b16 %v3847
        %v3856 = vpack.c.b16 %v3853, %v3852
        %v3857 = vpack.c.b16 %v3855, %v3854
        %v3859 = vsel %vm888, %v3842, 0
        %v3862 = vsel %vm888, %v3856, 0
        %v3865 = vsel %vm888, %v3857, 0
        %3867 = vmatprep.subr.bf16.mxu0 0
        %3868 = vmatpush1.bf16.xpose.msra.mxu0 0
        %3869 = vmatprep.subr.bf16.mxu0 0
        %3870 = vmatpush1.bf16.xpose.msra.mxu0 0
        %3871 = vmatprep.subr.bf16.mxu0 0
        %3872 = vmatpush1.bf16.xpose.msra.mxu0 0
        %3873 = vmatprep.subr.bf16.mxu0 0
        %3874 = vmatpush1.bf16.xpose.msra.mxu0 0
        %3875 = vmatprep.subr.bf16.mxu0 0
        %3876 = vmatpush1.bf16.xpose.msra.mxu0 0
        %3877 = vmatprep.subr.bf16.mxu0 0
        %3878 = vmatpush1.bf16.xpose.msra.mxu0 0
        %3879 = vmatprep.subr.bf16.mxu0 0
        %3880 = vmatpush1.bf16.xpose.msra.mxu0 %v3865
        %3881 = vmatprep.subr.bf16.mxu0 0
        %3882 = vmatpush1.bf16.xpose.msra.mxu0 %v3862
        %3883 = vmatprep.subr.bf16.mxu0 0
        %3884 = vmatpush2.bf16.xpose.msra.mxu0 0
        %3885 = vmatprep.subr.bf16.mxu0 0
        %3886 = vmatpush2.bf16.xpose.msra.mxu0 0
        %3887 = vmatprep.subr.bf16.mxu0 0
        %3888 = vmatpush2.bf16.xpose.msra.mxu0 0
        %3889 = vmatprep.subr.bf16.mxu0 0
        %3890 = vmatpush2.bf16.xpose.msra.mxu0 0
        %3891 = vmatprep.subr.bf16.mxu0 0
        %3892 = vmatpush2.bf16.xpose.msra.mxu0 0
        %3893 = vmatprep.subr.bf16.mxu0 0
        %3894 = vmatpush2.bf16.xpose.msra.mxu0 0
        %3895 = vmatprep.subr.bf16.mxu0 0
        %3896 = vmatpush2.bf16.xpose.msra.mxu0 0
        %3897 = vmatprep.subr.bf16.mxu0 0
        %3898 = vmatpush2.bf16.xpose.msra.mxu0 0
        %3899 = vmatprep.mubr.bf16.mxu0 0
        %3900 = vmatmul.mubr.bf16.gmra.mxu0 %v3859
        %v3901 = vpop.f32.mrf.mxu0
        %v3902 = vadd.f32 0.0, %v3901
        %v3903 = vpop.f32.mrf.mxu0
        %v3904 = vpop.f32.mrf.mxu0
        %v3905 = vpop.f32.mrf.mxu0
        %3906 = vdwg.mxu0
        %v3911 = vunpack.c.l.b16 %v3304
        %v3912 = vunpack.c.l.b16 %v3305
        %v3913 = vunpack.c.l.b16 %v3306
        %v3914 = vunpack.c.l.b16 %v3307
        %v3915 = vpack.c.b16 %v3912, %v3911
        %v3916 = vpack.c.b16 %v3914, %v3913
        %v3918 = vsel %vm888, %v3302, 0
        %v3921 = vsel %vm888, %v3915, 0
        %v3924 = vsel %vm888, %v3916, 0
        %3926 = vmatprep.subr.bf16.mxu0 0
        %3927 = vmatpush1.bf16.xpose.msra.mxu0 0
        %3928 = vmatprep.subr.bf16.mxu0 0
        %3929 = vmatpush1.bf16.xpose.msra.mxu0 0
        %3930 = vmatprep.subr.bf16.mxu0 0
        %3931 = vmatpush1.bf16.xpose.msra.mxu0 0
        %3932 = vmatprep.subr.bf16.mxu0 0
        %3933 = vmatpush1.bf16.xpose.msra.mxu0 0
        %3934 = vmatprep.subr.bf16.mxu0 0
        %3935 = vmatpush1.bf16.xpose.msra.mxu0 0
        %3936 = vmatprep.subr.bf16.mxu0 0
        %3937 = vmatpush1.bf16.xpose.msra.mxu0 0
        %3938 = vmatprep.subr.bf16.mxu0 0
        %3939 = vmatpush1.bf16.xpose.msra.mxu0 %v3924
        %3940 = vmatprep.subr.bf16.mxu0 0
        %3941 = vmatpush1.bf16.xpose.msra.mxu0 %v3921
        %3942 = vmatprep.subr.bf16.mxu0 0
        %3943 = vmatpush2.bf16.xpose.msra.mxu0 0
        %3944 = vmatprep.subr.bf16.mxu0 0
        %3945 = vmatpush2.bf16.xpose.msra.mxu0 0
        %3946 = vmatprep.subr.bf16.mxu0 0
        %3947 = vmatpush2.bf16.xpose.msra.mxu0 0
        %3948 = vmatprep.subr.bf16.mxu0 0
        %3949 = vmatpush2.bf16.xpose.msra.mxu0 0
        %3950 = vmatprep.subr.bf16.mxu0 0
        %3951 = vmatpush2.bf16.xpose.msra.mxu0 0
        %3952 = vmatprep.subr.bf16.mxu0 0
        %3953 = vmatpush2.bf16.xpose.msra.mxu0 0
        %3954 = vmatprep.subr.bf16.mxu0 0
        %3955 = vmatpush2.bf16.xpose.msra.mxu0 0
        %3956 = vmatprep.subr.bf16.mxu0 0
        %3957 = vmatpush2.bf16.xpose.msra.mxu0 0
        %3958 = vmatprep.mubr.bf16.mxu0 0
        %3959 = vmatmul.mubr.bf16.gmra.mxu0 %v3918
        %v3960 = vpop.f32.mrf.mxu0
        %v3961 = vadd.f32 %v3902, %v3960
        %v3962 = vpop.f32.mrf.mxu0
        %v3963 = vpop.f32.mrf.mxu0
        %v3964 = vpop.f32.mrf.mxu0
        %3965 = vdwg.mxu0
        %s3966 = scalar_lea.vmem %s13, 1
        %v3967 = vld [vmem:[%s3966] sm:$0x1]
        %v3969 = vlaneseq
        %v3970 = vshrl.u32 %v3969, 7
        %v3971 = vsub.s32 0, %v3970
        %v3972 = vrot.slane %v3967, %v3971
        %v3974 = vadd.f32 %v3961, %v3972
        %v3975 = vadd.f32 %v2741, %v3974
        %s3976 = scalar_lea.vmem %s16, 1
        %v3977 = vld [vmem:[%s3976] sm:$0x1]
        %s3978 = scalar_lea.vmem %s17, 1
        %v3979 = vld [vmem:[%s3978] sm:$0x1]
        %v3980 = vsel %vm836, %v3975, 0.0
        %3981 = vadd.xlane.f32.xlu0 %v3980
        %v3982 = vpop.xlane.xlu0 %3981
        %v3983 = vmul.f32 %v3982, %v2209
        %v3984 = vsub.f32 %v3975, %v3983
        %v3985 = vmul.f32 %v3984, %v3984
        %v3986 = vsel %vm836, %v3985, 0.0
        %3987 = vadd.xlane.f32.xlu0 %v3986
        %v3988 = vpop.xlane.xlu0 %3987
        %v3989 = vmul.f32 %v3988, %v2209
        %v3990 = vadd.f32 %v3989, 1e-05
        %v3991 = vrsqrt.pop %v3990
        %v3992 = vmul.f32 %v3984, %v3991
        %v3994 = vlaneseq
        %v3995 = vshrl.u32 %v3994, 7
        %v3996 = vsub.s32 0, %v3995
        %v3997 = vrot.slane %v3977, %v3996
        %v3999 = vmul.f32 %v3992, %v3997
        %v4001 = vlaneseq
        %v4002 = vshrl.u32 %v4001, 7
        %v4003 = vsub.s32 0, %v4002
        %v4004 = vrot.slane %v3979, %v4003
        %v4006 = vadd.f32 %v3999, %v4004
        %v4007 = vmul.f32 %v4006, %v849
        %s4008 = scalar_lea.vmem %s19, 1
        %v4009 = vld [vmem:[%s4008] sm:$0x1]
        %4010 = vst.msk [vmem:[#allocation2 + $0x1] sm:$0xff] %vm836, %v4007
        %v4011 = vld [vmem:[#allocation2] sm:$0xff]
        %v4012 = vpack.c.bf16 %v4011, %v4011
        %s4013 = scalar_lea.vmem %s18, 96
        %v4014 = vld [vmem:[%s4013] sm:$0xf]
        %v4015 = vld [vmem:[%s4013 + $0x4] sm:$0xf]
        %v4016 = vld [vmem:[%s4013 + $0x8] sm:$0xf]
        %v4017 = vld [vmem:[%s4013 + $0xc] sm:$0xf]
        %v4018 = vld [vmem:[%s4013 + $0x10] sm:$0xf]
        %v4019 = vld [vmem:[%s4013 + $0x14] sm:$0xf]
        %v4020 = vld [vmem:[%s4013 + $0x18] sm:$0xf]
        %v4021 = vld [vmem:[%s4013 + $0x1c] sm:$0xf]
        %v4022 = vld [vmem:[#allocation2 + $0x1] sm:$0xff]
        %v4023 = vpack.c.bf16 %v4022, %v4022
        %s4024 = scalar_lea.vmem %s18, 128
        %v4025 = vld [vmem:[%s4024] sm:$0xf]
        %v4026 = vld [vmem:[%s4024 + $0x4] sm:$0xf]
        %v4027 = vld [vmem:[%s4024 + $0x8] sm:$0xf]
        %v4028 = vld [vmem:[%s4024 + $0xc] sm:$0xf]
        %v4029 = vld [vmem:[%s4024 + $0x10] sm:$0xf]
        %v4030 = vld [vmem:[%s4024 + $0x14] sm:$0xf]
        %v4031 = vld [vmem:[%s4024 + $0x18] sm:$0xf]
        %v4032 = vld [vmem:[%s4024 + $0x1c] sm:$0xf]
        %v4041 = vunpack.c.l.b16 %v4025
        %v4042 = vunpack.c.l.b16 %v4026
        %v4043 = vunpack.c.l.b16 %v4027
        %v4044 = vunpack.c.l.b16 %v4028
        %v4045 = vunpack.c.l.b16 %v4029
        %v4046 = vunpack.c.l.b16 %v4030
        %v4047 = vunpack.c.l.b16 %v4031
        %v4048 = vunpack.c.l.b16 %v4032
        %v4049 = vpack.c.b16 %v4042, %v4041
        %v4050 = vpack.c.b16 %v4044, %v4043
        %v4051 = vpack.c.b16 %v4046, %v4045
        %v4052 = vpack.c.b16 %v4048, %v4047
        %v4054 = vsel %vm836, %v4023, 0
        %v4057 = vsel %vm836, %v4049, 0
        %v4060 = vsel %vm836, %v4050, 0
        %v4063 = vsel %vm836, %v4051, 0
        %v4066 = vsel %vm836, %v4052, 0
        %4068 = vmatprep.subr.bf16.mxu0 0
        %4069 = vmatpush1.bf16.xpose.msra.mxu0 0
        %4070 = vmatprep.subr.bf16.mxu0 0
        %4071 = vmatpush1.bf16.xpose.msra.mxu0 0
        %4072 = vmatprep.subr.bf16.mxu0 0
        %4073 = vmatpush1.bf16.xpose.msra.mxu0 0
        %4074 = vmatprep.subr.bf16.mxu0 0
        %4075 = vmatpush1.bf16.xpose.msra.mxu0 0
        %4076 = vmatprep.subr.bf16.mxu0 0
        %4077 = vmatpush1.bf16.xpose.msra.mxu0 %v4066
        %4078 = vmatprep.subr.bf16.mxu0 0
        %4079 = vmatpush1.bf16.xpose.msra.mxu0 %v4063
        %4080 = vmatprep.subr.bf16.mxu0 0
        %4081 = vmatpush1.bf16.xpose.msra.mxu0 %v4060
        %4082 = vmatprep.subr.bf16.mxu0 0
        %4083 = vmatpush1.bf16.xpose.msra.mxu0 %v4057
        %4084 = vmatprep.subr.bf16.mxu0 0
        %4085 = vmatpush2.bf16.xpose.msra.mxu0 0
        %4086 = vmatprep.subr.bf16.mxu0 0
        %4087 = vmatpush2.bf16.xpose.msra.mxu0 0
        %4088 = vmatprep.subr.bf16.mxu0 0
        %4089 = vmatpush2.bf16.xpose.msra.mxu0 0
        %4090 = vmatprep.subr.bf16.mxu0 0
        %4091 = vmatpush2.bf16.xpose.msra.mxu0 0
        %4092 = vmatprep.subr.bf16.mxu0 0
        %4093 = vmatpush2.bf16.xpose.msra.mxu0 0
        %4094 = vmatprep.subr.bf16.mxu0 0
        %4095 = vmatpush2.bf16.xpose.msra.mxu0 0
        %4096 = vmatprep.subr.bf16.mxu0 0
        %4097 = vmatpush2.bf16.xpose.msra.mxu0 0
        %4098 = vmatprep.subr.bf16.mxu0 0
        %4099 = vmatpush2.bf16.xpose.msra.mxu0 0
        %4100 = vmatprep.mubr.bf16.mxu0 0
        %4101 = vmatmul.mubr.bf16.gmra.mxu0 %v4054
        %v4102 = vpop.f32.mrf.mxu0
        %v4103 = vadd.f32 0.0, %v4102
        %v4104 = vpop.f32.mrf.mxu0
        %v4105 = vpop.f32.mrf.mxu0
        %v4106 = vpop.f32.mrf.mxu0
        %4107 = vdwg.mxu0
        %v4116 = vunpack.c.l.b16 %v4014
        %v4117 = vunpack.c.l.b16 %v4015
        %v4118 = vunpack.c.l.b16 %v4016
        %v4119 = vunpack.c.l.b16 %v4017
        %v4120 = vunpack.c.l.b16 %v4018
        %v4121 = vunpack.c.l.b16 %v4019
        %v4122 = vunpack.c.l.b16 %v4020
        %v4123 = vunpack.c.l.b16 %v4021
        %v4124 = vpack.c.b16 %v4117, %v4116
        %v4125 = vpack.c.b16 %v4119, %v4118
        %v4126 = vpack.c.b16 %v4121, %v4120
        %v4127 = vpack.c.b16 %v4123, %v4122
        %v4129 = vsel %vm836, %v4012, 0
        %v4132 = vsel %vm836, %v4124, 0
        %v4135 = vsel %vm836, %v4125, 0
        %v4138 = vsel %vm836, %v4126, 0
        %v4141 = vsel %vm836, %v4127, 0
        %4143 = vmatprep.subr.bf16.mxu0 0
        %4144 = vmatpush1.bf16.xpose.msra.mxu0 0
        %4145 = vmatprep.subr.bf16.mxu0 0
        %4146 = vmatpush1.bf16.xpose.msra.mxu0 0
        %4147 = vmatprep.subr.bf16.mxu0 0
        %4148 = vmatpush1.bf16.xpose.msra.mxu0 0
        %4149 = vmatprep.subr.bf16.mxu0 0
        %4150 = vmatpush1.bf16.xpose.msra.mxu0 0
        %4151 = vmatprep.subr.bf16.mxu0 0
        %4152 = vmatpush1.bf16.xpose.msra.mxu0 %v4141
        %4153 = vmatprep.subr.bf16.mxu0 0
        %4154 = vmatpush1.bf16.xpose.msra.mxu0 %v4138
        %4155 = vmatprep.subr.bf16.mxu0 0
        %4156 = vmatpush1.bf16.xpose.msra.mxu0 %v4135
        %4157 = vmatprep.subr.bf16.mxu0 0
        %4158 = vmatpush1.bf16.xpose.msra.mxu0 %v4132
        %4159 = vmatprep.subr.bf16.mxu0 0
        %4160 = vmatpush2.bf16.xpose.msra.mxu0 0
        %4161 = vmatprep.subr.bf16.mxu0 0
        %4162 = vmatpush2.bf16.xpose.msra.mxu0 0
        %4163 = vmatprep.subr.bf16.mxu0 0
        %4164 = vmatpush2.bf16.xpose.msra.mxu0 0
        %4165 = vmatprep.subr.bf16.mxu0 0
        %4166 = vmatpush2.bf16.xpose.msra.mxu0 0
        %4167 = vmatprep.subr.bf16.mxu0 0
        %4168 = vmatpush2.bf16.xpose.msra.mxu0 0
        %4169 = vmatprep.subr.bf16.mxu0 0
        %4170 = vmatpush2.bf16.xpose.msra.mxu0 0
        %4171 = vmatprep.subr.bf16.mxu0 0
        %4172 = vmatpush2.bf16.xpose.msra.mxu0 0
        %4173 = vmatprep.subr.bf16.mxu0 0
        %4174 = vmatpush2.bf16.xpose.msra.mxu0 0
        %4175 = vmatprep.mubr.bf16.mxu0 0
        %4176 = vmatmul.mubr.bf16.gmra.mxu0 %v4129
        %v4177 = vpop.f32.mrf.mxu0
        %v4178 = vadd.f32 %v4103, %v4177
        %v4179 = vpop.f32.mrf.mxu0
        %v4180 = vpop.f32.mrf.mxu0
        %v4181 = vpop.f32.mrf.mxu0
        %4182 = vdwg.mxu0
        %v4183 = vld [vmem:[#allocation2 + $0x2] sm:$0xff]
        %v4184 = vpack.c.bf16 %v4183, %v4183
        %s4185 = scalar_lea.vmem %s18, 160
        %v4186 = vld [vmem:[%s4185] sm:$0xf]
        %v4187 = vld [vmem:[%s4185 + $0x4] sm:$0xf]
        %v4188 = vld [vmem:[%s4185 + $0x8] sm:$0xf]
        %v4189 = vld [vmem:[%s4185 + $0xc] sm:$0xf]
        %v4190 = vld [vmem:[%s4185 + $0x10] sm:$0xf]
        %v4191 = vld [vmem:[%s4185 + $0x14] sm:$0xf]
        %v4192 = vld [vmem:[%s4185 + $0x18] sm:$0xf]
        %v4193 = vld [vmem:[%s4185 + $0x1c] sm:$0xf]
        %v4202 = vunpack.c.l.b16 %v4186
        %v4203 = vunpack.c.l.b16 %v4187
        %v4204 = vunpack.c.l.b16 %v4188
        %v4205 = vunpack.c.l.b16 %v4189
        %v4206 = vunpack.c.l.b16 %v4190
        %v4207 = vunpack.c.l.b16 %v4191
        %v4208 = vunpack.c.l.b16 %v4192
        %v4209 = vunpack.c.l.b16 %v4193
        %v4210 = vpack.c.b16 %v4203, %v4202
        %v4211 = vpack.c.b16 %v4205, %v4204
        %v4212 = vpack.c.b16 %v4207, %v4206
        %v4213 = vpack.c.b16 %v4209, %v4208
        %v4215 = vsel %vm836, %v4184, 0
        %v4218 = vsel %vm836, %v4210, 0
        %v4221 = vsel %vm836, %v4211, 0
        %v4224 = vsel %vm836, %v4212, 0
        %v4227 = vsel %vm836, %v4213, 0
        %4229 = vmatprep.subr.bf16.mxu0 0
        %4230 = vmatpush1.bf16.xpose.msra.mxu0 0
        %4231 = vmatprep.subr.bf16.mxu0 0
        %4232 = vmatpush1.bf16.xpose.msra.mxu0 0
        %4233 = vmatprep.subr.bf16.mxu0 0
        %4234 = vmatpush1.bf16.xpose.msra.mxu0 0
        %4235 = vmatprep.subr.bf16.mxu0 0
        %4236 = vmatpush1.bf16.xpose.msra.mxu0 0
        %4237 = vmatprep.subr.bf16.mxu0 0
        %4238 = vmatpush1.bf16.xpose.msra.mxu0 %v4227
        %4239 = vmatprep.subr.bf16.mxu0 0
        %4240 = vmatpush1.bf16.xpose.msra.mxu0 %v4224
        %4241 = vmatprep.subr.bf16.mxu0 0
        %4242 = vmatpush1.bf16.xpose.msra.mxu0 %v4221
        %4243 = vmatprep.subr.bf16.mxu0 0
        %4244 = vmatpush1.bf16.xpose.msra.mxu0 %v4218
        %4245 = vmatprep.subr.bf16.mxu0 0
        %4246 = vmatpush2.bf16.xpose.msra.mxu0 0
        %4247 = vmatprep.subr.bf16.mxu0 0
        %4248 = vmatpush2.bf16.xpose.msra.mxu0 0
        %4249 = vmatprep.subr.bf16.mxu0 0
        %4250 = vmatpush2.bf16.xpose.msra.mxu0 0
        %4251 = vmatprep.subr.bf16.mxu0 0
        %4252 = vmatpush2.bf16.xpose.msra.mxu0 0
        %4253 = vmatprep.subr.bf16.mxu0 0
        %4254 = vmatpush2.bf16.xpose.msra.mxu0 0
        %4255 = vmatprep.subr.bf16.mxu0 0
        %4256 = vmatpush2.bf16.xpose.msra.mxu0 0
        %4257 = vmatprep.subr.bf16.mxu0 0
        %4258 = vmatpush2.bf16.xpose.msra.mxu0 0
        %4259 = vmatprep.subr.bf16.mxu0 0
        %4260 = vmatpush2.bf16.xpose.msra.mxu0 0
        %4261 = vmatprep.mubr.bf16.mxu0 0
        %4262 = vmatmul.mubr.bf16.gmra.mxu0 %v4215
        %v4263 = vpop.f32.mrf.mxu0
        %v4264 = vadd.f32 0.0, %v4263
        %v4265 = vpop.f32.mrf.mxu0
        %v4266 = vpop.f32.mrf.mxu0
        %v4267 = vpop.f32.mrf.mxu0
        %4268 = vdwg.mxu0
        %v4269 = vadd.f32 %v4178, %v4264
        %v4271 = vlaneseq
        %v4272 = vshrl.u32 %v4271, 7
        %v4273 = vsub.s32 0, %v4272
        %v4274 = vrot.slane %v4009, %v4273
        %v4276 = vadd.f32 %v4269, %v4274
        %v4277 = vmax.f32 %v4276, 0.0
        %v4278 = vmul.f32 %v4277, %v849
        %s4279 = scalar_lea.vmem %s21, 1
        %v4280 = vld [vmem:[%s4279] sm:$0x1]
        %4281 = vst.msk [vmem:[#allocation3 + $0x1] sm:$0xff] %vm840, %v4278
        %v4282 = vld [vmem:[#allocation3] sm:$0xff]
        %v4283 = vpack.c.bf16 %v4282, %v4282
        %s4284 = scalar_lea.vmem %s20, 48
        %v4285 = vld [vmem:[%s4284] sm:$0xf]
        %v4286 = vld [vmem:[%s4284 + $0x4] sm:$0xf]
        %v4287 = vld [vmem:[%s4284 + $0x8] sm:$0xf]
        %v4288 = vld [vmem:[%s4284 + $0xc] sm:$0xf]
        %v4289 = vld [vmem:[#allocation3 + $0x1] sm:$0xff]
        %v4290 = vpack.c.bf16 %v4289, %v4289
        %s4291 = scalar_lea.vmem %s20, 64
        %v4292 = vld [vmem:[%s4291] sm:$0xf]
        %v4293 = vld [vmem:[%s4291 + $0x4] sm:$0xf]
        %v4294 = vld [vmem:[%s4291 + $0x8] sm:$0xf]
        %v4295 = vld [vmem:[%s4291 + $0xc] sm:$0xf]
        %v4300 = vunpack.c.l.b16 %v4292
        %v4301 = vunpack.c.l.b16 %v4293
        %v4302 = vunpack.c.l.b16 %v4294
        %v4303 = vunpack.c.l.b16 %v4295
        %v4304 = vpack.c.b16 %v4301, %v4300
        %v4305 = vpack.c.b16 %v4303, %v4302
        %v4307 = vsel %vm840, %v4290, 0
        %v4310 = vsel %vm840, %v4304, 0
        %v4313 = vsel %vm840, %v4305, 0
        %4315 = vmatprep.subr.bf16.mxu0 0
        %4316 = vmatpush1.bf16.xpose.msra.mxu0 0
        %4317 = vmatprep.subr.bf16.mxu0 0
        %4318 = vmatpush1.bf16.xpose.msra.mxu0 0
        %4319 = vmatprep.subr.bf16.mxu0 0
        %4320 = vmatpush1.bf16.xpose.msra.mxu0 0
        %4321 = vmatprep.subr.bf16.mxu0 0
        %4322 = vmatpush1.bf16.xpose.msra.mxu0 0
        %4323 = vmatprep.subr.bf16.mxu0 0
        %4324 = vmatpush1.bf16.xpose.msra.mxu0 0
        %4325 = vmatprep.subr.bf16.mxu0 0
        %4326 = vmatpush1.bf16.xpose.msra.mxu0 0
        %4327 = vmatprep.subr.bf16.mxu0 0
        %4328 = vmatpush1.bf16.xpose.msra.mxu0 %v4313
        %4329 = vmatprep.subr.bf16.mxu0 0
        %4330 = vmatpush1.bf16.xpose.msra.mxu0 %v4310
        %4331 = vmatprep.subr.bf16.mxu0 0
        %4332 = vmatpush2.bf16.xpose.msra.mxu0 0
        %4333 = vmatprep.subr.bf16.mxu0 0
        %4334 = vmatpush2.bf16.xpose.msra.mxu0 0
        %4335 = vmatprep.subr.bf16.mxu0 0
        %4336 = vmatpush2.bf16.xpose.msra.mxu0 0
        %4337 = vmatprep.subr.bf16.mxu0 0
        %4338 = vmatpush2.bf16.xpose.msra.mxu0 0
        %4339 = vmatprep.subr.bf16.mxu0 0
        %4340 = vmatpush2.bf16.xpose.msra.mxu0 0
        %4341 = vmatprep.subr.bf16.mxu0 0
        %4342 = vmatpush2.bf16.xpose.msra.mxu0 0
        %4343 = vmatprep.subr.bf16.mxu0 0
        %4344 = vmatpush2.bf16.xpose.msra.mxu0 0
        %4345 = vmatprep.subr.bf16.mxu0 0
        %4346 = vmatpush2.bf16.xpose.msra.mxu0 0
        %4347 = vmatprep.mubr.bf16.mxu0 0
        %4348 = vmatmul.mubr.bf16.gmra.mxu0 %v4307
        %v4349 = vpop.f32.mrf.mxu0
        %v4350 = vadd.f32 0.0, %v4349
        %v4351 = vpop.f32.mrf.mxu0
        %v4352 = vpop.f32.mrf.mxu0
        %v4353 = vpop.f32.mrf.mxu0
        %4354 = vdwg.mxu0
        %v4359 = vunpack.c.l.b16 %v4285
        %v4360 = vunpack.c.l.b16 %v4286
        %v4361 = vunpack.c.l.b16 %v4287
        %v4362 = vunpack.c.l.b16 %v4288
        %v4363 = vpack.c.b16 %v4360, %v4359
        %v4364 = vpack.c.b16 %v4362, %v4361
        %v4366 = vsel %vm840, %v4283, 0
        %v4369 = vsel %vm840, %v4363, 0
        %v4372 = vsel %vm840, %v4364, 0
        %4374 = vmatprep.subr.bf16.mxu0 0
        %4375 = vmatpush1.bf16.xpose.msra.mxu0 0
        %4376 = vmatprep.subr.bf16.mxu0 0
        %4377 = vmatpush1.bf16.xpose.msra.mxu0 0
        %4378 = vmatprep.subr.bf16.mxu0 0
        %4379 = vmatpush1.bf16.xpose.msra.mxu0 0
        %4380 = vmatprep.subr.bf16.mxu0 0
        %4381 = vmatpush1.bf16.xpose.msra.mxu0 0
        %4382 = vmatprep.subr.bf16.mxu0 0
        %4383 = vmatpush1.bf16.xpose.msra.mxu0 0
        %4384 = vmatprep.subr.bf16.mxu0 0
        %4385 = vmatpush1.bf16.xpose.msra.mxu0 0
        %4386 = vmatprep.subr.bf16.mxu0 0
        %4387 = vmatpush1.bf16.xpose.msra.mxu0 %v4372
        %4388 = vmatprep.subr.bf16.mxu0 0
        %4389 = vmatpush1.bf16.xpose.msra.mxu0 %v4369
        %4390 = vmatprep.subr.bf16.mxu0 0
        %4391 = vmatpush2.bf16.xpose.msra.mxu0 0
        %4392 = vmatprep.subr.bf16.mxu0 0
        %4393 = vmatpush2.bf16.xpose.msra.mxu0 0
        %4394 = vmatprep.subr.bf16.mxu0 0
        %4395 = vmatpush2.bf16.xpose.msra.mxu0 0
        %4396 = vmatprep.subr.bf16.mxu0 0
        %4397 = vmatpush2.bf16.xpose.msra.mxu0 0
        %4398 = vmatprep.subr.bf16.mxu0 0
        %4399 = vmatpush2.bf16.xpose.msra.mxu0 0
        %4400 = vmatprep.subr.bf16.mxu0 0
        %4401 = vmatpush2.bf16.xpose.msra.mxu0 0
        %4402 = vmatprep.subr.bf16.mxu0 0
        %4403 = vmatpush2.bf16.xpose.msra.mxu0 0
        %4404 = vmatprep.subr.bf16.mxu0 0
        %4405 = vmatpush2.bf16.xpose.msra.mxu0 0
        %4406 = vmatprep.mubr.bf16.mxu0 0
        %4407 = vmatmul.mubr.bf16.gmra.mxu0 %v4366
        %v4408 = vpop.f32.mrf.mxu0
        %v4409 = vadd.f32 %v4350, %v4408
        %v4410 = vpop.f32.mrf.mxu0
        %v4411 = vpop.f32.mrf.mxu0
        %v4412 = vpop.f32.mrf.mxu0
        %4413 = vdwg.mxu0
        %v4414 = vld [vmem:[#allocation3 + $0x2] sm:$0xff]
        %v4415 = vpack.c.bf16 %v4414, %v4414
        %s4416 = scalar_lea.vmem %s20, 80
        %v4417 = vld [vmem:[%s4416] sm:$0xf]
        %v4418 = vld [vmem:[%s4416 + $0x4] sm:$0xf]
        %v4419 = vld [vmem:[%s4416 + $0x8] sm:$0xf]
        %v4420 = vld [vmem:[%s4416 + $0xc] sm:$0xf]
        %v4425 = vunpack.c.l.b16 %v4417
        %v4426 = vunpack.c.l.b16 %v4418
        %v4427 = vunpack.c.l.b16 %v4419
        %v4428 = vunpack.c.l.b16 %v4420
        %v4429 = vpack.c.b16 %v4426, %v4425
        %v4430 = vpack.c.b16 %v4428, %v4427
        %v4432 = vsel %vm840, %v4415, 0
        %v4435 = vsel %vm840, %v4429, 0
        %v4438 = vsel %vm840, %v4430, 0
        %4440 = vmatprep.subr.bf16.mxu0 0
        %4441 = vmatpush1.bf16.xpose.msra.mxu0 0
        %4442 = vmatprep.subr.bf16.mxu0 0
        %4443 = vmatpush1.bf16.xpose.msra.mxu0 0
        %4444 = vmatprep.subr.bf16.mxu0 0
        %4445 = vmatpush1.bf16.xpose.msra.mxu0 0
        %4446 = vmatprep.subr.bf16.mxu0 0
        %4447 = vmatpush1.bf16.xpose.msra.mxu0 0
        %4448 = vmatprep.subr.bf16.mxu0 0
        %4449 = vmatpush1.bf16.xpose.msra.mxu0 0
        %4450 = vmatprep.subr.bf16.mxu0 0
        %4451 = vmatpush1.bf16.xpose.msra.mxu0 0
        %4452 = vmatprep.subr.bf16.mxu0 0
        %4453 = vmatpush1.bf16.xpose.msra.mxu0 %v4438
        %4454 = vmatprep.subr.bf16.mxu0 0
        %4455 = vmatpush1.bf16.xpose.msra.mxu0 %v4435
        %4456 = vmatprep.subr.bf16.mxu0 0
        %4457 = vmatpush2.bf16.xpose.msra.mxu0 0
        %4458 = vmatprep.subr.bf16.mxu0 0
        %4459 = vmatpush2.bf16.xpose.msra.mxu0 0
        %4460 = vmatprep.subr.bf16.mxu0 0
        %4461 = vmatpush2.bf16.xpose.msra.mxu0 0
        %4462 = vmatprep.subr.bf16.mxu0 0
        %4463 = vmatpush2.bf16.xpose.msra.mxu0 0
        %4464 = vmatprep.subr.bf16.mxu0 0
        %4465 = vmatpush2.bf16.xpose.msra.mxu0 0
        %4466 = vmatprep.subr.bf16.mxu0 0
        %4467 = vmatpush2.bf16.xpose.msra.mxu0 0
        %4468 = vmatprep.subr.bf16.mxu0 0
        %4469 = vmatpush2.bf16.xpose.msra.mxu0 0
        %4470 = vmatprep.subr.bf16.mxu0 0
        %4471 = vmatpush2.bf16.xpose.msra.mxu0 0
        %4472 = vmatprep.mubr.bf16.mxu0 0
        %4473 = vmatmul.mubr.bf16.gmra.mxu0 %v4432
        %v4474 = vpop.f32.mrf.mxu0
        %v4475 = vadd.f32 0.0, %v4474
        %v4476 = vpop.f32.mrf.mxu0
        %v4477 = vpop.f32.mrf.mxu0
        %v4478 = vpop.f32.mrf.mxu0
        %4479 = vdwg.mxu0
        %v4480 = vadd.f32 %v4409, %v4475
        %v4482 = vlaneseq
        %v4483 = vshrl.u32 %v4482, 7
        %v4484 = vsub.s32 0, %v4483
        %v4485 = vrot.slane %v4280, %v4484
        %v4487 = vadd.f32 %v4480, %v4485
        %v4488 = vmul.f32 %v4487, %v849
        %v4489 = vadd.f32 %v4006, %v4488
        %s4490 = scalar_lea.vmem %s22, 1
        %v4491 = vld [vmem:[%s4490] sm:$0x1]
        %s4492 = scalar_lea.vmem %s23, 1
        %v4493 = vld [vmem:[%s4492] sm:$0x1]
        %v4494 = vsel %vm836, %v4489, 0.0
        %4495 = vadd.xlane.f32.xlu0 %v4494
        %v4496 = vpop.xlane.xlu0 %4495
        %v4497 = vmul.f32 %v4496, %v2209
        %v4498 = vsub.f32 %v4489, %v4497
        %v4499 = vmul.f32 %v4498, %v4498
        %v4500 = vsel %vm836, %v4499, 0.0
        %4501 = vadd.xlane.f32.xlu0 %v4500
        %v4502 = vpop.xlane.xlu0 %4501
        %v4503 = vmul.f32 %v4502, %v2209
        %v4504 = vadd.f32 %v4503, 1e-05
        %v4505 = vrsqrt.pop %v4504
        %v4506 = vmul.f32 %v4498, %v4505
        %v4508 = vlaneseq
        %v4509 = vshrl.u32 %v4508, 7
        %v4510 = vsub.s32 0, %v4509
        %v4511 = vrot.slane %v4491, %v4510
        %v4513 = vmul.f32 %v4506, %v4511
        %v4515 = vlaneseq
        %v4516 = vshrl.u32 %v4515, 7
        %v4517 = vsub.s32 0, %v4516
        %v4518 = vrot.slane %v4493, %v4517
        %v4520 = vadd.f32 %v4513, %v4518
        %v4521 = vmul.f32 %v4520, %v849
        %v4522 = vpack.c.bf16 %v4521, %v4521
        %v4523 = vld [vmem:[%s24] sm:$0xf]
        %v4524 = vld [vmem:[%s24 + $0x4] sm:$0xf]
        %v4525 = vld [vmem:[%s24 + $0x8] sm:$0xf]
        %v4526 = vld [vmem:[%s24 + $0xc] sm:$0xf]
        %v4527 = vld [vmem:[%s24 + $0x10] sm:$0xf]
        %v4528 = vld [vmem:[%s24 + $0x14] sm:$0xf]
        %v4529 = vld [vmem:[%s24 + $0x18] sm:$0xf]
        %v4530 = vld [vmem:[%s24 + $0x1c] sm:$0xf]
        %v4531 = vld [vmem:[%s24 + $0x20] sm:$0xf]
        %v4532 = vld [vmem:[%s24 + $0x24] sm:$0xf]
        %v4533 = vld [vmem:[%s24 + $0x28] sm:$0xf]
        %v4534 = vld [vmem:[%s24 + $0x2c] sm:$0xf]
        %v4535 = vld [vmem:[%s24 + $0x30] sm:$0xf]
        %v4536 = vld [vmem:[%s24 + $0x34] sm:$0xf]
        %v4537 = vld [vmem:[%s24 + $0x38] sm:$0xf]
        %v4538 = vld [vmem:[%s24 + $0x3c] sm:$0xf]
        %v4539 = vld [vmem:[%s25] sm:$0x1]
        %v4541 = vlaneseq
        %v4542 = vshrl.u32 %v4541, 7
        %v4543 = vsub.s32 0, %v4542
        %v4544 = vrot.slane %v4539, %v4543
        %v4562 = vunpack.c.l.b16 %v4523
        %v4563 = vunpack.c.l.b16 %v4524
        %v4564 = vunpack.c.l.b16 %v4525
        %v4565 = vunpack.c.l.b16 %v4526
        %v4566 = vunpack.c.l.b16 %v4527
        %v4567 = vunpack.c.l.b16 %v4528
        %v4568 = vunpack.c.l.b16 %v4529
        %v4569 = vunpack.c.l.b16 %v4530
        %v4570 = vunpack.c.l.b16 %v4531
        %v4571 = vunpack.c.l.b16 %v4532
        %v4572 = vunpack.c.l.b16 %v4533
        %v4573 = vunpack.c.l.b16 %v4534
        %v4574 = vunpack.c.l.b16 %v4535
        %v4575 = vunpack.c.l.b16 %v4536
        %v4576 = vunpack.c.l.b16 %v4537
        %v4577 = vunpack.c.l.b16 %v4538
        %v4578 = vpack.c.b16 %v4563, %v4562
        %v4579 = vpack.c.b16 %v4565, %v4564
        %v4580 = vpack.c.b16 %v4567, %v4566
        %v4581 = vpack.c.b16 %v4569, %v4568
        %v4582 = vpack.c.b16 %v4571, %v4570
        %v4583 = vpack.c.b16 %v4573, %v4572
        %v4584 = vpack.c.b16 %v4575, %v4574
        %v4585 = vpack.c.b16 %v4577, %v4576
        %v4587 = vsel %vm836, %v4522, 0
        %v4590 = vsel %vm836, %v4578, 0
        %v4593 = vsel %vm836, %v4579, 0
        %v4596 = vsel %vm836, %v4580, 0
        %v4599 = vsel %vm836, %v4581, 0
        %v4602 = vsel %vm836, %v4582, 0
        %v4605 = vsel %vm836, %v4583, 0
        %v4608 = vsel %vm836, %v4584, 0
        %v4611 = vsel %vm836, %v4585, 0
        %4613 = vmatprep.subr.bf16.mxu0 0
        %4614 = vmatpush1.bf16.xpose.msra.mxu0 %v4611
        %4615 = vmatprep.subr.bf16.mxu0 0
        %4616 = vmatpush1.bf16.xpose.msra.mxu0 %v4608
        %4617 = vmatprep.subr.bf16.mxu0 0
        %4618 = vmatpush1.bf16.xpose.msra.mxu0 %v4605
        %4619 = vmatprep.subr.bf16.mxu0 0
        %4620 = vmatpush1.bf16.xpose.msra.mxu0 %v4602
        %4621 = vmatprep.subr.bf16.mxu0 0
        %4622 = vmatpush1.bf16.xpose.msra.mxu0 %v4599
        %4623 = vmatprep.subr.bf16.mxu0 0
        %4624 = vmatpush1.bf16.xpose.msra.mxu0 %v4596
        %4625 = vmatprep.subr.bf16.mxu0 0
        %4626 = vmatpush1.bf16.xpose.msra.mxu0 %v4593
        %4627 = vmatprep.subr.bf16.mxu0 0
        %4628 = vmatpush1.bf16.xpose.msra.mxu0 %v4590
        %4629 = vmatprep.subr.bf16.mxu0 0
        %4630 = vmatpush2.bf16.xpose.msra.mxu0 0
        %4631 = vmatprep.subr.bf16.mxu0 0
        %4632 = vmatpush2.bf16.xpose.msra.mxu0 0
        %4633 = vmatprep.subr.bf16.mxu0 0
        %4634 = vmatpush2.bf16.xpose.msra.mxu0 0
        %4635 = vmatprep.subr.bf16.mxu0 0
        %4636 = vmatpush2.bf16.xpose.msra.mxu0 0
        %4637 = vmatprep.subr.bf16.mxu0 0
        %4638 = vmatpush2.bf16.xpose.msra.mxu0 0
        %4639 = vmatprep.subr.bf16.mxu0 0
        %4640 = vmatpush2.bf16.xpose.msra.mxu0 0
        %4641 = vmatprep.subr.bf16.mxu0 0
        %4642 = vmatpush2.bf16.xpose.msra.mxu0 0
        %4643 = vmatprep.subr.bf16.mxu0 0
        %4644 = vmatpush2.bf16.xpose.msra.mxu0 0
        %4645 = vmatprep.mubr.bf16.mxu0 0
        %4646 = vmatmul.mubr.bf16.gmra.mxu0 %v4587
        %v4647 = vpop.f32.mrf.mxu0
        %v4648 = vadd.f32 %v4544, %v4647
        %v4649 = vpop.f32.mrf.mxu0
        %v4650 = vpop.f32.mrf.mxu0
        %v4651 = vpop.f32.mrf.mxu0
        %4652 = vdwg.mxu0
        %v4653 = vmul.f32 %v4648, %v849
        %4654 = vst [vmem:[%s819] sm:$0xff] %v4653
        %s4655 = sand.u32 %s614, 1
        %s4656 = scalar_lea.sflag [#allocation5], %s4655
        %s4657 = sand.u32 %s614, 1
        %s4658 = smul.addr %s4657, 8
        %s4659 = scalar_lea.vmem [#allocation4], %s4658
        // Predicated region
        $region125: #{tpu_custom_call.1} parent=123 // pred_check
          %p4660 = pneg %p624
        $region126: #{tpu_custom_call.1} parent=123 // pred_check_branch
          %4662 = sbr.rel (%p4660) target = $region128
        $region127: #{tpu_custom_call.1} parent=123 // pred_region
          %s4664 = ssub.s32 128, 128
          %4665 = vsyncadd %s4656, %s4664
          %s4666 = smul.addr %s40, 128
          %s4667 = scalar_lea.hbm %s26, %s4666
          %s4669 = sshll.u32 %s4659, 4
          %s4670 = int_to_ptr.vmem [resolvable:$true] %s4669
          %4672 = dma.vmem_to_hbm [thread:$0]  %s4670, 128, %s4667, %s4656
        $region128: #{tpu_custom_call.1} parent=123 // pred_fallthru
          _
      $region124: #{tpu_custom_call.1} parent=5 // pred_fallthru
        _
      %p4673 = scmp.le.s32.totalorder 2, %s35
      // Predicated region
      $region129: #{tpu_custom_call.1} parent=5 // pred_check
        %p4674 = pneg %p4673
      $region130: #{tpu_custom_call.1} parent=5 // pred_check_branch
        %4676 = sbr.rel (%p4674) target = $region132
      $region131: #{tpu_custom_call.1} parent=5 // pred_region
        %s4677 = ssub.s32 %s35, 2
        // Predicated region
        $region133: #{tpu_custom_call.1} parent=131 // pred_check
          %p4678 = pneg %p630
        $region134: #{tpu_custom_call.1} parent=131 // pred_check_branch
          %4680 = sbr.rel (%p4678) target = $region136
        $region135: #{tpu_custom_call.1} parent=131 // pred_region
          %s4681 = sand.u32 %s615, 1
          %s4682 = scalar_lea.sflag [#allocation5], %s4681
          %s4683 = sand.u32 %s615, 1
          %s4684 = smul.addr %s4683, 8
          %s4685 = scalar_lea.vmem [#allocation4], %s4684
          %4686 = dma.done %s4682, 128
        $region136: #{tpu_custom_call.1} parent=131 // pred_fallthru
          _
      $region132: #{tpu_custom_call.1} parent=5 // pred_fallthru
        _
    $region6: #{tpu_custom_call.1} parent=1 // loop_footer
      %s39 = sadd.s32 1, %s35
    $region7: #{tpu_custom_call.1} parent=1 // loop_footer_branch
      %34 = sbr.rel target = $region3
    $region8: #{tpu_custom_call.1} parent=1 // loop_exit
      _
    %4687 = vsyncpa [#allocation5], 1
    %s4688 = scalar_lea.sflag [#allocation5], 1
    %4689 = vsyncpa %s4688, 1

</llo_original>
